<compile_context>
chip_gen: v7x
topology: tpu7x:2x2x1
jax: 0.10.0
libtpu: 0.0.40
codegen_flags: <defaults>
</compile_context>

<pallas_src>
import functools

import numpy as np

import jax
import jax.numpy as jnp
from jax import lax
from jax.experimental import pallas as pl
from jax.experimental.pallas import tpu as pltpu


# ----------------------------------------------------------------------------
# Static miniature-InceptionV3 configuration
# ----------------------------------------------------------------------------
H_IN = 16                      # toy input spatial size (real inception: 299)
C_IN = 3
C_STEM = 16                    # stem conv channels
OH = H_IN // 2                 # spatial size after stem conv (stride 2)  -> 8
HW = OH // 2                   # spatial size after 3x3/s2 maxpool        -> 4
N_SP = HW * HW                 # spatial positions in the mixed block     -> 16
B1, B5R, B5, B3R, B3, BPOOL = 16, 8, 16, 8, 16, 16
C_CAT = B1 + B5 + B3 + BPOOL   # 64-channel InceptionA concat
NC_PAD = 128                   # lane-dense logits slab width
K_IN = (H_IN + 2) * (H_IN + 2) * C_IN       # flattened padded image = 972
K_IN_PAD = 1024                # padded to 8*128 lanes
STEM_COLS = 9 * N_SP * C_STEM  # stem matmul width, col=(pool-tap,pos,ch)=2304
MAX_B_TILE = 128               # batch rows per grid step (cap; VMEM-safe on
                               # v7x's 64 MiB as well as v5e/v6e)


def _round_up(n, m):
    return ((n + m - 1) // m) * m


def _shift_matrices(h, w, ksize, pad):
    """0/1 matrices S_t so that (S_t @ feat) is feat shifted by conv tap t."""
    n = h * w
    mats = np.zeros((ksize * ksize, n, n), np.float32)
    for kh in range(ksize):
        for kw in range(ksize):
            t = kh * ksize + kw
            for oh in range(h):
                for ow in range(w):
                    ih, iw = oh + kh - pad, ow + kw - pad
                    if 0 <= ih < h and 0 <= iw < w:
                        mats[t, oh * w + ow, ih * w + iw] = 1.0
    return mats


# ----------------------------------------------------------------------------
# The single fused kernel (one grid step == one batch tile)
# ----------------------------------------------------------------------------
def _inception_kernel(x_ref, kstem_ref, k1_ref, k5_ref, k3a_ref, k3b_ref,
                      kp_ref, kfc_ref, bns_ref, bn1_ref, bnm_ref, fcb_ref,
                      o_ref):
    f32 = jnp.float32
    bf16 = jnp.bfloat16

    def mm(a, b_ref):                      # bf16 MXU matmul, f32 accumulation
        return jnp.dot(a.astype(bf16), b_ref[...], preferred_element_type=f32)

    # --- stem conv3x3/s2 + BN + ReLU: im2col, conv weights and the maxpool
    #     window ordering are all folded into K_stem -> ONE matmul.
    z = jnp.dot(x_ref[...], kstem_ref[...], preferred_element_type=f32)
    z = jnp.maximum(z * bns_ref[0:1, :] + bns_ref[1:2, :], 0.0)     # [Bt,2304]

    # --- 3x3/s2 maxpool: pairwise-tree max over nine lane-aligned 256-wide
    #     pool-tap slabs (clamped window duplicates don't change a max).
    slabs = [z[:, t * 256:(t + 1) * 256] for t in range(9)]
    while len(slabs) > 1:
        nxt = [jnp.maximum(slabs[i], slabs[i + 1])
               for i in range(0, len(slabs) - 1, 2)]
        if len(slabs) % 2:
            nxt.append(slabs[-1])
        slabs = nxt
    feat = slabs[0]                        # [Bt, 256], col = pos*16 + ch
    feat_bf = feat.astype(bf16)

    # --- InceptionA: the three 1x1s sharing `feat` fused into ONE matmul.
    t1 = jnp.dot(feat_bf, k1_ref[...], preferred_element_type=f32)  # [Bt,512]
    t1 = jnp.maximum(t1 * bn1_ref[0:1, :] + bn1_ref[1:2, :], 0.0)
    b1 = t1[:, 0:256]                      # 1x1 branch        (col = pos*16+o)
    r5 = t1[:, 256:384]                    # 5x5 reduce, 8 ch  (col = pos*8+o)
    r3 = t1[:, 384:512]                    # 3x3 reduce, 8 ch  (col = pos*8+o)

    def bn_relu(v, i):                     # lane-dense [1,256] scale/shift
        return jnp.maximum(
            v * bnm_ref[2 * i:2 * i + 1, :] + bnm_ref[2 * i + 1:2 * i + 2, :],
            0.0)

    # each KxK conv (and avgpool3x3 + 1x1) is ONE Kronecker-folded matmul
    b5 = bn_relu(mm(r5, k5_ref), 0)        # [Bt,128] x [128,256]
    d3 = bn_relu(mm(r3, k3a_ref), 1)       # [Bt,128] x [128,256]
    b3 = bn_relu(mm(d3, k3b_ref), 2)       # [Bt,256] x [256,256]
    bp = bn_relu(mm(feat_bf, kp_ref), 3)   # [Bt,256] x [256,256]

    # --- head: GAP + fc folded into four bf16 matmuls (fc rows replicated
    #     over positions and pre-scaled by 1/16); concat order b1|b5|b3|bp.
    acc = jnp.dot(b1.astype(bf16), kfc_ref[0], preferred_element_type=f32)
    acc = acc + jnp.dot(b5.astype(bf16), kfc_ref[1], preferred_element_type=f32)
    acc = acc + jnp.dot(b3.astype(bf16), kfc_ref[2], preferred_element_type=f32)
    acc = acc + jnp.dot(bp.astype(bf16), kfc_ref[3], preferred_element_type=f32)
    o_ref[...] = acc + fcb_ref[...]        # [Bt, 128] lane-dense store


# ----------------------------------------------------------------------------
# Parameters: synthetic deterministic weights, pre-packed into kernel layout
# ----------------------------------------------------------------------------
def init_params(key, num_classes=10):
    """Returns (params, raw): params feed the kernel, raw feeds the reference."""
    ks = jax.random.split(key, 20)

    def conv_w(k, cout, cin, kh, kw):      # kaiming(relu) init, as in the spec
        fan_in = cin * kh * kw
        return np.asarray(jax.random.normal(
            k, (cout, cin, kh, kw), jnp.float32)) * (2.0 / fan_in) ** 0.5

    def bn_fold(k, c, eps=1e-3):           # BasicConv2d: BN eps=0.001
        k1, k2, k3, k4 = jax.random.split(k, 4)
        gamma = 1.0 + 0.1 * np.asarray(jax.random.normal(k1, (c,), jnp.float32))
        beta = 0.1 * np.asarray(jax.random.normal(k2, (c,), jnp.float32))
        mean = 0.1 * np.asarray(jax.random.normal(k3, (c,), jnp.float32))
        var = 1.0 + 0.1 * np.abs(
            np.asarray(jax.random.normal(k4, (c,), jnp.float32)))
        scale = (gamma / np.sqrt(var + eps)).astype(np.float32)
        shift = (beta - mean * scale).astype(np.float32)
        return scale, shift

    w_stem = conv_w(ks[0], C_STEM, C_IN, 3, 3)
    w_b1 = conv_w(ks[1], B1, C_STEM, 1, 1)
    w_b5r = conv_w(ks[2], B5R, C_STEM, 1, 1)
    w_b5 = conv_w(ks[3], B5, B5R, 5, 5)
    w_b3r = conv_w(ks[4], B3R, C_STEM, 1, 1)
    w_b3a = conv_w(ks[5], B3, B3R, 3, 3)
    w_b3b = conv_w(ks[6], B3, B3, 3, 3)
    w_bp = conv_w(ks[7], BPOOL, C_STEM, 1, 1)
    convs = (w_stem, w_b1, w_b5r, w_b5, w_b3r, w_b3a, w_b3b, w_bp)

    widths = (C_STEM, B1, B5R, B5, B3R, B3, B3, BPOOL)
    bn = [bn_fold(ks[8 + i], c) for i, c in enumerate(widths)]
    scales = [s for s, _ in bn]
    shifts = [t for _, t in bn]

    # --- K_stem [1024, 2304]: stride-2 conv weights + im2col + maxpool-window
    #     ordering folded together.  row = flat padded-image pixel, column =
    #     (pool tap t, pool position p, channel o).
    w_stem_taps = np.transpose(w_stem, (2, 3, 1, 0)).reshape(9 * C_IN, C_STEM)
    k_stem = np.zeros((K_IN_PAD, STEM_COLS), np.float32)
    wpad = H_IN + 2
    for tkh in range(3):
        for tkw in range(3):
            t = tkh * 3 + tkw
            for poh in range(HW):
                for pow_ in range(HW):
                    p = poh * HW + pow_
                    # clamped pool-window index: duplicates don't change a max
                    oh = int(np.clip(2 * poh - 1 + tkh, 0, OH - 1))
                    ow = int(np.clip(2 * pow_ - 1 + tkw, 0, OH - 1))
                    rows = [((2 * oh + ckh) * wpad + (2 * ow + ckw)) * C_IN + c
                            for ckh in range(3) for ckw in range(3)
                            for c in range(C_IN)]
                    col0 = (t * N_SP + p) * C_STEM
                    k_stem[np.asarray(rows), col0:col0 + C_STEM] = w_stem_taps

    # --- fused 1x1 reductions [256, 512]: block-diagonal over positions,
    #     branch-major columns (b1 | b5-reduce | b3-reduce).
    w1_io = w_b1[:, :, 0, 0].T
    w5r_io = w_b5r[:, :, 0, 0].T
    w3r_io = w_b3r[:, :, 0, 0].T
    k_1x1 = np.zeros((N_SP * C_STEM, N_SP * (B1 + B5R + B3R)), np.float32)
    for p in range(N_SP):
        r0 = p * C_STEM
        k_1x1[r0:r0 + C_STEM, p * B1:(p + 1) * B1] = w1_io
        c5 = N_SP * B1 + p * B5R
        k_1x1[r0:r0 + C_STEM, c5:c5 + B5R] = w5r_io
        c3 = N_SP * (B1 + B5R) + p * B3R
        k_1x1[r0:r0 + C_STEM, c3:c3 + B3R] = w3r_io

    # --- KxK convs as single Kronecker-folded matrices:
    #     K[n*cin+c, m*cout+o] = sum_t S_t[m,n] * W[o,c,kh,kw]
    def kron_conv(S, w):
        T, cout, cin = S.shape[0], w.shape[0], w.shape[1]
        taps = np.transpose(w, (2, 3, 1, 0)).reshape(T, cin, cout)   # [t,c,o]
        K = np.einsum('tmn,tco->ncmo', S, taps)
        return K.reshape(N_SP * cin, N_SP * cout)

    s3 = _shift_matrices(HW, HW, 3, 1)
    s5 = _shift_matrices(HW, HW, 5, 2)
    k_5 = kron_conv(s5, w_b5)              # [128, 256]
    k_3a = kron_conv(s3, w_b3a)            # [128, 256]
    k_3b = kron_conv(s3, w_b3b)            # [256, 256]
    # avgpool3x3/s1/p1 + 1x1 conv folded together (the /9 lives in BN scale)
    psum = s3.sum(0)                       # [16,16] window-membership counts
    wp_io = w_bp[:, :, 0, 0].T
    k_p = np.einsum('mn,co->ncmo', psum, wp_io).reshape(N_SP * C_STEM,
                                                        N_SP * BPOOL)

    # --- folded BN as lane-dense f32 row vectors
    bn_stem = np.stack([np.tile(scales[0], 9 * N_SP),
                        np.tile(shifts[0], 9 * N_SP)])              # [2,2304]
    bn_1x1 = np.stack([
        np.concatenate([np.tile(scales[1], N_SP), np.tile(scales[2], N_SP),
                        np.tile(scales[4], N_SP)]),
        np.concatenate([np.tile(shifts[1], N_SP), np.tile(shifts[2], N_SP),
                        np.tile(shifts[4], N_SP)]),
    ])                                                              # [2, 512]
    bn_misc = np.stack([
        np.tile(scales[3], N_SP), np.tile(shifts[3], N_SP),         # b5
        np.tile(scales[5], N_SP), np.tile(shifts[5], N_SP),         # b3a
        np.tile(scales[6], N_SP), np.tile(shifts[6], N_SP),         # b3b
        np.tile(scales[7] / 9.0, N_SP), np.tile(shifts[7], N_SP),   # bp (+ /9)
    ])                                                              # [8, 256]

    # --- replaced fc (change_last_layer): xavier_uniform weight, zero bias.
    #     GAP (1/16) and branch-concat order are folded into 4 matrices with
    #     columns padded to 128 for a lane-dense output store.
    limit = float(np.sqrt(6.0 / (C_CAT + num_classes)))
    fc_w = np.asarray(jax.random.uniform(ks[16], (C_CAT, num_classes),
                                         jnp.float32, -limit, limit))
    fc_w_pad = np.zeros((C_CAT, NC_PAD), np.float32)
    fc_w_pad[:, :num_classes] = fc_w
    k_fc = np.zeros((4, N_SP * 16, NC_PAD), np.float32)
    for i in range(4):
        k_fc[i] = np.tile(fc_w_pad[i * 16:(i + 1) * 16, :], (N_SP, 1)) / N_SP

    params = {
        'k_stem': jnp.asarray(k_stem, jnp.bfloat16),
        'k_1x1': jnp.asarray(k_1x1, jnp.bfloat16),
        'k_5': jnp.asarray(k_5, jnp.bfloat16),
        'k_3a': jnp.asarray(k_3a, jnp.bfloat16),
        'k_3b': jnp.asarray(k_3b, jnp.bfloat16),
        'k_p': jnp.asarray(k_p, jnp.bfloat16),
        'k_fc': jnp.asarray(k_fc, jnp.bfloat16),
        'bn_stem': jnp.asarray(bn_stem, jnp.float32),
        'bn_1x1': jnp.asarray(bn_1x1, jnp.float32),
        'bn_misc': jnp.asarray(bn_misc, jnp.float32),
        'fc_b': jnp.zeros((1, NC_PAD), jnp.float32),
    }
    raw = {'convs': convs, 'scales': scales, 'shifts': shifts,
           'fc_w': fc_w, 'fc_b': np.zeros((num_classes,), np.float32)}
    return params, raw


# ----------------------------------------------------------------------------
# Forward
# ----------------------------------------------------------------------------
def forward(params, x_nchw, *, num_classes):
    B = x_nchw.shape[0]
    b_tile = min(MAX_B_TILE, _round_up(B, 8))
    b_pad = _round_up(B, b_tile)   # NOTE: on v7x prefer B a multiple of
                                   # 2*b_tile so both TensorCores get steps.

    # Host prep is just transpose + pad + reshape + cast: no im2col expansion,
    # no gather/stack chain (that work is folded into K_stem).
    x = jnp.transpose(x_nchw, (0, 2, 3, 1)).astype(jnp.float32)     # NHWC
    xp = jnp.pad(x, ((0, 0), (1, 1), (1, 1), (0, 0)))               # [B,18,18,3]
    x_flat = xp.reshape(B, K_IN)
    x_flat = jnp.pad(x_flat, ((0, b_pad - B), (0, K_IN_PAD - K_IN)))
    x_flat = x_flat.astype(jnp.bfloat16)                            # [Bp,1024]

    inputs = (x_flat, params['k_stem'], params['k_1x1'], params['k_5'],
              params['k_3a'], params['k_3b'], params['k_p'], params['k_fc'],
              params['bn_stem'], params['bn_1x1'], params['bn_misc'],
              params['fc_b'])

    in_specs = [pl.BlockSpec((b_tile, K_IN_PAD), lambda i: (i, 0))]
    in_specs += [pl.BlockSpec(a.shape, lambda i, n=a.ndim: (0,) * n)
                 for a in inputs[1:]]

    out = pl.pallas_call(
        _inception_kernel,
        out_shape=jax.ShapeDtypeStruct((b_pad, NC_PAD), jnp.float32),
        grid=(b_pad // b_tile,),
        in_specs=in_specs,
        out_specs=pl.BlockSpec((b_tile, NC_PAD), lambda i: (i, 0)),
        compiler_params=pltpu.CompilerParams(
            dimension_semantics=("parallel",),
            vmem_limit_bytes=32 * 1024 * 1024),
    )(*inputs)
    return out[:B, :num_classes]


# ----------------------------------------------------------------------------
# Pure-JAX f32 reference of the same miniature network (for validation)
# ----------------------------------------------------------------------------
def reference_forward(raw, x_nchw):
    (w_stem, w_b1, w_b5r, w_b5, w_b3r, w_b3a, w_b3b, w_bp) = raw['convs']
    sc, sh = raw['scales'], raw['shifts']

    def conv(x, w, stride, pad):
        return lax.conv_general_dilated(
            x, jnp.asarray(np.transpose(w, (2, 3, 1, 0))),
            (stride, stride), [(pad, pad), (pad, pad)],
            dimension_numbers=('NHWC', 'HWIO', 'NHWC'),
            precision=lax.Precision.HIGHEST)

    def bn_relu(x, i):
        return jnp.maximum(x * sc[i] + sh[i], 0.0)

    x = jnp.transpose(x_nchw, (0, 2, 3, 1)).astype(jnp.float32)
    y = bn_relu(conv(x, w_stem, 2, 1), 0)
    y = lax.reduce_window(y, -jnp.inf, lax.max, (1, 3, 3, 1), (1, 2, 2, 1),
                          [(0, 0), (1, 1), (1, 1), (0, 0)])
    b1 = bn_relu(conv(y, w_b1, 1, 0), 1)
    r5 = bn_relu(conv(y, w_b5r, 1, 0), 2)
    b5 = bn_relu(conv(r5, w_b5, 1, 2), 3)
    r3 = bn_relu(conv(y, w_b3r, 1, 0), 4)
    d3 = bn_relu(conv(r3, w_b3a, 1, 1), 5)
    b3 = bn_relu(conv(d3, w_b3b, 1, 1), 6)
    ap = lax.reduce_window(y, 0.0, lax.add, (1, 3, 3, 1), (1, 1, 1, 1),
                           [(0, 0), (1, 1), (1, 1), (0, 0)]) / 9.0
    bp = bn_relu(conv(ap, w_bp, 1, 0), 7)
    cat = jnp.concatenate([b1, b5, b3, bp], axis=-1)
    gap = jnp.mean(cat, axis=(1, 2))
    return jnp.dot(gap, jnp.asarray(raw['fc_w']),
                   precision=lax.Precision.HIGHEST) + jnp.asarray(raw['fc_b'])


if __name__ == "__main__":
    key = jax.random.PRNGKey(0)
    k_x, k_p = jax.random.split(key)
    num_classes = 10
    x = jax.random.normal(k_x, (2, C_IN, H_IN, H_IN), jnp.float32)   # NCHW

    params, raw = init_params(k_p, num_classes=num_classes)
    fwd = jax.jit(functools.partial(forward, num_classes=num_classes))
    logits = jax.block_until_ready(fwd(params, x))

    assert logits.shape == (2, num_classes)
    assert bool(jnp.all(jnp.isfinite(logits)))

    # validate against the f32 reference (kernel uses bf16 weights/activations)
    ref = reference_forward(raw, x)
    rel_err = float(jnp.linalg.norm(logits - ref) /
                    (jnp.linalg.norm(ref) + 1e-6))
    assert rel_err < 5e-2, f"kernel/reference mismatch: rel_err={rel_err}"
    print("KERNEL_OK")
</pallas_src>

<mosaic_0001>
module attributes {stable_mosaic.version = 11 : i64} {
  func.func @_inception_kernel(%arg0: i32, %arg1: memref<8x1024xbf16, #tpu.memory_space<vmem>>, %arg2: memref<1024x2304xbf16, #tpu.memory_space<vmem>>, %arg3: memref<256x512xbf16, #tpu.memory_space<vmem>>, %arg4: memref<128x256xbf16, #tpu.memory_space<vmem>>, %arg5: memref<128x256xbf16, #tpu.memory_space<vmem>>, %arg6: memref<256x256xbf16, #tpu.memory_space<vmem>>, %arg7: memref<256x256xbf16, #tpu.memory_space<vmem>>, %arg8: memref<4x256x128xbf16, #tpu.memory_space<vmem>>, %arg9: memref<2x2304xf32, #tpu.memory_space<vmem>>, %arg10: memref<2x512xf32, #tpu.memory_space<vmem>>, %arg11: memref<8x256xf32, #tpu.memory_space<vmem>>, %arg12: memref<1x128xf32, #tpu.memory_space<vmem>>, %arg13: memref<8x128xf32, #tpu.memory_space<vmem>>) attributes {dimension_semantics = [#tpu.dimension_semantics<parallel>], iteration_bounds = array<i64: 1>, scalar_prefetch = 0 : i64, scratch_operands = 0 : i64, tpu.core_type = #tpu.core_type<tc>, window_params = [{transform_indices = @transform_0, window_bounds = array<i64: 8, 1024>}, {pipeline_mode = #tpu.pipeline_mode<synchronous>, transform_indices = @transform_1, window_bounds = array<i64: 1024, 2304>}, {pipeline_mode = #tpu.pipeline_mode<synchronous>, transform_indices = @transform_2, window_bounds = array<i64: 256, 512>}, {pipeline_mode = #tpu.pipeline_mode<synchronous>, transform_indices = @transform_3, window_bounds = array<i64: 128, 256>}, {pipeline_mode = #tpu.pipeline_mode<synchronous>, transform_indices = @transform_4, window_bounds = array<i64: 128, 256>}, {pipeline_mode = #tpu.pipeline_mode<synchronous>, transform_indices = @transform_5, window_bounds = array<i64: 256, 256>}, {pipeline_mode = #tpu.pipeline_mode<synchronous>, transform_indices = @transform_6, window_bounds = array<i64: 256, 256>}, {pipeline_mode = #tpu.pipeline_mode<synchronous>, transform_indices = @transform_7, window_bounds = array<i64: 4, 256, 128>}, {pipeline_mode = #tpu.pipeline_mode<synchronous>, transform_indices = @transform_8, window_bounds = array<i64: 2, 2304>}, {pipeline_mode = #tpu.pipeline_mode<synchronous>, transform_indices = @transform_9, window_bounds = array<i64: 2, 512>}, {pipeline_mode = #tpu.pipeline_mode<synchronous>, transform_indices = @transform_10, window_bounds = array<i64: 8, 256>}, {pipeline_mode = #tpu.pipeline_mode<synchronous>, transform_indices = @transform_11, window_bounds = array<i64: 1, 128>}, {transform_indices = @transform_12, window_bounds = array<i64: 8, 128>}]} {
    %c0 = arith.constant 0 : index
    %c0_0 = arith.constant 0 : index
    %0 = vector.load %arg1[%c0, %c0_0] : memref<8x1024xbf16, #tpu.memory_space<vmem>>, vector<8x1024xbf16>
    %c0_1 = arith.constant 0 : index
    %c0_2 = arith.constant 0 : index
    %1 = vector.load %arg2[%c0_1, %c0_2] : memref<1024x2304xbf16, #tpu.memory_space<vmem>>, vector<1024x2304xbf16>
    %cst = arith.constant dense<0.000000e+00> : vector<8x2304xf32>
    %2 = tpu.matmul %0, %1, %cst {dimension_numbers = #tpu.dot_dimension_numbers<[1], [0], [0], [1], [0, 0, 1, 1], [], []>} : vector<8x1024xbf16>, vector<1024x2304xbf16>, vector<8x2304xf32> -> vector<8x2304xf32>
    %c0_3 = arith.constant 0 : index
    %c0_4 = arith.constant 0 : index
    %3 = vector.load %arg9[%c0_3, %c0_4] : memref<2x2304xf32, #tpu.memory_space<vmem>>, vector<1x2304xf32>
    %4 = vector.broadcast %3 : vector<1x2304xf32> to vector<8x2304xf32>
    %5 = arith.mulf %2, %4 : vector<8x2304xf32>
    %c1 = arith.constant 1 : index
    %c0_5 = arith.constant 0 : index
    %6 = vector.load %arg9[%c1, %c0_5] : memref<2x2304xf32, #tpu.memory_space<vmem>>, vector<1x2304xf32>
    %7 = vector.broadcast %6 : vector<1x2304xf32> to vector<8x2304xf32>
    %8 = arith.addf %5, %7 : vector<8x2304xf32>
    %cst_6 = arith.constant 0.000000e+00 : f32
    %9 = vector.broadcast %cst_6 : f32 to vector<8x2304xf32>
    %10 = arith.maximumf %8, %9 : vector<8x2304xf32>
    %11 = vector.extract_strided_slice %10 {offsets = [0, 0], sizes = [8, 256], strides = [1, 1]} : vector<8x2304xf32> to vector<8x256xf32>
    %12 = vector.extract_strided_slice %10 {offsets = [0, 256], sizes = [8, 256], strides = [1, 1]} : vector<8x2304xf32> to vector<8x256xf32>
    %13 = vector.extract_strided_slice %10 {offsets = [0, 512], sizes = [8, 256], strides = [1, 1]} : vector<8x2304xf32> to vector<8x256xf32>
    %14 = vector.extract_strided_slice %10 {offsets = [0, 768], sizes = [8, 256], strides = [1, 1]} : vector<8x2304xf32> to vector<8x256xf32>
    %15 = vector.extract_strided_slice %10 {offsets = [0, 1024], sizes = [8, 256], strides = [1, 1]} : vector<8x2304xf32> to vector<8x256xf32>
    %16 = vector.extract_strided_slice %10 {offsets = [0, 1280], sizes = [8, 256], strides = [1, 1]} : vector<8x2304xf32> to vector<8x256xf32>
    %17 = vector.extract_strided_slice %10 {offsets = [0, 1536], sizes = [8, 256], strides = [1, 1]} : vector<8x2304xf32> to vector<8x256xf32>
    %18 = vector.extract_strided_slice %10 {offsets = [0, 1792], sizes = [8, 256], strides = [1, 1]} : vector<8x2304xf32> to vector<8x256xf32>
    %19 = vector.extract_strided_slice %10 {offsets = [0, 2048], sizes = [8, 256], strides = [1, 1]} : vector<8x2304xf32> to vector<8x256xf32>
    %20 = arith.maximumf %11, %12 : vector<8x256xf32>
    %21 = arith.maximumf %13, %14 : vector<8x256xf32>
    %22 = arith.maximumf %15, %16 : vector<8x256xf32>
    %23 = arith.maximumf %17, %18 : vector<8x256xf32>
    %24 = arith.maximumf %20, %21 : vector<8x256xf32>
    %25 = arith.maximumf %22, %23 : vector<8x256xf32>
    %26 = arith.maximumf %24, %25 : vector<8x256xf32>
    %27 = arith.maximumf %26, %19 : vector<8x256xf32>
    %28 = arith.truncf %27 : vector<8x256xf32> to vector<8x256xbf16>
    %c0_7 = arith.constant 0 : index
    %c0_8 = arith.constant 0 : index
    %29 = vector.load %arg3[%c0_7, %c0_8] : memref<256x512xbf16, #tpu.memory_space<vmem>>, vector<256x512xbf16>
    %cst_9 = arith.constant dense<0.000000e+00> : vector<8x512xf32>
    %30 = tpu.matmul %28, %29, %cst_9 {dimension_numbers = #tpu.dot_dimension_numbers<[1], [0], [0], [1], [0, 0, 1, 1], [], []>} : vector<8x256xbf16>, vector<256x512xbf16>, vector<8x512xf32> -> vector<8x512xf32>
    %c0_10 = arith.constant 0 : index
    %c0_11 = arith.constant 0 : index
    %31 = vector.load %arg10[%c0_10, %c0_11] : memref<2x512xf32, #tpu.memory_space<vmem>>, vector<1x512xf32>
    %32 = vector.broadcast %31 : vector<1x512xf32> to vector<8x512xf32>
    %33 = arith.mulf %30, %32 : vector<8x512xf32>
    %c1_12 = arith.constant 1 : index
    %c0_13 = arith.constant 0 : index
    %34 = vector.load %arg10[%c1_12, %c0_13] : memref<2x512xf32, #tpu.memory_space<vmem>>, vector<1x512xf32>
    %35 = vector.broadcast %34 : vector<1x512xf32> to vector<8x512xf32>
    %36 = arith.addf %33, %35 : vector<8x512xf32>
    %cst_14 = arith.constant 0.000000e+00 : f32
    %37 = vector.broadcast %cst_14 : f32 to vector<8x512xf32>
    %38 = arith.maximumf %36, %37 : vector<8x512xf32>
    %39 = vector.extract_strided_slice %38 {offsets = [0, 0], sizes = [8, 256], strides = [1, 1]} : vector<8x512xf32> to vector<8x256xf32>
    %40 = vector.extract_strided_slice %38 {offsets = [0, 256], sizes = [8, 128], strides = [1, 1]} : vector<8x512xf32> to vector<8x128xf32>
    %41 = vector.extract_strided_slice %38 {offsets = [0, 384], sizes = [8, 128], strides = [1, 1]} : vector<8x512xf32> to vector<8x128xf32>
    %42 = arith.truncf %40 : vector<8x128xf32> to vector<8x128xbf16>
    %c0_15 = arith.constant 0 : index
    %c0_16 = arith.constant 0 : index
    %43 = vector.load %arg4[%c0_15, %c0_16] : memref<128x256xbf16, #tpu.memory_space<vmem>>, vector<128x256xbf16>
    %cst_17 = arith.constant dense<0.000000e+00> : vector<8x256xf32>
    %44 = tpu.matmul %42, %43, %cst_17 {dimension_numbers = #tpu.dot_dimension_numbers<[1], [0], [0], [1], [0, 0, 1, 1], [], []>} : vector<8x128xbf16>, vector<128x256xbf16>, vector<8x256xf32> -> vector<8x256xf32>
    %c0_18 = arith.constant 0 : index
    %c0_19 = arith.constant 0 : index
    %45 = vector.load %arg11[%c0_18, %c0_19] : memref<8x256xf32, #tpu.memory_space<vmem>>, vector<1x256xf32>
    %46 = vector.broadcast %45 : vector<1x256xf32> to vector<8x256xf32>
    %47 = arith.mulf %44, %46 : vector<8x256xf32>
    %c1_20 = arith.constant 1 : index
    %c0_21 = arith.constant 0 : index
    %48 = vector.load %arg11[%c1_20, %c0_21] : memref<8x256xf32, #tpu.memory_space<vmem>>, vector<1x256xf32>
    %49 = vector.broadcast %48 : vector<1x256xf32> to vector<8x256xf32>
    %50 = arith.addf %47, %49 : vector<8x256xf32>
    %cst_22 = arith.constant 0.000000e+00 : f32
    %51 = vector.broadcast %cst_22 : f32 to vector<8x256xf32>
    %52 = arith.maximumf %50, %51 : vector<8x256xf32>
    %53 = arith.truncf %41 : vector<8x128xf32> to vector<8x128xbf16>
    %c0_23 = arith.constant 0 : index
    %c0_24 = arith.constant 0 : index
    %54 = vector.load %arg5[%c0_23, %c0_24] : memref<128x256xbf16, #tpu.memory_space<vmem>>, vector<128x256xbf16>
    %cst_25 = arith.constant dense<0.000000e+00> : vector<8x256xf32>
    %55 = tpu.matmul %53, %54, %cst_25 {dimension_numbers = #tpu.dot_dimension_numbers<[1], [0], [0], [1], [0, 0, 1, 1], [], []>} : vector<8x128xbf16>, vector<128x256xbf16>, vector<8x256xf32> -> vector<8x256xf32>
    %c2 = arith.constant 2 : index
    %c0_26 = arith.constant 0 : index
    %56 = vector.load %arg11[%c2, %c0_26] : memref<8x256xf32, #tpu.memory_space<vmem>>, vector<1x256xf32>
    %57 = vector.broadcast %56 : vector<1x256xf32> to vector<8x256xf32>
    %58 = arith.mulf %55, %57 : vector<8x256xf32>
    %c3 = arith.constant 3 : index
    %c0_27 = arith.constant 0 : index
    %59 = vector.load %arg11[%c3, %c0_27] : memref<8x256xf32, #tpu.memory_space<vmem>>, vector<1x256xf32>
    %60 = vector.broadcast %59 : vector<1x256xf32> to vector<8x256xf32>
    %61 = arith.addf %58, %60 : vector<8x256xf32>
    %cst_28 = arith.constant 0.000000e+00 : f32
    %62 = vector.broadcast %cst_28 : f32 to vector<8x256xf32>
    %63 = arith.maximumf %61, %62 : vector<8x256xf32>
    %64 = arith.truncf %63 : vector<8x256xf32> to vector<8x256xbf16>
    %c0_29 = arith.constant 0 : index
    %c0_30 = arith.constant 0 : index
    %65 = vector.load %arg6[%c0_29, %c0_30] : memref<256x256xbf16, #tpu.memory_space<vmem>>, vector<256x256xbf16>
    %cst_31 = arith.constant dense<0.000000e+00> : vector<8x256xf32>
    %66 = tpu.matmul %64, %65, %cst_31 {dimension_numbers = #tpu.dot_dimension_numbers<[1], [0], [0], [1], [0, 0, 1, 1], [], []>} : vector<8x256xbf16>, vector<256x256xbf16>, vector<8x256xf32> -> vector<8x256xf32>
    %c4 = arith.constant 4 : index
    %c0_32 = arith.constant 0 : index
    %67 = vector.load %arg11[%c4, %c0_32] : memref<8x256xf32, #tpu.memory_space<vmem>>, vector<1x256xf32>
    %68 = vector.broadcast %67 : vector<1x256xf32> to vector<8x256xf32>
    %69 = arith.mulf %66, %68 : vector<8x256xf32>
    %c5 = arith.constant 5 : index
    %c0_33 = arith.constant 0 : index
    %70 = vector.load %arg11[%c5, %c0_33] : memref<8x256xf32, #tpu.memory_space<vmem>>, vector<1x256xf32>
    %71 = vector.broadcast %70 : vector<1x256xf32> to vector<8x256xf32>
    %72 = arith.addf %69, %71 : vector<8x256xf32>
    %cst_34 = arith.constant 0.000000e+00 : f32
    %73 = vector.broadcast %cst_34 : f32 to vector<8x256xf32>
    %74 = arith.maximumf %72, %73 : vector<8x256xf32>
    %c0_35 = arith.constant 0 : index
    %c0_36 = arith.constant 0 : index
    %75 = vector.load %arg7[%c0_35, %c0_36] : memref<256x256xbf16, #tpu.memory_space<vmem>>, vector<256x256xbf16>
    %cst_37 = arith.constant dense<0.000000e+00> : vector<8x256xf32>
    %76 = tpu.matmul %28, %75, %cst_37 {dimension_numbers = #tpu.dot_dimension_numbers<[1], [0], [0], [1], [0, 0, 1, 1], [], []>} : vector<8x256xbf16>, vector<256x256xbf16>, vector<8x256xf32> -> vector<8x256xf32>
    %c6 = arith.constant 6 : index
    %c0_38 = arith.constant 0 : index
    %77 = vector.load %arg11[%c6, %c0_38] : memref<8x256xf32, #tpu.memory_space<vmem>>, vector<1x256xf32>
    %78 = vector.broadcast %77 : vector<1x256xf32> to vector<8x256xf32>
    %79 = arith.mulf %76, %78 : vector<8x256xf32>
    %c7 = arith.constant 7 : index
    %c0_39 = arith.constant 0 : index
    %80 = vector.load %arg11[%c7, %c0_39] : memref<8x256xf32, #tpu.memory_space<vmem>>, vector<1x256xf32>
    %81 = vector.broadcast %80 : vector<1x256xf32> to vector<8x256xf32>
    %82 = arith.addf %79, %81 : vector<8x256xf32>
    %cst_40 = arith.constant 0.000000e+00 : f32
    %83 = vector.broadcast %cst_40 : f32 to vector<8x256xf32>
    %84 = arith.maximumf %82, %83 : vector<8x256xf32>
    %85 = arith.truncf %39 : vector<8x256xf32> to vector<8x256xbf16>
    %c0_41 = arith.constant 0 : index
    %c0_42 = arith.constant 0 : index
    %c0_43 = arith.constant 0 : index
    %86 = vector.load %arg8[%c0_41, %c0_42, %c0_43] : memref<4x256x128xbf16, #tpu.memory_space<vmem>>, vector<1x256x128xbf16>
    %87 = vector.shape_cast %86 : vector<1x256x128xbf16> to vector<256x128xbf16>
    %cst_44 = arith.constant dense<0.000000e+00> : vector<8x128xf32>
    %88 = tpu.matmul %85, %87, %cst_44 {dimension_numbers = #tpu.dot_dimension_numbers<[1], [0], [0], [1], [0, 0, 1, 1], [], []>} : vector<8x256xbf16>, vector<256x128xbf16>, vector<8x128xf32> -> vector<8x128xf32>
    %89 = arith.truncf %52 : vector<8x256xf32> to vector<8x256xbf16>
    %c1_45 = arith.constant 1 : index
    %c0_46 = arith.constant 0 : index
    %c0_47 = arith.constant 0 : index
    %90 = vector.load %arg8[%c1_45, %c0_46, %c0_47] : memref<4x256x128xbf16, #tpu.memory_space<vmem>>, vector<1x256x128xbf16>
    %91 = vector.shape_cast %90 : vector<1x256x128xbf16> to vector<256x128xbf16>
    %cst_48 = arith.constant dense<0.000000e+00> : vector<8x128xf32>
    %92 = tpu.matmul %89, %91, %cst_48 {dimension_numbers = #tpu.dot_dimension_numbers<[1], [0], [0], [1], [0, 0, 1, 1], [], []>} : vector<8x256xbf16>, vector<256x128xbf16>, vector<8x128xf32> -> vector<8x128xf32>
    %93 = arith.addf %88, %92 : vector<8x128xf32>
    %94 = arith.truncf %74 : vector<8x256xf32> to vector<8x256xbf16>
    %c2_49 = arith.constant 2 : index
    %c0_50 = arith.constant 0 : index
    %c0_51 = arith.constant 0 : index
    %95 = vector.load %arg8[%c2_49, %c0_50, %c0_51] : memref<4x256x128xbf16, #tpu.memory_space<vmem>>, vector<1x256x128xbf16>
    %96 = vector.shape_cast %95 : vector<1x256x128xbf16> to vector<256x128xbf16>
    %cst_52 = arith.constant dense<0.000000e+00> : vector<8x128xf32>
    %97 = tpu.matmul %94, %96, %cst_52 {dimension_numbers = #tpu.dot_dimension_numbers<[1], [0], [0], [1], [0, 0, 1, 1], [], []>} : vector<8x256xbf16>, vector<256x128xbf16>, vector<8x128xf32> -> vector<8x128xf32>
    %98 = arith.addf %93, %97 : vector<8x128xf32>
    %99 = arith.truncf %84 : vector<8x256xf32> to vector<8x256xbf16>
    %c3_53 = arith.constant 3 : index
    %c0_54 = arith.constant 0 : index
    %c0_55 = arith.constant 0 : index
    %100 = vector.load %arg8[%c3_53, %c0_54, %c0_55] : memref<4x256x128xbf16, #tpu.memory_space<vmem>>, vector<1x256x128xbf16>
    %101 = vector.shape_cast %100 : vector<1x256x128xbf16> to vector<256x128xbf16>
    %cst_56 = arith.constant dense<0.000000e+00> : vector<8x128xf32>
    %102 = tpu.matmul %99, %101, %cst_56 {dimension_numbers = #tpu.dot_dimension_numbers<[1], [0], [0], [1], [0, 0, 1, 1], [], []>} : vector<8x256xbf16>, vector<256x128xbf16>, vector<8x128xf32> -> vector<8x128xf32>
    %103 = arith.addf %98, %102 : vector<8x128xf32>
    %c0_57 = arith.constant 0 : index
    %c0_58 = arith.constant 0 : index
    %104 = vector.load %arg12[%c0_57, %c0_58] : memref<1x128xf32, #tpu.memory_space<vmem>>, vector<1x128xf32>
    %105 = vector.broadcast %104 : vector<1x128xf32> to vector<8x128xf32>
    %106 = arith.addf %103, %105 : vector<8x128xf32>
    %c0_59 = arith.constant 0 : index
    %c0_60 = arith.constant 0 : index
    %107 = vector.load %arg13[%c0_59, %c0_60] : memref<8x128xf32, #tpu.memory_space<vmem>>, vector<8x128xf32>
    tpu.vector_store %arg13[%c0_59, %c0_60], %106 {strides = array<i32>} : memref<8x128xf32, #tpu.memory_space<vmem>>, vector<8x128xf32>,
    return
  }
  func.func @transform_0(%arg0: i32) -> (i32, i32) {
    %c0_i32 = arith.constant 0 : i32
    %c0_i32_0 = arith.constant 0 : i32
    return %arg0, %c0_i32 : i32, i32
  }
  func.func @transform_1(%arg0: i32) -> (i32, i32) {
    %c0_i32 = arith.constant 0 : i32
    %c0_i32_0 = arith.constant 0 : i32
    %c0_i32_1 = arith.constant 0 : i32
    return %c0_i32, %c0_i32_0 : i32, i32
  }
  func.func @transform_2(%arg0: i32) -> (i32, i32) {
    %c0_i32 = arith.constant 0 : i32
    %c0_i32_0 = arith.constant 0 : i32
    %c0_i32_1 = arith.constant 0 : i32
    return %c0_i32, %c0_i32_0 : i32, i32
  }
  func.func @transform_3(%arg0: i32) -> (i32, i32) {
    %c0_i32 = arith.constant 0 : i32
    %c0_i32_0 = arith.constant 0 : i32
    %c0_i32_1 = arith.constant 0 : i32
    return %c0_i32, %c0_i32_0 : i32, i32
  }
  func.func @transform_4(%arg0: i32) -> (i32, i32) {
    %c0_i32 = arith.constant 0 : i32
    %c0_i32_0 = arith.constant 0 : i32
    %c0_i32_1 = arith.constant 0 : i32
    return %c0_i32, %c0_i32_0 : i32, i32
  }
  func.func @transform_5(%arg0: i32) -> (i32, i32) {
    %c0_i32 = arith.constant 0 : i32
    %c0_i32_0 = arith.constant 0 : i32
    %c0_i32_1 = arith.constant 0 : i32
    return %c0_i32, %c0_i32_0 : i32, i32
  }
  func.func @transform_6(%arg0: i32) -> (i32, i32) {
    %c0_i32 = arith.constant 0 : i32
    %c0_i32_0 = arith.constant 0 : i32
    %c0_i32_1 = arith.constant 0 : i32
    return %c0_i32, %c0_i32_0 : i32, i32
  }
  func.func @transform_7(%arg0: i32) -> (i32, i32, i32) {
    %c0_i32 = arith.constant 0 : i32
    %c0_i32_0 = arith.constant 0 : i32
    %c0_i32_1 = arith.constant 0 : i32
    %c0_i32_2 = arith.constant 0 : i32
    return %c0_i32, %c0_i32_0, %c0_i32_1 : i32, i32, i32
  }
  func.func @transform_8(%arg0: i32) -> (i32, i32) {
    %c0_i32 = arith.constant 0 : i32
    %c0_i32_0 = arith.constant 0 : i32
    %c0_i32_1 = arith.constant 0 : i32
    return %c0_i32, %c0_i32_0 : i32, i32
  }
  func.func @transform_9(%arg0: i32) -> (i32, i32) {
    %c0_i32 = arith.constant 0 : i32
    %c0_i32_0 = arith.constant 0 : i32
    %c0_i32_1 = arith.constant 0 : i32
    return %c0_i32, %c0_i32_0 : i32, i32
  }
  func.func @transform_10(%arg0: i32) -> (i32, i32) {
    %c0_i32 = arith.constant 0 : i32
    %c0_i32_0 = arith.constant 0 : i32
    %c0_i32_1 = arith.constant 0 : i32
    return %c0_i32, %c0_i32_0 : i32, i32
  }
  func.func @transform_11(%arg0: i32) -> (i32, i32) {
    %c0_i32 = arith.constant 0 : i32
    %c0_i32_0 = arith.constant 0 : i32
    %c0_i32_1 = arith.constant 0 : i32
    return %c0_i32, %c0_i32_0 : i32, i32
  }
  func.func @transform_12(%arg0: i32) -> (i32, i32) {
    %c0_i32 = arith.constant 0 : i32
    %c0_i32_0 = arith.constant 0 : i32
    return %arg0, %c0_i32 : i32, i32
  }
}

</mosaic_0001>

<llo_original>
// kernel: forward.1
$region0: #{forward.1}
  #allocation0 [shape = 'u32[]', space=smem, size = 0x4, offset = 0x4, fixed_abs, tag = 'smem constant byte address 0x4 - core index']
  #allocation1 [shape = 'u32[144,128]{1,0:T(1,128)}', space=vmem, size = 0x12000, scoped, tag = 'internal scratch']
  %s0 = inlined_call_operand.vmem [shape: bf16[8,1024], index: 0, kind: input, shape index: {}]
  %s1 = inlined_call_operand.hbm [shape: bf16[1024,2304], index: 1, kind: input, shape index: {}]
  %s2 = inlined_call_operand.hbm [shape: bf16[256,512], index: 2, kind: input, shape index: {}]
  %s3 = inlined_call_operand.hbm [shape: bf16[128,256], index: 3, kind: input, shape index: {}]
  %s4 = inlined_call_operand.hbm [shape: bf16[128,256], index: 4, kind: input, shape index: {}]
  %s5 = inlined_call_operand.hbm [shape: bf16[256,256], index: 5, kind: input, shape index: {}]
  %s6 = inlined_call_operand.hbm [shape: bf16[256,256], index: 6, kind: input, shape index: {}]
  %s7 = inlined_call_operand.hbm [shape: bf16[4,256,128], index: 7, kind: input, shape index: {}]
  %s8 = inlined_call_operand.hbm [shape: f32[2,2304], index: 8, kind: input, shape index: {}]
  %s9 = inlined_call_operand.hbm [shape: f32[2,512], index: 9, kind: input, shape index: {}]
  %s10 = inlined_call_operand.hbm [shape: f32[8,256], index: 10, kind: input, shape index: {}]
  %s11 = inlined_call_operand.hbm [shape: f32[1,128], index: 11, kind: input, shape index: {}]
  %s12 = inlined_call_operand.vmem [shape: f32[8,128], index: 12, kind: output, shape index: {}]
  %s13 = sld [smem:[#allocation0]]
  $region102: #{forward.1} parent=0
    _
  %s15 = ssub.s32 1, %s13
  %s16 = scalar_select 0, %s15, %s13
  $region1: #{forward.1} parent=0
    #allocation2 [shape = 'u8[4718592]{0}', space=vmem, size = 0x480000, scoped, tag = 'input window, operand 1, single buffered']
    #allocation3 [shape = 's32[1]{0}', space=sflag, size = 0x4, scoped, tag = 'scoped memory for forward.1']
    #allocation4 [shape = 'u8[262144]{0}', space=vmem, size = 0x40000, scoped, tag = 'input window, operand 2, single buffered']
    #allocation5 [shape = 's32[1]{0}', space=sflag, size = 0x4, scoped, tag = 'scoped memory for forward.1']
    #allocation6 [shape = 'u8[65536]{0}', space=vmem, size = 0x10000, scoped, tag = 'input window, operand 3, single buffered']
    #allocation7 [shape = 'u8[65536]{0}', space=vmem, size = 0x10000, scoped, tag = 'input window, operand 4, single buffered']
    #allocation8 [shape = 's32[1]{0}', space=sflag, size = 0x4, scoped, tag = 'scoped memory for forward.1']
    #allocation9 [shape = 'u8[131072]{0}', space=vmem, size = 0x20000, scoped, tag = 'input window, operand 5, single buffered']
    #allocation10 [shape = 'u8[131072]{0}', space=vmem, size = 0x20000, scoped, tag = 'input window, operand 6, single buffered']
    #allocation11 [shape = 's32[1]{0}', space=sflag, size = 0x4, scoped, tag = 'scoped memory for forward.1']
    #allocation12 [shape = 'u8[262144]{0}', space=vmem, size = 0x40000, scoped, tag = 'input window, operand 7, single buffered']
    #allocation13 [shape = 'u8[18432]{0}', space=vmem, size = 0x4800, scoped, tag = 'input window, operand 8, single buffered']
    #allocation14 [shape = 's32[1]{0}', space=sflag, size = 0x4, scoped, tag = 'scoped memory for forward.1']
    #allocation15 [shape = 'u8[4096]{0}', space=vmem, size = 0x1000, scoped, tag = 'input window, operand 9, single buffered']
    #allocation16 [shape = 'u8[8192]{0}', space=vmem, size = 0x2000, scoped, tag = 'input window, operand 10, single buffered']
    #allocation17 [shape = 's32[1]{0}', space=sflag, size = 0x4, scoped, tag = 'scoped memory for forward.1']
    #allocation18 [shape = 'u8[512]{0}', space=vmem, size = 0x400, scoped, tag = 'input window, operand 11, single buffered']
    %17 = vsyncpa [#allocation3], 0
    %18 = vsyncpa [#allocation5], 0
    %19 = vsyncpa [#allocation8], 0
    %20 = vsyncpa [#allocation11], 0
    %21 = vsyncpa [#allocation14], 0
    %22 = vsyncpa [#allocation17], 0
    // Predicated region
    $region2: #{forward.1} parent=1 // pred_check
      _
    $region3: #{forward.1} parent=1 // pred_check_branch
      %24 = sbr.rel (0) target = $region5
    $region4: #{forward.1} parent=1 // pred_region
      _
    $region5: #{forward.1} parent=1 // pred_fallthru
      _
    // Predicated region
    $region6: #{forward.1} parent=1 // pred_check
      _
    $region7: #{forward.1} parent=1 // pred_check_branch
      %26 = sbr.rel (0) target = $region9
    $region8: #{forward.1} parent=1 // pred_region
      %s28 = ssub.s32 147456, 147456
      %29 = vsyncadd [#allocation3], %s28
      %s30 = sshll.u32 [#allocation2], 4
      %s31 = int_to_ptr.vmem [resolvable:$true] %s30
      %36 = dma.hbm_to_vmem [thread:$0]  %s1, 147456, %s31, [#allocation3], 1152, 1152, 72
    $region9: #{forward.1} parent=1 // pred_fallthru
      _
    // Predicated region
    $region10: #{forward.1} parent=1 // pred_check
      _
    $region11: #{forward.1} parent=1 // pred_check_branch
      %38 = sbr.rel (0) target = $region13
    $region12: #{forward.1} parent=1 // pred_region
      %s40 = ssub.s32 8192, 8192
      %41 = vsyncadd [#allocation5], %s40
      %s42 = sshll.u32 [#allocation4], 4
      %s43 = int_to_ptr.vmem [resolvable:$true] %s42
      %48 = dma.hbm_to_vmem [thread:$0]  %s2, 8192, %s43, [#allocation5], 256, 256, 16
    $region13: #{forward.1} parent=1 // pred_fallthru
      _
    // Predicated region
    $region14: #{forward.1} parent=1 // pred_check
      _
    $region15: #{forward.1} parent=1 // pred_check_branch
      %50 = sbr.rel (0) target = $region17
    $region16: #{forward.1} parent=1 // pred_region
      %s52 = ssub.s32 2048, 2048
      %53 = vsyncadd [#allocation5], %s52
      %s54 = sshll.u32 [#allocation6], 4
      %s55 = int_to_ptr.vmem [resolvable:$true] %s54
      %60 = dma.hbm_to_vmem [thread:$0]  %s3, 2048, %s55, [#allocation5], 128, 128, 8
    $region17: #{forward.1} parent=1 // pred_fallthru
      _
    // Predicated region
    $region18: #{forward.1} parent=1 // pred_check
      _
    $region19: #{forward.1} parent=1 // pred_check_branch
      %62 = sbr.rel (0) target = $region21
    $region20: #{forward.1} parent=1 // pred_region
      %s64 = ssub.s32 2048, 2048
      %65 = vsyncadd [#allocation8], %s64
      %s66 = sshll.u32 [#allocation7], 4
      %s67 = int_to_ptr.vmem [resolvable:$true] %s66
      %72 = dma.hbm_to_vmem [thread:$0]  %s4, 2048, %s67, [#allocation8], 128, 128, 8
    $region21: #{forward.1} parent=1 // pred_fallthru
      _
    // Predicated region
    $region22: #{forward.1} parent=1 // pred_check
      _
    $region23: #{forward.1} parent=1 // pred_check_branch
      %74 = sbr.rel (0) target = $region25
    $region24: #{forward.1} parent=1 // pred_region
      %s76 = ssub.s32 4096, 4096
      %77 = vsyncadd [#allocation8], %s76
      %s78 = sshll.u32 [#allocation9], 4
      %s79 = int_to_ptr.vmem [resolvable:$true] %s78
      %84 = dma.hbm_to_vmem [thread:$0]  %s5, 4096, %s79, [#allocation8], 128, 128, 8
    $region25: #{forward.1} parent=1 // pred_fallthru
      _
    // Predicated region
    $region26: #{forward.1} parent=1 // pred_check
      _
    $region27: #{forward.1} parent=1 // pred_check_branch
      %86 = sbr.rel (0) target = $region29
    $region28: #{forward.1} parent=1 // pred_region
      %s88 = ssub.s32 4096, 4096
      %89 = vsyncadd [#allocation11], %s88
      %s90 = sshll.u32 [#allocation10], 4
      %s91 = int_to_ptr.vmem [resolvable:$true] %s90
      %96 = dma.hbm_to_vmem [thread:$0]  %s6, 4096, %s91, [#allocation11], 128, 128, 8
    $region29: #{forward.1} parent=1 // pred_fallthru
      _
    // Predicated region
    $region30: #{forward.1} parent=1 // pred_check
      _
    $region31: #{forward.1} parent=1 // pred_check_branch
      %98 = sbr.rel (0) target = $region33
    $region32: #{forward.1} parent=1 // pred_region
      %s100 = ssub.s32 8192, 8192
      %101 = vsyncadd [#allocation11], %s100
      %s102 = sshll.u32 [#allocation12], 4
      %s103 = int_to_ptr.vmem [resolvable:$true] %s102
      %108 = dma.hbm_to_vmem [thread:$0]  %s7, 8192, %s103, [#allocation11], 64, 64, 4
    $region33: #{forward.1} parent=1 // pred_fallthru
      _
    // Predicated region
    $region34: #{forward.1} parent=1 // pred_check
      _
    $region35: #{forward.1} parent=1 // pred_check_branch
      %110 = sbr.rel (0) target = $region37
    $region36: #{forward.1} parent=1 // pred_region
      %s112 = ssub.s32 576, 576
      %113 = vsyncadd [#allocation14], %s112
      %s115 = sshll.u32 [#allocation13], 4
      %s116 = int_to_ptr.vmem [resolvable:$true] %s115
      %118 = dma.hbm_to_vmem [thread:$0]  %s8, 576, %s116, [#allocation14]
    $region37: #{forward.1} parent=1 // pred_fallthru
      _
    // Predicated region
    $region38: #{forward.1} parent=1 // pred_check
      _
    $region39: #{forward.1} parent=1 // pred_check_branch
      %120 = sbr.rel (0) target = $region41
    $region40: #{forward.1} parent=1 // pred_region
      %s122 = ssub.s32 128, 128
      %123 = vsyncadd [#allocation14], %s122
      %s125 = sshll.u32 [#allocation15], 4
      %s126 = int_to_ptr.vmem [resolvable:$true] %s125
      %128 = dma.hbm_to_vmem [thread:$0]  %s9, 128, %s126, [#allocation14]
    $region41: #{forward.1} parent=1 // pred_fallthru
      _
    // Predicated region
    $region42: #{forward.1} parent=1 // pred_check
      _
    $region43: #{forward.1} parent=1 // pred_check_branch
      %130 = sbr.rel (0) target = $region45
    $region44: #{forward.1} parent=1 // pred_region
      %s132 = ssub.s32 256, 256
      %133 = vsyncadd [#allocation17], %s132
      %s135 = sshll.u32 [#allocation16], 4
      %s136 = int_to_ptr.vmem [resolvable:$true] %s135
      %138 = dma.hbm_to_vmem [thread:$0]  %s10, 256, %s136, [#allocation17]
    $region45: #{forward.1} parent=1 // pred_fallthru
      _
    // Predicated region
    $region46: #{forward.1} parent=1 // pred_check
      _
    $region47: #{forward.1} parent=1 // pred_check_branch
      %140 = sbr.rel (0) target = $region49
    $region48: #{forward.1} parent=1 // pred_region
      %s142 = ssub.s32 16, 16
      %143 = vsyncadd [#allocation17], %s142
      %s145 = sshll.u32 [#allocation18], 4
      %s146 = int_to_ptr.vmem [resolvable:$true] %s145
      %148 = dma.hbm_to_vmem [thread:$0]  %s11, 16, %s146, [#allocation17]
    $region49: #{forward.1} parent=1 // pred_fallthru
      _
    // Predicated region
    $region50: #{forward.1} parent=1 // pred_check
      _
    $region51: #{forward.1} parent=1 // pred_check_branch
      %150 = sbr.rel (0) target = $region53
    $region52: #{forward.1} parent=1 // pred_region
      %151 = dma.done [#allocation3], 147456
    $region53: #{forward.1} parent=1 // pred_fallthru
      _
    // Predicated region
    $region54: #{forward.1} parent=1 // pred_check
      _
    $region55: #{forward.1} parent=1 // pred_check_branch
      %153 = sbr.rel (0) target = $region57
    $region56: #{forward.1} parent=1 // pred_region
      %154 = dma.done [#allocation5], 8192
    $region57: #{forward.1} parent=1 // pred_fallthru
      _
    // Predicated region
    $region58: #{forward.1} parent=1 // pred_check
      _
    $region59: #{forward.1} parent=1 // pred_check_branch
      %156 = sbr.rel (0) target = $region61
    $region60: #{forward.1} parent=1 // pred_region
      %157 = dma.done [#allocation5], 2048
    $region61: #{forward.1} parent=1 // pred_fallthru
      _
    // Predicated region
    $region62: #{forward.1} parent=1 // pred_check
      _
    $region63: #{forward.1} parent=1 // pred_check_branch
      %159 = sbr.rel (0) target = $region65
    $region64: #{forward.1} parent=1 // pred_region
      %160 = dma.done [#allocation8], 2048
    $region65: #{forward.1} parent=1 // pred_fallthru
      _
    // Predicated region
    $region66: #{forward.1} parent=1 // pred_check
      _
    $region67: #{forward.1} parent=1 // pred_check_branch
      %162 = sbr.rel (0) target = $region69
    $region68: #{forward.1} parent=1 // pred_region
      %163 = dma.done [#allocation8], 4096
    $region69: #{forward.1} parent=1 // pred_fallthru
      _
    // Predicated region
    $region70: #{forward.1} parent=1 // pred_check
      _
    $region71: #{forward.1} parent=1 // pred_check_branch
      %165 = sbr.rel (0) target = $region73
    $region72: #{forward.1} parent=1 // pred_region
      %166 = dma.done [#allocation11], 4096
    $region73: #{forward.1} parent=1 // pred_fallthru
      _
    // Predicated region
    $region74: #{forward.1} parent=1 // pred_check
      _
    $region75: #{forward.1} parent=1 // pred_check_branch
      %168 = sbr.rel (0) target = $region77
    $region76: #{forward.1} parent=1 // pred_region
      %169 = dma.done [#allocation11], 8192
    $region77: #{forward.1} parent=1 // pred_fallthru
      _
    // Predicated region
    $region78: #{forward.1} parent=1 // pred_check
      _
    $region79: #{forward.1} parent=1 // pred_check_branch
      %171 = sbr.rel (0) target = $region81
    $region80: #{forward.1} parent=1 // pred_region
      %172 = dma.done [#allocation14], 576
    $region81: #{forward.1} parent=1 // pred_fallthru
      _
    // Predicated region
    $region82: #{forward.1} parent=1 // pred_check
      _
    $region83: #{forward.1} parent=1 // pred_check_branch
      %174 = sbr.rel (0) target = $region85
    $region84: #{forward.1} parent=1 // pred_region
      %175 = dma.done [#allocation14], 128
    $region85: #{forward.1} parent=1 // pred_fallthru
      _
    // Predicated region
    $region86: #{forward.1} parent=1 // pred_check
      _
    $region87: #{forward.1} parent=1 // pred_check_branch
      %177 = sbr.rel (0) target = $region89
    $region88: #{forward.1} parent=1 // pred_region
      %178 = dma.done [#allocation17], 256
    $region89: #{forward.1} parent=1 // pred_fallthru
      _
    // Predicated region
    $region90: #{forward.1} parent=1 // pred_check
      _
    $region91: #{forward.1} parent=1 // pred_check_branch
      %180 = sbr.rel (0) target = $region93
    $region92: #{forward.1} parent=1 // pred_region
      %181 = dma.done [#allocation17], 16
    $region93: #{forward.1} parent=1 // pred_fallthru
      _
    %v183 = vld [vmem:[%s0] sm:$0xff]
    %v184 = vld [vmem:[%s0 + $0x8] sm:$0xff]
    %v185 = vld [vmem:[%s0 + $0x10] sm:$0xff]
    %v186 = vld [vmem:[%s0 + $0x18] sm:$0xff]
    %v187 = vld [vmem:[#allocation2] sm:$0xff]
    %v188 = vld [vmem:[#allocation2 + $0x8] sm:$0xff]
    %v189 = vld [vmem:[#allocation2 + $0x10] sm:$0xff]
    %v190 = vld [vmem:[#allocation2 + $0x18] sm:$0xff]
    %v191 = vld [vmem:[#allocation2 + $0x20] sm:$0xff]
    %v192 = vld [vmem:[#allocation2 + $0x28] sm:$0xff]
    %v193 = vld [vmem:[#allocation2 + $0x30] sm:$0xff]
    %v194 = vld [vmem:[#allocation2 + $0x38] sm:$0xff]
    %v195 = vld [vmem:[#allocation2 + $0x40] sm:$0xff]
    %v196 = vld [vmem:[#allocation2 + $0x48] sm:$0xff]
    %v197 = vld [vmem:[#allocation2 + $0x50] sm:$0xff]
    %v198 = vld [vmem:[#allocation2 + $0x58] sm:$0xff]
    %v199 = vld [vmem:[#allocation2 + $0x60] sm:$0xff]
    %v200 = vld [vmem:[#allocation2 + $0x68] sm:$0xff]
    %v201 = vld [vmem:[#allocation2 + $0x70] sm:$0xff]
    %v202 = vld [vmem:[#allocation2 + $0x78] sm:$0xff]
    %v203 = vld [vmem:[#allocation2 + $0x80] sm:$0xff]
    %v204 = vld [vmem:[#allocation2 + $0x88] sm:$0xff]
    %v205 = vld [vmem:[#allocation2 + $0x90] sm:$0xff]
    %v206 = vld [vmem:[#allocation2 + $0x98] sm:$0xff]
    %v207 = vld [vmem:[#allocation2 + $0xa0] sm:$0xff]
    %v208 = vld [vmem:[#allocation2 + $0xa8] sm:$0xff]
    %v209 = vld [vmem:[#allocation2 + $0xb0] sm:$0xff]
    %v210 = vld [vmem:[#allocation2 + $0xb8] sm:$0xff]
    %v211 = vld [vmem:[#allocation2 + $0xc0] sm:$0xff]
    %v212 = vld [vmem:[#allocation2 + $0xc8] sm:$0xff]
    %v213 = vld [vmem:[#allocation2 + $0xd0] sm:$0xff]
    %v214 = vld [vmem:[#allocation2 + $0xd8] sm:$0xff]
    %v215 = vld [vmem:[#allocation2 + $0xe0] sm:$0xff]
    %v216 = vld [vmem:[#allocation2 + $0xe8] sm:$0xff]
    %v217 = vld [vmem:[#allocation2 + $0xf0] sm:$0xff]
    %v218 = vld [vmem:[#allocation2 + $0xf8] sm:$0xff]
    %v219 = vld [vmem:[#allocation2 + $0x100] sm:$0xff]
    %v220 = vld [vmem:[#allocation2 + $0x108] sm:$0xff]
    %v221 = vld [vmem:[#allocation2 + $0x110] sm:$0xff]
    %v222 = vld [vmem:[#allocation2 + $0x118] sm:$0xff]
    %v223 = vld [vmem:[#allocation2 + $0x120] sm:$0xff]
    %v224 = vld [vmem:[#allocation2 + $0x128] sm:$0xff]
    %v225 = vld [vmem:[#allocation2 + $0x130] sm:$0xff]
    %v226 = vld [vmem:[#allocation2 + $0x138] sm:$0xff]
    %v227 = vld [vmem:[#allocation2 + $0x140] sm:$0xff]
    %v228 = vld [vmem:[#allocation2 + $0x148] sm:$0xff]
    %v229 = vld [vmem:[#allocation2 + $0x150] sm:$0xff]
    %v230 = vld [vmem:[#allocation2 + $0x158] sm:$0xff]
    %v231 = vld [vmem:[#allocation2 + $0x160] sm:$0xff]
    %v232 = vld [vmem:[#allocation2 + $0x168] sm:$0xff]
    %v233 = vld [vmem:[#allocation2 + $0x170] sm:$0xff]
    %v234 = vld [vmem:[#allocation2 + $0x178] sm:$0xff]
    %v235 = vld [vmem:[#allocation2 + $0x180] sm:$0xff]
    %v236 = vld [vmem:[#allocation2 + $0x188] sm:$0xff]
    %v237 = vld [vmem:[#allocation2 + $0x190] sm:$0xff]
    %v238 = vld [vmem:[#allocation2 + $0x198] sm:$0xff]
    %v239 = vld [vmem:[#allocation2 + $0x1a0] sm:$0xff]
    %v240 = vld [vmem:[#allocation2 + $0x1a8] sm:$0xff]
    %v241 = vld [vmem:[#allocation2 + $0x1b0] sm:$0xff]
    %v242 = vld [vmem:[#allocation2 + $0x1b8] sm:$0xff]
    %v243 = vld [vmem:[#allocation2 + $0x1c0] sm:$0xff]
    %v244 = vld [vmem:[#allocation2 + $0x1c8] sm:$0xff]
    %v245 = vld [vmem:[#allocation2 + $0x1d0] sm:$0xff]
    %v246 = vld [vmem:[#allocation2 + $0x1d8] sm:$0xff]
    %v247 = vld [vmem:[#allocation2 + $0x1e0] sm:$0xff]
    %v248 = vld [vmem:[#allocation2 + $0x1e8] sm:$0xff]
    %v249 = vld [vmem:[#allocation2 + $0x1f0] sm:$0xff]
    %v250 = vld [vmem:[#allocation2 + $0x1f8] sm:$0xff]
    %v251 = vld [vmem:[#allocation2 + $0x200] sm:$0xff]
    %v252 = vld [vmem:[#allocation2 + $0x208] sm:$0xff]
    %v253 = vld [vmem:[#allocation2 + $0x210] sm:$0xff]
    %v254 = vld [vmem:[#allocation2 + $0x218] sm:$0xff]
    %v255 = vld [vmem:[#allocation2 + $0x220] sm:$0xff]
    %v256 = vld [vmem:[#allocation2 + $0x228] sm:$0xff]
    %v257 = vld [vmem:[#allocation2 + $0x230] sm:$0xff]
    %v258 = vld [vmem:[#allocation2 + $0x238] sm:$0xff]
    %v259 = vld [vmem:[#allocation2 + $0x240] sm:$0xff]
    %v260 = vld [vmem:[#allocation2 + $0x248] sm:$0xff]
    %v261 = vld [vmem:[#allocation2 + $0x250] sm:$0xff]
    %v262 = vld [vmem:[#allocation2 + $0x258] sm:$0xff]
    %v263 = vld [vmem:[#allocation2 + $0x260] sm:$0xff]
    %v264 = vld [vmem:[#allocation2 + $0x268] sm:$0xff]
    %v265 = vld [vmem:[#allocation2 + $0x270] sm:$0xff]
    %v266 = vld [vmem:[#allocation2 + $0x278] sm:$0xff]
    %v267 = vld [vmem:[#allocation2 + $0x280] sm:$0xff]
    %v268 = vld [vmem:[#allocation2 + $0x288] sm:$0xff]
    %v269 = vld [vmem:[#allocation2 + $0x290] sm:$0xff]
    %v270 = vld [vmem:[#allocation2 + $0x298] sm:$0xff]
    %v271 = vld [vmem:[#allocation2 + $0x2a0] sm:$0xff]
    %v272 = vld [vmem:[#allocation2 + $0x2a8] sm:$0xff]
    %v273 = vld [vmem:[#allocation2 + $0x2b0] sm:$0xff]
    %v274 = vld [vmem:[#allocation2 + $0x2b8] sm:$0xff]
    %v275 = vld [vmem:[#allocation2 + $0x2c0] sm:$0xff]
    %v276 = vld [vmem:[#allocation2 + $0x2c8] sm:$0xff]
    %v277 = vld [vmem:[#allocation2 + $0x2d0] sm:$0xff]
    %v278 = vld [vmem:[#allocation2 + $0x2d8] sm:$0xff]
    %v279 = vld [vmem:[#allocation2 + $0x2e0] sm:$0xff]
    %v280 = vld [vmem:[#allocation2 + $0x2e8] sm:$0xff]
    %v281 = vld [vmem:[#allocation2 + $0x2f0] sm:$0xff]
    %v282 = vld [vmem:[#allocation2 + $0x2f8] sm:$0xff]
    %v283 = vld [vmem:[#allocation2 + $0x300] sm:$0xff]
    %v284 = vld [vmem:[#allocation2 + $0x308] sm:$0xff]
    %v285 = vld [vmem:[#allocation2 + $0x310] sm:$0xff]
    %v286 = vld [vmem:[#allocation2 + $0x318] sm:$0xff]
    %v287 = vld [vmem:[#allocation2 + $0x320] sm:$0xff]
    %v288 = vld [vmem:[#allocation2 + $0x328] sm:$0xff]
    %v289 = vld [vmem:[#allocation2 + $0x330] sm:$0xff]
    %v290 = vld [vmem:[#allocation2 + $0x338] sm:$0xff]
    %v291 = vld [vmem:[#allocation2 + $0x340] sm:$0xff]
    %v292 = vld [vmem:[#allocation2 + $0x348] sm:$0xff]
    %v293 = vld [vmem:[#allocation2 + $0x350] sm:$0xff]
    %v294 = vld [vmem:[#allocation2 + $0x358] sm:$0xff]
    %v295 = vld [vmem:[#allocation2 + $0x360] sm:$0xff]
    %v296 = vld [vmem:[#allocation2 + $0x368] sm:$0xff]
    %v297 = vld [vmem:[#allocation2 + $0x370] sm:$0xff]
    %v298 = vld [vmem:[#allocation2 + $0x378] sm:$0xff]
    %v299 = vld [vmem:[#allocation2 + $0x380] sm:$0xff]
    %v300 = vld [vmem:[#allocation2 + $0x388] sm:$0xff]
    %v301 = vld [vmem:[#allocation2 + $0x390] sm:$0xff]
    %v302 = vld [vmem:[#allocation2 + $0x398] sm:$0xff]
    %v303 = vld [vmem:[#allocation2 + $0x3a0] sm:$0xff]
    %v304 = vld [vmem:[#allocation2 + $0x3a8] sm:$0xff]
    %v305 = vld [vmem:[#allocation2 + $0x3b0] sm:$0xff]
    %v306 = vld [vmem:[#allocation2 + $0x3b8] sm:$0xff]
    %v307 = vld [vmem:[#allocation2 + $0x3c0] sm:$0xff]
    %v308 = vld [vmem:[#allocation2 + $0x3c8] sm:$0xff]
    %v309 = vld [vmem:[#allocation2 + $0x3d0] sm:$0xff]
    %v310 = vld [vmem:[#allocation2 + $0x3d8] sm:$0xff]
    %v311 = vld [vmem:[#allocation2 + $0x3e0] sm:$0xff]
    %v312 = vld [vmem:[#allocation2 + $0x3e8] sm:$0xff]
    %v313 = vld [vmem:[#allocation2 + $0x3f0] sm:$0xff]
    %v314 = vld [vmem:[#allocation2 + $0x3f8] sm:$0xff]
    %v315 = vld [vmem:[#allocation2 + $0x400] sm:$0xff]
    %v316 = vld [vmem:[#allocation2 + $0x408] sm:$0xff]
    %v317 = vld [vmem:[#allocation2 + $0x410] sm:$0xff]
    %v318 = vld [vmem:[#allocation2 + $0x418] sm:$0xff]
    %v319 = vld [vmem:[#allocation2 + $0x420] sm:$0xff]
    %v320 = vld [vmem:[#allocation2 + $0x428] sm:$0xff]
    %v321 = vld [vmem:[#allocation2 + $0x430] sm:$0xff]
    %v322 = vld [vmem:[#allocation2 + $0x438] sm:$0xff]
    %v323 = vld [vmem:[#allocation2 + $0x440] sm:$0xff]
    %v324 = vld [vmem:[#allocation2 + $0x448] sm:$0xff]
    %v325 = vld [vmem:[#allocation2 + $0x450] sm:$0xff]
    %v326 = vld [vmem:[#allocation2 + $0x458] sm:$0xff]
    %v327 = vld [vmem:[#allocation2 + $0x460] sm:$0xff]
    %v328 = vld [vmem:[#allocation2 + $0x468] sm:$0xff]
    %v329 = vld [vmem:[#allocation2 + $0x470] sm:$0xff]
    %v330 = vld [vmem:[#allocation2 + $0x478] sm:$0xff]
    %v331 = vld [vmem:[#allocation2 + $0x480] sm:$0xff]
    %v332 = vld [vmem:[#allocation2 + $0x488] sm:$0xff]
    %v333 = vld [vmem:[#allocation2 + $0x490] sm:$0xff]
    %v334 = vld [vmem:[#allocation2 + $0x498] sm:$0xff]
    %v335 = vld [vmem:[#allocation2 + $0x4a0] sm:$0xff]
    %v336 = vld [vmem:[#allocation2 + $0x4a8] sm:$0xff]
    %v337 = vld [vmem:[#allocation2 + $0x4b0] sm:$0xff]
    %v338 = vld [vmem:[#allocation2 + $0x4b8] sm:$0xff]
    %v339 = vld [vmem:[#allocation2 + $0x4c0] sm:$0xff]
    %v340 = vld [vmem:[#allocation2 + $0x4c8] sm:$0xff]
    %v341 = vld [vmem:[#allocation2 + $0x4d0] sm:$0xff]
    %v342 = vld [vmem:[#allocation2 + $0x4d8] sm:$0xff]
    %v343 = vld [vmem:[#allocation2 + $0x4e0] sm:$0xff]
    %v344 = vld [vmem:[#allocation2 + $0x4e8] sm:$0xff]
    %v345 = vld [vmem:[#allocation2 + $0x4f0] sm:$0xff]
    %v346 = vld [vmem:[#allocation2 + $0x4f8] sm:$0xff]
    %v347 = vld [vmem:[#allocation2 + $0x500] sm:$0xff]
    %v348 = vld [vmem:[#allocation2 + $0x508] sm:$0xff]
    %v349 = vld [vmem:[#allocation2 + $0x510] sm:$0xff]
    %v350 = vld [vmem:[#allocation2 + $0x518] sm:$0xff]
    %v351 = vld [vmem:[#allocation2 + $0x520] sm:$0xff]
    %v352 = vld [vmem:[#allocation2 + $0x528] sm:$0xff]
    %v353 = vld [vmem:[#allocation2 + $0x530] sm:$0xff]
    %v354 = vld [vmem:[#allocation2 + $0x538] sm:$0xff]
    %v355 = vld [vmem:[#allocation2 + $0x540] sm:$0xff]
    %v356 = vld [vmem:[#allocation2 + $0x548] sm:$0xff]
    %v357 = vld [vmem:[#allocation2 + $0x550] sm:$0xff]
    %v358 = vld [vmem:[#allocation2 + $0x558] sm:$0xff]
    %v359 = vld [vmem:[#allocation2 + $0x560] sm:$0xff]
    %v360 = vld [vmem:[#allocation2 + $0x568] sm:$0xff]
    %v361 = vld [vmem:[#allocation2 + $0x570] sm:$0xff]
    %v362 = vld [vmem:[#allocation2 + $0x578] sm:$0xff]
    %v363 = vld [vmem:[#allocation2 + $0x580] sm:$0xff]
    %v364 = vld [vmem:[#allocation2 + $0x588] sm:$0xff]
    %v365 = vld [vmem:[#allocation2 + $0x590] sm:$0xff]
    %v366 = vld [vmem:[#allocation2 + $0x598] sm:$0xff]
    %v367 = vld [vmem:[#allocation2 + $0x5a0] sm:$0xff]
    %v368 = vld [vmem:[#allocation2 + $0x5a8] sm:$0xff]
    %v369 = vld [vmem:[#allocation2 + $0x5b0] sm:$0xff]
    %v370 = vld [vmem:[#allocation2 + $0x5b8] sm:$0xff]
    %v371 = vld [vmem:[#allocation2 + $0x5c0] sm:$0xff]
    %v372 = vld [vmem:[#allocation2 + $0x5c8] sm:$0xff]
    %v373 = vld [vmem:[#allocation2 + $0x5d0] sm:$0xff]
    %v374 = vld [vmem:[#allocation2 + $0x5d8] sm:$0xff]
    %v375 = vld [vmem:[#allocation2 + $0x5e0] sm:$0xff]
    %v376 = vld [vmem:[#allocation2 + $0x5e8] sm:$0xff]
    %v377 = vld [vmem:[#allocation2 + $0x5f0] sm:$0xff]
    %v378 = vld [vmem:[#allocation2 + $0x5f8] sm:$0xff]
    %v379 = vld [vmem:[#allocation2 + $0x600] sm:$0xff]
    %v380 = vld [vmem:[#allocation2 + $0x608] sm:$0xff]
    %v381 = vld [vmem:[#allocation2 + $0x610] sm:$0xff]
    %v382 = vld [vmem:[#allocation2 + $0x618] sm:$0xff]
    %v383 = vld [vmem:[#allocation2 + $0x620] sm:$0xff]
    %v384 = vld [vmem:[#allocation2 + $0x628] sm:$0xff]
    %v385 = vld [vmem:[#allocation2 + $0x630] sm:$0xff]
    %v386 = vld [vmem:[#allocation2 + $0x638] sm:$0xff]
    %v387 = vld [vmem:[#allocation2 + $0x640] sm:$0xff]
    %v388 = vld [vmem:[#allocation2 + $0x648] sm:$0xff]
    %v389 = vld [vmem:[#allocation2 + $0x650] sm:$0xff]
    %v390 = vld [vmem:[#allocation2 + $0x658] sm:$0xff]
    %v391 = vld [vmem:[#allocation2 + $0x660] sm:$0xff]
    %v392 = vld [vmem:[#allocation2 + $0x668] sm:$0xff]
    %v393 = vld [vmem:[#allocation2 + $0x670] sm:$0xff]
    %v394 = vld [vmem:[#allocation2 + $0x678] sm:$0xff]
    %v395 = vld [vmem:[#allocation2 + $0x680] sm:$0xff]
    %v396 = vld [vmem:[#allocation2 + $0x688] sm:$0xff]
    %v397 = vld [vmem:[#allocation2 + $0x690] sm:$0xff]
    %v398 = vld [vmem:[#allocation2 + $0x698] sm:$0xff]
    %v399 = vld [vmem:[#allocation2 + $0x6a0] sm:$0xff]
    %v400 = vld [vmem:[#allocation2 + $0x6a8] sm:$0xff]
    %v401 = vld [vmem:[#allocation2 + $0x6b0] sm:$0xff]
    %v402 = vld [vmem:[#allocation2 + $0x6b8] sm:$0xff]
    %v403 = vld [vmem:[#allocation2 + $0x6c0] sm:$0xff]
    %v404 = vld [vmem:[#allocation2 + $0x6c8] sm:$0xff]
    %v405 = vld [vmem:[#allocation2 + $0x6d0] sm:$0xff]
    %v406 = vld [vmem:[#allocation2 + $0x6d8] sm:$0xff]
    %v407 = vld [vmem:[#allocation2 + $0x6e0] sm:$0xff]
    %v408 = vld [vmem:[#allocation2 + $0x6e8] sm:$0xff]
    %v409 = vld [vmem:[#allocation2 + $0x6f0] sm:$0xff]
    %v410 = vld [vmem:[#allocation2 + $0x6f8] sm:$0xff]
    %v411 = vld [vmem:[#allocation2 + $0x700] sm:$0xff]
    %v412 = vld [vmem:[#allocation2 + $0x708] sm:$0xff]
    %v413 = vld [vmem:[#allocation2 + $0x710] sm:$0xff]
    %v414 = vld [vmem:[#allocation2 + $0x718] sm:$0xff]
    %v415 = vld [vmem:[#allocation2 + $0x720] sm:$0xff]
    %v416 = vld [vmem:[#allocation2 + $0x728] sm:$0xff]
    %v417 = vld [vmem:[#allocation2 + $0x730] sm:$0xff]
    %v418 = vld [vmem:[#allocation2 + $0x738] sm:$0xff]
    %v419 = vld [vmem:[#allocation2 + $0x740] sm:$0xff]
    %v420 = vld [vmem:[#allocation2 + $0x748] sm:$0xff]
    %v421 = vld [vmem:[#allocation2 + $0x750] sm:$0xff]
    %v422 = vld [vmem:[#allocation2 + $0x758] sm:$0xff]
    %v423 = vld [vmem:[#allocation2 + $0x760] sm:$0xff]
    %v424 = vld [vmem:[#allocation2 + $0x768] sm:$0xff]
    %v425 = vld [vmem:[#allocation2 + $0x770] sm:$0xff]
    %v426 = vld [vmem:[#allocation2 + $0x778] sm:$0xff]
    %v427 = vld [vmem:[#allocation2 + $0x780] sm:$0xff]
    %v428 = vld [vmem:[#allocation2 + $0x788] sm:$0xff]
    %v429 = vld [vmem:[#allocation2 + $0x790] sm:$0xff]
    %v430 = vld [vmem:[#allocation2 + $0x798] sm:$0xff]
    %v431 = vld [vmem:[#allocation2 + $0x7a0] sm:$0xff]
    %v432 = vld [vmem:[#allocation2 + $0x7a8] sm:$0xff]
    %v433 = vld [vmem:[#allocation2 + $0x7b0] sm:$0xff]
    %v434 = vld [vmem:[#allocation2 + $0x7b8] sm:$0xff]
    %v435 = vld [vmem:[#allocation2 + $0x7c0] sm:$0xff]
    %v436 = vld [vmem:[#allocation2 + $0x7c8] sm:$0xff]
    %v437 = vld [vmem:[#allocation2 + $0x7d0] sm:$0xff]
    %v438 = vld [vmem:[#allocation2 + $0x7d8] sm:$0xff]
    %v439 = vld [vmem:[#allocation2 + $0x7e0] sm:$0xff]
    %v440 = vld [vmem:[#allocation2 + $0x7e8] sm:$0xff]
    %v441 = vld [vmem:[#allocation2 + $0x7f0] sm:$0xff]
    %v442 = vld [vmem:[#allocation2 + $0x7f8] sm:$0xff]
    %v443 = vld [vmem:[#allocation2 + $0x800] sm:$0xff]
    %v444 = vld [vmem:[#allocation2 + $0x808] sm:$0xff]
    %v445 = vld [vmem:[#allocation2 + $0x810] sm:$0xff]
    %v446 = vld [vmem:[#allocation2 + $0x818] sm:$0xff]
    %v447 = vld [vmem:[#allocation2 + $0x820] sm:$0xff]
    %v448 = vld [vmem:[#allocation2 + $0x828] sm:$0xff]
    %v449 = vld [vmem:[#allocation2 + $0x830] sm:$0xff]
    %v450 = vld [vmem:[#allocation2 + $0x838] sm:$0xff]
    %v451 = vld [vmem:[#allocation2 + $0x840] sm:$0xff]
    %v452 = vld [vmem:[#allocation2 + $0x848] sm:$0xff]
    %v453 = vld [vmem:[#allocation2 + $0x850] sm:$0xff]
    %v454 = vld [vmem:[#allocation2 + $0x858] sm:$0xff]
    %v455 = vld [vmem:[#allocation2 + $0x860] sm:$0xff]
    %v456 = vld [vmem:[#allocation2 + $0x868] sm:$0xff]
    %v457 = vld [vmem:[#allocation2 + $0x870] sm:$0xff]
    %v458 = vld [vmem:[#allocation2 + $0x878] sm:$0xff]
    %v459 = vld [vmem:[#allocation2 + $0x880] sm:$0xff]
    %v460 = vld [vmem:[#allocation2 + $0x888] sm:$0xff]
    %v461 = vld [vmem:[#allocation2 + $0x890] sm:$0xff]
    %v462 = vld [vmem:[#allocation2 + $0x898] sm:$0xff]
    %v463 = vld [vmem:[#allocation2 + $0x8a0] sm:$0xff]
    %v464 = vld [vmem:[#allocation2 + $0x8a8] sm:$0xff]
    %v465 = vld [vmem:[#allocation2 + $0x8b0] sm:$0xff]
    %v466 = vld [vmem:[#allocation2 + $0x8b8] sm:$0xff]
    %v467 = vld [vmem:[#allocation2 + $0x8c0] sm:$0xff]
    %v468 = vld [vmem:[#allocation2 + $0x8c8] sm:$0xff]
    %v469 = vld [vmem:[#allocation2 + $0x8d0] sm:$0xff]
    %v470 = vld [vmem:[#allocation2 + $0x8d8] sm:$0xff]
    %v471 = vld [vmem:[#allocation2 + $0x8e0] sm:$0xff]
    %v472 = vld [vmem:[#allocation2 + $0x8e8] sm:$0xff]
    %v473 = vld [vmem:[#allocation2 + $0x8f0] sm:$0xff]
    %v474 = vld [vmem:[#allocation2 + $0x8f8] sm:$0xff]
    %v475 = vld [vmem:[#allocation2 + $0x900] sm:$0xff]
    %v476 = vld [vmem:[#allocation2 + $0x908] sm:$0xff]
    %v477 = vld [vmem:[#allocation2 + $0x910] sm:$0xff]
    %v478 = vld [vmem:[#allocation2 + $0x918] sm:$0xff]
    %v479 = vld [vmem:[#allocation2 + $0x920] sm:$0xff]
    %v480 = vld [vmem:[#allocation2 + $0x928] sm:$0xff]
    %v481 = vld [vmem:[#allocation2 + $0x930] sm:$0xff]
    %v482 = vld [vmem:[#allocation2 + $0x938] sm:$0xff]
    %v483 = vld [vmem:[#allocation2 + $0x940] sm:$0xff]
    %v484 = vld [vmem:[#allocation2 + $0x948] sm:$0xff]
    %v485 = vld [vmem:[#allocation2 + $0x950] sm:$0xff]
    %v486 = vld [vmem:[#allocation2 + $0x958] sm:$0xff]
    %v487 = vld [vmem:[#allocation2 + $0x960] sm:$0xff]
    %v488 = vld [vmem:[#allocation2 + $0x968] sm:$0xff]
    %v489 = vld [vmem:[#allocation2 + $0x970] sm:$0xff]
    %v490 = vld [vmem:[#allocation2 + $0x978] sm:$0xff]
    %v491 = vld [vmem:[#allocation2 + $0x980] sm:$0xff]
    %v492 = vld [vmem:[#allocation2 + $0x988] sm:$0xff]
    %v493 = vld [vmem:[#allocation2 + $0x990] sm:$0xff]
    %v494 = vld [vmem:[#allocation2 + $0x998] sm:$0xff]
    %v495 = vld [vmem:[#allocation2 + $0x9a0] sm:$0xff]
    %v496 = vld [vmem:[#allocation2 + $0x9a8] sm:$0xff]
    %v497 = vld [vmem:[#allocation2 + $0x9b0] sm:$0xff]
    %v498 = vld [vmem:[#allocation2 + $0x9b8] sm:$0xff]
    %v499 = vld [vmem:[#allocation2 + $0x9c0] sm:$0xff]
    %v500 = vld [vmem:[#allocation2 + $0x9c8] sm:$0xff]
    %v501 = vld [vmem:[#allocation2 + $0x9d0] sm:$0xff]
    %v502 = vld [vmem:[#allocation2 + $0x9d8] sm:$0xff]
    %v503 = vld [vmem:[#allocation2 + $0x9e0] sm:$0xff]
    %v504 = vld [vmem:[#allocation2 + $0x9e8] sm:$0xff]
    %v505 = vld [vmem:[#allocation2 + $0x9f0] sm:$0xff]
    %v506 = vld [vmem:[#allocation2 + $0x9f8] sm:$0xff]
    %v507 = vld [vmem:[#allocation2 + $0xa00] sm:$0xff]
    %v508 = vld [vmem:[#allocation2 + $0xa08] sm:$0xff]
    %v509 = vld [vmem:[#allocation2 + $0xa10] sm:$0xff]
    %v510 = vld [vmem:[#allocation2 + $0xa18] sm:$0xff]
    %v511 = vld [vmem:[#allocation2 + $0xa20] sm:$0xff]
    %v512 = vld [vmem:[#allocation2 + $0xa28] sm:$0xff]
    %v513 = vld [vmem:[#allocation2 + $0xa30] sm:$0xff]
    %v514 = vld [vmem:[#allocation2 + $0xa38] sm:$0xff]
    %v515 = vld [vmem:[#allocation2 + $0xa40] sm:$0xff]
    %v516 = vld [vmem:[#allocation2 + $0xa48] sm:$0xff]
    %v517 = vld [vmem:[#allocation2 + $0xa50] sm:$0xff]
    %v518 = vld [vmem:[#allocation2 + $0xa58] sm:$0xff]
    %v519 = vld [vmem:[#allocation2 + $0xa60] sm:$0xff]
    %v520 = vld [vmem:[#allocation2 + $0xa68] sm:$0xff]
    %v521 = vld [vmem:[#allocation2 + $0xa70] sm:$0xff]
    %v522 = vld [vmem:[#allocation2 + $0xa78] sm:$0xff]
    %v523 = vld [vmem:[#allocation2 + $0xa80] sm:$0xff]
    %v524 = vld [vmem:[#allocation2 + $0xa88] sm:$0xff]
    %v525 = vld [vmem:[#allocation2 + $0xa90] sm:$0xff]
    %v526 = vld [vmem:[#allocation2 + $0xa98] sm:$0xff]
    %v527 = vld [vmem:[#allocation2 + $0xaa0] sm:$0xff]
    %v528 = vld [vmem:[#allocation2 + $0xaa8] sm:$0xff]
    %v529 = vld [vmem:[#allocation2 + $0xab0] sm:$0xff]
    %v530 = vld [vmem:[#allocation2 + $0xab8] sm:$0xff]
    %v531 = vld [vmem:[#allocation2 + $0xac0] sm:$0xff]
    %v532 = vld [vmem:[#allocation2 + $0xac8] sm:$0xff]
    %v533 = vld [vmem:[#allocation2 + $0xad0] sm:$0xff]
    %v534 = vld [vmem:[#allocation2 + $0xad8] sm:$0xff]
    %v535 = vld [vmem:[#allocation2 + $0xae0] sm:$0xff]
    %v536 = vld [vmem:[#allocation2 + $0xae8] sm:$0xff]
    %v537 = vld [vmem:[#allocation2 + $0xaf0] sm:$0xff]
    %v538 = vld [vmem:[#allocation2 + $0xaf8] sm:$0xff]
    %v539 = vld [vmem:[#allocation2 + $0xb00] sm:$0xff]
    %v540 = vld [vmem:[#allocation2 + $0xb08] sm:$0xff]
    %v541 = vld [vmem:[#allocation2 + $0xb10] sm:$0xff]
    %v542 = vld [vmem:[#allocation2 + $0xb18] sm:$0xff]
    %v543 = vld [vmem:[#allocation2 + $0xb20] sm:$0xff]
    %v544 = vld [vmem:[#allocation2 + $0xb28] sm:$0xff]
    %v545 = vld [vmem:[#allocation2 + $0xb30] sm:$0xff]
    %v546 = vld [vmem:[#allocation2 + $0xb38] sm:$0xff]
    %v547 = vld [vmem:[#allocation2 + $0xb40] sm:$0xff]
    %v548 = vld [vmem:[#allocation2 + $0xb48] sm:$0xff]
    %v549 = vld [vmem:[#allocation2 + $0xb50] sm:$0xff]
    %v550 = vld [vmem:[#allocation2 + $0xb58] sm:$0xff]
    %v551 = vld [vmem:[#allocation2 + $0xb60] sm:$0xff]
    %v552 = vld [vmem:[#allocation2 + $0xb68] sm:$0xff]
    %v553 = vld [vmem:[#allocation2 + $0xb70] sm:$0xff]
    %v554 = vld [vmem:[#allocation2 + $0xb78] sm:$0xff]
    %v555 = vld [vmem:[#allocation2 + $0xb80] sm:$0xff]
    %v556 = vld [vmem:[#allocation2 + $0xb88] sm:$0xff]
    %v557 = vld [vmem:[#allocation2 + $0xb90] sm:$0xff]
    %v558 = vld [vmem:[#allocation2 + $0xb98] sm:$0xff]
    %v559 = vld [vmem:[#allocation2 + $0xba0] sm:$0xff]
    %v560 = vld [vmem:[#allocation2 + $0xba8] sm:$0xff]
    %v561 = vld [vmem:[#allocation2 + $0xbb0] sm:$0xff]
    %v562 = vld [vmem:[#allocation2 + $0xbb8] sm:$0xff]
    %v563 = vld [vmem:[#allocation2 + $0xbc0] sm:$0xff]
    %v564 = vld [vmem:[#allocation2 + $0xbc8] sm:$0xff]
    %v565 = vld [vmem:[#allocation2 + $0xbd0] sm:$0xff]
    %v566 = vld [vmem:[#allocation2 + $0xbd8] sm:$0xff]
    %v567 = vld [vmem:[#allocation2 + $0xbe0] sm:$0xff]
    %v568 = vld [vmem:[#allocation2 + $0xbe8] sm:$0xff]
    %v569 = vld [vmem:[#allocation2 + $0xbf0] sm:$0xff]
    %v570 = vld [vmem:[#allocation2 + $0xbf8] sm:$0xff]
    %v571 = vld [vmem:[#allocation2 + $0xc00] sm:$0xff]
    %v572 = vld [vmem:[#allocation2 + $0xc08] sm:$0xff]
    %v573 = vld [vmem:[#allocation2 + $0xc10] sm:$0xff]
    %v574 = vld [vmem:[#allocation2 + $0xc18] sm:$0xff]
    %v575 = vld [vmem:[#allocation2 + $0xc20] sm:$0xff]
    %v576 = vld [vmem:[#allocation2 + $0xc28] sm:$0xff]
    %v577 = vld [vmem:[#allocation2 + $0xc30] sm:$0xff]
    %v578 = vld [vmem:[#allocation2 + $0xc38] sm:$0xff]
    %v579 = vld [vmem:[#allocation2 + $0xc40] sm:$0xff]
    %v580 = vld [vmem:[#allocation2 + $0xc48] sm:$0xff]
    %v581 = vld [vmem:[#allocation2 + $0xc50] sm:$0xff]
    %v582 = vld [vmem:[#allocation2 + $0xc58] sm:$0xff]
    %v583 = vld [vmem:[#allocation2 + $0xc60] sm:$0xff]
    %v584 = vld [vmem:[#allocation2 + $0xc68] sm:$0xff]
    %v585 = vld [vmem:[#allocation2 + $0xc70] sm:$0xff]
    %v586 = vld [vmem:[#allocation2 + $0xc78] sm:$0xff]
    %v587 = vld [vmem:[#allocation2 + $0xc80] sm:$0xff]
    %v588 = vld [vmem:[#allocation2 + $0xc88] sm:$0xff]
    %v589 = vld [vmem:[#allocation2 + $0xc90] sm:$0xff]
    %v590 = vld [vmem:[#allocation2 + $0xc98] sm:$0xff]
    %v591 = vld [vmem:[#allocation2 + $0xca0] sm:$0xff]
    %v592 = vld [vmem:[#allocation2 + $0xca8] sm:$0xff]
    %v593 = vld [vmem:[#allocation2 + $0xcb0] sm:$0xff]
    %v594 = vld [vmem:[#allocation2 + $0xcb8] sm:$0xff]
    %v595 = vld [vmem:[#allocation2 + $0xcc0] sm:$0xff]
    %v596 = vld [vmem:[#allocation2 + $0xcc8] sm:$0xff]
    %v597 = vld [vmem:[#allocation2 + $0xcd0] sm:$0xff]
    %v598 = vld [vmem:[#allocation2 + $0xcd8] sm:$0xff]
    %v599 = vld [vmem:[#allocation2 + $0xce0] sm:$0xff]
    %v600 = vld [vmem:[#allocation2 + $0xce8] sm:$0xff]
    %v601 = vld [vmem:[#allocation2 + $0xcf0] sm:$0xff]
    %v602 = vld [vmem:[#allocation2 + $0xcf8] sm:$0xff]
    %v603 = vld [vmem:[#allocation2 + $0xd00] sm:$0xff]
    %v604 = vld [vmem:[#allocation2 + $0xd08] sm:$0xff]
    %v605 = vld [vmem:[#allocation2 + $0xd10] sm:$0xff]
    %v606 = vld [vmem:[#allocation2 + $0xd18] sm:$0xff]
    %v607 = vld [vmem:[#allocation2 + $0xd20] sm:$0xff]
    %v608 = vld [vmem:[#allocation2 + $0xd28] sm:$0xff]
    %v609 = vld [vmem:[#allocation2 + $0xd30] sm:$0xff]
    %v610 = vld [vmem:[#allocation2 + $0xd38] sm:$0xff]
    %v611 = vld [vmem:[#allocation2 + $0xd40] sm:$0xff]
    %v612 = vld [vmem:[#allocation2 + $0xd48] sm:$0xff]
    %v613 = vld [vmem:[#allocation2 + $0xd50] sm:$0xff]
    %v614 = vld [vmem:[#allocation2 + $0xd58] sm:$0xff]
    %v615 = vld [vmem:[#allocation2 + $0xd60] sm:$0xff]
    %v616 = vld [vmem:[#allocation2 + $0xd68] sm:$0xff]
    %v617 = vld [vmem:[#allocation2 + $0xd70] sm:$0xff]
    %v618 = vld [vmem:[#allocation2 + $0xd78] sm:$0xff]
    %v619 = vld [vmem:[#allocation2 + $0xd80] sm:$0xff]
    %v620 = vld [vmem:[#allocation2 + $0xd88] sm:$0xff]
    %v621 = vld [vmem:[#allocation2 + $0xd90] sm:$0xff]
    %v622 = vld [vmem:[#allocation2 + $0xd98] sm:$0xff]
    %v623 = vld [vmem:[#allocation2 + $0xda0] sm:$0xff]
    %v624 = vld [vmem:[#allocation2 + $0xda8] sm:$0xff]
    %v625 = vld [vmem:[#allocation2 + $0xdb0] sm:$0xff]
    %v626 = vld [vmem:[#allocation2 + $0xdb8] sm:$0xff]
    %v627 = vld [vmem:[#allocation2 + $0xdc0] sm:$0xff]
    %v628 = vld [vmem:[#allocation2 + $0xdc8] sm:$0xff]
    %v629 = vld [vmem:[#allocation2 + $0xdd0] sm:$0xff]
    %v630 = vld [vmem:[#allocation2 + $0xdd8] sm:$0xff]
    %v631 = vld [vmem:[#allocation2 + $0xde0] sm:$0xff]
    %v632 = vld [vmem:[#allocation2 + $0xde8] sm:$0xff]
    %v633 = vld [vmem:[#allocation2 + $0xdf0] sm:$0xff]
    %v634 = vld [vmem:[#allocation2 + $0xdf8] sm:$0xff]
    %v635 = vld [vmem:[#allocation2 + $0xe00] sm:$0xff]
    %v636 = vld [vmem:[#allocation2 + $0xe08] sm:$0xff]
    %v637 = vld [vmem:[#allocation2 + $0xe10] sm:$0xff]
    %v638 = vld [vmem:[#allocation2 + $0xe18] sm:$0xff]
    %v639 = vld [vmem:[#allocation2 + $0xe20] sm:$0xff]
    %v640 = vld [vmem:[#allocation2 + $0xe28] sm:$0xff]
    %v641 = vld [vmem:[#allocation2 + $0xe30] sm:$0xff]
    %v642 = vld [vmem:[#allocation2 + $0xe38] sm:$0xff]
    %v643 = vld [vmem:[#allocation2 + $0xe40] sm:$0xff]
    %v644 = vld [vmem:[#allocation2 + $0xe48] sm:$0xff]
    %v645 = vld [vmem:[#allocation2 + $0xe50] sm:$0xff]
    %v646 = vld [vmem:[#allocation2 + $0xe58] sm:$0xff]
    %v647 = vld [vmem:[#allocation2 + $0xe60] sm:$0xff]
    %v648 = vld [vmem:[#allocation2 + $0xe68] sm:$0xff]
    %v649 = vld [vmem:[#allocation2 + $0xe70] sm:$0xff]
    %v650 = vld [vmem:[#allocation2 + $0xe78] sm:$0xff]
    %v651 = vld [vmem:[#allocation2 + $0xe80] sm:$0xff]
    %v652 = vld [vmem:[#allocation2 + $0xe88] sm:$0xff]
    %v653 = vld [vmem:[#allocation2 + $0xe90] sm:$0xff]
    %v654 = vld [vmem:[#allocation2 + $0xe98] sm:$0xff]
    %v655 = vld [vmem:[#allocation2 + $0xea0] sm:$0xff]
    %v656 = vld [vmem:[#allocation2 + $0xea8] sm:$0xff]
    %v657 = vld [vmem:[#allocation2 + $0xeb0] sm:$0xff]
    %v658 = vld [vmem:[#allocation2 + $0xeb8] sm:$0xff]
    %v659 = vld [vmem:[#allocation2 + $0xec0] sm:$0xff]
    %v660 = vld [vmem:[#allocation2 + $0xec8] sm:$0xff]
    %v661 = vld [vmem:[#allocation2 + $0xed0] sm:$0xff]
    %v662 = vld [vmem:[#allocation2 + $0xed8] sm:$0xff]
    %v663 = vld [vmem:[#allocation2 + $0xee0] sm:$0xff]
    %v664 = vld [vmem:[#allocation2 + $0xee8] sm:$0xff]
    %v665 = vld [vmem:[#allocation2 + $0xef0] sm:$0xff]
    %v666 = vld [vmem:[#allocation2 + $0xef8] sm:$0xff]
    %v667 = vld [vmem:[#allocation2 + $0xf00] sm:$0xff]
    %v668 = vld [vmem:[#allocation2 + $0xf08] sm:$0xff]
    %v669 = vld [vmem:[#allocation2 + $0xf10] sm:$0xff]
    %v670 = vld [vmem:[#allocation2 + $0xf18] sm:$0xff]
    %v671 = vld [vmem:[#allocation2 + $0xf20] sm:$0xff]
    %v672 = vld [vmem:[#allocation2 + $0xf28] sm:$0xff]
    %v673 = vld [vmem:[#allocation2 + $0xf30] sm:$0xff]
    %v674 = vld [vmem:[#allocation2 + $0xf38] sm:$0xff]
    %v675 = vld [vmem:[#allocation2 + $0xf40] sm:$0xff]
    %v676 = vld [vmem:[#allocation2 + $0xf48] sm:$0xff]
    %v677 = vld [vmem:[#allocation2 + $0xf50] sm:$0xff]
    %v678 = vld [vmem:[#allocation2 + $0xf58] sm:$0xff]
    %v679 = vld [vmem:[#allocation2 + $0xf60] sm:$0xff]
    %v680 = vld [vmem:[#allocation2 + $0xf68] sm:$0xff]
    %v681 = vld [vmem:[#allocation2 + $0xf70] sm:$0xff]
    %v682 = vld [vmem:[#allocation2 + $0xf78] sm:$0xff]
    %v683 = vld [vmem:[#allocation2 + $0xf80] sm:$0xff]
    %v684 = vld [vmem:[#allocation2 + $0xf88] sm:$0xff]
    %v685 = vld [vmem:[#allocation2 + $0xf90] sm:$0xff]
    %v686 = vld [vmem:[#allocation2 + $0xf98] sm:$0xff]
    %v687 = vld [vmem:[#allocation2 + $0xfa0] sm:$0xff]
    %v688 = vld [vmem:[#allocation2 + $0xfa8] sm:$0xff]
    %v689 = vld [vmem:[#allocation2 + $0xfb0] sm:$0xff]
    %v690 = vld [vmem:[#allocation2 + $0xfb8] sm:$0xff]
    %v691 = vld [vmem:[#allocation2 + $0xfc0] sm:$0xff]
    %v692 = vld [vmem:[#allocation2 + $0xfc8] sm:$0xff]
    %v693 = vld [vmem:[#allocation2 + $0xfd0] sm:$0xff]
    %v694 = vld [vmem:[#allocation2 + $0xfd8] sm:$0xff]
    %v695 = vld [vmem:[#allocation2 + $0xfe0] sm:$0xff]
    %v696 = vld [vmem:[#allocation2 + $0xfe8] sm:$0xff]
    %v697 = vld [vmem:[#allocation2 + $0xff0] sm:$0xff]
    %v698 = vld [vmem:[#allocation2 + $0xff8] sm:$0xff]
    %v699 = vld [vmem:[#allocation2 + $0x1000] sm:$0xff]
    %v700 = vld [vmem:[#allocation2 + $0x1008] sm:$0xff]
    %v701 = vld [vmem:[#allocation2 + $0x1010] sm:$0xff]
    %v702 = vld [vmem:[#allocation2 + $0x1018] sm:$0xff]
    %v703 = vld [vmem:[#allocation2 + $0x1020] sm:$0xff]
    %v704 = vld [vmem:[#allocation2 + $0x1028] sm:$0xff]
    %v705 = vld [vmem:[#allocation2 + $0x1030] sm:$0xff]
    %v706 = vld [vmem:[#allocation2 + $0x1038] sm:$0xff]
    %v707 = vld [vmem:[#allocation2 + $0x1040] sm:$0xff]
    %v708 = vld [vmem:[#allocation2 + $0x1048] sm:$0xff]
    %v709 = vld [vmem:[#allocation2 + $0x1050] sm:$0xff]
    %v710 = vld [vmem:[#allocation2 + $0x1058] sm:$0xff]
    %v711 = vld [vmem:[#allocation2 + $0x1060] sm:$0xff]
    %v712 = vld [vmem:[#allocation2 + $0x1068] sm:$0xff]
    %v713 = vld [vmem:[#allocation2 + $0x1070] sm:$0xff]
    %v714 = vld [vmem:[#allocation2 + $0x1078] sm:$0xff]
    %v715 = vld [vmem:[#allocation2 + $0x1080] sm:$0xff]
    %v716 = vld [vmem:[#allocation2 + $0x1088] sm:$0xff]
    %v717 = vld [vmem:[#allocation2 + $0x1090] sm:$0xff]
    %v718 = vld [vmem:[#allocation2 + $0x1098] sm:$0xff]
    %v719 = vld [vmem:[#allocation2 + $0x10a0] sm:$0xff]
    %v720 = vld [vmem:[#allocation2 + $0x10a8] sm:$0xff]
    %v721 = vld [vmem:[#allocation2 + $0x10b0] sm:$0xff]
    %v722 = vld [vmem:[#allocation2 + $0x10b8] sm:$0xff]
    %v723 = vld [vmem:[#allocation2 + $0x10c0] sm:$0xff]
    %v724 = vld [vmem:[#allocation2 + $0x10c8] sm:$0xff]
    %v725 = vld [vmem:[#allocation2 + $0x10d0] sm:$0xff]
    %v726 = vld [vmem:[#allocation2 + $0x10d8] sm:$0xff]
    %v727 = vld [vmem:[#allocation2 + $0x10e0] sm:$0xff]
    %v728 = vld [vmem:[#allocation2 + $0x10e8] sm:$0xff]
    %v729 = vld [vmem:[#allocation2 + $0x10f0] sm:$0xff]
    %v730 = vld [vmem:[#allocation2 + $0x10f8] sm:$0xff]
    %v731 = vld [vmem:[#allocation2 + $0x1100] sm:$0xff]
    %v732 = vld [vmem:[#allocation2 + $0x1108] sm:$0xff]
    %v733 = vld [vmem:[#allocation2 + $0x1110] sm:$0xff]
    %v734 = vld [vmem:[#allocation2 + $0x1118] sm:$0xff]
    %v735 = vld [vmem:[#allocation2 + $0x1120] sm:$0xff]
    %v736 = vld [vmem:[#allocation2 + $0x1128] sm:$0xff]
    %v737 = vld [vmem:[#allocation2 + $0x1130] sm:$0xff]
    %v738 = vld [vmem:[#allocation2 + $0x1138] sm:$0xff]
    %v739 = vld [vmem:[#allocation2 + $0x1140] sm:$0xff]
    %v740 = vld [vmem:[#allocation2 + $0x1148] sm:$0xff]
    %v741 = vld [vmem:[#allocation2 + $0x1150] sm:$0xff]
    %v742 = vld [vmem:[#allocation2 + $0x1158] sm:$0xff]
    %v743 = vld [vmem:[#allocation2 + $0x1160] sm:$0xff]
    %v744 = vld [vmem:[#allocation2 + $0x1168] sm:$0xff]
    %v745 = vld [vmem:[#allocation2 + $0x1170] sm:$0xff]
    %v746 = vld [vmem:[#allocation2 + $0x1178] sm:$0xff]
    %v747 = vld [vmem:[#allocation2 + $0x1180] sm:$0xff]
    %v748 = vld [vmem:[#allocation2 + $0x1188] sm:$0xff]
    %v749 = vld [vmem:[#allocation2 + $0x1190] sm:$0xff]
    %v750 = vld [vmem:[#allocation2 + $0x1198] sm:$0xff]
    %v751 = vld [vmem:[#allocation2 + $0x11a0] sm:$0xff]
    %v752 = vld [vmem:[#allocation2 + $0x11a8] sm:$0xff]
    %v753 = vld [vmem:[#allocation2 + $0x11b0] sm:$0xff]
    %v754 = vld [vmem:[#allocation2 + $0x11b8] sm:$0xff]
    %v755 = vld [vmem:[#allocation2 + $0x11c0] sm:$0xff]
    %v756 = vld [vmem:[#allocation2 + $0x11c8] sm:$0xff]
    %v757 = vld [vmem:[#allocation2 + $0x11d0] sm:$0xff]
    %v758 = vld [vmem:[#allocation2 + $0x11d8] sm:$0xff]
    %v759 = vld [vmem:[#allocation2 + $0x11e0] sm:$0xff]
    %v760 = vld [vmem:[#allocation2 + $0x11e8] sm:$0xff]
    %v761 = vld [vmem:[#allocation2 + $0x11f0] sm:$0xff]
    %v762 = vld [vmem:[#allocation2 + $0x11f8] sm:$0xff]
    %v763 = vld [vmem:[#allocation2 + $0x1200] sm:$0xff]
    %v764 = vld [vmem:[#allocation2 + $0x1208] sm:$0xff]
    %v765 = vld [vmem:[#allocation2 + $0x1210] sm:$0xff]
    %v766 = vld [vmem:[#allocation2 + $0x1218] sm:$0xff]
    %v767 = vld [vmem:[#allocation2 + $0x1220] sm:$0xff]
    %v768 = vld [vmem:[#allocation2 + $0x1228] sm:$0xff]
    %v769 = vld [vmem:[#allocation2 + $0x1230] sm:$0xff]
    %v770 = vld [vmem:[#allocation2 + $0x1238] sm:$0xff]
    %v771 = vld [vmem:[#allocation2 + $0x1240] sm:$0xff]
    %v772 = vld [vmem:[#allocation2 + $0x1248] sm:$0xff]
    %v773 = vld [vmem:[#allocation2 + $0x1250] sm:$0xff]
    %v774 = vld [vmem:[#allocation2 + $0x1258] sm:$0xff]
    %v775 = vld [vmem:[#allocation2 + $0x1260] sm:$0xff]
    %v776 = vld [vmem:[#allocation2 + $0x1268] sm:$0xff]
    %v777 = vld [vmem:[#allocation2 + $0x1270] sm:$0xff]
    %v778 = vld [vmem:[#allocation2 + $0x1278] sm:$0xff]
    %v779 = vld [vmem:[#allocation2 + $0x1280] sm:$0xff]
    %v780 = vld [vmem:[#allocation2 + $0x1288] sm:$0xff]
    %v781 = vld [vmem:[#allocation2 + $0x1290] sm:$0xff]
    %v782 = vld [vmem:[#allocation2 + $0x1298] sm:$0xff]
    %v783 = vld [vmem:[#allocation2 + $0x12a0] sm:$0xff]
    %v784 = vld [vmem:[#allocation2 + $0x12a8] sm:$0xff]
    %v785 = vld [vmem:[#allocation2 + $0x12b0] sm:$0xff]
    %v786 = vld [vmem:[#allocation2 + $0x12b8] sm:$0xff]
    %v787 = vld [vmem:[#allocation2 + $0x12c0] sm:$0xff]
    %v788 = vld [vmem:[#allocation2 + $0x12c8] sm:$0xff]
    %v789 = vld [vmem:[#allocation2 + $0x12d0] sm:$0xff]
    %v790 = vld [vmem:[#allocation2 + $0x12d8] sm:$0xff]
    %v791 = vld [vmem:[#allocation2 + $0x12e0] sm:$0xff]
    %v792 = vld [vmem:[#allocation2 + $0x12e8] sm:$0xff]
    %v793 = vld [vmem:[#allocation2 + $0x12f0] sm:$0xff]
    %v794 = vld [vmem:[#allocation2 + $0x12f8] sm:$0xff]
    %v795 = vld [vmem:[#allocation2 + $0x1300] sm:$0xff]
    %v796 = vld [vmem:[#allocation2 + $0x1308] sm:$0xff]
    %v797 = vld [vmem:[#allocation2 + $0x1310] sm:$0xff]
    %v798 = vld [vmem:[#allocation2 + $0x1318] sm:$0xff]
    %v799 = vld [vmem:[#allocation2 + $0x1320] sm:$0xff]
    %v800 = vld [vmem:[#allocation2 + $0x1328] sm:$0xff]
    %v801 = vld [vmem:[#allocation2 + $0x1330] sm:$0xff]
    %v802 = vld [vmem:[#allocation2 + $0x1338] sm:$0xff]
    %v803 = vld [vmem:[#allocation2 + $0x1340] sm:$0xff]
    %v804 = vld [vmem:[#allocation2 + $0x1348] sm:$0xff]
    %v805 = vld [vmem:[#allocation2 + $0x1350] sm:$0xff]
    %v806 = vld [vmem:[#allocation2 + $0x1358] sm:$0xff]
    %v807 = vld [vmem:[#allocation2 + $0x1360] sm:$0xff]
    %v808 = vld [vmem:[#allocation2 + $0x1368] sm:$0xff]
    %v809 = vld [vmem:[#allocation2 + $0x1370] sm:$0xff]
    %v810 = vld [vmem:[#allocation2 + $0x1378] sm:$0xff]
    %v811 = vld [vmem:[#allocation2 + $0x1380] sm:$0xff]
    %v812 = vld [vmem:[#allocation2 + $0x1388] sm:$0xff]
    %v813 = vld [vmem:[#allocation2 + $0x1390] sm:$0xff]
    %v814 = vld [vmem:[#allocation2 + $0x1398] sm:$0xff]
    %v815 = vld [vmem:[#allocation2 + $0x13a0] sm:$0xff]
    %v816 = vld [vmem:[#allocation2 + $0x13a8] sm:$0xff]
    %v817 = vld [vmem:[#allocation2 + $0x13b0] sm:$0xff]
    %v818 = vld [vmem:[#allocation2 + $0x13b8] sm:$0xff]
    %v819 = vld [vmem:[#allocation2 + $0x13c0] sm:$0xff]
    %v820 = vld [vmem:[#allocation2 + $0x13c8] sm:$0xff]
    %v821 = vld [vmem:[#allocation2 + $0x13d0] sm:$0xff]
    %v822 = vld [vmem:[#allocation2 + $0x13d8] sm:$0xff]
    %v823 = vld [vmem:[#allocation2 + $0x13e0] sm:$0xff]
    %v824 = vld [vmem:[#allocation2 + $0x13e8] sm:$0xff]
    %v825 = vld [vmem:[#allocation2 + $0x13f0] sm:$0xff]
    %v826 = vld [vmem:[#allocation2 + $0x13f8] sm:$0xff]
    %v827 = vld [vmem:[#allocation2 + $0x1400] sm:$0xff]
    %v828 = vld [vmem:[#allocation2 + $0x1408] sm:$0xff]
    %v829 = vld [vmem:[#allocation2 + $0x1410] sm:$0xff]
    %v830 = vld [vmem:[#allocation2 + $0x1418] sm:$0xff]
    %v831 = vld [vmem:[#allocation2 + $0x1420] sm:$0xff]
    %v832 = vld [vmem:[#allocation2 + $0x1428] sm:$0xff]
    %v833 = vld [vmem:[#allocation2 + $0x1430] sm:$0xff]
    %v834 = vld [vmem:[#allocation2 + $0x1438] sm:$0xff]
    %v835 = vld [vmem:[#allocation2 + $0x1440] sm:$0xff]
    %v836 = vld [vmem:[#allocation2 + $0x1448] sm:$0xff]
    %v837 = vld [vmem:[#allocation2 + $0x1450] sm:$0xff]
    %v838 = vld [vmem:[#allocation2 + $0x1458] sm:$0xff]
    %v839 = vld [vmem:[#allocation2 + $0x1460] sm:$0xff]
    %v840 = vld [vmem:[#allocation2 + $0x1468] sm:$0xff]
    %v841 = vld [vmem:[#allocation2 + $0x1470] sm:$0xff]
    %v842 = vld [vmem:[#allocation2 + $0x1478] sm:$0xff]
    %v843 = vld [vmem:[#allocation2 + $0x1480] sm:$0xff]
    %v844 = vld [vmem:[#allocation2 + $0x1488] sm:$0xff]
    %v845 = vld [vmem:[#allocation2 + $0x1490] sm:$0xff]
    %v846 = vld [vmem:[#allocation2 + $0x1498] sm:$0xff]
    %v847 = vld [vmem:[#allocation2 + $0x14a0] sm:$0xff]
    %v848 = vld [vmem:[#allocation2 + $0x14a8] sm:$0xff]
    %v849 = vld [vmem:[#allocation2 + $0x14b0] sm:$0xff]
    %v850 = vld [vmem:[#allocation2 + $0x14b8] sm:$0xff]
    %v851 = vld [vmem:[#allocation2 + $0x14c0] sm:$0xff]
    %v852 = vld [vmem:[#allocation2 + $0x14c8] sm:$0xff]
    %v853 = vld [vmem:[#allocation2 + $0x14d0] sm:$0xff]
    %v854 = vld [vmem:[#allocation2 + $0x14d8] sm:$0xff]
    %v855 = vld [vmem:[#allocation2 + $0x14e0] sm:$0xff]
    %v856 = vld [vmem:[#allocation2 + $0x14e8] sm:$0xff]
    %v857 = vld [vmem:[#allocation2 + $0x14f0] sm:$0xff]
    %v858 = vld [vmem:[#allocation2 + $0x14f8] sm:$0xff]
    %v859 = vld [vmem:[#allocation2 + $0x1500] sm:$0xff]
    %v860 = vld [vmem:[#allocation2 + $0x1508] sm:$0xff]
    %v861 = vld [vmem:[#allocation2 + $0x1510] sm:$0xff]
    %v862 = vld [vmem:[#allocation2 + $0x1518] sm:$0xff]
    %v863 = vld [vmem:[#allocation2 + $0x1520] sm:$0xff]
    %v864 = vld [vmem:[#allocation2 + $0x1528] sm:$0xff]
    %v865 = vld [vmem:[#allocation2 + $0x1530] sm:$0xff]
    %v866 = vld [vmem:[#allocation2 + $0x1538] sm:$0xff]
    %v867 = vld [vmem:[#allocation2 + $0x1540] sm:$0xff]
    %v868 = vld [vmem:[#allocation2 + $0x1548] sm:$0xff]
    %v869 = vld [vmem:[#allocation2 + $0x1550] sm:$0xff]
    %v870 = vld [vmem:[#allocation2 + $0x1558] sm:$0xff]
    %v871 = vld [vmem:[#allocation2 + $0x1560] sm:$0xff]
    %v872 = vld [vmem:[#allocation2 + $0x1568] sm:$0xff]
    %v873 = vld [vmem:[#allocation2 + $0x1570] sm:$0xff]
    %v874 = vld [vmem:[#allocation2 + $0x1578] sm:$0xff]
    %v875 = vld [vmem:[#allocation2 + $0x1580] sm:$0xff]
    %v876 = vld [vmem:[#allocation2 + $0x1588] sm:$0xff]
    %v877 = vld [vmem:[#allocation2 + $0x1590] sm:$0xff]
    %v878 = vld [vmem:[#allocation2 + $0x1598] sm:$0xff]
    %v879 = vld [vmem:[#allocation2 + $0x15a0] sm:$0xff]
    %v880 = vld [vmem:[#allocation2 + $0x15a8] sm:$0xff]
    %v881 = vld [vmem:[#allocation2 + $0x15b0] sm:$0xff]
    %v882 = vld [vmem:[#allocation2 + $0x15b8] sm:$0xff]
    %v883 = vld [vmem:[#allocation2 + $0x15c0] sm:$0xff]
    %v884 = vld [vmem:[#allocation2 + $0x15c8] sm:$0xff]
    %v885 = vld [vmem:[#allocation2 + $0x15d0] sm:$0xff]
    %v886 = vld [vmem:[#allocation2 + $0x15d8] sm:$0xff]
    %v887 = vld [vmem:[#allocation2 + $0x15e0] sm:$0xff]
    %v888 = vld [vmem:[#allocation2 + $0x15e8] sm:$0xff]
    %v889 = vld [vmem:[#allocation2 + $0x15f0] sm:$0xff]
    %v890 = vld [vmem:[#allocation2 + $0x15f8] sm:$0xff]
    %v891 = vld [vmem:[#allocation2 + $0x1600] sm:$0xff]
    %v892 = vld [vmem:[#allocation2 + $0x1608] sm:$0xff]
    %v893 = vld [vmem:[#allocation2 + $0x1610] sm:$0xff]
    %v894 = vld [vmem:[#allocation2 + $0x1618] sm:$0xff]
    %v895 = vld [vmem:[#allocation2 + $0x1620] sm:$0xff]
    %v896 = vld [vmem:[#allocation2 + $0x1628] sm:$0xff]
    %v897 = vld [vmem:[#allocation2 + $0x1630] sm:$0xff]
    %v898 = vld [vmem:[#allocation2 + $0x1638] sm:$0xff]
    %v899 = vld [vmem:[#allocation2 + $0x1640] sm:$0xff]
    %v900 = vld [vmem:[#allocation2 + $0x1648] sm:$0xff]
    %v901 = vld [vmem:[#allocation2 + $0x1650] sm:$0xff]
    %v902 = vld [vmem:[#allocation2 + $0x1658] sm:$0xff]
    %v903 = vld [vmem:[#allocation2 + $0x1660] sm:$0xff]
    %v904 = vld [vmem:[#allocation2 + $0x1668] sm:$0xff]
    %v905 = vld [vmem:[#allocation2 + $0x1670] sm:$0xff]
    %v906 = vld [vmem:[#allocation2 + $0x1678] sm:$0xff]
    %v907 = vld [vmem:[#allocation2 + $0x1680] sm:$0xff]
    %v908 = vld [vmem:[#allocation2 + $0x1688] sm:$0xff]
    %v909 = vld [vmem:[#allocation2 + $0x1690] sm:$0xff]
    %v910 = vld [vmem:[#allocation2 + $0x1698] sm:$0xff]
    %v911 = vld [vmem:[#allocation2 + $0x16a0] sm:$0xff]
    %v912 = vld [vmem:[#allocation2 + $0x16a8] sm:$0xff]
    %v913 = vld [vmem:[#allocation2 + $0x16b0] sm:$0xff]
    %v914 = vld [vmem:[#allocation2 + $0x16b8] sm:$0xff]
    %v915 = vld [vmem:[#allocation2 + $0x16c0] sm:$0xff]
    %v916 = vld [vmem:[#allocation2 + $0x16c8] sm:$0xff]
    %v917 = vld [vmem:[#allocation2 + $0x16d0] sm:$0xff]
    %v918 = vld [vmem:[#allocation2 + $0x16d8] sm:$0xff]
    %v919 = vld [vmem:[#allocation2 + $0x16e0] sm:$0xff]
    %v920 = vld [vmem:[#allocation2 + $0x16e8] sm:$0xff]
    %v921 = vld [vmem:[#allocation2 + $0x16f0] sm:$0xff]
    %v922 = vld [vmem:[#allocation2 + $0x16f8] sm:$0xff]
    %v923 = vld [vmem:[#allocation2 + $0x1700] sm:$0xff]
    %v924 = vld [vmem:[#allocation2 + $0x1708] sm:$0xff]
    %v925 = vld [vmem:[#allocation2 + $0x1710] sm:$0xff]
    %v926 = vld [vmem:[#allocation2 + $0x1718] sm:$0xff]
    %v927 = vld [vmem:[#allocation2 + $0x1720] sm:$0xff]
    %v928 = vld [vmem:[#allocation2 + $0x1728] sm:$0xff]
    %v929 = vld [vmem:[#allocation2 + $0x1730] sm:$0xff]
    %v930 = vld [vmem:[#allocation2 + $0x1738] sm:$0xff]
    %v931 = vld [vmem:[#allocation2 + $0x1740] sm:$0xff]
    %v932 = vld [vmem:[#allocation2 + $0x1748] sm:$0xff]
    %v933 = vld [vmem:[#allocation2 + $0x1750] sm:$0xff]
    %v934 = vld [vmem:[#allocation2 + $0x1758] sm:$0xff]
    %v935 = vld [vmem:[#allocation2 + $0x1760] sm:$0xff]
    %v936 = vld [vmem:[#allocation2 + $0x1768] sm:$0xff]
    %v937 = vld [vmem:[#allocation2 + $0x1770] sm:$0xff]
    %v938 = vld [vmem:[#allocation2 + $0x1778] sm:$0xff]
    %v939 = vld [vmem:[#allocation2 + $0x1780] sm:$0xff]
    %v940 = vld [vmem:[#allocation2 + $0x1788] sm:$0xff]
    %v941 = vld [vmem:[#allocation2 + $0x1790] sm:$0xff]
    %v942 = vld [vmem:[#allocation2 + $0x1798] sm:$0xff]
    %v943 = vld [vmem:[#allocation2 + $0x17a0] sm:$0xff]
    %v944 = vld [vmem:[#allocation2 + $0x17a8] sm:$0xff]
    %v945 = vld [vmem:[#allocation2 + $0x17b0] sm:$0xff]
    %v946 = vld [vmem:[#allocation2 + $0x17b8] sm:$0xff]
    %v947 = vld [vmem:[#allocation2 + $0x17c0] sm:$0xff]
    %v948 = vld [vmem:[#allocation2 + $0x17c8] sm:$0xff]
    %v949 = vld [vmem:[#allocation2 + $0x17d0] sm:$0xff]
    %v950 = vld [vmem:[#allocation2 + $0x17d8] sm:$0xff]
    %v951 = vld [vmem:[#allocation2 + $0x17e0] sm:$0xff]
    %v952 = vld [vmem:[#allocation2 + $0x17e8] sm:$0xff]
    %v953 = vld [vmem:[#allocation2 + $0x17f0] sm:$0xff]
    %v954 = vld [vmem:[#allocation2 + $0x17f8] sm:$0xff]
    %v955 = vld [vmem:[#allocation2 + $0x1800] sm:$0xff]
    %v956 = vld [vmem:[#allocation2 + $0x1808] sm:$0xff]
    %v957 = vld [vmem:[#allocation2 + $0x1810] sm:$0xff]
    %v958 = vld [vmem:[#allocation2 + $0x1818] sm:$0xff]
    %v959 = vld [vmem:[#allocation2 + $0x1820] sm:$0xff]
    %v960 = vld [vmem:[#allocation2 + $0x1828] sm:$0xff]
    %v961 = vld [vmem:[#allocation2 + $0x1830] sm:$0xff]
    %v962 = vld [vmem:[#allocation2 + $0x1838] sm:$0xff]
    %v963 = vld [vmem:[#allocation2 + $0x1840] sm:$0xff]
    %v964 = vld [vmem:[#allocation2 + $0x1848] sm:$0xff]
    %v965 = vld [vmem:[#allocation2 + $0x1850] sm:$0xff]
    %v966 = vld [vmem:[#allocation2 + $0x1858] sm:$0xff]
    %v967 = vld [vmem:[#allocation2 + $0x1860] sm:$0xff]
    %v968 = vld [vmem:[#allocation2 + $0x1868] sm:$0xff]
    %v969 = vld [vmem:[#allocation2 + $0x1870] sm:$0xff]
    %v970 = vld [vmem:[#allocation2 + $0x1878] sm:$0xff]
    %v971 = vld [vmem:[#allocation2 + $0x1880] sm:$0xff]
    %v972 = vld [vmem:[#allocation2 + $0x1888] sm:$0xff]
    %v973 = vld [vmem:[#allocation2 + $0x1890] sm:$0xff]
    %v974 = vld [vmem:[#allocation2 + $0x1898] sm:$0xff]
    %v975 = vld [vmem:[#allocation2 + $0x18a0] sm:$0xff]
    %v976 = vld [vmem:[#allocation2 + $0x18a8] sm:$0xff]
    %v977 = vld [vmem:[#allocation2 + $0x18b0] sm:$0xff]
    %v978 = vld [vmem:[#allocation2 + $0x18b8] sm:$0xff]
    %v979 = vld [vmem:[#allocation2 + $0x18c0] sm:$0xff]
    %v980 = vld [vmem:[#allocation2 + $0x18c8] sm:$0xff]
    %v981 = vld [vmem:[#allocation2 + $0x18d0] sm:$0xff]
    %v982 = vld [vmem:[#allocation2 + $0x18d8] sm:$0xff]
    %v983 = vld [vmem:[#allocation2 + $0x18e0] sm:$0xff]
    %v984 = vld [vmem:[#allocation2 + $0x18e8] sm:$0xff]
    %v985 = vld [vmem:[#allocation2 + $0x18f0] sm:$0xff]
    %v986 = vld [vmem:[#allocation2 + $0x18f8] sm:$0xff]
    %v987 = vld [vmem:[#allocation2 + $0x1900] sm:$0xff]
    %v988 = vld [vmem:[#allocation2 + $0x1908] sm:$0xff]
    %v989 = vld [vmem:[#allocation2 + $0x1910] sm:$0xff]
    %v990 = vld [vmem:[#allocation2 + $0x1918] sm:$0xff]
    %v991 = vld [vmem:[#allocation2 + $0x1920] sm:$0xff]
    %v992 = vld [vmem:[#allocation2 + $0x1928] sm:$0xff]
    %v993 = vld [vmem:[#allocation2 + $0x1930] sm:$0xff]
    %v994 = vld [vmem:[#allocation2 + $0x1938] sm:$0xff]
    %v995 = vld [vmem:[#allocation2 + $0x1940] sm:$0xff]
    %v996 = vld [vmem:[#allocation2 + $0x1948] sm:$0xff]
    %v997 = vld [vmem:[#allocation2 + $0x1950] sm:$0xff]
    %v998 = vld [vmem:[#allocation2 + $0x1958] sm:$0xff]
    %v999 = vld [vmem:[#allocation2 + $0x1960] sm:$0xff]
    %v1000 = vld [vmem:[#allocation2 + $0x1968] sm:$0xff]
    %v1001 = vld [vmem:[#allocation2 + $0x1970] sm:$0xff]
    %v1002 = vld [vmem:[#allocation2 + $0x1978] sm:$0xff]
    %v1003 = vld [vmem:[#allocation2 + $0x1980] sm:$0xff]
    %v1004 = vld [vmem:[#allocation2 + $0x1988] sm:$0xff]
    %v1005 = vld [vmem:[#allocation2 + $0x1990] sm:$0xff]
    %v1006 = vld [vmem:[#allocation2 + $0x1998] sm:$0xff]
    %v1007 = vld [vmem:[#allocation2 + $0x19a0] sm:$0xff]
    %v1008 = vld [vmem:[#allocation2 + $0x19a8] sm:$0xff]
    %v1009 = vld [vmem:[#allocation2 + $0x19b0] sm:$0xff]
    %v1010 = vld [vmem:[#allocation2 + $0x19b8] sm:$0xff]
    %v1011 = vld [vmem:[#allocation2 + $0x19c0] sm:$0xff]
    %v1012 = vld [vmem:[#allocation2 + $0x19c8] sm:$0xff]
    %v1013 = vld [vmem:[#allocation2 + $0x19d0] sm:$0xff]
    %v1014 = vld [vmem:[#allocation2 + $0x19d8] sm:$0xff]
    %v1015 = vld [vmem:[#allocation2 + $0x19e0] sm:$0xff]
    %v1016 = vld [vmem:[#allocation2 + $0x19e8] sm:$0xff]
    %v1017 = vld [vmem:[#allocation2 + $0x19f0] sm:$0xff]
    %v1018 = vld [vmem:[#allocation2 + $0x19f8] sm:$0xff]
    %v1019 = vld [vmem:[#allocation2 + $0x1a00] sm:$0xff]
    %v1020 = vld [vmem:[#allocation2 + $0x1a08] sm:$0xff]
    %v1021 = vld [vmem:[#allocation2 + $0x1a10] sm:$0xff]
    %v1022 = vld [vmem:[#allocation2 + $0x1a18] sm:$0xff]
    %v1023 = vld [vmem:[#allocation2 + $0x1a20] sm:$0xff]
    %v1024 = vld [vmem:[#allocation2 + $0x1a28] sm:$0xff]
    %v1025 = vld [vmem:[#allocation2 + $0x1a30] sm:$0xff]
    %v1026 = vld [vmem:[#allocation2 + $0x1a38] sm:$0xff]
    %v1027 = vld [vmem:[#allocation2 + $0x1a40] sm:$0xff]
    %v1028 = vld [vmem:[#allocation2 + $0x1a48] sm:$0xff]
    %v1029 = vld [vmem:[#allocation2 + $0x1a50] sm:$0xff]
    %v1030 = vld [vmem:[#allocation2 + $0x1a58] sm:$0xff]
    %v1031 = vld [vmem:[#allocation2 + $0x1a60] sm:$0xff]
    %v1032 = vld [vmem:[#allocation2 + $0x1a68] sm:$0xff]
    %v1033 = vld [vmem:[#allocation2 + $0x1a70] sm:$0xff]
    %v1034 = vld [vmem:[#allocation2 + $0x1a78] sm:$0xff]
    %v1035 = vld [vmem:[#allocation2 + $0x1a80] sm:$0xff]
    %v1036 = vld [vmem:[#allocation2 + $0x1a88] sm:$0xff]
    %v1037 = vld [vmem:[#allocation2 + $0x1a90] sm:$0xff]
    %v1038 = vld [vmem:[#allocation2 + $0x1a98] sm:$0xff]
    %v1039 = vld [vmem:[#allocation2 + $0x1aa0] sm:$0xff]
    %v1040 = vld [vmem:[#allocation2 + $0x1aa8] sm:$0xff]
    %v1041 = vld [vmem:[#allocation2 + $0x1ab0] sm:$0xff]
    %v1042 = vld [vmem:[#allocation2 + $0x1ab8] sm:$0xff]
    %v1043 = vld [vmem:[#allocation2 + $0x1ac0] sm:$0xff]
    %v1044 = vld [vmem:[#allocation2 + $0x1ac8] sm:$0xff]
    %v1045 = vld [vmem:[#allocation2 + $0x1ad0] sm:$0xff]
    %v1046 = vld [vmem:[#allocation2 + $0x1ad8] sm:$0xff]
    %v1047 = vld [vmem:[#allocation2 + $0x1ae0] sm:$0xff]
    %v1048 = vld [vmem:[#allocation2 + $0x1ae8] sm:$0xff]
    %v1049 = vld [vmem:[#allocation2 + $0x1af0] sm:$0xff]
    %v1050 = vld [vmem:[#allocation2 + $0x1af8] sm:$0xff]
    %v1051 = vld [vmem:[#allocation2 + $0x1b00] sm:$0xff]
    %v1052 = vld [vmem:[#allocation2 + $0x1b08] sm:$0xff]
    %v1053 = vld [vmem:[#allocation2 + $0x1b10] sm:$0xff]
    %v1054 = vld [vmem:[#allocation2 + $0x1b18] sm:$0xff]
    %v1055 = vld [vmem:[#allocation2 + $0x1b20] sm:$0xff]
    %v1056 = vld [vmem:[#allocation2 + $0x1b28] sm:$0xff]
    %v1057 = vld [vmem:[#allocation2 + $0x1b30] sm:$0xff]
    %v1058 = vld [vmem:[#allocation2 + $0x1b38] sm:$0xff]
    %v1059 = vld [vmem:[#allocation2 + $0x1b40] sm:$0xff]
    %v1060 = vld [vmem:[#allocation2 + $0x1b48] sm:$0xff]
    %v1061 = vld [vmem:[#allocation2 + $0x1b50] sm:$0xff]
    %v1062 = vld [vmem:[#allocation2 + $0x1b58] sm:$0xff]
    %v1063 = vld [vmem:[#allocation2 + $0x1b60] sm:$0xff]
    %v1064 = vld [vmem:[#allocation2 + $0x1b68] sm:$0xff]
    %v1065 = vld [vmem:[#allocation2 + $0x1b70] sm:$0xff]
    %v1066 = vld [vmem:[#allocation2 + $0x1b78] sm:$0xff]
    %v1067 = vld [vmem:[#allocation2 + $0x1b80] sm:$0xff]
    %v1068 = vld [vmem:[#allocation2 + $0x1b88] sm:$0xff]
    %v1069 = vld [vmem:[#allocation2 + $0x1b90] sm:$0xff]
    %v1070 = vld [vmem:[#allocation2 + $0x1b98] sm:$0xff]
    %v1071 = vld [vmem:[#allocation2 + $0x1ba0] sm:$0xff]
    %v1072 = vld [vmem:[#allocation2 + $0x1ba8] sm:$0xff]
    %v1073 = vld [vmem:[#allocation2 + $0x1bb0] sm:$0xff]
    %v1074 = vld [vmem:[#allocation2 + $0x1bb8] sm:$0xff]
    %v1075 = vld [vmem:[#allocation2 + $0x1bc0] sm:$0xff]
    %v1076 = vld [vmem:[#allocation2 + $0x1bc8] sm:$0xff]
    %v1077 = vld [vmem:[#allocation2 + $0x1bd0] sm:$0xff]
    %v1078 = vld [vmem:[#allocation2 + $0x1bd8] sm:$0xff]
    %v1079 = vld [vmem:[#allocation2 + $0x1be0] sm:$0xff]
    %v1080 = vld [vmem:[#allocation2 + $0x1be8] sm:$0xff]
    %v1081 = vld [vmem:[#allocation2 + $0x1bf0] sm:$0xff]
    %v1082 = vld [vmem:[#allocation2 + $0x1bf8] sm:$0xff]
    %v1083 = vld [vmem:[#allocation2 + $0x1c00] sm:$0xff]
    %v1084 = vld [vmem:[#allocation2 + $0x1c08] sm:$0xff]
    %v1085 = vld [vmem:[#allocation2 + $0x1c10] sm:$0xff]
    %v1086 = vld [vmem:[#allocation2 + $0x1c18] sm:$0xff]
    %v1087 = vld [vmem:[#allocation2 + $0x1c20] sm:$0xff]
    %v1088 = vld [vmem:[#allocation2 + $0x1c28] sm:$0xff]
    %v1089 = vld [vmem:[#allocation2 + $0x1c30] sm:$0xff]
    %v1090 = vld [vmem:[#allocation2 + $0x1c38] sm:$0xff]
    %v1091 = vld [vmem:[#allocation2 + $0x1c40] sm:$0xff]
    %v1092 = vld [vmem:[#allocation2 + $0x1c48] sm:$0xff]
    %v1093 = vld [vmem:[#allocation2 + $0x1c50] sm:$0xff]
    %v1094 = vld [vmem:[#allocation2 + $0x1c58] sm:$0xff]
    %v1095 = vld [vmem:[#allocation2 + $0x1c60] sm:$0xff]
    %v1096 = vld [vmem:[#allocation2 + $0x1c68] sm:$0xff]
    %v1097 = vld [vmem:[#allocation2 + $0x1c70] sm:$0xff]
    %v1098 = vld [vmem:[#allocation2 + $0x1c78] sm:$0xff]
    %v1099 = vld [vmem:[#allocation2 + $0x1c80] sm:$0xff]
    %v1100 = vld [vmem:[#allocation2 + $0x1c88] sm:$0xff]
    %v1101 = vld [vmem:[#allocation2 + $0x1c90] sm:$0xff]
    %v1102 = vld [vmem:[#allocation2 + $0x1c98] sm:$0xff]
    %v1103 = vld [vmem:[#allocation2 + $0x1ca0] sm:$0xff]
    %v1104 = vld [vmem:[#allocation2 + $0x1ca8] sm:$0xff]
    %v1105 = vld [vmem:[#allocation2 + $0x1cb0] sm:$0xff]
    %v1106 = vld [vmem:[#allocation2 + $0x1cb8] sm:$0xff]
    %v1107 = vld [vmem:[#allocation2 + $0x1cc0] sm:$0xff]
    %v1108 = vld [vmem:[#allocation2 + $0x1cc8] sm:$0xff]
    %v1109 = vld [vmem:[#allocation2 + $0x1cd0] sm:$0xff]
    %v1110 = vld [vmem:[#allocation2 + $0x1cd8] sm:$0xff]
    %v1111 = vld [vmem:[#allocation2 + $0x1ce0] sm:$0xff]
    %v1112 = vld [vmem:[#allocation2 + $0x1ce8] sm:$0xff]
    %v1113 = vld [vmem:[#allocation2 + $0x1cf0] sm:$0xff]
    %v1114 = vld [vmem:[#allocation2 + $0x1cf8] sm:$0xff]
    %v1115 = vld [vmem:[#allocation2 + $0x1d00] sm:$0xff]
    %v1116 = vld [vmem:[#allocation2 + $0x1d08] sm:$0xff]
    %v1117 = vld [vmem:[#allocation2 + $0x1d10] sm:$0xff]
    %v1118 = vld [vmem:[#allocation2 + $0x1d18] sm:$0xff]
    %v1119 = vld [vmem:[#allocation2 + $0x1d20] sm:$0xff]
    %v1120 = vld [vmem:[#allocation2 + $0x1d28] sm:$0xff]
    %v1121 = vld [vmem:[#allocation2 + $0x1d30] sm:$0xff]
    %v1122 = vld [vmem:[#allocation2 + $0x1d38] sm:$0xff]
    %v1123 = vld [vmem:[#allocation2 + $0x1d40] sm:$0xff]
    %v1124 = vld [vmem:[#allocation2 + $0x1d48] sm:$0xff]
    %v1125 = vld [vmem:[#allocation2 + $0x1d50] sm:$0xff]
    %v1126 = vld [vmem:[#allocation2 + $0x1d58] sm:$0xff]
    %v1127 = vld [vmem:[#allocation2 + $0x1d60] sm:$0xff]
    %v1128 = vld [vmem:[#allocation2 + $0x1d68] sm:$0xff]
    %v1129 = vld [vmem:[#allocation2 + $0x1d70] sm:$0xff]
    %v1130 = vld [vmem:[#allocation2 + $0x1d78] sm:$0xff]
    %v1131 = vld [vmem:[#allocation2 + $0x1d80] sm:$0xff]
    %v1132 = vld [vmem:[#allocation2 + $0x1d88] sm:$0xff]
    %v1133 = vld [vmem:[#allocation2 + $0x1d90] sm:$0xff]
    %v1134 = vld [vmem:[#allocation2 + $0x1d98] sm:$0xff]
    %v1135 = vld [vmem:[#allocation2 + $0x1da0] sm:$0xff]
    %v1136 = vld [vmem:[#allocation2 + $0x1da8] sm:$0xff]
    %v1137 = vld [vmem:[#allocation2 + $0x1db0] sm:$0xff]
    %v1138 = vld [vmem:[#allocation2 + $0x1db8] sm:$0xff]
    %v1139 = vld [vmem:[#allocation2 + $0x1dc0] sm:$0xff]
    %v1140 = vld [vmem:[#allocation2 + $0x1dc8] sm:$0xff]
    %v1141 = vld [vmem:[#allocation2 + $0x1dd0] sm:$0xff]
    %v1142 = vld [vmem:[#allocation2 + $0x1dd8] sm:$0xff]
    %v1143 = vld [vmem:[#allocation2 + $0x1de0] sm:$0xff]
    %v1144 = vld [vmem:[#allocation2 + $0x1de8] sm:$0xff]
    %v1145 = vld [vmem:[#allocation2 + $0x1df0] sm:$0xff]
    %v1146 = vld [vmem:[#allocation2 + $0x1df8] sm:$0xff]
    %v1147 = vld [vmem:[#allocation2 + $0x1e00] sm:$0xff]
    %v1148 = vld [vmem:[#allocation2 + $0x1e08] sm:$0xff]
    %v1149 = vld [vmem:[#allocation2 + $0x1e10] sm:$0xff]
    %v1150 = vld [vmem:[#allocation2 + $0x1e18] sm:$0xff]
    %v1151 = vld [vmem:[#allocation2 + $0x1e20] sm:$0xff]
    %v1152 = vld [vmem:[#allocation2 + $0x1e28] sm:$0xff]
    %v1153 = vld [vmem:[#allocation2 + $0x1e30] sm:$0xff]
    %v1154 = vld [vmem:[#allocation2 + $0x1e38] sm:$0xff]
    %v1155 = vld [vmem:[#allocation2 + $0x1e40] sm:$0xff]
    %v1156 = vld [vmem:[#allocation2 + $0x1e48] sm:$0xff]
    %v1157 = vld [vmem:[#allocation2 + $0x1e50] sm:$0xff]
    %v1158 = vld [vmem:[#allocation2 + $0x1e58] sm:$0xff]
    %v1159 = vld [vmem:[#allocation2 + $0x1e60] sm:$0xff]
    %v1160 = vld [vmem:[#allocation2 + $0x1e68] sm:$0xff]
    %v1161 = vld [vmem:[#allocation2 + $0x1e70] sm:$0xff]
    %v1162 = vld [vmem:[#allocation2 + $0x1e78] sm:$0xff]
    %v1163 = vld [vmem:[#allocation2 + $0x1e80] sm:$0xff]
    %v1164 = vld [vmem:[#allocation2 + $0x1e88] sm:$0xff]
    %v1165 = vld [vmem:[#allocation2 + $0x1e90] sm:$0xff]
    %v1166 = vld [vmem:[#allocation2 + $0x1e98] sm:$0xff]
    %v1167 = vld [vmem:[#allocation2 + $0x1ea0] sm:$0xff]
    %v1168 = vld [vmem:[#allocation2 + $0x1ea8] sm:$0xff]
    %v1169 = vld [vmem:[#allocation2 + $0x1eb0] sm:$0xff]
    %v1170 = vld [vmem:[#allocation2 + $0x1eb8] sm:$0xff]
    %v1171 = vld [vmem:[#allocation2 + $0x1ec0] sm:$0xff]
    %v1172 = vld [vmem:[#allocation2 + $0x1ec8] sm:$0xff]
    %v1173 = vld [vmem:[#allocation2 + $0x1ed0] sm:$0xff]
    %v1174 = vld [vmem:[#allocation2 + $0x1ed8] sm:$0xff]
    %v1175 = vld [vmem:[#allocation2 + $0x1ee0] sm:$0xff]
    %v1176 = vld [vmem:[#allocation2 + $0x1ee8] sm:$0xff]
    %v1177 = vld [vmem:[#allocation2 + $0x1ef0] sm:$0xff]
    %v1178 = vld [vmem:[#allocation2 + $0x1ef8] sm:$0xff]
    %v1179 = vld [vmem:[#allocation2 + $0x1f00] sm:$0xff]
    %v1180 = vld [vmem:[#allocation2 + $0x1f08] sm:$0xff]
    %v1181 = vld [vmem:[#allocation2 + $0x1f10] sm:$0xff]
    %v1182 = vld [vmem:[#allocation2 + $0x1f18] sm:$0xff]
    %v1183 = vld [vmem:[#allocation2 + $0x1f20] sm:$0xff]
    %v1184 = vld [vmem:[#allocation2 + $0x1f28] sm:$0xff]
    %v1185 = vld [vmem:[#allocation2 + $0x1f30] sm:$0xff]
    %v1186 = vld [vmem:[#allocation2 + $0x1f38] sm:$0xff]
    %v1187 = vld [vmem:[#allocation2 + $0x1f40] sm:$0xff]
    %v1188 = vld [vmem:[#allocation2 + $0x1f48] sm:$0xff]
    %v1189 = vld [vmem:[#allocation2 + $0x1f50] sm:$0xff]
    %v1190 = vld [vmem:[#allocation2 + $0x1f58] sm:$0xff]
    %v1191 = vld [vmem:[#allocation2 + $0x1f60] sm:$0xff]
    %v1192 = vld [vmem:[#allocation2 + $0x1f68] sm:$0xff]
    %v1193 = vld [vmem:[#allocation2 + $0x1f70] sm:$0xff]
    %v1194 = vld [vmem:[#allocation2 + $0x1f78] sm:$0xff]
    %v1195 = vld [vmem:[#allocation2 + $0x1f80] sm:$0xff]
    %v1196 = vld [vmem:[#allocation2 + $0x1f88] sm:$0xff]
    %v1197 = vld [vmem:[#allocation2 + $0x1f90] sm:$0xff]
    %v1198 = vld [vmem:[#allocation2 + $0x1f98] sm:$0xff]
    %v1199 = vld [vmem:[#allocation2 + $0x1fa0] sm:$0xff]
    %v1200 = vld [vmem:[#allocation2 + $0x1fa8] sm:$0xff]
    %v1201 = vld [vmem:[#allocation2 + $0x1fb0] sm:$0xff]
    %v1202 = vld [vmem:[#allocation2 + $0x1fb8] sm:$0xff]
    %v1203 = vld [vmem:[#allocation2 + $0x1fc0] sm:$0xff]
    %v1204 = vld [vmem:[#allocation2 + $0x1fc8] sm:$0xff]
    %v1205 = vld [vmem:[#allocation2 + $0x1fd0] sm:$0xff]
    %v1206 = vld [vmem:[#allocation2 + $0x1fd8] sm:$0xff]
    %v1207 = vld [vmem:[#allocation2 + $0x1fe0] sm:$0xff]
    %v1208 = vld [vmem:[#allocation2 + $0x1fe8] sm:$0xff]
    %v1209 = vld [vmem:[#allocation2 + $0x1ff0] sm:$0xff]
    %v1210 = vld [vmem:[#allocation2 + $0x1ff8] sm:$0xff]
    %v1211 = vld [vmem:[#allocation2 + $0x2000] sm:$0xff]
    %v1212 = vld [vmem:[#allocation2 + $0x2008] sm:$0xff]
    %v1213 = vld [vmem:[#allocation2 + $0x2010] sm:$0xff]
    %v1214 = vld [vmem:[#allocation2 + $0x2018] sm:$0xff]
    %v1215 = vld [vmem:[#allocation2 + $0x2020] sm:$0xff]
    %v1216 = vld [vmem:[#allocation2 + $0x2028] sm:$0xff]
    %v1217 = vld [vmem:[#allocation2 + $0x2030] sm:$0xff]
    %v1218 = vld [vmem:[#allocation2 + $0x2038] sm:$0xff]
    %v1219 = vld [vmem:[#allocation2 + $0x2040] sm:$0xff]
    %v1220 = vld [vmem:[#allocation2 + $0x2048] sm:$0xff]
    %v1221 = vld [vmem:[#allocation2 + $0x2050] sm:$0xff]
    %v1222 = vld [vmem:[#allocation2 + $0x2058] sm:$0xff]
    %v1223 = vld [vmem:[#allocation2 + $0x2060] sm:$0xff]
    %v1224 = vld [vmem:[#allocation2 + $0x2068] sm:$0xff]
    %v1225 = vld [vmem:[#allocation2 + $0x2070] sm:$0xff]
    %v1226 = vld [vmem:[#allocation2 + $0x2078] sm:$0xff]
    %v1227 = vld [vmem:[#allocation2 + $0x2080] sm:$0xff]
    %v1228 = vld [vmem:[#allocation2 + $0x2088] sm:$0xff]
    %v1229 = vld [vmem:[#allocation2 + $0x2090] sm:$0xff]
    %v1230 = vld [vmem:[#allocation2 + $0x2098] sm:$0xff]
    %v1231 = vld [vmem:[#allocation2 + $0x20a0] sm:$0xff]
    %v1232 = vld [vmem:[#allocation2 + $0x20a8] sm:$0xff]
    %v1233 = vld [vmem:[#allocation2 + $0x20b0] sm:$0xff]
    %v1234 = vld [vmem:[#allocation2 + $0x20b8] sm:$0xff]
    %v1235 = vld [vmem:[#allocation2 + $0x20c0] sm:$0xff]
    %v1236 = vld [vmem:[#allocation2 + $0x20c8] sm:$0xff]
    %v1237 = vld [vmem:[#allocation2 + $0x20d0] sm:$0xff]
    %v1238 = vld [vmem:[#allocation2 + $0x20d8] sm:$0xff]
    %v1239 = vld [vmem:[#allocation2 + $0x20e0] sm:$0xff]
    %v1240 = vld [vmem:[#allocation2 + $0x20e8] sm:$0xff]
    %v1241 = vld [vmem:[#allocation2 + $0x20f0] sm:$0xff]
    %v1242 = vld [vmem:[#allocation2 + $0x20f8] sm:$0xff]
    %v1243 = vld [vmem:[#allocation2 + $0x2100] sm:$0xff]
    %v1244 = vld [vmem:[#allocation2 + $0x2108] sm:$0xff]
    %v1245 = vld [vmem:[#allocation2 + $0x2110] sm:$0xff]
    %v1246 = vld [vmem:[#allocation2 + $0x2118] sm:$0xff]
    %v1247 = vld [vmem:[#allocation2 + $0x2120] sm:$0xff]
    %v1248 = vld [vmem:[#allocation2 + $0x2128] sm:$0xff]
    %v1249 = vld [vmem:[#allocation2 + $0x2130] sm:$0xff]
    %v1250 = vld [vmem:[#allocation2 + $0x2138] sm:$0xff]
    %v1251 = vld [vmem:[#allocation2 + $0x2140] sm:$0xff]
    %v1252 = vld [vmem:[#allocation2 + $0x2148] sm:$0xff]
    %v1253 = vld [vmem:[#allocation2 + $0x2150] sm:$0xff]
    %v1254 = vld [vmem:[#allocation2 + $0x2158] sm:$0xff]
    %v1255 = vld [vmem:[#allocation2 + $0x2160] sm:$0xff]
    %v1256 = vld [vmem:[#allocation2 + $0x2168] sm:$0xff]
    %v1257 = vld [vmem:[#allocation2 + $0x2170] sm:$0xff]
    %v1258 = vld [vmem:[#allocation2 + $0x2178] sm:$0xff]
    %v1259 = vld [vmem:[#allocation2 + $0x2180] sm:$0xff]
    %v1260 = vld [vmem:[#allocation2 + $0x2188] sm:$0xff]
    %v1261 = vld [vmem:[#allocation2 + $0x2190] sm:$0xff]
    %v1262 = vld [vmem:[#allocation2 + $0x2198] sm:$0xff]
    %v1263 = vld [vmem:[#allocation2 + $0x21a0] sm:$0xff]
    %v1264 = vld [vmem:[#allocation2 + $0x21a8] sm:$0xff]
    %v1265 = vld [vmem:[#allocation2 + $0x21b0] sm:$0xff]
    %v1266 = vld [vmem:[#allocation2 + $0x21b8] sm:$0xff]
    %v1267 = vld [vmem:[#allocation2 + $0x21c0] sm:$0xff]
    %v1268 = vld [vmem:[#allocation2 + $0x21c8] sm:$0xff]
    %v1269 = vld [vmem:[#allocation2 + $0x21d0] sm:$0xff]
    %v1270 = vld [vmem:[#allocation2 + $0x21d8] sm:$0xff]
    %v1271 = vld [vmem:[#allocation2 + $0x21e0] sm:$0xff]
    %v1272 = vld [vmem:[#allocation2 + $0x21e8] sm:$0xff]
    %v1273 = vld [vmem:[#allocation2 + $0x21f0] sm:$0xff]
    %v1274 = vld [vmem:[#allocation2 + $0x21f8] sm:$0xff]
    %v1275 = vld [vmem:[#allocation2 + $0x2200] sm:$0xff]
    %v1276 = vld [vmem:[#allocation2 + $0x2208] sm:$0xff]
    %v1277 = vld [vmem:[#allocation2 + $0x2210] sm:$0xff]
    %v1278 = vld [vmem:[#allocation2 + $0x2218] sm:$0xff]
    %v1279 = vld [vmem:[#allocation2 + $0x2220] sm:$0xff]
    %v1280 = vld [vmem:[#allocation2 + $0x2228] sm:$0xff]
    %v1281 = vld [vmem:[#allocation2 + $0x2230] sm:$0xff]
    %v1282 = vld [vmem:[#allocation2 + $0x2238] sm:$0xff]
    %v1283 = vld [vmem:[#allocation2 + $0x2240] sm:$0xff]
    %v1284 = vld [vmem:[#allocation2 + $0x2248] sm:$0xff]
    %v1285 = vld [vmem:[#allocation2 + $0x2250] sm:$0xff]
    %v1286 = vld [vmem:[#allocation2 + $0x2258] sm:$0xff]
    %v1287 = vld [vmem:[#allocation2 + $0x2260] sm:$0xff]
    %v1288 = vld [vmem:[#allocation2 + $0x2268] sm:$0xff]
    %v1289 = vld [vmem:[#allocation2 + $0x2270] sm:$0xff]
    %v1290 = vld [vmem:[#allocation2 + $0x2278] sm:$0xff]
    %v1291 = vld [vmem:[#allocation2 + $0x2280] sm:$0xff]
    %v1292 = vld [vmem:[#allocation2 + $0x2288] sm:$0xff]
    %v1293 = vld [vmem:[#allocation2 + $0x2290] sm:$0xff]
    %v1294 = vld [vmem:[#allocation2 + $0x2298] sm:$0xff]
    %v1295 = vld [vmem:[#allocation2 + $0x22a0] sm:$0xff]
    %v1296 = vld [vmem:[#allocation2 + $0x22a8] sm:$0xff]
    %v1297 = vld [vmem:[#allocation2 + $0x22b0] sm:$0xff]
    %v1298 = vld [vmem:[#allocation2 + $0x22b8] sm:$0xff]
    %v1299 = vld [vmem:[#allocation2 + $0x22c0] sm:$0xff]
    %v1300 = vld [vmem:[#allocation2 + $0x22c8] sm:$0xff]
    %v1301 = vld [vmem:[#allocation2 + $0x22d0] sm:$0xff]
    %v1302 = vld [vmem:[#allocation2 + $0x22d8] sm:$0xff]
    %v1303 = vld [vmem:[#allocation2 + $0x22e0] sm:$0xff]
    %v1304 = vld [vmem:[#allocation2 + $0x22e8] sm:$0xff]
    %v1305 = vld [vmem:[#allocation2 + $0x22f0] sm:$0xff]
    %v1306 = vld [vmem:[#allocation2 + $0x22f8] sm:$0xff]
    %v1307 = vld [vmem:[#allocation2 + $0x2300] sm:$0xff]
    %v1308 = vld [vmem:[#allocation2 + $0x2308] sm:$0xff]
    %v1309 = vld [vmem:[#allocation2 + $0x2310] sm:$0xff]
    %v1310 = vld [vmem:[#allocation2 + $0x2318] sm:$0xff]
    %v1311 = vld [vmem:[#allocation2 + $0x2320] sm:$0xff]
    %v1312 = vld [vmem:[#allocation2 + $0x2328] sm:$0xff]
    %v1313 = vld [vmem:[#allocation2 + $0x2330] sm:$0xff]
    %v1314 = vld [vmem:[#allocation2 + $0x2338] sm:$0xff]
    %v1315 = vld [vmem:[#allocation2 + $0x2340] sm:$0xff]
    %v1316 = vld [vmem:[#allocation2 + $0x2348] sm:$0xff]
    %v1317 = vld [vmem:[#allocation2 + $0x2350] sm:$0xff]
    %v1318 = vld [vmem:[#allocation2 + $0x2358] sm:$0xff]
    %v1319 = vld [vmem:[#allocation2 + $0x2360] sm:$0xff]
    %v1320 = vld [vmem:[#allocation2 + $0x2368] sm:$0xff]
    %v1321 = vld [vmem:[#allocation2 + $0x2370] sm:$0xff]
    %v1322 = vld [vmem:[#allocation2 + $0x2378] sm:$0xff]
    %v1323 = vld [vmem:[#allocation2 + $0x2380] sm:$0xff]
    %v1324 = vld [vmem:[#allocation2 + $0x2388] sm:$0xff]
    %v1325 = vld [vmem:[#allocation2 + $0x2390] sm:$0xff]
    %v1326 = vld [vmem:[#allocation2 + $0x2398] sm:$0xff]
    %v1327 = vld [vmem:[#allocation2 + $0x23a0] sm:$0xff]
    %v1328 = vld [vmem:[#allocation2 + $0x23a8] sm:$0xff]
    %v1329 = vld [vmem:[#allocation2 + $0x23b0] sm:$0xff]
    %v1330 = vld [vmem:[#allocation2 + $0x23b8] sm:$0xff]
    %v1331 = vld [vmem:[#allocation2 + $0x23c0] sm:$0xff]
    %v1332 = vld [vmem:[#allocation2 + $0x23c8] sm:$0xff]
    %v1333 = vld [vmem:[#allocation2 + $0x23d0] sm:$0xff]
    %v1334 = vld [vmem:[#allocation2 + $0x23d8] sm:$0xff]
    %v1335 = vld [vmem:[#allocation2 + $0x23e0] sm:$0xff]
    %v1336 = vld [vmem:[#allocation2 + $0x23e8] sm:$0xff]
    %v1337 = vld [vmem:[#allocation2 + $0x23f0] sm:$0xff]
    %v1338 = vld [vmem:[#allocation2 + $0x23f8] sm:$0xff]
    %v1343 = vunpack.c.l.b16 %v183
    %v1344 = vunpack.c.h.b16 %v183
    %v1345 = vunpack.c.l.b16 %v184
    %v1346 = vunpack.c.h.b16 %v184
    %v1347 = vunpack.c.l.b16 %v185
    %v1348 = vunpack.c.h.b16 %v185
    %v1349 = vunpack.c.l.b16 %v186
    %v1350 = vunpack.c.h.b16 %v186
    %v1351 = vpack.c.b16 %v1343, %v1343
    %v1352 = vpack.c.b16 %v1344, %v1344
    %v1353 = vpack.c.b16 %v1345, %v1345
    %v1354 = vpack.c.b16 %v1346, %v1346
    %v1355 = vpack.c.b16 %v1347, %v1347
    %v1356 = vpack.c.b16 %v1348, %v1348
    %v1357 = vpack.c.b16 %v1349, %v1349
    %v1358 = vpack.c.b16 %v1350, %v1350
    %v2519 = vunpack.c.l.b16 %v187
    %v2520 = vunpack.c.h.b16 %v187
    %v2521 = vunpack.c.l.b16 %v188
    %v2522 = vunpack.c.h.b16 %v188
    %v2523 = vunpack.c.l.b16 %v189
    %v2524 = vunpack.c.h.b16 %v189
    %v2525 = vunpack.c.l.b16 %v190
    %v2526 = vunpack.c.h.b16 %v190
    %v2527 = vunpack.c.l.b16 %v191
    %v2528 = vunpack.c.h.b16 %v191
    %v2529 = vunpack.c.l.b16 %v192
    %v2530 = vunpack.c.h.b16 %v192
    %v2531 = vunpack.c.l.b16 %v193
    %v2532 = vunpack.c.h.b16 %v193
    %v2533 = vunpack.c.l.b16 %v194
    %v2534 = vunpack.c.h.b16 %v194
    %v2535 = vunpack.c.l.b16 %v195
    %v2536 = vunpack.c.h.b16 %v195
    %v2537 = vunpack.c.l.b16 %v196
    %v2538 = vunpack.c.h.b16 %v196
    %v2539 = vunpack.c.l.b16 %v197
    %v2540 = vunpack.c.h.b16 %v197
    %v2541 = vunpack.c.l.b16 %v198
    %v2542 = vunpack.c.h.b16 %v198
    %v2543 = vunpack.c.l.b16 %v199
    %v2544 = vunpack.c.h.b16 %v199
    %v2545 = vunpack.c.l.b16 %v200
    %v2546 = vunpack.c.h.b16 %v200
    %v2547 = vunpack.c.l.b16 %v201
    %v2548 = vunpack.c.h.b16 %v201
    %v2549 = vunpack.c.l.b16 %v202
    %v2550 = vunpack.c.h.b16 %v202
    %v2551 = vunpack.c.l.b16 %v203
    %v2552 = vunpack.c.h.b16 %v203
    %v2553 = vunpack.c.l.b16 %v204
    %v2554 = vunpack.c.h.b16 %v204
    %v2555 = vunpack.c.l.b16 %v205
    %v2556 = vunpack.c.h.b16 %v205
    %v2557 = vunpack.c.l.b16 %v206
    %v2558 = vunpack.c.h.b16 %v206
    %v2559 = vunpack.c.l.b16 %v207
    %v2560 = vunpack.c.h.b16 %v207
    %v2561 = vunpack.c.l.b16 %v208
    %v2562 = vunpack.c.h.b16 %v208
    %v2563 = vunpack.c.l.b16 %v209
    %v2564 = vunpack.c.h.b16 %v209
    %v2565 = vunpack.c.l.b16 %v210
    %v2566 = vunpack.c.h.b16 %v210
    %v2567 = vunpack.c.l.b16 %v211
    %v2568 = vunpack.c.h.b16 %v211
    %v2569 = vunpack.c.l.b16 %v212
    %v2570 = vunpack.c.h.b16 %v212
    %v2571 = vunpack.c.l.b16 %v213
    %v2572 = vunpack.c.h.b16 %v213
    %v2573 = vunpack.c.l.b16 %v214
    %v2574 = vunpack.c.h.b16 %v214
    %v2575 = vunpack.c.l.b16 %v215
    %v2576 = vunpack.c.h.b16 %v215
    %v2577 = vunpack.c.l.b16 %v216
    %v2578 = vunpack.c.h.b16 %v216
    %v2579 = vunpack.c.l.b16 %v217
    %v2580 = vunpack.c.h.b16 %v217
    %v2581 = vunpack.c.l.b16 %v218
    %v2582 = vunpack.c.h.b16 %v218
    %v2583 = vunpack.c.l.b16 %v219
    %v2584 = vunpack.c.h.b16 %v219
    %v2585 = vunpack.c.l.b16 %v220
    %v2586 = vunpack.c.h.b16 %v220
    %v2587 = vunpack.c.l.b16 %v221
    %v2588 = vunpack.c.h.b16 %v221
    %v2589 = vunpack.c.l.b16 %v222
    %v2590 = vunpack.c.h.b16 %v222
    %v2591 = vunpack.c.l.b16 %v223
    %v2592 = vunpack.c.h.b16 %v223
    %v2593 = vunpack.c.l.b16 %v224
    %v2594 = vunpack.c.h.b16 %v224
    %v2595 = vunpack.c.l.b16 %v225
    %v2596 = vunpack.c.h.b16 %v225
    %v2597 = vunpack.c.l.b16 %v226
    %v2598 = vunpack.c.h.b16 %v226
    %v2599 = vunpack.c.l.b16 %v227
    %v2600 = vunpack.c.h.b16 %v227
    %v2601 = vunpack.c.l.b16 %v228
    %v2602 = vunpack.c.h.b16 %v228
    %v2603 = vunpack.c.l.b16 %v229
    %v2604 = vunpack.c.h.b16 %v229
    %v2605 = vunpack.c.l.b16 %v230
    %v2606 = vunpack.c.h.b16 %v230
    %v2607 = vunpack.c.l.b16 %v231
    %v2608 = vunpack.c.h.b16 %v231
    %v2609 = vunpack.c.l.b16 %v232
    %v2610 = vunpack.c.h.b16 %v232
    %v2611 = vunpack.c.l.b16 %v233
    %v2612 = vunpack.c.h.b16 %v233
    %v2613 = vunpack.c.l.b16 %v234
    %v2614 = vunpack.c.h.b16 %v234
    %v2615 = vunpack.c.l.b16 %v235
    %v2616 = vunpack.c.h.b16 %v235
    %v2617 = vunpack.c.l.b16 %v236
    %v2618 = vunpack.c.h.b16 %v236
    %v2619 = vunpack.c.l.b16 %v237
    %v2620 = vunpack.c.h.b16 %v237
    %v2621 = vunpack.c.l.b16 %v238
    %v2622 = vunpack.c.h.b16 %v238
    %v2623 = vunpack.c.l.b16 %v239
    %v2624 = vunpack.c.h.b16 %v239
    %v2625 = vunpack.c.l.b16 %v240
    %v2626 = vunpack.c.h.b16 %v240
    %v2627 = vunpack.c.l.b16 %v241
    %v2628 = vunpack.c.h.b16 %v241
    %v2629 = vunpack.c.l.b16 %v242
    %v2630 = vunpack.c.h.b16 %v242
    %v2631 = vunpack.c.l.b16 %v243
    %v2632 = vunpack.c.h.b16 %v243
    %v2633 = vunpack.c.l.b16 %v244
    %v2634 = vunpack.c.h.b16 %v244
    %v2635 = vunpack.c.l.b16 %v245
    %v2636 = vunpack.c.h.b16 %v245
    %v2637 = vunpack.c.l.b16 %v246
    %v2638 = vunpack.c.h.b16 %v246
    %v2639 = vunpack.c.l.b16 %v247
    %v2640 = vunpack.c.h.b16 %v247
    %v2641 = vunpack.c.l.b16 %v248
    %v2642 = vunpack.c.h.b16 %v248
    %v2643 = vunpack.c.l.b16 %v249
    %v2644 = vunpack.c.h.b16 %v249
    %v2645 = vunpack.c.l.b16 %v250
    %v2646 = vunpack.c.h.b16 %v250
    %v2647 = vunpack.c.l.b16 %v251
    %v2648 = vunpack.c.h.b16 %v251
    %v2649 = vunpack.c.l.b16 %v252
    %v2650 = vunpack.c.h.b16 %v252
    %v2651 = vunpack.c.l.b16 %v253
    %v2652 = vunpack.c.h.b16 %v253
    %v2653 = vunpack.c.l.b16 %v254
    %v2654 = vunpack.c.h.b16 %v254
    %v2655 = vunpack.c.l.b16 %v255
    %v2656 = vunpack.c.h.b16 %v255
    %v2657 = vunpack.c.l.b16 %v256
    %v2658 = vunpack.c.h.b16 %v256
    %v2659 = vunpack.c.l.b16 %v257
    %v2660 = vunpack.c.h.b16 %v257
    %v2661 = vunpack.c.l.b16 %v258
    %v2662 = vunpack.c.h.b16 %v258
    %v2663 = vunpack.c.l.b16 %v259
    %v2664 = vunpack.c.h.b16 %v259
    %v2665 = vunpack.c.l.b16 %v260
    %v2666 = vunpack.c.h.b16 %v260
    %v2667 = vunpack.c.l.b16 %v261
    %v2668 = vunpack.c.h.b16 %v261
    %v2669 = vunpack.c.l.b16 %v262
    %v2670 = vunpack.c.h.b16 %v262
    %v2671 = vunpack.c.l.b16 %v263
    %v2672 = vunpack.c.h.b16 %v263
    %v2673 = vunpack.c.l.b16 %v264
    %v2674 = vunpack.c.h.b16 %v264
    %v2675 = vunpack.c.l.b16 %v265
    %v2676 = vunpack.c.h.b16 %v265
    %v2677 = vunpack.c.l.b16 %v266
    %v2678 = vunpack.c.h.b16 %v266
    %v2679 = vunpack.c.l.b16 %v267
    %v2680 = vunpack.c.h.b16 %v267
    %v2681 = vunpack.c.l.b16 %v268
    %v2682 = vunpack.c.h.b16 %v268
    %v2683 = vunpack.c.l.b16 %v269
    %v2684 = vunpack.c.h.b16 %v269
    %v2685 = vunpack.c.l.b16 %v270
    %v2686 = vunpack.c.h.b16 %v270
    %v2687 = vunpack.c.l.b16 %v271
    %v2688 = vunpack.c.h.b16 %v271
    %v2689 = vunpack.c.l.b16 %v272
    %v2690 = vunpack.c.h.b16 %v272
    %v2691 = vunpack.c.l.b16 %v273
    %v2692 = vunpack.c.h.b16 %v273
    %v2693 = vunpack.c.l.b16 %v274
    %v2694 = vunpack.c.h.b16 %v274
    %v2695 = vunpack.c.l.b16 %v275
    %v2696 = vunpack.c.h.b16 %v275
    %v2697 = vunpack.c.l.b16 %v276
    %v2698 = vunpack.c.h.b16 %v276
    %v2699 = vunpack.c.l.b16 %v277
    %v2700 = vunpack.c.h.b16 %v277
    %v2701 = vunpack.c.l.b16 %v278
    %v2702 = vunpack.c.h.b16 %v278
    %v2703 = vunpack.c.l.b16 %v279
    %v2704 = vunpack.c.h.b16 %v279
    %v2705 = vunpack.c.l.b16 %v280
    %v2706 = vunpack.c.h.b16 %v280
    %v2707 = vunpack.c.l.b16 %v281
    %v2708 = vunpack.c.h.b16 %v281
    %v2709 = vunpack.c.l.b16 %v282
    %v2710 = vunpack.c.h.b16 %v282
    %v2711 = vunpack.c.l.b16 %v283
    %v2712 = vunpack.c.h.b16 %v283
    %v2713 = vunpack.c.l.b16 %v284
    %v2714 = vunpack.c.h.b16 %v284
    %v2715 = vunpack.c.l.b16 %v285
    %v2716 = vunpack.c.h.b16 %v285
    %v2717 = vunpack.c.l.b16 %v286
    %v2718 = vunpack.c.h.b16 %v286
    %v2719 = vunpack.c.l.b16 %v287
    %v2720 = vunpack.c.h.b16 %v287
    %v2721 = vunpack.c.l.b16 %v288
    %v2722 = vunpack.c.h.b16 %v288
    %v2723 = vunpack.c.l.b16 %v289
    %v2724 = vunpack.c.h.b16 %v289
    %v2725 = vunpack.c.l.b16 %v290
    %v2726 = vunpack.c.h.b16 %v290
    %v2727 = vunpack.c.l.b16 %v291
    %v2728 = vunpack.c.h.b16 %v291
    %v2729 = vunpack.c.l.b16 %v292
    %v2730 = vunpack.c.h.b16 %v292
    %v2731 = vunpack.c.l.b16 %v293
    %v2732 = vunpack.c.h.b16 %v293
    %v2733 = vunpack.c.l.b16 %v294
    %v2734 = vunpack.c.h.b16 %v294
    %v2735 = vunpack.c.l.b16 %v295
    %v2736 = vunpack.c.h.b16 %v295
    %v2737 = vunpack.c.l.b16 %v296
    %v2738 = vunpack.c.h.b16 %v296
    %v2739 = vunpack.c.l.b16 %v297
    %v2740 = vunpack.c.h.b16 %v297
    %v2741 = vunpack.c.l.b16 %v298
    %v2742 = vunpack.c.h.b16 %v298
    %v2743 = vunpack.c.l.b16 %v299
    %v2744 = vunpack.c.h.b16 %v299
    %v2745 = vunpack.c.l.b16 %v300
    %v2746 = vunpack.c.h.b16 %v300
    %v2747 = vunpack.c.l.b16 %v301
    %v2748 = vunpack.c.h.b16 %v301
    %v2749 = vunpack.c.l.b16 %v302
    %v2750 = vunpack.c.h.b16 %v302
    %v2751 = vunpack.c.l.b16 %v303
    %v2752 = vunpack.c.h.b16 %v303
    %v2753 = vunpack.c.l.b16 %v304
    %v2754 = vunpack.c.h.b16 %v304
    %v2755 = vunpack.c.l.b16 %v305
    %v2756 = vunpack.c.h.b16 %v305
    %v2757 = vunpack.c.l.b16 %v306
    %v2758 = vunpack.c.h.b16 %v306
    %v2759 = vunpack.c.l.b16 %v307
    %v2760 = vunpack.c.h.b16 %v307
    %v2761 = vunpack.c.l.b16 %v308
    %v2762 = vunpack.c.h.b16 %v308
    %v2763 = vunpack.c.l.b16 %v309
    %v2764 = vunpack.c.h.b16 %v309
    %v2765 = vunpack.c.l.b16 %v310
    %v2766 = vunpack.c.h.b16 %v310
    %v2767 = vunpack.c.l.b16 %v311
    %v2768 = vunpack.c.h.b16 %v311
    %v2769 = vunpack.c.l.b16 %v312
    %v2770 = vunpack.c.h.b16 %v312
    %v2771 = vunpack.c.l.b16 %v313
    %v2772 = vunpack.c.h.b16 %v313
    %v2773 = vunpack.c.l.b16 %v314
    %v2774 = vunpack.c.h.b16 %v314
    %v2775 = vunpack.c.l.b16 %v315
    %v2776 = vunpack.c.h.b16 %v315
    %v2777 = vunpack.c.l.b16 %v316
    %v2778 = vunpack.c.h.b16 %v316
    %v2779 = vunpack.c.l.b16 %v317
    %v2780 = vunpack.c.h.b16 %v317
    %v2781 = vunpack.c.l.b16 %v318
    %v2782 = vunpack.c.h.b16 %v318
    %v2783 = vunpack.c.l.b16 %v319
    %v2784 = vunpack.c.h.b16 %v319
    %v2785 = vunpack.c.l.b16 %v320
    %v2786 = vunpack.c.h.b16 %v320
    %v2787 = vunpack.c.l.b16 %v321
    %v2788 = vunpack.c.h.b16 %v321
    %v2789 = vunpack.c.l.b16 %v322
    %v2790 = vunpack.c.h.b16 %v322
    %v2791 = vunpack.c.l.b16 %v323
    %v2792 = vunpack.c.h.b16 %v323
    %v2793 = vunpack.c.l.b16 %v324
    %v2794 = vunpack.c.h.b16 %v324
    %v2795 = vunpack.c.l.b16 %v325
    %v2796 = vunpack.c.h.b16 %v325
    %v2797 = vunpack.c.l.b16 %v326
    %v2798 = vunpack.c.h.b16 %v326
    %v2799 = vunpack.c.l.b16 %v327
    %v2800 = vunpack.c.h.b16 %v327
    %v2801 = vunpack.c.l.b16 %v328
    %v2802 = vunpack.c.h.b16 %v328
    %v2803 = vunpack.c.l.b16 %v329
    %v2804 = vunpack.c.h.b16 %v329
    %v2805 = vunpack.c.l.b16 %v330
    %v2806 = vunpack.c.h.b16 %v330
    %v2807 = vunpack.c.l.b16 %v331
    %v2808 = vunpack.c.h.b16 %v331
    %v2809 = vunpack.c.l.b16 %v332
    %v2810 = vunpack.c.h.b16 %v332
    %v2811 = vunpack.c.l.b16 %v333
    %v2812 = vunpack.c.h.b16 %v333
    %v2813 = vunpack.c.l.b16 %v334
    %v2814 = vunpack.c.h.b16 %v334
    %v2815 = vunpack.c.l.b16 %v335
    %v2816 = vunpack.c.h.b16 %v335
    %v2817 = vunpack.c.l.b16 %v336
    %v2818 = vunpack.c.h.b16 %v336
    %v2819 = vunpack.c.l.b16 %v337
    %v2820 = vunpack.c.h.b16 %v337
    %v2821 = vunpack.c.l.b16 %v338
    %v2822 = vunpack.c.h.b16 %v338
    %v2823 = vunpack.c.l.b16 %v339
    %v2824 = vunpack.c.h.b16 %v339
    %v2825 = vunpack.c.l.b16 %v340
    %v2826 = vunpack.c.h.b16 %v340
    %v2827 = vunpack.c.l.b16 %v341
    %v2828 = vunpack.c.h.b16 %v341
    %v2829 = vunpack.c.l.b16 %v342
    %v2830 = vunpack.c.h.b16 %v342
    %v2831 = vunpack.c.l.b16 %v343
    %v2832 = vunpack.c.h.b16 %v343
    %v2833 = vunpack.c.l.b16 %v344
    %v2834 = vunpack.c.h.b16 %v344
    %v2835 = vunpack.c.l.b16 %v345
    %v2836 = vunpack.c.h.b16 %v345
    %v2837 = vunpack.c.l.b16 %v346
    %v2838 = vunpack.c.h.b16 %v346
    %v2839 = vunpack.c.l.b16 %v347
    %v2840 = vunpack.c.h.b16 %v347
    %v2841 = vunpack.c.l.b16 %v348
    %v2842 = vunpack.c.h.b16 %v348
    %v2843 = vunpack.c.l.b16 %v349
    %v2844 = vunpack.c.h.b16 %v349
    %v2845 = vunpack.c.l.b16 %v350
    %v2846 = vunpack.c.h.b16 %v350
    %v2847 = vunpack.c.l.b16 %v351
    %v2848 = vunpack.c.h.b16 %v351
    %v2849 = vunpack.c.l.b16 %v352
    %v2850 = vunpack.c.h.b16 %v352
    %v2851 = vunpack.c.l.b16 %v353
    %v2852 = vunpack.c.h.b16 %v353
    %v2853 = vunpack.c.l.b16 %v354
    %v2854 = vunpack.c.h.b16 %v354
    %v2855 = vunpack.c.l.b16 %v355
    %v2856 = vunpack.c.h.b16 %v355
    %v2857 = vunpack.c.l.b16 %v356
    %v2858 = vunpack.c.h.b16 %v356
    %v2859 = vunpack.c.l.b16 %v357
    %v2860 = vunpack.c.h.b16 %v357
    %v2861 = vunpack.c.l.b16 %v358
    %v2862 = vunpack.c.h.b16 %v358
    %v2863 = vunpack.c.l.b16 %v359
    %v2864 = vunpack.c.h.b16 %v359
    %v2865 = vunpack.c.l.b16 %v360
    %v2866 = vunpack.c.h.b16 %v360
    %v2867 = vunpack.c.l.b16 %v361
    %v2868 = vunpack.c.h.b16 %v361
    %v2869 = vunpack.c.l.b16 %v362
    %v2870 = vunpack.c.h.b16 %v362
    %v2871 = vunpack.c.l.b16 %v363
    %v2872 = vunpack.c.h.b16 %v363
    %v2873 = vunpack.c.l.b16 %v364
    %v2874 = vunpack.c.h.b16 %v364
    %v2875 = vunpack.c.l.b16 %v365
    %v2876 = vunpack.c.h.b16 %v365
    %v2877 = vunpack.c.l.b16 %v366
    %v2878 = vunpack.c.h.b16 %v366
    %v2879 = vunpack.c.l.b16 %v367
    %v2880 = vunpack.c.h.b16 %v367
    %v2881 = vunpack.c.l.b16 %v368
    %v2882 = vunpack.c.h.b16 %v368
    %v2883 = vunpack.c.l.b16 %v369
    %v2884 = vunpack.c.h.b16 %v369
    %v2885 = vunpack.c.l.b16 %v370
    %v2886 = vunpack.c.h.b16 %v370
    %v2887 = vunpack.c.l.b16 %v371
    %v2888 = vunpack.c.h.b16 %v371
    %v2889 = vunpack.c.l.b16 %v372
    %v2890 = vunpack.c.h.b16 %v372
    %v2891 = vunpack.c.l.b16 %v373
    %v2892 = vunpack.c.h.b16 %v373
    %v2893 = vunpack.c.l.b16 %v374
    %v2894 = vunpack.c.h.b16 %v374
    %v2895 = vunpack.c.l.b16 %v375
    %v2896 = vunpack.c.h.b16 %v375
    %v2897 = vunpack.c.l.b16 %v376
    %v2898 = vunpack.c.h.b16 %v376
    %v2899 = vunpack.c.l.b16 %v377
    %v2900 = vunpack.c.h.b16 %v377
    %v2901 = vunpack.c.l.b16 %v378
    %v2902 = vunpack.c.h.b16 %v378
    %v2903 = vunpack.c.l.b16 %v379
    %v2904 = vunpack.c.h.b16 %v379
    %v2905 = vunpack.c.l.b16 %v380
    %v2906 = vunpack.c.h.b16 %v380
    %v2907 = vunpack.c.l.b16 %v381
    %v2908 = vunpack.c.h.b16 %v381
    %v2909 = vunpack.c.l.b16 %v382
    %v2910 = vunpack.c.h.b16 %v382
    %v2911 = vunpack.c.l.b16 %v383
    %v2912 = vunpack.c.h.b16 %v383
    %v2913 = vunpack.c.l.b16 %v384
    %v2914 = vunpack.c.h.b16 %v384
    %v2915 = vunpack.c.l.b16 %v385
    %v2916 = vunpack.c.h.b16 %v385
    %v2917 = vunpack.c.l.b16 %v386
    %v2918 = vunpack.c.h.b16 %v386
    %v2919 = vunpack.c.l.b16 %v387
    %v2920 = vunpack.c.h.b16 %v387
    %v2921 = vunpack.c.l.b16 %v388
    %v2922 = vunpack.c.h.b16 %v388
    %v2923 = vunpack.c.l.b16 %v389
    %v2924 = vunpack.c.h.b16 %v389
    %v2925 = vunpack.c.l.b16 %v390
    %v2926 = vunpack.c.h.b16 %v390
    %v2927 = vunpack.c.l.b16 %v391
    %v2928 = vunpack.c.h.b16 %v391
    %v2929 = vunpack.c.l.b16 %v392
    %v2930 = vunpack.c.h.b16 %v392
    %v2931 = vunpack.c.l.b16 %v393
    %v2932 = vunpack.c.h.b16 %v393
    %v2933 = vunpack.c.l.b16 %v394
    %v2934 = vunpack.c.h.b16 %v394
    %v2935 = vunpack.c.l.b16 %v395
    %v2936 = vunpack.c.h.b16 %v395
    %v2937 = vunpack.c.l.b16 %v396
    %v2938 = vunpack.c.h.b16 %v396
    %v2939 = vunpack.c.l.b16 %v397
    %v2940 = vunpack.c.h.b16 %v397
    %v2941 = vunpack.c.l.b16 %v398
    %v2942 = vunpack.c.h.b16 %v398
    %v2943 = vunpack.c.l.b16 %v399
    %v2944 = vunpack.c.h.b16 %v399
    %v2945 = vunpack.c.l.b16 %v400
    %v2946 = vunpack.c.h.b16 %v400
    %v2947 = vunpack.c.l.b16 %v401
    %v2948 = vunpack.c.h.b16 %v401
    %v2949 = vunpack.c.l.b16 %v402
    %v2950 = vunpack.c.h.b16 %v402
    %v2951 = vunpack.c.l.b16 %v403
    %v2952 = vunpack.c.h.b16 %v403
    %v2953 = vunpack.c.l.b16 %v404
    %v2954 = vunpack.c.h.b16 %v404
    %v2955 = vunpack.c.l.b16 %v405
    %v2956 = vunpack.c.h.b16 %v405
    %v2957 = vunpack.c.l.b16 %v406
    %v2958 = vunpack.c.h.b16 %v406
    %v2959 = vunpack.c.l.b16 %v407
    %v2960 = vunpack.c.h.b16 %v407
    %v2961 = vunpack.c.l.b16 %v408
    %v2962 = vunpack.c.h.b16 %v408
    %v2963 = vunpack.c.l.b16 %v409
    %v2964 = vunpack.c.h.b16 %v409
    %v2965 = vunpack.c.l.b16 %v410
    %v2966 = vunpack.c.h.b16 %v410
    %v2967 = vunpack.c.l.b16 %v411
    %v2968 = vunpack.c.h.b16 %v411
    %v2969 = vunpack.c.l.b16 %v412
    %v2970 = vunpack.c.h.b16 %v412
    %v2971 = vunpack.c.l.b16 %v413
    %v2972 = vunpack.c.h.b16 %v413
    %v2973 = vunpack.c.l.b16 %v414
    %v2974 = vunpack.c.h.b16 %v414
    %v2975 = vunpack.c.l.b16 %v415
    %v2976 = vunpack.c.h.b16 %v415
    %v2977 = vunpack.c.l.b16 %v416
    %v2978 = vunpack.c.h.b16 %v416
    %v2979 = vunpack.c.l.b16 %v417
    %v2980 = vunpack.c.h.b16 %v417
    %v2981 = vunpack.c.l.b16 %v418
    %v2982 = vunpack.c.h.b16 %v418
    %v2983 = vunpack.c.l.b16 %v419
    %v2984 = vunpack.c.h.b16 %v419
    %v2985 = vunpack.c.l.b16 %v420
    %v2986 = vunpack.c.h.b16 %v420
    %v2987 = vunpack.c.l.b16 %v421
    %v2988 = vunpack.c.h.b16 %v421
    %v2989 = vunpack.c.l.b16 %v422
    %v2990 = vunpack.c.h.b16 %v422
    %v2991 = vunpack.c.l.b16 %v423
    %v2992 = vunpack.c.h.b16 %v423
    %v2993 = vunpack.c.l.b16 %v424
    %v2994 = vunpack.c.h.b16 %v424
    %v2995 = vunpack.c.l.b16 %v425
    %v2996 = vunpack.c.h.b16 %v425
    %v2997 = vunpack.c.l.b16 %v426
    %v2998 = vunpack.c.h.b16 %v426
    %v2999 = vunpack.c.l.b16 %v427
    %v3000 = vunpack.c.h.b16 %v427
    %v3001 = vunpack.c.l.b16 %v428
    %v3002 = vunpack.c.h.b16 %v428
    %v3003 = vunpack.c.l.b16 %v429
    %v3004 = vunpack.c.h.b16 %v429
    %v3005 = vunpack.c.l.b16 %v430
    %v3006 = vunpack.c.h.b16 %v430
    %v3007 = vunpack.c.l.b16 %v431
    %v3008 = vunpack.c.h.b16 %v431
    %v3009 = vunpack.c.l.b16 %v432
    %v3010 = vunpack.c.h.b16 %v432
    %v3011 = vunpack.c.l.b16 %v433
    %v3012 = vunpack.c.h.b16 %v433
    %v3013 = vunpack.c.l.b16 %v434
    %v3014 = vunpack.c.h.b16 %v434
    %v3015 = vunpack.c.l.b16 %v435
    %v3016 = vunpack.c.h.b16 %v435
    %v3017 = vunpack.c.l.b16 %v436
    %v3018 = vunpack.c.h.b16 %v436
    %v3019 = vunpack.c.l.b16 %v437
    %v3020 = vunpack.c.h.b16 %v437
    %v3021 = vunpack.c.l.b16 %v438
    %v3022 = vunpack.c.h.b16 %v438
    %v3023 = vunpack.c.l.b16 %v439
    %v3024 = vunpack.c.h.b16 %v439
    %v3025 = vunpack.c.l.b16 %v440
    %v3026 = vunpack.c.h.b16 %v440
    %v3027 = vunpack.c.l.b16 %v441
    %v3028 = vunpack.c.h.b16 %v441
    %v3029 = vunpack.c.l.b16 %v442
    %v3030 = vunpack.c.h.b16 %v442
    %v3031 = vunpack.c.l.b16 %v443
    %v3032 = vunpack.c.h.b16 %v443
    %v3033 = vunpack.c.l.b16 %v444
    %v3034 = vunpack.c.h.b16 %v444
    %v3035 = vunpack.c.l.b16 %v445
    %v3036 = vunpack.c.h.b16 %v445
    %v3037 = vunpack.c.l.b16 %v446
    %v3038 = vunpack.c.h.b16 %v446
    %v3039 = vunpack.c.l.b16 %v447
    %v3040 = vunpack.c.h.b16 %v447
    %v3041 = vunpack.c.l.b16 %v448
    %v3042 = vunpack.c.h.b16 %v448
    %v3043 = vunpack.c.l.b16 %v449
    %v3044 = vunpack.c.h.b16 %v449
    %v3045 = vunpack.c.l.b16 %v450
    %v3046 = vunpack.c.h.b16 %v450
    %v3047 = vunpack.c.l.b16 %v451
    %v3048 = vunpack.c.h.b16 %v451
    %v3049 = vunpack.c.l.b16 %v452
    %v3050 = vunpack.c.h.b16 %v452
    %v3051 = vunpack.c.l.b16 %v453
    %v3052 = vunpack.c.h.b16 %v453
    %v3053 = vunpack.c.l.b16 %v454
    %v3054 = vunpack.c.h.b16 %v454
    %v3055 = vunpack.c.l.b16 %v455
    %v3056 = vunpack.c.h.b16 %v455
    %v3057 = vunpack.c.l.b16 %v456
    %v3058 = vunpack.c.h.b16 %v456
    %v3059 = vunpack.c.l.b16 %v457
    %v3060 = vunpack.c.h.b16 %v457
    %v3061 = vunpack.c.l.b16 %v458
    %v3062 = vunpack.c.h.b16 %v458
    %v3063 = vunpack.c.l.b16 %v459
    %v3064 = vunpack.c.h.b16 %v459
    %v3065 = vunpack.c.l.b16 %v460
    %v3066 = vunpack.c.h.b16 %v460
    %v3067 = vunpack.c.l.b16 %v461
    %v3068 = vunpack.c.h.b16 %v461
    %v3069 = vunpack.c.l.b16 %v462
    %v3070 = vunpack.c.h.b16 %v462
    %v3071 = vunpack.c.l.b16 %v463
    %v3072 = vunpack.c.h.b16 %v463
    %v3073 = vunpack.c.l.b16 %v464
    %v3074 = vunpack.c.h.b16 %v464
    %v3075 = vunpack.c.l.b16 %v465
    %v3076 = vunpack.c.h.b16 %v465
    %v3077 = vunpack.c.l.b16 %v466
    %v3078 = vunpack.c.h.b16 %v466
    %v3079 = vunpack.c.l.b16 %v467
    %v3080 = vunpack.c.h.b16 %v467
    %v3081 = vunpack.c.l.b16 %v468
    %v3082 = vunpack.c.h.b16 %v468
    %v3083 = vunpack.c.l.b16 %v469
    %v3084 = vunpack.c.h.b16 %v469
    %v3085 = vunpack.c.l.b16 %v470
    %v3086 = vunpack.c.h.b16 %v470
    %v3087 = vunpack.c.l.b16 %v471
    %v3088 = vunpack.c.h.b16 %v471
    %v3089 = vunpack.c.l.b16 %v472
    %v3090 = vunpack.c.h.b16 %v472
    %v3091 = vunpack.c.l.b16 %v473
    %v3092 = vunpack.c.h.b16 %v473
    %v3093 = vunpack.c.l.b16 %v474
    %v3094 = vunpack.c.h.b16 %v474
    %v3095 = vunpack.c.l.b16 %v475
    %v3096 = vunpack.c.h.b16 %v475
    %v3097 = vunpack.c.l.b16 %v476
    %v3098 = vunpack.c.h.b16 %v476
    %v3099 = vunpack.c.l.b16 %v477
    %v3100 = vunpack.c.h.b16 %v477
    %v3101 = vunpack.c.l.b16 %v478
    %v3102 = vunpack.c.h.b16 %v478
    %v3103 = vunpack.c.l.b16 %v479
    %v3104 = vunpack.c.h.b16 %v479
    %v3105 = vunpack.c.l.b16 %v480
    %v3106 = vunpack.c.h.b16 %v480
    %v3107 = vunpack.c.l.b16 %v481
    %v3108 = vunpack.c.h.b16 %v481
    %v3109 = vunpack.c.l.b16 %v482
    %v3110 = vunpack.c.h.b16 %v482
    %v3111 = vunpack.c.l.b16 %v483
    %v3112 = vunpack.c.h.b16 %v483
    %v3113 = vunpack.c.l.b16 %v484
    %v3114 = vunpack.c.h.b16 %v484
    %v3115 = vunpack.c.l.b16 %v485
    %v3116 = vunpack.c.h.b16 %v485
    %v3117 = vunpack.c.l.b16 %v486
    %v3118 = vunpack.c.h.b16 %v486
    %v3119 = vunpack.c.l.b16 %v487
    %v3120 = vunpack.c.h.b16 %v487
    %v3121 = vunpack.c.l.b16 %v488
    %v3122 = vunpack.c.h.b16 %v488
    %v3123 = vunpack.c.l.b16 %v489
    %v3124 = vunpack.c.h.b16 %v489
    %v3125 = vunpack.c.l.b16 %v490
    %v3126 = vunpack.c.h.b16 %v490
    %v3127 = vunpack.c.l.b16 %v491
    %v3128 = vunpack.c.h.b16 %v491
    %v3129 = vunpack.c.l.b16 %v492
    %v3130 = vunpack.c.h.b16 %v492
    %v3131 = vunpack.c.l.b16 %v493
    %v3132 = vunpack.c.h.b16 %v493
    %v3133 = vunpack.c.l.b16 %v494
    %v3134 = vunpack.c.h.b16 %v494
    %v3135 = vunpack.c.l.b16 %v495
    %v3136 = vunpack.c.h.b16 %v495
    %v3137 = vunpack.c.l.b16 %v496
    %v3138 = vunpack.c.h.b16 %v496
    %v3139 = vunpack.c.l.b16 %v497
    %v3140 = vunpack.c.h.b16 %v497
    %v3141 = vunpack.c.l.b16 %v498
    %v3142 = vunpack.c.h.b16 %v498
    %v3143 = vunpack.c.l.b16 %v499
    %v3144 = vunpack.c.h.b16 %v499
    %v3145 = vunpack.c.l.b16 %v500
    %v3146 = vunpack.c.h.b16 %v500
    %v3147 = vunpack.c.l.b16 %v501
    %v3148 = vunpack.c.h.b16 %v501
    %v3149 = vunpack.c.l.b16 %v502
    %v3150 = vunpack.c.h.b16 %v502
    %v3151 = vunpack.c.l.b16 %v503
    %v3152 = vunpack.c.h.b16 %v503
    %v3153 = vunpack.c.l.b16 %v504
    %v3154 = vunpack.c.h.b16 %v504
    %v3155 = vunpack.c.l.b16 %v505
    %v3156 = vunpack.c.h.b16 %v505
    %v3157 = vunpack.c.l.b16 %v506
    %v3158 = vunpack.c.h.b16 %v506
    %v3159 = vunpack.c.l.b16 %v507
    %v3160 = vunpack.c.h.b16 %v507
    %v3161 = vunpack.c.l.b16 %v508
    %v3162 = vunpack.c.h.b16 %v508
    %v3163 = vunpack.c.l.b16 %v509
    %v3164 = vunpack.c.h.b16 %v509
    %v3165 = vunpack.c.l.b16 %v510
    %v3166 = vunpack.c.h.b16 %v510
    %v3167 = vunpack.c.l.b16 %v511
    %v3168 = vunpack.c.h.b16 %v511
    %v3169 = vunpack.c.l.b16 %v512
    %v3170 = vunpack.c.h.b16 %v512
    %v3171 = vunpack.c.l.b16 %v513
    %v3172 = vunpack.c.h.b16 %v513
    %v3173 = vunpack.c.l.b16 %v514
    %v3174 = vunpack.c.h.b16 %v514
    %v3175 = vunpack.c.l.b16 %v515
    %v3176 = vunpack.c.h.b16 %v515
    %v3177 = vunpack.c.l.b16 %v516
    %v3178 = vunpack.c.h.b16 %v516
    %v3179 = vunpack.c.l.b16 %v517
    %v3180 = vunpack.c.h.b16 %v517
    %v3181 = vunpack.c.l.b16 %v518
    %v3182 = vunpack.c.h.b16 %v518
    %v3183 = vunpack.c.l.b16 %v519
    %v3184 = vunpack.c.h.b16 %v519
    %v3185 = vunpack.c.l.b16 %v520
    %v3186 = vunpack.c.h.b16 %v520
    %v3187 = vunpack.c.l.b16 %v521
    %v3188 = vunpack.c.h.b16 %v521
    %v3189 = vunpack.c.l.b16 %v522
    %v3190 = vunpack.c.h.b16 %v522
    %v3191 = vunpack.c.l.b16 %v523
    %v3192 = vunpack.c.h.b16 %v523
    %v3193 = vunpack.c.l.b16 %v524
    %v3194 = vunpack.c.h.b16 %v524
    %v3195 = vunpack.c.l.b16 %v525
    %v3196 = vunpack.c.h.b16 %v525
    %v3197 = vunpack.c.l.b16 %v526
    %v3198 = vunpack.c.h.b16 %v526
    %v3199 = vunpack.c.l.b16 %v527
    %v3200 = vunpack.c.h.b16 %v527
    %v3201 = vunpack.c.l.b16 %v528
    %v3202 = vunpack.c.h.b16 %v528
    %v3203 = vunpack.c.l.b16 %v529
    %v3204 = vunpack.c.h.b16 %v529
    %v3205 = vunpack.c.l.b16 %v530
    %v3206 = vunpack.c.h.b16 %v530
    %v3207 = vunpack.c.l.b16 %v531
    %v3208 = vunpack.c.h.b16 %v531
    %v3209 = vunpack.c.l.b16 %v532
    %v3210 = vunpack.c.h.b16 %v532
    %v3211 = vunpack.c.l.b16 %v533
    %v3212 = vunpack.c.h.b16 %v533
    %v3213 = vunpack.c.l.b16 %v534
    %v3214 = vunpack.c.h.b16 %v534
    %v3215 = vunpack.c.l.b16 %v535
    %v3216 = vunpack.c.h.b16 %v535
    %v3217 = vunpack.c.l.b16 %v536
    %v3218 = vunpack.c.h.b16 %v536
    %v3219 = vunpack.c.l.b16 %v537
    %v3220 = vunpack.c.h.b16 %v537
    %v3221 = vunpack.c.l.b16 %v538
    %v3222 = vunpack.c.h.b16 %v538
    %v3223 = vunpack.c.l.b16 %v539
    %v3224 = vunpack.c.h.b16 %v539
    %v3225 = vunpack.c.l.b16 %v540
    %v3226 = vunpack.c.h.b16 %v540
    %v3227 = vunpack.c.l.b16 %v541
    %v3228 = vunpack.c.h.b16 %v541
    %v3229 = vunpack.c.l.b16 %v542
    %v3230 = vunpack.c.h.b16 %v542
    %v3231 = vunpack.c.l.b16 %v543
    %v3232 = vunpack.c.h.b16 %v543
    %v3233 = vunpack.c.l.b16 %v544
    %v3234 = vunpack.c.h.b16 %v544
    %v3235 = vunpack.c.l.b16 %v545
    %v3236 = vunpack.c.h.b16 %v545
    %v3237 = vunpack.c.l.b16 %v546
    %v3238 = vunpack.c.h.b16 %v546
    %v3239 = vunpack.c.l.b16 %v547
    %v3240 = vunpack.c.h.b16 %v547
    %v3241 = vunpack.c.l.b16 %v548
    %v3242 = vunpack.c.h.b16 %v548
    %v3243 = vunpack.c.l.b16 %v549
    %v3244 = vunpack.c.h.b16 %v549
    %v3245 = vunpack.c.l.b16 %v550
    %v3246 = vunpack.c.h.b16 %v550
    %v3247 = vunpack.c.l.b16 %v551
    %v3248 = vunpack.c.h.b16 %v551
    %v3249 = vunpack.c.l.b16 %v552
    %v3250 = vunpack.c.h.b16 %v552
    %v3251 = vunpack.c.l.b16 %v553
    %v3252 = vunpack.c.h.b16 %v553
    %v3253 = vunpack.c.l.b16 %v554
    %v3254 = vunpack.c.h.b16 %v554
    %v3255 = vunpack.c.l.b16 %v555
    %v3256 = vunpack.c.h.b16 %v555
    %v3257 = vunpack.c.l.b16 %v556
    %v3258 = vunpack.c.h.b16 %v556
    %v3259 = vunpack.c.l.b16 %v557
    %v3260 = vunpack.c.h.b16 %v557
    %v3261 = vunpack.c.l.b16 %v558
    %v3262 = vunpack.c.h.b16 %v558
    %v3263 = vunpack.c.l.b16 %v559
    %v3264 = vunpack.c.h.b16 %v559
    %v3265 = vunpack.c.l.b16 %v560
    %v3266 = vunpack.c.h.b16 %v560
    %v3267 = vunpack.c.l.b16 %v561
    %v3268 = vunpack.c.h.b16 %v561
    %v3269 = vunpack.c.l.b16 %v562
    %v3270 = vunpack.c.h.b16 %v562
    %v3271 = vunpack.c.l.b16 %v563
    %v3272 = vunpack.c.h.b16 %v563
    %v3273 = vunpack.c.l.b16 %v564
    %v3274 = vunpack.c.h.b16 %v564
    %v3275 = vunpack.c.l.b16 %v565
    %v3276 = vunpack.c.h.b16 %v565
    %v3277 = vunpack.c.l.b16 %v566
    %v3278 = vunpack.c.h.b16 %v566
    %v3279 = vunpack.c.l.b16 %v567
    %v3280 = vunpack.c.h.b16 %v567
    %v3281 = vunpack.c.l.b16 %v568
    %v3282 = vunpack.c.h.b16 %v568
    %v3283 = vunpack.c.l.b16 %v569
    %v3284 = vunpack.c.h.b16 %v569
    %v3285 = vunpack.c.l.b16 %v570
    %v3286 = vunpack.c.h.b16 %v570
    %v3287 = vunpack.c.l.b16 %v571
    %v3288 = vunpack.c.h.b16 %v571
    %v3289 = vunpack.c.l.b16 %v572
    %v3290 = vunpack.c.h.b16 %v572
    %v3291 = vunpack.c.l.b16 %v573
    %v3292 = vunpack.c.h.b16 %v573
    %v3293 = vunpack.c.l.b16 %v574
    %v3294 = vunpack.c.h.b16 %v574
    %v3295 = vunpack.c.l.b16 %v575
    %v3296 = vunpack.c.h.b16 %v575
    %v3297 = vunpack.c.l.b16 %v576
    %v3298 = vunpack.c.h.b16 %v576
    %v3299 = vunpack.c.l.b16 %v577
    %v3300 = vunpack.c.h.b16 %v577
    %v3301 = vunpack.c.l.b16 %v578
    %v3302 = vunpack.c.h.b16 %v578
    %v3303 = vunpack.c.l.b16 %v579
    %v3304 = vunpack.c.h.b16 %v579
    %v3305 = vunpack.c.l.b16 %v580
    %v3306 = vunpack.c.h.b16 %v580
    %v3307 = vunpack.c.l.b16 %v581
    %v3308 = vunpack.c.h.b16 %v581
    %v3309 = vunpack.c.l.b16 %v582
    %v3310 = vunpack.c.h.b16 %v582
    %v3311 = vunpack.c.l.b16 %v583
    %v3312 = vunpack.c.h.b16 %v583
    %v3313 = vunpack.c.l.b16 %v584
    %v3314 = vunpack.c.h.b16 %v584
    %v3315 = vunpack.c.l.b16 %v585
    %v3316 = vunpack.c.h.b16 %v585
    %v3317 = vunpack.c.l.b16 %v586
    %v3318 = vunpack.c.h.b16 %v586
    %v3319 = vunpack.c.l.b16 %v587
    %v3320 = vunpack.c.h.b16 %v587
    %v3321 = vunpack.c.l.b16 %v588
    %v3322 = vunpack.c.h.b16 %v588
    %v3323 = vunpack.c.l.b16 %v589
    %v3324 = vunpack.c.h.b16 %v589
    %v3325 = vunpack.c.l.b16 %v590
    %v3326 = vunpack.c.h.b16 %v590
    %v3327 = vunpack.c.l.b16 %v591
    %v3328 = vunpack.c.h.b16 %v591
    %v3329 = vunpack.c.l.b16 %v592
    %v3330 = vunpack.c.h.b16 %v592
    %v3331 = vunpack.c.l.b16 %v593
    %v3332 = vunpack.c.h.b16 %v593
    %v3333 = vunpack.c.l.b16 %v594
    %v3334 = vunpack.c.h.b16 %v594
    %v3335 = vunpack.c.l.b16 %v595
    %v3336 = vunpack.c.h.b16 %v595
    %v3337 = vunpack.c.l.b16 %v596
    %v3338 = vunpack.c.h.b16 %v596
    %v3339 = vunpack.c.l.b16 %v597
    %v3340 = vunpack.c.h.b16 %v597
    %v3341 = vunpack.c.l.b16 %v598
    %v3342 = vunpack.c.h.b16 %v598
    %v3343 = vunpack.c.l.b16 %v599
    %v3344 = vunpack.c.h.b16 %v599
    %v3345 = vunpack.c.l.b16 %v600
    %v3346 = vunpack.c.h.b16 %v600
    %v3347 = vunpack.c.l.b16 %v601
    %v3348 = vunpack.c.h.b16 %v601
    %v3349 = vunpack.c.l.b16 %v602
    %v3350 = vunpack.c.h.b16 %v602
    %v3351 = vunpack.c.l.b16 %v603
    %v3352 = vunpack.c.h.b16 %v603
    %v3353 = vunpack.c.l.b16 %v604
    %v3354 = vunpack.c.h.b16 %v604
    %v3355 = vunpack.c.l.b16 %v605
    %v3356 = vunpack.c.h.b16 %v605
    %v3357 = vunpack.c.l.b16 %v606
    %v3358 = vunpack.c.h.b16 %v606
    %v3359 = vunpack.c.l.b16 %v607
    %v3360 = vunpack.c.h.b16 %v607
    %v3361 = vunpack.c.l.b16 %v608
    %v3362 = vunpack.c.h.b16 %v608
    %v3363 = vunpack.c.l.b16 %v609
    %v3364 = vunpack.c.h.b16 %v609
    %v3365 = vunpack.c.l.b16 %v610
    %v3366 = vunpack.c.h.b16 %v610
    %v3367 = vunpack.c.l.b16 %v611
    %v3368 = vunpack.c.h.b16 %v611
    %v3369 = vunpack.c.l.b16 %v612
    %v3370 = vunpack.c.h.b16 %v612
    %v3371 = vunpack.c.l.b16 %v613
    %v3372 = vunpack.c.h.b16 %v613
    %v3373 = vunpack.c.l.b16 %v614
    %v3374 = vunpack.c.h.b16 %v614
    %v3375 = vunpack.c.l.b16 %v615
    %v3376 = vunpack.c.h.b16 %v615
    %v3377 = vunpack.c.l.b16 %v616
    %v3378 = vunpack.c.h.b16 %v616
    %v3379 = vunpack.c.l.b16 %v617
    %v3380 = vunpack.c.h.b16 %v617
    %v3381 = vunpack.c.l.b16 %v618
    %v3382 = vunpack.c.h.b16 %v618
    %v3383 = vunpack.c.l.b16 %v619
    %v3384 = vunpack.c.h.b16 %v619
    %v3385 = vunpack.c.l.b16 %v620
    %v3386 = vunpack.c.h.b16 %v620
    %v3387 = vunpack.c.l.b16 %v621
    %v3388 = vunpack.c.h.b16 %v621
    %v3389 = vunpack.c.l.b16 %v622
    %v3390 = vunpack.c.h.b16 %v622
    %v3391 = vunpack.c.l.b16 %v623
    %v3392 = vunpack.c.h.b16 %v623
    %v3393 = vunpack.c.l.b16 %v624
    %v3394 = vunpack.c.h.b16 %v624
    %v3395 = vunpack.c.l.b16 %v625
    %v3396 = vunpack.c.h.b16 %v625
    %v3397 = vunpack.c.l.b16 %v626
    %v3398 = vunpack.c.h.b16 %v626
    %v3399 = vunpack.c.l.b16 %v627
    %v3400 = vunpack.c.h.b16 %v627
    %v3401 = vunpack.c.l.b16 %v628
    %v3402 = vunpack.c.h.b16 %v628
    %v3403 = vunpack.c.l.b16 %v629
    %v3404 = vunpack.c.h.b16 %v629
    %v3405 = vunpack.c.l.b16 %v630
    %v3406 = vunpack.c.h.b16 %v630
    %v3407 = vunpack.c.l.b16 %v631
    %v3408 = vunpack.c.h.b16 %v631
    %v3409 = vunpack.c.l.b16 %v632
    %v3410 = vunpack.c.h.b16 %v632
    %v3411 = vunpack.c.l.b16 %v633
    %v3412 = vunpack.c.h.b16 %v633
    %v3413 = vunpack.c.l.b16 %v634
    %v3414 = vunpack.c.h.b16 %v634
    %v3415 = vunpack.c.l.b16 %v635
    %v3416 = vunpack.c.h.b16 %v635
    %v3417 = vunpack.c.l.b16 %v636
    %v3418 = vunpack.c.h.b16 %v636
    %v3419 = vunpack.c.l.b16 %v637
    %v3420 = vunpack.c.h.b16 %v637
    %v3421 = vunpack.c.l.b16 %v638
    %v3422 = vunpack.c.h.b16 %v638
    %v3423 = vunpack.c.l.b16 %v639
    %v3424 = vunpack.c.h.b16 %v639
    %v3425 = vunpack.c.l.b16 %v640
    %v3426 = vunpack.c.h.b16 %v640
    %v3427 = vunpack.c.l.b16 %v641
    %v3428 = vunpack.c.h.b16 %v641
    %v3429 = vunpack.c.l.b16 %v642
    %v3430 = vunpack.c.h.b16 %v642
    %v3431 = vunpack.c.l.b16 %v643
    %v3432 = vunpack.c.h.b16 %v643
    %v3433 = vunpack.c.l.b16 %v644
    %v3434 = vunpack.c.h.b16 %v644
    %v3435 = vunpack.c.l.b16 %v645
    %v3436 = vunpack.c.h.b16 %v645
    %v3437 = vunpack.c.l.b16 %v646
    %v3438 = vunpack.c.h.b16 %v646
    %v3439 = vunpack.c.l.b16 %v647
    %v3440 = vunpack.c.h.b16 %v647
    %v3441 = vunpack.c.l.b16 %v648
    %v3442 = vunpack.c.h.b16 %v648
    %v3443 = vunpack.c.l.b16 %v649
    %v3444 = vunpack.c.h.b16 %v649
    %v3445 = vunpack.c.l.b16 %v650
    %v3446 = vunpack.c.h.b16 %v650
    %v3447 = vunpack.c.l.b16 %v651
    %v3448 = vunpack.c.h.b16 %v651
    %v3449 = vunpack.c.l.b16 %v652
    %v3450 = vunpack.c.h.b16 %v652
    %v3451 = vunpack.c.l.b16 %v653
    %v3452 = vunpack.c.h.b16 %v653
    %v3453 = vunpack.c.l.b16 %v654
    %v3454 = vunpack.c.h.b16 %v654
    %v3455 = vunpack.c.l.b16 %v655
    %v3456 = vunpack.c.h.b16 %v655
    %v3457 = vunpack.c.l.b16 %v656
    %v3458 = vunpack.c.h.b16 %v656
    %v3459 = vunpack.c.l.b16 %v657
    %v3460 = vunpack.c.h.b16 %v657
    %v3461 = vunpack.c.l.b16 %v658
    %v3462 = vunpack.c.h.b16 %v658
    %v3463 = vunpack.c.l.b16 %v659
    %v3464 = vunpack.c.h.b16 %v659
    %v3465 = vunpack.c.l.b16 %v660
    %v3466 = vunpack.c.h.b16 %v660
    %v3467 = vunpack.c.l.b16 %v661
    %v3468 = vunpack.c.h.b16 %v661
    %v3469 = vunpack.c.l.b16 %v662
    %v3470 = vunpack.c.h.b16 %v662
    %v3471 = vunpack.c.l.b16 %v663
    %v3472 = vunpack.c.h.b16 %v663
    %v3473 = vunpack.c.l.b16 %v664
    %v3474 = vunpack.c.h.b16 %v664
    %v3475 = vunpack.c.l.b16 %v665
    %v3476 = vunpack.c.h.b16 %v665
    %v3477 = vunpack.c.l.b16 %v666
    %v3478 = vunpack.c.h.b16 %v666
    %v3479 = vunpack.c.l.b16 %v667
    %v3480 = vunpack.c.h.b16 %v667
    %v3481 = vunpack.c.l.b16 %v668
    %v3482 = vunpack.c.h.b16 %v668
    %v3483 = vunpack.c.l.b16 %v669
    %v3484 = vunpack.c.h.b16 %v669
    %v3485 = vunpack.c.l.b16 %v670
    %v3486 = vunpack.c.h.b16 %v670
    %v3487 = vunpack.c.l.b16 %v671
    %v3488 = vunpack.c.h.b16 %v671
    %v3489 = vunpack.c.l.b16 %v672
    %v3490 = vunpack.c.h.b16 %v672
    %v3491 = vunpack.c.l.b16 %v673
    %v3492 = vunpack.c.h.b16 %v673
    %v3493 = vunpack.c.l.b16 %v674
    %v3494 = vunpack.c.h.b16 %v674
    %v3495 = vunpack.c.l.b16 %v675
    %v3496 = vunpack.c.h.b16 %v675
    %v3497 = vunpack.c.l.b16 %v676
    %v3498 = vunpack.c.h.b16 %v676
    %v3499 = vunpack.c.l.b16 %v677
    %v3500 = vunpack.c.h.b16 %v677
    %v3501 = vunpack.c.l.b16 %v678
    %v3502 = vunpack.c.h.b16 %v678
    %v3503 = vunpack.c.l.b16 %v679
    %v3504 = vunpack.c.h.b16 %v679
    %v3505 = vunpack.c.l.b16 %v680
    %v3506 = vunpack.c.h.b16 %v680
    %v3507 = vunpack.c.l.b16 %v681
    %v3508 = vunpack.c.h.b16 %v681
    %v3509 = vunpack.c.l.b16 %v682
    %v3510 = vunpack.c.h.b16 %v682
    %v3511 = vunpack.c.l.b16 %v683
    %v3512 = vunpack.c.h.b16 %v683
    %v3513 = vunpack.c.l.b16 %v684
    %v3514 = vunpack.c.h.b16 %v684
    %v3515 = vunpack.c.l.b16 %v685
    %v3516 = vunpack.c.h.b16 %v685
    %v3517 = vunpack.c.l.b16 %v686
    %v3518 = vunpack.c.h.b16 %v686
    %v3519 = vunpack.c.l.b16 %v687
    %v3520 = vunpack.c.h.b16 %v687
    %v3521 = vunpack.c.l.b16 %v688
    %v3522 = vunpack.c.h.b16 %v688
    %v3523 = vunpack.c.l.b16 %v689
    %v3524 = vunpack.c.h.b16 %v689
    %v3525 = vunpack.c.l.b16 %v690
    %v3526 = vunpack.c.h.b16 %v690
    %v3527 = vunpack.c.l.b16 %v691
    %v3528 = vunpack.c.h.b16 %v691
    %v3529 = vunpack.c.l.b16 %v692
    %v3530 = vunpack.c.h.b16 %v692
    %v3531 = vunpack.c.l.b16 %v693
    %v3532 = vunpack.c.h.b16 %v693
    %v3533 = vunpack.c.l.b16 %v694
    %v3534 = vunpack.c.h.b16 %v694
    %v3535 = vunpack.c.l.b16 %v695
    %v3536 = vunpack.c.h.b16 %v695
    %v3537 = vunpack.c.l.b16 %v696
    %v3538 = vunpack.c.h.b16 %v696
    %v3539 = vunpack.c.l.b16 %v697
    %v3540 = vunpack.c.h.b16 %v697
    %v3541 = vunpack.c.l.b16 %v698
    %v3542 = vunpack.c.h.b16 %v698
    %v3543 = vunpack.c.l.b16 %v699
    %v3544 = vunpack.c.h.b16 %v699
    %v3545 = vunpack.c.l.b16 %v700
    %v3546 = vunpack.c.h.b16 %v700
    %v3547 = vunpack.c.l.b16 %v701
    %v3548 = vunpack.c.h.b16 %v701
    %v3549 = vunpack.c.l.b16 %v702
    %v3550 = vunpack.c.h.b16 %v702
    %v3551 = vunpack.c.l.b16 %v703
    %v3552 = vunpack.c.h.b16 %v703
    %v3553 = vunpack.c.l.b16 %v704
    %v3554 = vunpack.c.h.b16 %v704
    %v3555 = vunpack.c.l.b16 %v705
    %v3556 = vunpack.c.h.b16 %v705
    %v3557 = vunpack.c.l.b16 %v706
    %v3558 = vunpack.c.h.b16 %v706
    %v3559 = vunpack.c.l.b16 %v707
    %v3560 = vunpack.c.h.b16 %v707
    %v3561 = vunpack.c.l.b16 %v708
    %v3562 = vunpack.c.h.b16 %v708
    %v3563 = vunpack.c.l.b16 %v709
    %v3564 = vunpack.c.h.b16 %v709
    %v3565 = vunpack.c.l.b16 %v710
    %v3566 = vunpack.c.h.b16 %v710
    %v3567 = vunpack.c.l.b16 %v711
    %v3568 = vunpack.c.h.b16 %v711
    %v3569 = vunpack.c.l.b16 %v712
    %v3570 = vunpack.c.h.b16 %v712
    %v3571 = vunpack.c.l.b16 %v713
    %v3572 = vunpack.c.h.b16 %v713
    %v3573 = vunpack.c.l.b16 %v714
    %v3574 = vunpack.c.h.b16 %v714
    %v3575 = vunpack.c.l.b16 %v715
    %v3576 = vunpack.c.h.b16 %v715
    %v3577 = vunpack.c.l.b16 %v716
    %v3578 = vunpack.c.h.b16 %v716
    %v3579 = vunpack.c.l.b16 %v717
    %v3580 = vunpack.c.h.b16 %v717
    %v3581 = vunpack.c.l.b16 %v718
    %v3582 = vunpack.c.h.b16 %v718
    %v3583 = vunpack.c.l.b16 %v719
    %v3584 = vunpack.c.h.b16 %v719
    %v3585 = vunpack.c.l.b16 %v720
    %v3586 = vunpack.c.h.b16 %v720
    %v3587 = vunpack.c.l.b16 %v721
    %v3588 = vunpack.c.h.b16 %v721
    %v3589 = vunpack.c.l.b16 %v722
    %v3590 = vunpack.c.h.b16 %v722
    %v3591 = vunpack.c.l.b16 %v723
    %v3592 = vunpack.c.h.b16 %v723
    %v3593 = vunpack.c.l.b16 %v724
    %v3594 = vunpack.c.h.b16 %v724
    %v3595 = vunpack.c.l.b16 %v725
    %v3596 = vunpack.c.h.b16 %v725
    %v3597 = vunpack.c.l.b16 %v726
    %v3598 = vunpack.c.h.b16 %v726
    %v3599 = vunpack.c.l.b16 %v727
    %v3600 = vunpack.c.h.b16 %v727
    %v3601 = vunpack.c.l.b16 %v728
    %v3602 = vunpack.c.h.b16 %v728
    %v3603 = vunpack.c.l.b16 %v729
    %v3604 = vunpack.c.h.b16 %v729
    %v3605 = vunpack.c.l.b16 %v730
    %v3606 = vunpack.c.h.b16 %v730
    %v3607 = vunpack.c.l.b16 %v731
    %v3608 = vunpack.c.h.b16 %v731
    %v3609 = vunpack.c.l.b16 %v732
    %v3610 = vunpack.c.h.b16 %v732
    %v3611 = vunpack.c.l.b16 %v733
    %v3612 = vunpack.c.h.b16 %v733
    %v3613 = vunpack.c.l.b16 %v734
    %v3614 = vunpack.c.h.b16 %v734
    %v3615 = vunpack.c.l.b16 %v735
    %v3616 = vunpack.c.h.b16 %v735
    %v3617 = vunpack.c.l.b16 %v736
    %v3618 = vunpack.c.h.b16 %v736
    %v3619 = vunpack.c.l.b16 %v737
    %v3620 = vunpack.c.h.b16 %v737
    %v3621 = vunpack.c.l.b16 %v738
    %v3622 = vunpack.c.h.b16 %v738
    %v3623 = vunpack.c.l.b16 %v739
    %v3624 = vunpack.c.h.b16 %v739
    %v3625 = vunpack.c.l.b16 %v740
    %v3626 = vunpack.c.h.b16 %v740
    %v3627 = vunpack.c.l.b16 %v741
    %v3628 = vunpack.c.h.b16 %v741
    %v3629 = vunpack.c.l.b16 %v742
    %v3630 = vunpack.c.h.b16 %v742
    %v3631 = vunpack.c.l.b16 %v743
    %v3632 = vunpack.c.h.b16 %v743
    %v3633 = vunpack.c.l.b16 %v744
    %v3634 = vunpack.c.h.b16 %v744
    %v3635 = vunpack.c.l.b16 %v745
    %v3636 = vunpack.c.h.b16 %v745
    %v3637 = vunpack.c.l.b16 %v746
    %v3638 = vunpack.c.h.b16 %v746
    %v3639 = vunpack.c.l.b16 %v747
    %v3640 = vunpack.c.h.b16 %v747
    %v3641 = vunpack.c.l.b16 %v748
    %v3642 = vunpack.c.h.b16 %v748
    %v3643 = vunpack.c.l.b16 %v749
    %v3644 = vunpack.c.h.b16 %v749
    %v3645 = vunpack.c.l.b16 %v750
    %v3646 = vunpack.c.h.b16 %v750
    %v3647 = vunpack.c.l.b16 %v751
    %v3648 = vunpack.c.h.b16 %v751
    %v3649 = vunpack.c.l.b16 %v752
    %v3650 = vunpack.c.h.b16 %v752
    %v3651 = vunpack.c.l.b16 %v753
    %v3652 = vunpack.c.h.b16 %v753
    %v3653 = vunpack.c.l.b16 %v754
    %v3654 = vunpack.c.h.b16 %v754
    %v3655 = vunpack.c.l.b16 %v755
    %v3656 = vunpack.c.h.b16 %v755
    %v3657 = vunpack.c.l.b16 %v756
    %v3658 = vunpack.c.h.b16 %v756
    %v3659 = vunpack.c.l.b16 %v757
    %v3660 = vunpack.c.h.b16 %v757
    %v3661 = vunpack.c.l.b16 %v758
    %v3662 = vunpack.c.h.b16 %v758
    %v3663 = vunpack.c.l.b16 %v759
    %v3664 = vunpack.c.h.b16 %v759
    %v3665 = vunpack.c.l.b16 %v760
    %v3666 = vunpack.c.h.b16 %v760
    %v3667 = vunpack.c.l.b16 %v761
    %v3668 = vunpack.c.h.b16 %v761
    %v3669 = vunpack.c.l.b16 %v762
    %v3670 = vunpack.c.h.b16 %v762
    %v3671 = vunpack.c.l.b16 %v763
    %v3672 = vunpack.c.h.b16 %v763
    %v3673 = vunpack.c.l.b16 %v764
    %v3674 = vunpack.c.h.b16 %v764
    %v3675 = vunpack.c.l.b16 %v765
    %v3676 = vunpack.c.h.b16 %v765
    %v3677 = vunpack.c.l.b16 %v766
    %v3678 = vunpack.c.h.b16 %v766
    %v3679 = vunpack.c.l.b16 %v767
    %v3680 = vunpack.c.h.b16 %v767
    %v3681 = vunpack.c.l.b16 %v768
    %v3682 = vunpack.c.h.b16 %v768
    %v3683 = vunpack.c.l.b16 %v769
    %v3684 = vunpack.c.h.b16 %v769
    %v3685 = vunpack.c.l.b16 %v770
    %v3686 = vunpack.c.h.b16 %v770
    %v3687 = vunpack.c.l.b16 %v771
    %v3688 = vunpack.c.h.b16 %v771
    %v3689 = vunpack.c.l.b16 %v772
    %v3690 = vunpack.c.h.b16 %v772
    %v3691 = vunpack.c.l.b16 %v773
    %v3692 = vunpack.c.h.b16 %v773
    %v3693 = vunpack.c.l.b16 %v774
    %v3694 = vunpack.c.h.b16 %v774
    %v3695 = vunpack.c.l.b16 %v775
    %v3696 = vunpack.c.h.b16 %v775
    %v3697 = vunpack.c.l.b16 %v776
    %v3698 = vunpack.c.h.b16 %v776
    %v3699 = vunpack.c.l.b16 %v777
    %v3700 = vunpack.c.h.b16 %v777
    %v3701 = vunpack.c.l.b16 %v778
    %v3702 = vunpack.c.h.b16 %v778
    %v3703 = vunpack.c.l.b16 %v779
    %v3704 = vunpack.c.h.b16 %v779
    %v3705 = vunpack.c.l.b16 %v780
    %v3706 = vunpack.c.h.b16 %v780
    %v3707 = vunpack.c.l.b16 %v781
    %v3708 = vunpack.c.h.b16 %v781
    %v3709 = vunpack.c.l.b16 %v782
    %v3710 = vunpack.c.h.b16 %v782
    %v3711 = vunpack.c.l.b16 %v783
    %v3712 = vunpack.c.h.b16 %v783
    %v3713 = vunpack.c.l.b16 %v784
    %v3714 = vunpack.c.h.b16 %v784
    %v3715 = vunpack.c.l.b16 %v785
    %v3716 = vunpack.c.h.b16 %v785
    %v3717 = vunpack.c.l.b16 %v786
    %v3718 = vunpack.c.h.b16 %v786
    %v3719 = vunpack.c.l.b16 %v787
    %v3720 = vunpack.c.h.b16 %v787
    %v3721 = vunpack.c.l.b16 %v788
    %v3722 = vunpack.c.h.b16 %v788
    %v3723 = vunpack.c.l.b16 %v789
    %v3724 = vunpack.c.h.b16 %v789
    %v3725 = vunpack.c.l.b16 %v790
    %v3726 = vunpack.c.h.b16 %v790
    %v3727 = vunpack.c.l.b16 %v791
    %v3728 = vunpack.c.h.b16 %v791
    %v3729 = vunpack.c.l.b16 %v792
    %v3730 = vunpack.c.h.b16 %v792
    %v3731 = vunpack.c.l.b16 %v793
    %v3732 = vunpack.c.h.b16 %v793
    %v3733 = vunpack.c.l.b16 %v794
    %v3734 = vunpack.c.h.b16 %v794
    %v3735 = vunpack.c.l.b16 %v795
    %v3736 = vunpack.c.h.b16 %v795
    %v3737 = vunpack.c.l.b16 %v796
    %v3738 = vunpack.c.h.b16 %v796
    %v3739 = vunpack.c.l.b16 %v797
    %v3740 = vunpack.c.h.b16 %v797
    %v3741 = vunpack.c.l.b16 %v798
    %v3742 = vunpack.c.h.b16 %v798
    %v3743 = vunpack.c.l.b16 %v799
    %v3744 = vunpack.c.h.b16 %v799
    %v3745 = vunpack.c.l.b16 %v800
    %v3746 = vunpack.c.h.b16 %v800
    %v3747 = vunpack.c.l.b16 %v801
    %v3748 = vunpack.c.h.b16 %v801
    %v3749 = vunpack.c.l.b16 %v802
    %v3750 = vunpack.c.h.b16 %v802
    %v3751 = vunpack.c.l.b16 %v803
    %v3752 = vunpack.c.h.b16 %v803
    %v3753 = vunpack.c.l.b16 %v804
    %v3754 = vunpack.c.h.b16 %v804
    %v3755 = vunpack.c.l.b16 %v805
    %v3756 = vunpack.c.h.b16 %v805
    %v3757 = vunpack.c.l.b16 %v806
    %v3758 = vunpack.c.h.b16 %v806
    %v3759 = vunpack.c.l.b16 %v807
    %v3760 = vunpack.c.h.b16 %v807
    %v3761 = vunpack.c.l.b16 %v808
    %v3762 = vunpack.c.h.b16 %v808
    %v3763 = vunpack.c.l.b16 %v809
    %v3764 = vunpack.c.h.b16 %v809
    %v3765 = vunpack.c.l.b16 %v810
    %v3766 = vunpack.c.h.b16 %v810
    %v3767 = vunpack.c.l.b16 %v811
    %v3768 = vunpack.c.h.b16 %v811
    %v3769 = vunpack.c.l.b16 %v812
    %v3770 = vunpack.c.h.b16 %v812
    %v3771 = vunpack.c.l.b16 %v813
    %v3772 = vunpack.c.h.b16 %v813
    %v3773 = vunpack.c.l.b16 %v814
    %v3774 = vunpack.c.h.b16 %v814
    %v3775 = vunpack.c.l.b16 %v815
    %v3776 = vunpack.c.h.b16 %v815
    %v3777 = vunpack.c.l.b16 %v816
    %v3778 = vunpack.c.h.b16 %v816
    %v3779 = vunpack.c.l.b16 %v817
    %v3780 = vunpack.c.h.b16 %v817
    %v3781 = vunpack.c.l.b16 %v818
    %v3782 = vunpack.c.h.b16 %v818
    %v3783 = vunpack.c.l.b16 %v819
    %v3784 = vunpack.c.h.b16 %v819
    %v3785 = vunpack.c.l.b16 %v820
    %v3786 = vunpack.c.h.b16 %v820
    %v3787 = vunpack.c.l.b16 %v821
    %v3788 = vunpack.c.h.b16 %v821
    %v3789 = vunpack.c.l.b16 %v822
    %v3790 = vunpack.c.h.b16 %v822
    %v3791 = vunpack.c.l.b16 %v823
    %v3792 = vunpack.c.h.b16 %v823
    %v3793 = vunpack.c.l.b16 %v824
    %v3794 = vunpack.c.h.b16 %v824
    %v3795 = vunpack.c.l.b16 %v825
    %v3796 = vunpack.c.h.b16 %v825
    %v3797 = vunpack.c.l.b16 %v826
    %v3798 = vunpack.c.h.b16 %v826
    %v3799 = vunpack.c.l.b16 %v827
    %v3800 = vunpack.c.h.b16 %v827
    %v3801 = vunpack.c.l.b16 %v828
    %v3802 = vunpack.c.h.b16 %v828
    %v3803 = vunpack.c.l.b16 %v829
    %v3804 = vunpack.c.h.b16 %v829
    %v3805 = vunpack.c.l.b16 %v830
    %v3806 = vunpack.c.h.b16 %v830
    %v3807 = vunpack.c.l.b16 %v831
    %v3808 = vunpack.c.h.b16 %v831
    %v3809 = vunpack.c.l.b16 %v832
    %v3810 = vunpack.c.h.b16 %v832
    %v3811 = vunpack.c.l.b16 %v833
    %v3812 = vunpack.c.h.b16 %v833
    %v3813 = vunpack.c.l.b16 %v834
    %v3814 = vunpack.c.h.b16 %v834
    %v3815 = vunpack.c.l.b16 %v835
    %v3816 = vunpack.c.h.b16 %v835
    %v3817 = vunpack.c.l.b16 %v836
    %v3818 = vunpack.c.h.b16 %v836
    %v3819 = vunpack.c.l.b16 %v837
    %v3820 = vunpack.c.h.b16 %v837
    %v3821 = vunpack.c.l.b16 %v838
    %v3822 = vunpack.c.h.b16 %v838
    %v3823 = vunpack.c.l.b16 %v839
    %v3824 = vunpack.c.h.b16 %v839
    %v3825 = vunpack.c.l.b16 %v840
    %v3826 = vunpack.c.h.b16 %v840
    %v3827 = vunpack.c.l.b16 %v841
    %v3828 = vunpack.c.h.b16 %v841
    %v3829 = vunpack.c.l.b16 %v842
    %v3830 = vunpack.c.h.b16 %v842
    %v3831 = vunpack.c.l.b16 %v843
    %v3832 = vunpack.c.h.b16 %v843
    %v3833 = vunpack.c.l.b16 %v844
    %v3834 = vunpack.c.h.b16 %v844
    %v3835 = vunpack.c.l.b16 %v845
    %v3836 = vunpack.c.h.b16 %v845
    %v3837 = vunpack.c.l.b16 %v846
    %v3838 = vunpack.c.h.b16 %v846
    %v3839 = vunpack.c.l.b16 %v847
    %v3840 = vunpack.c.h.b16 %v847
    %v3841 = vunpack.c.l.b16 %v848
    %v3842 = vunpack.c.h.b16 %v848
    %v3843 = vunpack.c.l.b16 %v849
    %v3844 = vunpack.c.h.b16 %v849
    %v3845 = vunpack.c.l.b16 %v850
    %v3846 = vunpack.c.h.b16 %v850
    %v3847 = vunpack.c.l.b16 %v851
    %v3848 = vunpack.c.h.b16 %v851
    %v3849 = vunpack.c.l.b16 %v852
    %v3850 = vunpack.c.h.b16 %v852
    %v3851 = vunpack.c.l.b16 %v853
    %v3852 = vunpack.c.h.b16 %v853
    %v3853 = vunpack.c.l.b16 %v854
    %v3854 = vunpack.c.h.b16 %v854
    %v3855 = vunpack.c.l.b16 %v855
    %v3856 = vunpack.c.h.b16 %v855
    %v3857 = vunpack.c.l.b16 %v856
    %v3858 = vunpack.c.h.b16 %v856
    %v3859 = vunpack.c.l.b16 %v857
    %v3860 = vunpack.c.h.b16 %v857
    %v3861 = vunpack.c.l.b16 %v858
    %v3862 = vunpack.c.h.b16 %v858
    %v3863 = vunpack.c.l.b16 %v859
    %v3864 = vunpack.c.h.b16 %v859
    %v3865 = vunpack.c.l.b16 %v860
    %v3866 = vunpack.c.h.b16 %v860
    %v3867 = vunpack.c.l.b16 %v861
    %v3868 = vunpack.c.h.b16 %v861
    %v3869 = vunpack.c.l.b16 %v862
    %v3870 = vunpack.c.h.b16 %v862
    %v3871 = vunpack.c.l.b16 %v863
    %v3872 = vunpack.c.h.b16 %v863
    %v3873 = vunpack.c.l.b16 %v864
    %v3874 = vunpack.c.h.b16 %v864
    %v3875 = vunpack.c.l.b16 %v865
    %v3876 = vunpack.c.h.b16 %v865
    %v3877 = vunpack.c.l.b16 %v866
    %v3878 = vunpack.c.h.b16 %v866
    %v3879 = vunpack.c.l.b16 %v867
    %v3880 = vunpack.c.h.b16 %v867
    %v3881 = vunpack.c.l.b16 %v868
    %v3882 = vunpack.c.h.b16 %v868
    %v3883 = vunpack.c.l.b16 %v869
    %v3884 = vunpack.c.h.b16 %v869
    %v3885 = vunpack.c.l.b16 %v870
    %v3886 = vunpack.c.h.b16 %v870
    %v3887 = vunpack.c.l.b16 %v871
    %v3888 = vunpack.c.h.b16 %v871
    %v3889 = vunpack.c.l.b16 %v872
    %v3890 = vunpack.c.h.b16 %v872
    %v3891 = vunpack.c.l.b16 %v873
    %v3892 = vunpack.c.h.b16 %v873
    %v3893 = vunpack.c.l.b16 %v874
    %v3894 = vunpack.c.h.b16 %v874
    %v3895 = vunpack.c.l.b16 %v875
    %v3896 = vunpack.c.h.b16 %v875
    %v3897 = vunpack.c.l.b16 %v876
    %v3898 = vunpack.c.h.b16 %v876
    %v3899 = vunpack.c.l.b16 %v877
    %v3900 = vunpack.c.h.b16 %v877
    %v3901 = vunpack.c.l.b16 %v878
    %v3902 = vunpack.c.h.b16 %v878
    %v3903 = vunpack.c.l.b16 %v879
    %v3904 = vunpack.c.h.b16 %v879
    %v3905 = vunpack.c.l.b16 %v880
    %v3906 = vunpack.c.h.b16 %v880
    %v3907 = vunpack.c.l.b16 %v881
    %v3908 = vunpack.c.h.b16 %v881
    %v3909 = vunpack.c.l.b16 %v882
    %v3910 = vunpack.c.h.b16 %v882
    %v3911 = vunpack.c.l.b16 %v883
    %v3912 = vunpack.c.h.b16 %v883
    %v3913 = vunpack.c.l.b16 %v884
    %v3914 = vunpack.c.h.b16 %v884
    %v3915 = vunpack.c.l.b16 %v885
    %v3916 = vunpack.c.h.b16 %v885
    %v3917 = vunpack.c.l.b16 %v886
    %v3918 = vunpack.c.h.b16 %v886
    %v3919 = vunpack.c.l.b16 %v887
    %v3920 = vunpack.c.h.b16 %v887
    %v3921 = vunpack.c.l.b16 %v888
    %v3922 = vunpack.c.h.b16 %v888
    %v3923 = vunpack.c.l.b16 %v889
    %v3924 = vunpack.c.h.b16 %v889
    %v3925 = vunpack.c.l.b16 %v890
    %v3926 = vunpack.c.h.b16 %v890
    %v3927 = vunpack.c.l.b16 %v891
    %v3928 = vunpack.c.h.b16 %v891
    %v3929 = vunpack.c.l.b16 %v892
    %v3930 = vunpack.c.h.b16 %v892
    %v3931 = vunpack.c.l.b16 %v893
    %v3932 = vunpack.c.h.b16 %v893
    %v3933 = vunpack.c.l.b16 %v894
    %v3934 = vunpack.c.h.b16 %v894
    %v3935 = vunpack.c.l.b16 %v895
    %v3936 = vunpack.c.h.b16 %v895
    %v3937 = vunpack.c.l.b16 %v896
    %v3938 = vunpack.c.h.b16 %v896
    %v3939 = vunpack.c.l.b16 %v897
    %v3940 = vunpack.c.h.b16 %v897
    %v3941 = vunpack.c.l.b16 %v898
    %v3942 = vunpack.c.h.b16 %v898
    %v3943 = vunpack.c.l.b16 %v899
    %v3944 = vunpack.c.h.b16 %v899
    %v3945 = vunpack.c.l.b16 %v900
    %v3946 = vunpack.c.h.b16 %v900
    %v3947 = vunpack.c.l.b16 %v901
    %v3948 = vunpack.c.h.b16 %v901
    %v3949 = vunpack.c.l.b16 %v902
    %v3950 = vunpack.c.h.b16 %v902
    %v3951 = vunpack.c.l.b16 %v903
    %v3952 = vunpack.c.h.b16 %v903
    %v3953 = vunpack.c.l.b16 %v904
    %v3954 = vunpack.c.h.b16 %v904
    %v3955 = vunpack.c.l.b16 %v905
    %v3956 = vunpack.c.h.b16 %v905
    %v3957 = vunpack.c.l.b16 %v906
    %v3958 = vunpack.c.h.b16 %v906
    %v3959 = vunpack.c.l.b16 %v907
    %v3960 = vunpack.c.h.b16 %v907
    %v3961 = vunpack.c.l.b16 %v908
    %v3962 = vunpack.c.h.b16 %v908
    %v3963 = vunpack.c.l.b16 %v909
    %v3964 = vunpack.c.h.b16 %v909
    %v3965 = vunpack.c.l.b16 %v910
    %v3966 = vunpack.c.h.b16 %v910
    %v3967 = vunpack.c.l.b16 %v911
    %v3968 = vunpack.c.h.b16 %v911
    %v3969 = vunpack.c.l.b16 %v912
    %v3970 = vunpack.c.h.b16 %v912
    %v3971 = vunpack.c.l.b16 %v913
    %v3972 = vunpack.c.h.b16 %v913
    %v3973 = vunpack.c.l.b16 %v914
    %v3974 = vunpack.c.h.b16 %v914
    %v3975 = vunpack.c.l.b16 %v915
    %v3976 = vunpack.c.h.b16 %v915
    %v3977 = vunpack.c.l.b16 %v916
    %v3978 = vunpack.c.h.b16 %v916
    %v3979 = vunpack.c.l.b16 %v917
    %v3980 = vunpack.c.h.b16 %v917
    %v3981 = vunpack.c.l.b16 %v918
    %v3982 = vunpack.c.h.b16 %v918
    %v3983 = vunpack.c.l.b16 %v919
    %v3984 = vunpack.c.h.b16 %v919
    %v3985 = vunpack.c.l.b16 %v920
    %v3986 = vunpack.c.h.b16 %v920
    %v3987 = vunpack.c.l.b16 %v921
    %v3988 = vunpack.c.h.b16 %v921
    %v3989 = vunpack.c.l.b16 %v922
    %v3990 = vunpack.c.h.b16 %v922
    %v3991 = vunpack.c.l.b16 %v923
    %v3992 = vunpack.c.h.b16 %v923
    %v3993 = vunpack.c.l.b16 %v924
    %v3994 = vunpack.c.h.b16 %v924
    %v3995 = vunpack.c.l.b16 %v925
    %v3996 = vunpack.c.h.b16 %v925
    %v3997 = vunpack.c.l.b16 %v926
    %v3998 = vunpack.c.h.b16 %v926
    %v3999 = vunpack.c.l.b16 %v927
    %v4000 = vunpack.c.h.b16 %v927
    %v4001 = vunpack.c.l.b16 %v928
    %v4002 = vunpack.c.h.b16 %v928
    %v4003 = vunpack.c.l.b16 %v929
    %v4004 = vunpack.c.h.b16 %v929
    %v4005 = vunpack.c.l.b16 %v930
    %v4006 = vunpack.c.h.b16 %v930
    %v4007 = vunpack.c.l.b16 %v931
    %v4008 = vunpack.c.h.b16 %v931
    %v4009 = vunpack.c.l.b16 %v932
    %v4010 = vunpack.c.h.b16 %v932
    %v4011 = vunpack.c.l.b16 %v933
    %v4012 = vunpack.c.h.b16 %v933
    %v4013 = vunpack.c.l.b16 %v934
    %v4014 = vunpack.c.h.b16 %v934
    %v4015 = vunpack.c.l.b16 %v935
    %v4016 = vunpack.c.h.b16 %v935
    %v4017 = vunpack.c.l.b16 %v936
    %v4018 = vunpack.c.h.b16 %v936
    %v4019 = vunpack.c.l.b16 %v937
    %v4020 = vunpack.c.h.b16 %v937
    %v4021 = vunpack.c.l.b16 %v938
    %v4022 = vunpack.c.h.b16 %v938
    %v4023 = vunpack.c.l.b16 %v939
    %v4024 = vunpack.c.h.b16 %v939
    %v4025 = vunpack.c.l.b16 %v940
    %v4026 = vunpack.c.h.b16 %v940
    %v4027 = vunpack.c.l.b16 %v941
    %v4028 = vunpack.c.h.b16 %v941
    %v4029 = vunpack.c.l.b16 %v942
    %v4030 = vunpack.c.h.b16 %v942
    %v4031 = vunpack.c.l.b16 %v943
    %v4032 = vunpack.c.h.b16 %v943
    %v4033 = vunpack.c.l.b16 %v944
    %v4034 = vunpack.c.h.b16 %v944
    %v4035 = vunpack.c.l.b16 %v945
    %v4036 = vunpack.c.h.b16 %v945
    %v4037 = vunpack.c.l.b16 %v946
    %v4038 = vunpack.c.h.b16 %v946
    %v4039 = vunpack.c.l.b16 %v947
    %v4040 = vunpack.c.h.b16 %v947
    %v4041 = vunpack.c.l.b16 %v948
    %v4042 = vunpack.c.h.b16 %v948
    %v4043 = vunpack.c.l.b16 %v949
    %v4044 = vunpack.c.h.b16 %v949
    %v4045 = vunpack.c.l.b16 %v950
    %v4046 = vunpack.c.h.b16 %v950
    %v4047 = vunpack.c.l.b16 %v951
    %v4048 = vunpack.c.h.b16 %v951
    %v4049 = vunpack.c.l.b16 %v952
    %v4050 = vunpack.c.h.b16 %v952
    %v4051 = vunpack.c.l.b16 %v953
    %v4052 = vunpack.c.h.b16 %v953
    %v4053 = vunpack.c.l.b16 %v954
    %v4054 = vunpack.c.h.b16 %v954
    %v4055 = vunpack.c.l.b16 %v955
    %v4056 = vunpack.c.h.b16 %v955
    %v4057 = vunpack.c.l.b16 %v956
    %v4058 = vunpack.c.h.b16 %v956
    %v4059 = vunpack.c.l.b16 %v957
    %v4060 = vunpack.c.h.b16 %v957
    %v4061 = vunpack.c.l.b16 %v958
    %v4062 = vunpack.c.h.b16 %v958
    %v4063 = vunpack.c.l.b16 %v959
    %v4064 = vunpack.c.h.b16 %v959
    %v4065 = vunpack.c.l.b16 %v960
    %v4066 = vunpack.c.h.b16 %v960
    %v4067 = vunpack.c.l.b16 %v961
    %v4068 = vunpack.c.h.b16 %v961
    %v4069 = vunpack.c.l.b16 %v962
    %v4070 = vunpack.c.h.b16 %v962
    %v4071 = vunpack.c.l.b16 %v963
    %v4072 = vunpack.c.h.b16 %v963
    %v4073 = vunpack.c.l.b16 %v964
    %v4074 = vunpack.c.h.b16 %v964
    %v4075 = vunpack.c.l.b16 %v965
    %v4076 = vunpack.c.h.b16 %v965
    %v4077 = vunpack.c.l.b16 %v966
    %v4078 = vunpack.c.h.b16 %v966
    %v4079 = vunpack.c.l.b16 %v967
    %v4080 = vunpack.c.h.b16 %v967
    %v4081 = vunpack.c.l.b16 %v968
    %v4082 = vunpack.c.h.b16 %v968
    %v4083 = vunpack.c.l.b16 %v969
    %v4084 = vunpack.c.h.b16 %v969
    %v4085 = vunpack.c.l.b16 %v970
    %v4086 = vunpack.c.h.b16 %v970
    %v4087 = vunpack.c.l.b16 %v971
    %v4088 = vunpack.c.h.b16 %v971
    %v4089 = vunpack.c.l.b16 %v972
    %v4090 = vunpack.c.h.b16 %v972
    %v4091 = vunpack.c.l.b16 %v973
    %v4092 = vunpack.c.h.b16 %v973
    %v4093 = vunpack.c.l.b16 %v974
    %v4094 = vunpack.c.h.b16 %v974
    %v4095 = vunpack.c.l.b16 %v975
    %v4096 = vunpack.c.h.b16 %v975
    %v4097 = vunpack.c.l.b16 %v976
    %v4098 = vunpack.c.h.b16 %v976
    %v4099 = vunpack.c.l.b16 %v977
    %v4100 = vunpack.c.h.b16 %v977
    %v4101 = vunpack.c.l.b16 %v978
    %v4102 = vunpack.c.h.b16 %v978
    %v4103 = vunpack.c.l.b16 %v979
    %v4104 = vunpack.c.h.b16 %v979
    %v4105 = vunpack.c.l.b16 %v980
    %v4106 = vunpack.c.h.b16 %v980
    %v4107 = vunpack.c.l.b16 %v981
    %v4108 = vunpack.c.h.b16 %v981
    %v4109 = vunpack.c.l.b16 %v982
    %v4110 = vunpack.c.h.b16 %v982
    %v4111 = vunpack.c.l.b16 %v983
    %v4112 = vunpack.c.h.b16 %v983
    %v4113 = vunpack.c.l.b16 %v984
    %v4114 = vunpack.c.h.b16 %v984
    %v4115 = vunpack.c.l.b16 %v985
    %v4116 = vunpack.c.h.b16 %v985
    %v4117 = vunpack.c.l.b16 %v986
    %v4118 = vunpack.c.h.b16 %v986
    %v4119 = vunpack.c.l.b16 %v987
    %v4120 = vunpack.c.h.b16 %v987
    %v4121 = vunpack.c.l.b16 %v988
    %v4122 = vunpack.c.h.b16 %v988
    %v4123 = vunpack.c.l.b16 %v989
    %v4124 = vunpack.c.h.b16 %v989
    %v4125 = vunpack.c.l.b16 %v990
    %v4126 = vunpack.c.h.b16 %v990
    %v4127 = vunpack.c.l.b16 %v991
    %v4128 = vunpack.c.h.b16 %v991
    %v4129 = vunpack.c.l.b16 %v992
    %v4130 = vunpack.c.h.b16 %v992
    %v4131 = vunpack.c.l.b16 %v993
    %v4132 = vunpack.c.h.b16 %v993
    %v4133 = vunpack.c.l.b16 %v994
    %v4134 = vunpack.c.h.b16 %v994
    %v4135 = vunpack.c.l.b16 %v995
    %v4136 = vunpack.c.h.b16 %v995
    %v4137 = vunpack.c.l.b16 %v996
    %v4138 = vunpack.c.h.b16 %v996
    %v4139 = vunpack.c.l.b16 %v997
    %v4140 = vunpack.c.h.b16 %v997
    %v4141 = vunpack.c.l.b16 %v998
    %v4142 = vunpack.c.h.b16 %v998
    %v4143 = vunpack.c.l.b16 %v999
    %v4144 = vunpack.c.h.b16 %v999
    %v4145 = vunpack.c.l.b16 %v1000
    %v4146 = vunpack.c.h.b16 %v1000
    %v4147 = vunpack.c.l.b16 %v1001
    %v4148 = vunpack.c.h.b16 %v1001
    %v4149 = vunpack.c.l.b16 %v1002
    %v4150 = vunpack.c.h.b16 %v1002
    %v4151 = vunpack.c.l.b16 %v1003
    %v4152 = vunpack.c.h.b16 %v1003
    %v4153 = vunpack.c.l.b16 %v1004
    %v4154 = vunpack.c.h.b16 %v1004
    %v4155 = vunpack.c.l.b16 %v1005
    %v4156 = vunpack.c.h.b16 %v1005
    %v4157 = vunpack.c.l.b16 %v1006
    %v4158 = vunpack.c.h.b16 %v1006
    %v4159 = vunpack.c.l.b16 %v1007
    %v4160 = vunpack.c.h.b16 %v1007
    %v4161 = vunpack.c.l.b16 %v1008
    %v4162 = vunpack.c.h.b16 %v1008
    %v4163 = vunpack.c.l.b16 %v1009
    %v4164 = vunpack.c.h.b16 %v1009
    %v4165 = vunpack.c.l.b16 %v1010
    %v4166 = vunpack.c.h.b16 %v1010
    %v4167 = vunpack.c.l.b16 %v1011
    %v4168 = vunpack.c.h.b16 %v1011
    %v4169 = vunpack.c.l.b16 %v1012
    %v4170 = vunpack.c.h.b16 %v1012
    %v4171 = vunpack.c.l.b16 %v1013
    %v4172 = vunpack.c.h.b16 %v1013
    %v4173 = vunpack.c.l.b16 %v1014
    %v4174 = vunpack.c.h.b16 %v1014
    %v4175 = vunpack.c.l.b16 %v1015
    %v4176 = vunpack.c.h.b16 %v1015
    %v4177 = vunpack.c.l.b16 %v1016
    %v4178 = vunpack.c.h.b16 %v1016
    %v4179 = vunpack.c.l.b16 %v1017
    %v4180 = vunpack.c.h.b16 %v1017
    %v4181 = vunpack.c.l.b16 %v1018
    %v4182 = vunpack.c.h.b16 %v1018
    %v4183 = vunpack.c.l.b16 %v1019
    %v4184 = vunpack.c.h.b16 %v1019
    %v4185 = vunpack.c.l.b16 %v1020
    %v4186 = vunpack.c.h.b16 %v1020
    %v4187 = vunpack.c.l.b16 %v1021
    %v4188 = vunpack.c.h.b16 %v1021
    %v4189 = vunpack.c.l.b16 %v1022
    %v4190 = vunpack.c.h.b16 %v1022
    %v4191 = vunpack.c.l.b16 %v1023
    %v4192 = vunpack.c.h.b16 %v1023
    %v4193 = vunpack.c.l.b16 %v1024
    %v4194 = vunpack.c.h.b16 %v1024
    %v4195 = vunpack.c.l.b16 %v1025
    %v4196 = vunpack.c.h.b16 %v1025
    %v4197 = vunpack.c.l.b16 %v1026
    %v4198 = vunpack.c.h.b16 %v1026
    %v4199 = vunpack.c.l.b16 %v1027
    %v4200 = vunpack.c.h.b16 %v1027
    %v4201 = vunpack.c.l.b16 %v1028
    %v4202 = vunpack.c.h.b16 %v1028
    %v4203 = vunpack.c.l.b16 %v1029
    %v4204 = vunpack.c.h.b16 %v1029
    %v4205 = vunpack.c.l.b16 %v1030
    %v4206 = vunpack.c.h.b16 %v1030
    %v4207 = vunpack.c.l.b16 %v1031
    %v4208 = vunpack.c.h.b16 %v1031
    %v4209 = vunpack.c.l.b16 %v1032
    %v4210 = vunpack.c.h.b16 %v1032
    %v4211 = vunpack.c.l.b16 %v1033
    %v4212 = vunpack.c.h.b16 %v1033
    %v4213 = vunpack.c.l.b16 %v1034
    %v4214 = vunpack.c.h.b16 %v1034
    %v4215 = vunpack.c.l.b16 %v1035
    %v4216 = vunpack.c.h.b16 %v1035
    %v4217 = vunpack.c.l.b16 %v1036
    %v4218 = vunpack.c.h.b16 %v1036
    %v4219 = vunpack.c.l.b16 %v1037
    %v4220 = vunpack.c.h.b16 %v1037
    %v4221 = vunpack.c.l.b16 %v1038
    %v4222 = vunpack.c.h.b16 %v1038
    %v4223 = vunpack.c.l.b16 %v1039
    %v4224 = vunpack.c.h.b16 %v1039
    %v4225 = vunpack.c.l.b16 %v1040
    %v4226 = vunpack.c.h.b16 %v1040
    %v4227 = vunpack.c.l.b16 %v1041
    %v4228 = vunpack.c.h.b16 %v1041
    %v4229 = vunpack.c.l.b16 %v1042
    %v4230 = vunpack.c.h.b16 %v1042
    %v4231 = vunpack.c.l.b16 %v1043
    %v4232 = vunpack.c.h.b16 %v1043
    %v4233 = vunpack.c.l.b16 %v1044
    %v4234 = vunpack.c.h.b16 %v1044
    %v4235 = vunpack.c.l.b16 %v1045
    %v4236 = vunpack.c.h.b16 %v1045
    %v4237 = vunpack.c.l.b16 %v1046
    %v4238 = vunpack.c.h.b16 %v1046
    %v4239 = vunpack.c.l.b16 %v1047
    %v4240 = vunpack.c.h.b16 %v1047
    %v4241 = vunpack.c.l.b16 %v1048
    %v4242 = vunpack.c.h.b16 %v1048
    %v4243 = vunpack.c.l.b16 %v1049
    %v4244 = vunpack.c.h.b16 %v1049
    %v4245 = vunpack.c.l.b16 %v1050
    %v4246 = vunpack.c.h.b16 %v1050
    %v4247 = vunpack.c.l.b16 %v1051
    %v4248 = vunpack.c.h.b16 %v1051
    %v4249 = vunpack.c.l.b16 %v1052
    %v4250 = vunpack.c.h.b16 %v1052
    %v4251 = vunpack.c.l.b16 %v1053
    %v4252 = vunpack.c.h.b16 %v1053
    %v4253 = vunpack.c.l.b16 %v1054
    %v4254 = vunpack.c.h.b16 %v1054
    %v4255 = vunpack.c.l.b16 %v1055
    %v4256 = vunpack.c.h.b16 %v1055
    %v4257 = vunpack.c.l.b16 %v1056
    %v4258 = vunpack.c.h.b16 %v1056
    %v4259 = vunpack.c.l.b16 %v1057
    %v4260 = vunpack.c.h.b16 %v1057
    %v4261 = vunpack.c.l.b16 %v1058
    %v4262 = vunpack.c.h.b16 %v1058
    %v4263 = vunpack.c.l.b16 %v1059
    %v4264 = vunpack.c.h.b16 %v1059
    %v4265 = vunpack.c.l.b16 %v1060
    %v4266 = vunpack.c.h.b16 %v1060
    %v4267 = vunpack.c.l.b16 %v1061
    %v4268 = vunpack.c.h.b16 %v1061
    %v4269 = vunpack.c.l.b16 %v1062
    %v4270 = vunpack.c.h.b16 %v1062
    %v4271 = vunpack.c.l.b16 %v1063
    %v4272 = vunpack.c.h.b16 %v1063
    %v4273 = vunpack.c.l.b16 %v1064
    %v4274 = vunpack.c.h.b16 %v1064
    %v4275 = vunpack.c.l.b16 %v1065
    %v4276 = vunpack.c.h.b16 %v1065
    %v4277 = vunpack.c.l.b16 %v1066
    %v4278 = vunpack.c.h.b16 %v1066
    %v4279 = vunpack.c.l.b16 %v1067
    %v4280 = vunpack.c.h.b16 %v1067
    %v4281 = vunpack.c.l.b16 %v1068
    %v4282 = vunpack.c.h.b16 %v1068
    %v4283 = vunpack.c.l.b16 %v1069
    %v4284 = vunpack.c.h.b16 %v1069
    %v4285 = vunpack.c.l.b16 %v1070
    %v4286 = vunpack.c.h.b16 %v1070
    %v4287 = vunpack.c.l.b16 %v1071
    %v4288 = vunpack.c.h.b16 %v1071
    %v4289 = vunpack.c.l.b16 %v1072
    %v4290 = vunpack.c.h.b16 %v1072
    %v4291 = vunpack.c.l.b16 %v1073
    %v4292 = vunpack.c.h.b16 %v1073
    %v4293 = vunpack.c.l.b16 %v1074
    %v4294 = vunpack.c.h.b16 %v1074
    %v4295 = vunpack.c.l.b16 %v1075
    %v4296 = vunpack.c.h.b16 %v1075
    %v4297 = vunpack.c.l.b16 %v1076
    %v4298 = vunpack.c.h.b16 %v1076
    %v4299 = vunpack.c.l.b16 %v1077
    %v4300 = vunpack.c.h.b16 %v1077
    %v4301 = vunpack.c.l.b16 %v1078
    %v4302 = vunpack.c.h.b16 %v1078
    %v4303 = vunpack.c.l.b16 %v1079
    %v4304 = vunpack.c.h.b16 %v1079
    %v4305 = vunpack.c.l.b16 %v1080
    %v4306 = vunpack.c.h.b16 %v1080
    %v4307 = vunpack.c.l.b16 %v1081
    %v4308 = vunpack.c.h.b16 %v1081
    %v4309 = vunpack.c.l.b16 %v1082
    %v4310 = vunpack.c.h.b16 %v1082
    %v4311 = vunpack.c.l.b16 %v1083
    %v4312 = vunpack.c.h.b16 %v1083
    %v4313 = vunpack.c.l.b16 %v1084
    %v4314 = vunpack.c.h.b16 %v1084
    %v4315 = vunpack.c.l.b16 %v1085
    %v4316 = vunpack.c.h.b16 %v1085
    %v4317 = vunpack.c.l.b16 %v1086
    %v4318 = vunpack.c.h.b16 %v1086
    %v4319 = vunpack.c.l.b16 %v1087
    %v4320 = vunpack.c.h.b16 %v1087
    %v4321 = vunpack.c.l.b16 %v1088
    %v4322 = vunpack.c.h.b16 %v1088
    %v4323 = vunpack.c.l.b16 %v1089
    %v4324 = vunpack.c.h.b16 %v1089
    %v4325 = vunpack.c.l.b16 %v1090
    %v4326 = vunpack.c.h.b16 %v1090
    %v4327 = vunpack.c.l.b16 %v1091
    %v4328 = vunpack.c.h.b16 %v1091
    %v4329 = vunpack.c.l.b16 %v1092
    %v4330 = vunpack.c.h.b16 %v1092
    %v4331 = vunpack.c.l.b16 %v1093
    %v4332 = vunpack.c.h.b16 %v1093
    %v4333 = vunpack.c.l.b16 %v1094
    %v4334 = vunpack.c.h.b16 %v1094
    %v4335 = vunpack.c.l.b16 %v1095
    %v4336 = vunpack.c.h.b16 %v1095
    %v4337 = vunpack.c.l.b16 %v1096
    %v4338 = vunpack.c.h.b16 %v1096
    %v4339 = vunpack.c.l.b16 %v1097
    %v4340 = vunpack.c.h.b16 %v1097
    %v4341 = vunpack.c.l.b16 %v1098
    %v4342 = vunpack.c.h.b16 %v1098
    %v4343 = vunpack.c.l.b16 %v1099
    %v4344 = vunpack.c.h.b16 %v1099
    %v4345 = vunpack.c.l.b16 %v1100
    %v4346 = vunpack.c.h.b16 %v1100
    %v4347 = vunpack.c.l.b16 %v1101
    %v4348 = vunpack.c.h.b16 %v1101
    %v4349 = vunpack.c.l.b16 %v1102
    %v4350 = vunpack.c.h.b16 %v1102
    %v4351 = vunpack.c.l.b16 %v1103
    %v4352 = vunpack.c.h.b16 %v1103
    %v4353 = vunpack.c.l.b16 %v1104
    %v4354 = vunpack.c.h.b16 %v1104
    %v4355 = vunpack.c.l.b16 %v1105
    %v4356 = vunpack.c.h.b16 %v1105
    %v4357 = vunpack.c.l.b16 %v1106
    %v4358 = vunpack.c.h.b16 %v1106
    %v4359 = vunpack.c.l.b16 %v1107
    %v4360 = vunpack.c.h.b16 %v1107
    %v4361 = vunpack.c.l.b16 %v1108
    %v4362 = vunpack.c.h.b16 %v1108
    %v4363 = vunpack.c.l.b16 %v1109
    %v4364 = vunpack.c.h.b16 %v1109
    %v4365 = vunpack.c.l.b16 %v1110
    %v4366 = vunpack.c.h.b16 %v1110
    %v4367 = vunpack.c.l.b16 %v1111
    %v4368 = vunpack.c.h.b16 %v1111
    %v4369 = vunpack.c.l.b16 %v1112
    %v4370 = vunpack.c.h.b16 %v1112
    %v4371 = vunpack.c.l.b16 %v1113
    %v4372 = vunpack.c.h.b16 %v1113
    %v4373 = vunpack.c.l.b16 %v1114
    %v4374 = vunpack.c.h.b16 %v1114
    %v4375 = vunpack.c.l.b16 %v1115
    %v4376 = vunpack.c.h.b16 %v1115
    %v4377 = vunpack.c.l.b16 %v1116
    %v4378 = vunpack.c.h.b16 %v1116
    %v4379 = vunpack.c.l.b16 %v1117
    %v4380 = vunpack.c.h.b16 %v1117
    %v4381 = vunpack.c.l.b16 %v1118
    %v4382 = vunpack.c.h.b16 %v1118
    %v4383 = vunpack.c.l.b16 %v1119
    %v4384 = vunpack.c.h.b16 %v1119
    %v4385 = vunpack.c.l.b16 %v1120
    %v4386 = vunpack.c.h.b16 %v1120
    %v4387 = vunpack.c.l.b16 %v1121
    %v4388 = vunpack.c.h.b16 %v1121
    %v4389 = vunpack.c.l.b16 %v1122
    %v4390 = vunpack.c.h.b16 %v1122
    %v4391 = vunpack.c.l.b16 %v1123
    %v4392 = vunpack.c.h.b16 %v1123
    %v4393 = vunpack.c.l.b16 %v1124
    %v4394 = vunpack.c.h.b16 %v1124
    %v4395 = vunpack.c.l.b16 %v1125
    %v4396 = vunpack.c.h.b16 %v1125
    %v4397 = vunpack.c.l.b16 %v1126
    %v4398 = vunpack.c.h.b16 %v1126
    %v4399 = vunpack.c.l.b16 %v1127
    %v4400 = vunpack.c.h.b16 %v1127
    %v4401 = vunpack.c.l.b16 %v1128
    %v4402 = vunpack.c.h.b16 %v1128
    %v4403 = vunpack.c.l.b16 %v1129
    %v4404 = vunpack.c.h.b16 %v1129
    %v4405 = vunpack.c.l.b16 %v1130
    %v4406 = vunpack.c.h.b16 %v1130
    %v4407 = vunpack.c.l.b16 %v1131
    %v4408 = vunpack.c.h.b16 %v1131
    %v4409 = vunpack.c.l.b16 %v1132
    %v4410 = vunpack.c.h.b16 %v1132
    %v4411 = vunpack.c.l.b16 %v1133
    %v4412 = vunpack.c.h.b16 %v1133
    %v4413 = vunpack.c.l.b16 %v1134
    %v4414 = vunpack.c.h.b16 %v1134
    %v4415 = vunpack.c.l.b16 %v1135
    %v4416 = vunpack.c.h.b16 %v1135
    %v4417 = vunpack.c.l.b16 %v1136
    %v4418 = vunpack.c.h.b16 %v1136
    %v4419 = vunpack.c.l.b16 %v1137
    %v4420 = vunpack.c.h.b16 %v1137
    %v4421 = vunpack.c.l.b16 %v1138
    %v4422 = vunpack.c.h.b16 %v1138
    %v4423 = vunpack.c.l.b16 %v1139
    %v4424 = vunpack.c.h.b16 %v1139
    %v4425 = vunpack.c.l.b16 %v1140
    %v4426 = vunpack.c.h.b16 %v1140
    %v4427 = vunpack.c.l.b16 %v1141
    %v4428 = vunpack.c.h.b16 %v1141
    %v4429 = vunpack.c.l.b16 %v1142
    %v4430 = vunpack.c.h.b16 %v1142
    %v4431 = vunpack.c.l.b16 %v1143
    %v4432 = vunpack.c.h.b16 %v1143
    %v4433 = vunpack.c.l.b16 %v1144
    %v4434 = vunpack.c.h.b16 %v1144
    %v4435 = vunpack.c.l.b16 %v1145
    %v4436 = vunpack.c.h.b16 %v1145
    %v4437 = vunpack.c.l.b16 %v1146
    %v4438 = vunpack.c.h.b16 %v1146
    %v4439 = vunpack.c.l.b16 %v1147
    %v4440 = vunpack.c.h.b16 %v1147
    %v4441 = vunpack.c.l.b16 %v1148
    %v4442 = vunpack.c.h.b16 %v1148
    %v4443 = vunpack.c.l.b16 %v1149
    %v4444 = vunpack.c.h.b16 %v1149
    %v4445 = vunpack.c.l.b16 %v1150
    %v4446 = vunpack.c.h.b16 %v1150
    %v4447 = vunpack.c.l.b16 %v1151
    %v4448 = vunpack.c.h.b16 %v1151
    %v4449 = vunpack.c.l.b16 %v1152
    %v4450 = vunpack.c.h.b16 %v1152
    %v4451 = vunpack.c.l.b16 %v1153
    %v4452 = vunpack.c.h.b16 %v1153
    %v4453 = vunpack.c.l.b16 %v1154
    %v4454 = vunpack.c.h.b16 %v1154
    %v4455 = vunpack.c.l.b16 %v1155
    %v4456 = vunpack.c.h.b16 %v1155
    %v4457 = vunpack.c.l.b16 %v1156
    %v4458 = vunpack.c.h.b16 %v1156
    %v4459 = vunpack.c.l.b16 %v1157
    %v4460 = vunpack.c.h.b16 %v1157
    %v4461 = vunpack.c.l.b16 %v1158
    %v4462 = vunpack.c.h.b16 %v1158
    %v4463 = vunpack.c.l.b16 %v1159
    %v4464 = vunpack.c.h.b16 %v1159
    %v4465 = vunpack.c.l.b16 %v1160
    %v4466 = vunpack.c.h.b16 %v1160
    %v4467 = vunpack.c.l.b16 %v1161
    %v4468 = vunpack.c.h.b16 %v1161
    %v4469 = vunpack.c.l.b16 %v1162
    %v4470 = vunpack.c.h.b16 %v1162
    %v4471 = vunpack.c.l.b16 %v1163
    %v4472 = vunpack.c.h.b16 %v1163
    %v4473 = vunpack.c.l.b16 %v1164
    %v4474 = vunpack.c.h.b16 %v1164
    %v4475 = vunpack.c.l.b16 %v1165
    %v4476 = vunpack.c.h.b16 %v1165
    %v4477 = vunpack.c.l.b16 %v1166
    %v4478 = vunpack.c.h.b16 %v1166
    %v4479 = vunpack.c.l.b16 %v1167
    %v4480 = vunpack.c.h.b16 %v1167
    %v4481 = vunpack.c.l.b16 %v1168
    %v4482 = vunpack.c.h.b16 %v1168
    %v4483 = vunpack.c.l.b16 %v1169
    %v4484 = vunpack.c.h.b16 %v1169
    %v4485 = vunpack.c.l.b16 %v1170
    %v4486 = vunpack.c.h.b16 %v1170
    %v4487 = vunpack.c.l.b16 %v1171
    %v4488 = vunpack.c.h.b16 %v1171
    %v4489 = vunpack.c.l.b16 %v1172
    %v4490 = vunpack.c.h.b16 %v1172
    %v4491 = vunpack.c.l.b16 %v1173
    %v4492 = vunpack.c.h.b16 %v1173
    %v4493 = vunpack.c.l.b16 %v1174
    %v4494 = vunpack.c.h.b16 %v1174
    %v4495 = vunpack.c.l.b16 %v1175
    %v4496 = vunpack.c.h.b16 %v1175
    %v4497 = vunpack.c.l.b16 %v1176
    %v4498 = vunpack.c.h.b16 %v1176
    %v4499 = vunpack.c.l.b16 %v1177
    %v4500 = vunpack.c.h.b16 %v1177
    %v4501 = vunpack.c.l.b16 %v1178
    %v4502 = vunpack.c.h.b16 %v1178
    %v4503 = vunpack.c.l.b16 %v1179
    %v4504 = vunpack.c.h.b16 %v1179
    %v4505 = vunpack.c.l.b16 %v1180
    %v4506 = vunpack.c.h.b16 %v1180
    %v4507 = vunpack.c.l.b16 %v1181
    %v4508 = vunpack.c.h.b16 %v1181
    %v4509 = vunpack.c.l.b16 %v1182
    %v4510 = vunpack.c.h.b16 %v1182
    %v4511 = vunpack.c.l.b16 %v1183
    %v4512 = vunpack.c.h.b16 %v1183
    %v4513 = vunpack.c.l.b16 %v1184
    %v4514 = vunpack.c.h.b16 %v1184
    %v4515 = vunpack.c.l.b16 %v1185
    %v4516 = vunpack.c.h.b16 %v1185
    %v4517 = vunpack.c.l.b16 %v1186
    %v4518 = vunpack.c.h.b16 %v1186
    %v4519 = vunpack.c.l.b16 %v1187
    %v4520 = vunpack.c.h.b16 %v1187
    %v4521 = vunpack.c.l.b16 %v1188
    %v4522 = vunpack.c.h.b16 %v1188
    %v4523 = vunpack.c.l.b16 %v1189
    %v4524 = vunpack.c.h.b16 %v1189
    %v4525 = vunpack.c.l.b16 %v1190
    %v4526 = vunpack.c.h.b16 %v1190
    %v4527 = vunpack.c.l.b16 %v1191
    %v4528 = vunpack.c.h.b16 %v1191
    %v4529 = vunpack.c.l.b16 %v1192
    %v4530 = vunpack.c.h.b16 %v1192
    %v4531 = vunpack.c.l.b16 %v1193
    %v4532 = vunpack.c.h.b16 %v1193
    %v4533 = vunpack.c.l.b16 %v1194
    %v4534 = vunpack.c.h.b16 %v1194
    %v4535 = vunpack.c.l.b16 %v1195
    %v4536 = vunpack.c.h.b16 %v1195
    %v4537 = vunpack.c.l.b16 %v1196
    %v4538 = vunpack.c.h.b16 %v1196
    %v4539 = vunpack.c.l.b16 %v1197
    %v4540 = vunpack.c.h.b16 %v1197
    %v4541 = vunpack.c.l.b16 %v1198
    %v4542 = vunpack.c.h.b16 %v1198
    %v4543 = vunpack.c.l.b16 %v1199
    %v4544 = vunpack.c.h.b16 %v1199
    %v4545 = vunpack.c.l.b16 %v1200
    %v4546 = vunpack.c.h.b16 %v1200
    %v4547 = vunpack.c.l.b16 %v1201
    %v4548 = vunpack.c.h.b16 %v1201
    %v4549 = vunpack.c.l.b16 %v1202
    %v4550 = vunpack.c.h.b16 %v1202
    %v4551 = vunpack.c.l.b16 %v1203
    %v4552 = vunpack.c.h.b16 %v1203
    %v4553 = vunpack.c.l.b16 %v1204
    %v4554 = vunpack.c.h.b16 %v1204
    %v4555 = vunpack.c.l.b16 %v1205
    %v4556 = vunpack.c.h.b16 %v1205
    %v4557 = vunpack.c.l.b16 %v1206
    %v4558 = vunpack.c.h.b16 %v1206
    %v4559 = vunpack.c.l.b16 %v1207
    %v4560 = vunpack.c.h.b16 %v1207
    %v4561 = vunpack.c.l.b16 %v1208
    %v4562 = vunpack.c.h.b16 %v1208
    %v4563 = vunpack.c.l.b16 %v1209
    %v4564 = vunpack.c.h.b16 %v1209
    %v4565 = vunpack.c.l.b16 %v1210
    %v4566 = vunpack.c.h.b16 %v1210
    %v4567 = vunpack.c.l.b16 %v1211
    %v4568 = vunpack.c.h.b16 %v1211
    %v4569 = vunpack.c.l.b16 %v1212
    %v4570 = vunpack.c.h.b16 %v1212
    %v4571 = vunpack.c.l.b16 %v1213
    %v4572 = vunpack.c.h.b16 %v1213
    %v4573 = vunpack.c.l.b16 %v1214
    %v4574 = vunpack.c.h.b16 %v1214
    %v4575 = vunpack.c.l.b16 %v1215
    %v4576 = vunpack.c.h.b16 %v1215
    %v4577 = vunpack.c.l.b16 %v1216
    %v4578 = vunpack.c.h.b16 %v1216
    %v4579 = vunpack.c.l.b16 %v1217
    %v4580 = vunpack.c.h.b16 %v1217
    %v4581 = vunpack.c.l.b16 %v1218
    %v4582 = vunpack.c.h.b16 %v1218
    %v4583 = vunpack.c.l.b16 %v1219
    %v4584 = vunpack.c.h.b16 %v1219
    %v4585 = vunpack.c.l.b16 %v1220
    %v4586 = vunpack.c.h.b16 %v1220
    %v4587 = vunpack.c.l.b16 %v1221
    %v4588 = vunpack.c.h.b16 %v1221
    %v4589 = vunpack.c.l.b16 %v1222
    %v4590 = vunpack.c.h.b16 %v1222
    %v4591 = vunpack.c.l.b16 %v1223
    %v4592 = vunpack.c.h.b16 %v1223
    %v4593 = vunpack.c.l.b16 %v1224
    %v4594 = vunpack.c.h.b16 %v1224
    %v4595 = vunpack.c.l.b16 %v1225
    %v4596 = vunpack.c.h.b16 %v1225
    %v4597 = vunpack.c.l.b16 %v1226
    %v4598 = vunpack.c.h.b16 %v1226
    %v4599 = vunpack.c.l.b16 %v1227
    %v4600 = vunpack.c.h.b16 %v1227
    %v4601 = vunpack.c.l.b16 %v1228
    %v4602 = vunpack.c.h.b16 %v1228
    %v4603 = vunpack.c.l.b16 %v1229
    %v4604 = vunpack.c.h.b16 %v1229
    %v4605 = vunpack.c.l.b16 %v1230
    %v4606 = vunpack.c.h.b16 %v1230
    %v4607 = vunpack.c.l.b16 %v1231
    %v4608 = vunpack.c.h.b16 %v1231
    %v4609 = vunpack.c.l.b16 %v1232
    %v4610 = vunpack.c.h.b16 %v1232
    %v4611 = vunpack.c.l.b16 %v1233
    %v4612 = vunpack.c.h.b16 %v1233
    %v4613 = vunpack.c.l.b16 %v1234
    %v4614 = vunpack.c.h.b16 %v1234
    %v4615 = vunpack.c.l.b16 %v1235
    %v4616 = vunpack.c.h.b16 %v1235
    %v4617 = vunpack.c.l.b16 %v1236
    %v4618 = vunpack.c.h.b16 %v1236
    %v4619 = vunpack.c.l.b16 %v1237
    %v4620 = vunpack.c.h.b16 %v1237
    %v4621 = vunpack.c.l.b16 %v1238
    %v4622 = vunpack.c.h.b16 %v1238
    %v4623 = vunpack.c.l.b16 %v1239
    %v4624 = vunpack.c.h.b16 %v1239
    %v4625 = vunpack.c.l.b16 %v1240
    %v4626 = vunpack.c.h.b16 %v1240
    %v4627 = vunpack.c.l.b16 %v1241
    %v4628 = vunpack.c.h.b16 %v1241
    %v4629 = vunpack.c.l.b16 %v1242
    %v4630 = vunpack.c.h.b16 %v1242
    %v4631 = vunpack.c.l.b16 %v1243
    %v4632 = vunpack.c.h.b16 %v1243
    %v4633 = vunpack.c.l.b16 %v1244
    %v4634 = vunpack.c.h.b16 %v1244
    %v4635 = vunpack.c.l.b16 %v1245
    %v4636 = vunpack.c.h.b16 %v1245
    %v4637 = vunpack.c.l.b16 %v1246
    %v4638 = vunpack.c.h.b16 %v1246
    %v4639 = vunpack.c.l.b16 %v1247
    %v4640 = vunpack.c.h.b16 %v1247
    %v4641 = vunpack.c.l.b16 %v1248
    %v4642 = vunpack.c.h.b16 %v1248
    %v4643 = vunpack.c.l.b16 %v1249
    %v4644 = vunpack.c.h.b16 %v1249
    %v4645 = vunpack.c.l.b16 %v1250
    %v4646 = vunpack.c.h.b16 %v1250
    %v4647 = vunpack.c.l.b16 %v1251
    %v4648 = vunpack.c.h.b16 %v1251
    %v4649 = vunpack.c.l.b16 %v1252
    %v4650 = vunpack.c.h.b16 %v1252
    %v4651 = vunpack.c.l.b16 %v1253
    %v4652 = vunpack.c.h.b16 %v1253
    %v4653 = vunpack.c.l.b16 %v1254
    %v4654 = vunpack.c.h.b16 %v1254
    %v4655 = vunpack.c.l.b16 %v1255
    %v4656 = vunpack.c.h.b16 %v1255
    %v4657 = vunpack.c.l.b16 %v1256
    %v4658 = vunpack.c.h.b16 %v1256
    %v4659 = vunpack.c.l.b16 %v1257
    %v4660 = vunpack.c.h.b16 %v1257
    %v4661 = vunpack.c.l.b16 %v1258
    %v4662 = vunpack.c.h.b16 %v1258
    %v4663 = vunpack.c.l.b16 %v1259
    %v4664 = vunpack.c.h.b16 %v1259
    %v4665 = vunpack.c.l.b16 %v1260
    %v4666 = vunpack.c.h.b16 %v1260
    %v4667 = vunpack.c.l.b16 %v1261
    %v4668 = vunpack.c.h.b16 %v1261
    %v4669 = vunpack.c.l.b16 %v1262
    %v4670 = vunpack.c.h.b16 %v1262
    %v4671 = vunpack.c.l.b16 %v1263
    %v4672 = vunpack.c.h.b16 %v1263
    %v4673 = vunpack.c.l.b16 %v1264
    %v4674 = vunpack.c.h.b16 %v1264
    %v4675 = vunpack.c.l.b16 %v1265
    %v4676 = vunpack.c.h.b16 %v1265
    %v4677 = vunpack.c.l.b16 %v1266
    %v4678 = vunpack.c.h.b16 %v1266
    %v4679 = vunpack.c.l.b16 %v1267
    %v4680 = vunpack.c.h.b16 %v1267
    %v4681 = vunpack.c.l.b16 %v1268
    %v4682 = vunpack.c.h.b16 %v1268
    %v4683 = vunpack.c.l.b16 %v1269
    %v4684 = vunpack.c.h.b16 %v1269
    %v4685 = vunpack.c.l.b16 %v1270
    %v4686 = vunpack.c.h.b16 %v1270
    %v4687 = vunpack.c.l.b16 %v1271
    %v4688 = vunpack.c.h.b16 %v1271
    %v4689 = vunpack.c.l.b16 %v1272
    %v4690 = vunpack.c.h.b16 %v1272
    %v4691 = vunpack.c.l.b16 %v1273
    %v4692 = vunpack.c.h.b16 %v1273
    %v4693 = vunpack.c.l.b16 %v1274
    %v4694 = vunpack.c.h.b16 %v1274
    %v4695 = vunpack.c.l.b16 %v1275
    %v4696 = vunpack.c.h.b16 %v1275
    %v4697 = vunpack.c.l.b16 %v1276
    %v4698 = vunpack.c.h.b16 %v1276
    %v4699 = vunpack.c.l.b16 %v1277
    %v4700 = vunpack.c.h.b16 %v1277
    %v4701 = vunpack.c.l.b16 %v1278
    %v4702 = vunpack.c.h.b16 %v1278
    %v4703 = vunpack.c.l.b16 %v1279
    %v4704 = vunpack.c.h.b16 %v1279
    %v4705 = vunpack.c.l.b16 %v1280
    %v4706 = vunpack.c.h.b16 %v1280
    %v4707 = vunpack.c.l.b16 %v1281
    %v4708 = vunpack.c.h.b16 %v1281
    %v4709 = vunpack.c.l.b16 %v1282
    %v4710 = vunpack.c.h.b16 %v1282
    %v4711 = vunpack.c.l.b16 %v1283
    %v4712 = vunpack.c.h.b16 %v1283
    %v4713 = vunpack.c.l.b16 %v1284
    %v4714 = vunpack.c.h.b16 %v1284
    %v4715 = vunpack.c.l.b16 %v1285
    %v4716 = vunpack.c.h.b16 %v1285
    %v4717 = vunpack.c.l.b16 %v1286
    %v4718 = vunpack.c.h.b16 %v1286
    %v4719 = vunpack.c.l.b16 %v1287
    %v4720 = vunpack.c.h.b16 %v1287
    %v4721 = vunpack.c.l.b16 %v1288
    %v4722 = vunpack.c.h.b16 %v1288
    %v4723 = vunpack.c.l.b16 %v1289
    %v4724 = vunpack.c.h.b16 %v1289
    %v4725 = vunpack.c.l.b16 %v1290
    %v4726 = vunpack.c.h.b16 %v1290
    %v4727 = vunpack.c.l.b16 %v1291
    %v4728 = vunpack.c.h.b16 %v1291
    %v4729 = vunpack.c.l.b16 %v1292
    %v4730 = vunpack.c.h.b16 %v1292
    %v4731 = vunpack.c.l.b16 %v1293
    %v4732 = vunpack.c.h.b16 %v1293
    %v4733 = vunpack.c.l.b16 %v1294
    %v4734 = vunpack.c.h.b16 %v1294
    %v4735 = vunpack.c.l.b16 %v1295
    %v4736 = vunpack.c.h.b16 %v1295
    %v4737 = vunpack.c.l.b16 %v1296
    %v4738 = vunpack.c.h.b16 %v1296
    %v4739 = vunpack.c.l.b16 %v1297
    %v4740 = vunpack.c.h.b16 %v1297
    %v4741 = vunpack.c.l.b16 %v1298
    %v4742 = vunpack.c.h.b16 %v1298
    %v4743 = vunpack.c.l.b16 %v1299
    %v4744 = vunpack.c.h.b16 %v1299
    %v4745 = vunpack.c.l.b16 %v1300
    %v4746 = vunpack.c.h.b16 %v1300
    %v4747 = vunpack.c.l.b16 %v1301
    %v4748 = vunpack.c.h.b16 %v1301
    %v4749 = vunpack.c.l.b16 %v1302
    %v4750 = vunpack.c.h.b16 %v1302
    %v4751 = vunpack.c.l.b16 %v1303
    %v4752 = vunpack.c.h.b16 %v1303
    %v4753 = vunpack.c.l.b16 %v1304
    %v4754 = vunpack.c.h.b16 %v1304
    %v4755 = vunpack.c.l.b16 %v1305
    %v4756 = vunpack.c.h.b16 %v1305
    %v4757 = vunpack.c.l.b16 %v1306
    %v4758 = vunpack.c.h.b16 %v1306
    %v4759 = vunpack.c.l.b16 %v1307
    %v4760 = vunpack.c.h.b16 %v1307
    %v4761 = vunpack.c.l.b16 %v1308
    %v4762 = vunpack.c.h.b16 %v1308
    %v4763 = vunpack.c.l.b16 %v1309
    %v4764 = vunpack.c.h.b16 %v1309
    %v4765 = vunpack.c.l.b16 %v1310
    %v4766 = vunpack.c.h.b16 %v1310
    %v4767 = vunpack.c.l.b16 %v1311
    %v4768 = vunpack.c.h.b16 %v1311
    %v4769 = vunpack.c.l.b16 %v1312
    %v4770 = vunpack.c.h.b16 %v1312
    %v4771 = vunpack.c.l.b16 %v1313
    %v4772 = vunpack.c.h.b16 %v1313
    %v4773 = vunpack.c.l.b16 %v1314
    %v4774 = vunpack.c.h.b16 %v1314
    %v4775 = vunpack.c.l.b16 %v1315
    %v4776 = vunpack.c.h.b16 %v1315
    %v4777 = vunpack.c.l.b16 %v1316
    %v4778 = vunpack.c.h.b16 %v1316
    %v4779 = vunpack.c.l.b16 %v1317
    %v4780 = vunpack.c.h.b16 %v1317
    %v4781 = vunpack.c.l.b16 %v1318
    %v4782 = vunpack.c.h.b16 %v1318
    %v4783 = vunpack.c.l.b16 %v1319
    %v4784 = vunpack.c.h.b16 %v1319
    %v4785 = vunpack.c.l.b16 %v1320
    %v4786 = vunpack.c.h.b16 %v1320
    %v4787 = vunpack.c.l.b16 %v1321
    %v4788 = vunpack.c.h.b16 %v1321
    %v4789 = vunpack.c.l.b16 %v1322
    %v4790 = vunpack.c.h.b16 %v1322
    %v4791 = vunpack.c.l.b16 %v1323
    %v4792 = vunpack.c.h.b16 %v1323
    %v4793 = vunpack.c.l.b16 %v1324
    %v4794 = vunpack.c.h.b16 %v1324
    %v4795 = vunpack.c.l.b16 %v1325
    %v4796 = vunpack.c.h.b16 %v1325
    %v4797 = vunpack.c.l.b16 %v1326
    %v4798 = vunpack.c.h.b16 %v1326
    %v4799 = vunpack.c.l.b16 %v1327
    %v4800 = vunpack.c.h.b16 %v1327
    %v4801 = vunpack.c.l.b16 %v1328
    %v4802 = vunpack.c.h.b16 %v1328
    %v4803 = vunpack.c.l.b16 %v1329
    %v4804 = vunpack.c.h.b16 %v1329
    %v4805 = vunpack.c.l.b16 %v1330
    %v4806 = vunpack.c.h.b16 %v1330
    %v4807 = vunpack.c.l.b16 %v1331
    %v4808 = vunpack.c.h.b16 %v1331
    %v4809 = vunpack.c.l.b16 %v1332
    %v4810 = vunpack.c.h.b16 %v1332
    %v4811 = vunpack.c.l.b16 %v1333
    %v4812 = vunpack.c.h.b16 %v1333
    %v4813 = vunpack.c.l.b16 %v1334
    %v4814 = vunpack.c.h.b16 %v1334
    %v4815 = vunpack.c.l.b16 %v1335
    %v4816 = vunpack.c.h.b16 %v1335
    %v4817 = vunpack.c.l.b16 %v1336
    %v4818 = vunpack.c.h.b16 %v1336
    %v4819 = vunpack.c.l.b16 %v1337
    %v4820 = vunpack.c.h.b16 %v1337
    %v4821 = vunpack.c.l.b16 %v1338
    %v4822 = vunpack.c.h.b16 %v1338
    %v4823 = vpack.c.b16 %v2537, %v2519
    %v4824 = vpack.c.b16 %v2538, %v2520
    %v4825 = vpack.c.b16 %v2539, %v2521
    %v4826 = vpack.c.b16 %v2540, %v2522
    %v4827 = vpack.c.b16 %v2541, %v2523
    %v4828 = vpack.c.b16 %v2542, %v2524
    %v4829 = vpack.c.b16 %v2543, %v2525
    %v4830 = vpack.c.b16 %v2544, %v2526
    %v4831 = vpack.c.b16 %v2545, %v2527
    %v4832 = vpack.c.b16 %v2546, %v2528
    %v4833 = vpack.c.b16 %v2547, %v2529
    %v4834 = vpack.c.b16 %v2548, %v2530
    %v4835 = vpack.c.b16 %v2549, %v2531
    %v4836 = vpack.c.b16 %v2550, %v2532
    %v4837 = vpack.c.b16 %v2551, %v2533
    %v4838 = vpack.c.b16 %v2552, %v2534
    %v4839 = vpack.c.b16 %v2553, %v2535
    %v4840 = vpack.c.b16 %v2554, %v2536
    %v4841 = vpack.c.b16 %v2573, %v2555
    %v4842 = vpack.c.b16 %v2574, %v2556
    %v4843 = vpack.c.b16 %v2575, %v2557
    %v4844 = vpack.c.b16 %v2576, %v2558
    %v4845 = vpack.c.b16 %v2577, %v2559
    %v4846 = vpack.c.b16 %v2578, %v2560
    %v4847 = vpack.c.b16 %v2579, %v2561
    %v4848 = vpack.c.b16 %v2580, %v2562
    %v4849 = vpack.c.b16 %v2581, %v2563
    %v4850 = vpack.c.b16 %v2582, %v2564
    %v4851 = vpack.c.b16 %v2583, %v2565
    %v4852 = vpack.c.b16 %v2584, %v2566
    %v4853 = vpack.c.b16 %v2585, %v2567
    %v4854 = vpack.c.b16 %v2586, %v2568
    %v4855 = vpack.c.b16 %v2587, %v2569
    %v4856 = vpack.c.b16 %v2588, %v2570
    %v4857 = vpack.c.b16 %v2589, %v2571
    %v4858 = vpack.c.b16 %v2590, %v2572
    %v4859 = vpack.c.b16 %v2609, %v2591
    %v4860 = vpack.c.b16 %v2610, %v2592
    %v4861 = vpack.c.b16 %v2611, %v2593
    %v4862 = vpack.c.b16 %v2612, %v2594
    %v4863 = vpack.c.b16 %v2613, %v2595
    %v4864 = vpack.c.b16 %v2614, %v2596
    %v4865 = vpack.c.b16 %v2615, %v2597
    %v4866 = vpack.c.b16 %v2616, %v2598
    %v4867 = vpack.c.b16 %v2617, %v2599
    %v4868 = vpack.c.b16 %v2618, %v2600
    %v4869 = vpack.c.b16 %v2619, %v2601
    %v4870 = vpack.c.b16 %v2620, %v2602
    %v4871 = vpack.c.b16 %v2621, %v2603
    %v4872 = vpack.c.b16 %v2622, %v2604
    %v4873 = vpack.c.b16 %v2623, %v2605
    %v4874 = vpack.c.b16 %v2624, %v2606
    %v4875 = vpack.c.b16 %v2625, %v2607
    %v4876 = vpack.c.b16 %v2626, %v2608
    %v4877 = vpack.c.b16 %v2645, %v2627
    %v4878 = vpack.c.b16 %v2646, %v2628
    %v4879 = vpack.c.b16 %v2647, %v2629
    %v4880 = vpack.c.b16 %v2648, %v2630
    %v4881 = vpack.c.b16 %v2649, %v2631
    %v4882 = vpack.c.b16 %v2650, %v2632
    %v4883 = vpack.c.b16 %v2651, %v2633
    %v4884 = vpack.c.b16 %v2652, %v2634
    %v4885 = vpack.c.b16 %v2653, %v2635
    %v4886 = vpack.c.b16 %v2654, %v2636
    %v4887 = vpack.c.b16 %v2655, %v2637
    %v4888 = vpack.c.b16 %v2656, %v2638
    %v4889 = vpack.c.b16 %v2657, %v2639
    %v4890 = vpack.c.b16 %v2658, %v2640
    %v4891 = vpack.c.b16 %v2659, %v2641
    %v4892 = vpack.c.b16 %v2660, %v2642
    %v4893 = vpack.c.b16 %v2661, %v2643
    %v4894 = vpack.c.b16 %v2662, %v2644
    %v4895 = vpack.c.b16 %v2681, %v2663
    %v4896 = vpack.c.b16 %v2682, %v2664
    %v4897 = vpack.c.b16 %v2683, %v2665
    %v4898 = vpack.c.b16 %v2684, %v2666
    %v4899 = vpack.c.b16 %v2685, %v2667
    %v4900 = vpack.c.b16 %v2686, %v2668
    %v4901 = vpack.c.b16 %v2687, %v2669
    %v4902 = vpack.c.b16 %v2688, %v2670
    %v4903 = vpack.c.b16 %v2689, %v2671
    %v4904 = vpack.c.b16 %v2690, %v2672
    %v4905 = vpack.c.b16 %v2691, %v2673
    %v4906 = vpack.c.b16 %v2692, %v2674
    %v4907 = vpack.c.b16 %v2693, %v2675
    %v4908 = vpack.c.b16 %v2694, %v2676
    %v4909 = vpack.c.b16 %v2695, %v2677
    %v4910 = vpack.c.b16 %v2696, %v2678
    %v4911 = vpack.c.b16 %v2697, %v2679
    %v4912 = vpack.c.b16 %v2698, %v2680
    %v4913 = vpack.c.b16 %v2717, %v2699
    %v4914 = vpack.c.b16 %v2718, %v2700
    %v4915 = vpack.c.b16 %v2719, %v2701
    %v4916 = vpack.c.b16 %v2720, %v2702
    %v4917 = vpack.c.b16 %v2721, %v2703
    %v4918 = vpack.c.b16 %v2722, %v2704
    %v4919 = vpack.c.b16 %v2723, %v2705
    %v4920 = vpack.c.b16 %v2724, %v2706
    %v4921 = vpack.c.b16 %v2725, %v2707
    %v4922 = vpack.c.b16 %v2726, %v2708
    %v4923 = vpack.c.b16 %v2727, %v2709
    %v4924 = vpack.c.b16 %v2728, %v2710
    %v4925 = vpack.c.b16 %v2729, %v2711
    %v4926 = vpack.c.b16 %v2730, %v2712
    %v4927 = vpack.c.b16 %v2731, %v2713
    %v4928 = vpack.c.b16 %v2732, %v2714
    %v4929 = vpack.c.b16 %v2733, %v2715
    %v4930 = vpack.c.b16 %v2734, %v2716
    %v4931 = vpack.c.b16 %v2753, %v2735
    %v4932 = vpack.c.b16 %v2754, %v2736
    %v4933 = vpack.c.b16 %v2755, %v2737
    %v4934 = vpack.c.b16 %v2756, %v2738
    %v4935 = vpack.c.b16 %v2757, %v2739
    %v4936 = vpack.c.b16 %v2758, %v2740
    %v4937 = vpack.c.b16 %v2759, %v2741
    %v4938 = vpack.c.b16 %v2760, %v2742
    %v4939 = vpack.c.b16 %v2761, %v2743
    %v4940 = vpack.c.b16 %v2762, %v2744
    %v4941 = vpack.c.b16 %v2763, %v2745
    %v4942 = vpack.c.b16 %v2764, %v2746
    %v4943 = vpack.c.b16 %v2765, %v2747
    %v4944 = vpack.c.b16 %v2766, %v2748
    %v4945 = vpack.c.b16 %v2767, %v2749
    %v4946 = vpack.c.b16 %v2768, %v2750
    %v4947 = vpack.c.b16 %v2769, %v2751
    %v4948 = vpack.c.b16 %v2770, %v2752
    %v4949 = vpack.c.b16 %v2789, %v2771
    %v4950 = vpack.c.b16 %v2790, %v2772
    %v4951 = vpack.c.b16 %v2791, %v2773
    %v4952 = vpack.c.b16 %v2792, %v2774
    %v4953 = vpack.c.b16 %v2793, %v2775
    %v4954 = vpack.c.b16 %v2794, %v2776
    %v4955 = vpack.c.b16 %v2795, %v2777
    %v4956 = vpack.c.b16 %v2796, %v2778
    %v4957 = vpack.c.b16 %v2797, %v2779
    %v4958 = vpack.c.b16 %v2798, %v2780
    %v4959 = vpack.c.b16 %v2799, %v2781
    %v4960 = vpack.c.b16 %v2800, %v2782
    %v4961 = vpack.c.b16 %v2801, %v2783
    %v4962 = vpack.c.b16 %v2802, %v2784
    %v4963 = vpack.c.b16 %v2803, %v2785
    %v4964 = vpack.c.b16 %v2804, %v2786
    %v4965 = vpack.c.b16 %v2805, %v2787
    %v4966 = vpack.c.b16 %v2806, %v2788
    %v4967 = vpack.c.b16 %v2825, %v2807
    %v4968 = vpack.c.b16 %v2826, %v2808
    %v4969 = vpack.c.b16 %v2827, %v2809
    %v4970 = vpack.c.b16 %v2828, %v2810
    %v4971 = vpack.c.b16 %v2829, %v2811
    %v4972 = vpack.c.b16 %v2830, %v2812
    %v4973 = vpack.c.b16 %v2831, %v2813
    %v4974 = vpack.c.b16 %v2832, %v2814
    %v4975 = vpack.c.b16 %v2833, %v2815
    %v4976 = vpack.c.b16 %v2834, %v2816
    %v4977 = vpack.c.b16 %v2835, %v2817
    %v4978 = vpack.c.b16 %v2836, %v2818
    %v4979 = vpack.c.b16 %v2837, %v2819
    %v4980 = vpack.c.b16 %v2838, %v2820
    %v4981 = vpack.c.b16 %v2839, %v2821
    %v4982 = vpack.c.b16 %v2840, %v2822
    %v4983 = vpack.c.b16 %v2841, %v2823
    %v4984 = vpack.c.b16 %v2842, %v2824
    %v4985 = vpack.c.b16 %v2861, %v2843
    %v4986 = vpack.c.b16 %v2862, %v2844
    %v4987 = vpack.c.b16 %v2863, %v2845
    %v4988 = vpack.c.b16 %v2864, %v2846
    %v4989 = vpack.c.b16 %v2865, %v2847
    %v4990 = vpack.c.b16 %v2866, %v2848
    %v4991 = vpack.c.b16 %v2867, %v2849
    %v4992 = vpack.c.b16 %v2868, %v2850
    %v4993 = vpack.c.b16 %v2869, %v2851
    %v4994 = vpack.c.b16 %v2870, %v2852
    %v4995 = vpack.c.b16 %v2871, %v2853
    %v4996 = vpack.c.b16 %v2872, %v2854
    %v4997 = vpack.c.b16 %v2873, %v2855
    %v4998 = vpack.c.b16 %v2874, %v2856
    %v4999 = vpack.c.b16 %v2875, %v2857
    %v5000 = vpack.c.b16 %v2876, %v2858
    %v5001 = vpack.c.b16 %v2877, %v2859
    %v5002 = vpack.c.b16 %v2878, %v2860
    %v5003 = vpack.c.b16 %v2897, %v2879
    %v5004 = vpack.c.b16 %v2898, %v2880
    %v5005 = vpack.c.b16 %v2899, %v2881
    %v5006 = vpack.c.b16 %v2900, %v2882
    %v5007 = vpack.c.b16 %v2901, %v2883
    %v5008 = vpack.c.b16 %v2902, %v2884
    %v5009 = vpack.c.b16 %v2903, %v2885
    %v5010 = vpack.c.b16 %v2904, %v2886
    %v5011 = vpack.c.b16 %v2905, %v2887
    %v5012 = vpack.c.b16 %v2906, %v2888
    %v5013 = vpack.c.b16 %v2907, %v2889
    %v5014 = vpack.c.b16 %v2908, %v2890
    %v5015 = vpack.c.b16 %v2909, %v2891
    %v5016 = vpack.c.b16 %v2910, %v2892
    %v5017 = vpack.c.b16 %v2911, %v2893
    %v5018 = vpack.c.b16 %v2912, %v2894
    %v5019 = vpack.c.b16 %v2913, %v2895
    %v5020 = vpack.c.b16 %v2914, %v2896
    %v5021 = vpack.c.b16 %v2933, %v2915
    %v5022 = vpack.c.b16 %v2934, %v2916
    %v5023 = vpack.c.b16 %v2935, %v2917
    %v5024 = vpack.c.b16 %v2936, %v2918
    %v5025 = vpack.c.b16 %v2937, %v2919
    %v5026 = vpack.c.b16 %v2938, %v2920
    %v5027 = vpack.c.b16 %v2939, %v2921
    %v5028 = vpack.c.b16 %v2940, %v2922
    %v5029 = vpack.c.b16 %v2941, %v2923
    %v5030 = vpack.c.b16 %v2942, %v2924
    %v5031 = vpack.c.b16 %v2943, %v2925
    %v5032 = vpack.c.b16 %v2944, %v2926
    %v5033 = vpack.c.b16 %v2945, %v2927
    %v5034 = vpack.c.b16 %v2946, %v2928
    %v5035 = vpack.c.b16 %v2947, %v2929
    %v5036 = vpack.c.b16 %v2948, %v2930
    %v5037 = vpack.c.b16 %v2949, %v2931
    %v5038 = vpack.c.b16 %v2950, %v2932
    %v5039 = vpack.c.b16 %v2969, %v2951
    %v5040 = vpack.c.b16 %v2970, %v2952
    %v5041 = vpack.c.b16 %v2971, %v2953
    %v5042 = vpack.c.b16 %v2972, %v2954
    %v5043 = vpack.c.b16 %v2973, %v2955
    %v5044 = vpack.c.b16 %v2974, %v2956
    %v5045 = vpack.c.b16 %v2975, %v2957
    %v5046 = vpack.c.b16 %v2976, %v2958
    %v5047 = vpack.c.b16 %v2977, %v2959
    %v5048 = vpack.c.b16 %v2978, %v2960
    %v5049 = vpack.c.b16 %v2979, %v2961
    %v5050 = vpack.c.b16 %v2980, %v2962
    %v5051 = vpack.c.b16 %v2981, %v2963
    %v5052 = vpack.c.b16 %v2982, %v2964
    %v5053 = vpack.c.b16 %v2983, %v2965
    %v5054 = vpack.c.b16 %v2984, %v2966
    %v5055 = vpack.c.b16 %v2985, %v2967
    %v5056 = vpack.c.b16 %v2986, %v2968
    %v5057 = vpack.c.b16 %v3005, %v2987
    %v5058 = vpack.c.b16 %v3006, %v2988
    %v5059 = vpack.c.b16 %v3007, %v2989
    %v5060 = vpack.c.b16 %v3008, %v2990
    %v5061 = vpack.c.b16 %v3009, %v2991
    %v5062 = vpack.c.b16 %v3010, %v2992
    %v5063 = vpack.c.b16 %v3011, %v2993
    %v5064 = vpack.c.b16 %v3012, %v2994
    %v5065 = vpack.c.b16 %v3013, %v2995
    %v5066 = vpack.c.b16 %v3014, %v2996
    %v5067 = vpack.c.b16 %v3015, %v2997
    %v5068 = vpack.c.b16 %v3016, %v2998
    %v5069 = vpack.c.b16 %v3017, %v2999
    %v5070 = vpack.c.b16 %v3018, %v3000
    %v5071 = vpack.c.b16 %v3019, %v3001
    %v5072 = vpack.c.b16 %v3020, %v3002
    %v5073 = vpack.c.b16 %v3021, %v3003
    %v5074 = vpack.c.b16 %v3022, %v3004
    %v5075 = vpack.c.b16 %v3041, %v3023
    %v5076 = vpack.c.b16 %v3042, %v3024
    %v5077 = vpack.c.b16 %v3043, %v3025
    %v5078 = vpack.c.b16 %v3044, %v3026
    %v5079 = vpack.c.b16 %v3045, %v3027
    %v5080 = vpack.c.b16 %v3046, %v3028
    %v5081 = vpack.c.b16 %v3047, %v3029
    %v5082 = vpack.c.b16 %v3048, %v3030
    %v5083 = vpack.c.b16 %v3049, %v3031
    %v5084 = vpack.c.b16 %v3050, %v3032
    %v5085 = vpack.c.b16 %v3051, %v3033
    %v5086 = vpack.c.b16 %v3052, %v3034
    %v5087 = vpack.c.b16 %v3053, %v3035
    %v5088 = vpack.c.b16 %v3054, %v3036
    %v5089 = vpack.c.b16 %v3055, %v3037
    %v5090 = vpack.c.b16 %v3056, %v3038
    %v5091 = vpack.c.b16 %v3057, %v3039
    %v5092 = vpack.c.b16 %v3058, %v3040
    %v5093 = vpack.c.b16 %v3077, %v3059
    %v5094 = vpack.c.b16 %v3078, %v3060
    %v5095 = vpack.c.b16 %v3079, %v3061
    %v5096 = vpack.c.b16 %v3080, %v3062
    %v5097 = vpack.c.b16 %v3081, %v3063
    %v5098 = vpack.c.b16 %v3082, %v3064
    %v5099 = vpack.c.b16 %v3083, %v3065
    %v5100 = vpack.c.b16 %v3084, %v3066
    %v5101 = vpack.c.b16 %v3085, %v3067
    %v5102 = vpack.c.b16 %v3086, %v3068
    %v5103 = vpack.c.b16 %v3087, %v3069
    %v5104 = vpack.c.b16 %v3088, %v3070
    %v5105 = vpack.c.b16 %v3089, %v3071
    %v5106 = vpack.c.b16 %v3090, %v3072
    %v5107 = vpack.c.b16 %v3091, %v3073
    %v5108 = vpack.c.b16 %v3092, %v3074
    %v5109 = vpack.c.b16 %v3093, %v3075
    %v5110 = vpack.c.b16 %v3094, %v3076
    %v5111 = vpack.c.b16 %v3113, %v3095
    %v5112 = vpack.c.b16 %v3114, %v3096
    %v5113 = vpack.c.b16 %v3115, %v3097
    %v5114 = vpack.c.b16 %v3116, %v3098
    %v5115 = vpack.c.b16 %v3117, %v3099
    %v5116 = vpack.c.b16 %v3118, %v3100
    %v5117 = vpack.c.b16 %v3119, %v3101
    %v5118 = vpack.c.b16 %v3120, %v3102
    %v5119 = vpack.c.b16 %v3121, %v3103
    %v5120 = vpack.c.b16 %v3122, %v3104
    %v5121 = vpack.c.b16 %v3123, %v3105
    %v5122 = vpack.c.b16 %v3124, %v3106
    %v5123 = vpack.c.b16 %v3125, %v3107
    %v5124 = vpack.c.b16 %v3126, %v3108
    %v5125 = vpack.c.b16 %v3127, %v3109
    %v5126 = vpack.c.b16 %v3128, %v3110
    %v5127 = vpack.c.b16 %v3129, %v3111
    %v5128 = vpack.c.b16 %v3130, %v3112
    %v5129 = vpack.c.b16 %v3149, %v3131
    %v5130 = vpack.c.b16 %v3150, %v3132
    %v5131 = vpack.c.b16 %v3151, %v3133
    %v5132 = vpack.c.b16 %v3152, %v3134
    %v5133 = vpack.c.b16 %v3153, %v3135
    %v5134 = vpack.c.b16 %v3154, %v3136
    %v5135 = vpack.c.b16 %v3155, %v3137
    %v5136 = vpack.c.b16 %v3156, %v3138
    %v5137 = vpack.c.b16 %v3157, %v3139
    %v5138 = vpack.c.b16 %v3158, %v3140
    %v5139 = vpack.c.b16 %v3159, %v3141
    %v5140 = vpack.c.b16 %v3160, %v3142
    %v5141 = vpack.c.b16 %v3161, %v3143
    %v5142 = vpack.c.b16 %v3162, %v3144
    %v5143 = vpack.c.b16 %v3163, %v3145
    %v5144 = vpack.c.b16 %v3164, %v3146
    %v5145 = vpack.c.b16 %v3165, %v3147
    %v5146 = vpack.c.b16 %v3166, %v3148
    %v5147 = vpack.c.b16 %v3185, %v3167
    %v5148 = vpack.c.b16 %v3186, %v3168
    %v5149 = vpack.c.b16 %v3187, %v3169
    %v5150 = vpack.c.b16 %v3188, %v3170
    %v5151 = vpack.c.b16 %v3189, %v3171
    %v5152 = vpack.c.b16 %v3190, %v3172
    %v5153 = vpack.c.b16 %v3191, %v3173
    %v5154 = vpack.c.b16 %v3192, %v3174
    %v5155 = vpack.c.b16 %v3193, %v3175
    %v5156 = vpack.c.b16 %v3194, %v3176
    %v5157 = vpack.c.b16 %v3195, %v3177
    %v5158 = vpack.c.b16 %v3196, %v3178
    %v5159 = vpack.c.b16 %v3197, %v3179
    %v5160 = vpack.c.b16 %v3198, %v3180
    %v5161 = vpack.c.b16 %v3199, %v3181
    %v5162 = vpack.c.b16 %v3200, %v3182
    %v5163 = vpack.c.b16 %v3201, %v3183
    %v5164 = vpack.c.b16 %v3202, %v3184
    %v5165 = vpack.c.b16 %v3221, %v3203
    %v5166 = vpack.c.b16 %v3222, %v3204
    %v5167 = vpack.c.b16 %v3223, %v3205
    %v5168 = vpack.c.b16 %v3224, %v3206
    %v5169 = vpack.c.b16 %v3225, %v3207
    %v5170 = vpack.c.b16 %v3226, %v3208
    %v5171 = vpack.c.b16 %v3227, %v3209
    %v5172 = vpack.c.b16 %v3228, %v3210
    %v5173 = vpack.c.b16 %v3229, %v3211
    %v5174 = vpack.c.b16 %v3230, %v3212
    %v5175 = vpack.c.b16 %v3231, %v3213
    %v5176 = vpack.c.b16 %v3232, %v3214
    %v5177 = vpack.c.b16 %v3233, %v3215
    %v5178 = vpack.c.b16 %v3234, %v3216
    %v5179 = vpack.c.b16 %v3235, %v3217
    %v5180 = vpack.c.b16 %v3236, %v3218
    %v5181 = vpack.c.b16 %v3237, %v3219
    %v5182 = vpack.c.b16 %v3238, %v3220
    %v5183 = vpack.c.b16 %v3257, %v3239
    %v5184 = vpack.c.b16 %v3258, %v3240
    %v5185 = vpack.c.b16 %v3259, %v3241
    %v5186 = vpack.c.b16 %v3260, %v3242
    %v5187 = vpack.c.b16 %v3261, %v3243
    %v5188 = vpack.c.b16 %v3262, %v3244
    %v5189 = vpack.c.b16 %v3263, %v3245
    %v5190 = vpack.c.b16 %v3264, %v3246
    %v5191 = vpack.c.b16 %v3265, %v3247
    %v5192 = vpack.c.b16 %v3266, %v3248
    %v5193 = vpack.c.b16 %v3267, %v3249
    %v5194 = vpack.c.b16 %v3268, %v3250
    %v5195 = vpack.c.b16 %v3269, %v3251
    %v5196 = vpack.c.b16 %v3270, %v3252
    %v5197 = vpack.c.b16 %v3271, %v3253
    %v5198 = vpack.c.b16 %v3272, %v3254
    %v5199 = vpack.c.b16 %v3273, %v3255
    %v5200 = vpack.c.b16 %v3274, %v3256
    %v5201 = vpack.c.b16 %v3293, %v3275
    %v5202 = vpack.c.b16 %v3294, %v3276
    %v5203 = vpack.c.b16 %v3295, %v3277
    %v5204 = vpack.c.b16 %v3296, %v3278
    %v5205 = vpack.c.b16 %v3297, %v3279
    %v5206 = vpack.c.b16 %v3298, %v3280
    %v5207 = vpack.c.b16 %v3299, %v3281
    %v5208 = vpack.c.b16 %v3300, %v3282
    %v5209 = vpack.c.b16 %v3301, %v3283
    %v5210 = vpack.c.b16 %v3302, %v3284
    %v5211 = vpack.c.b16 %v3303, %v3285
    %v5212 = vpack.c.b16 %v3304, %v3286
    %v5213 = vpack.c.b16 %v3305, %v3287
    %v5214 = vpack.c.b16 %v3306, %v3288
    %v5215 = vpack.c.b16 %v3307, %v3289
    %v5216 = vpack.c.b16 %v3308, %v3290
    %v5217 = vpack.c.b16 %v3309, %v3291
    %v5218 = vpack.c.b16 %v3310, %v3292
    %v5219 = vpack.c.b16 %v3329, %v3311
    %v5220 = vpack.c.b16 %v3330, %v3312
    %v5221 = vpack.c.b16 %v3331, %v3313
    %v5222 = vpack.c.b16 %v3332, %v3314
    %v5223 = vpack.c.b16 %v3333, %v3315
    %v5224 = vpack.c.b16 %v3334, %v3316
    %v5225 = vpack.c.b16 %v3335, %v3317
    %v5226 = vpack.c.b16 %v3336, %v3318
    %v5227 = vpack.c.b16 %v3337, %v3319
    %v5228 = vpack.c.b16 %v3338, %v3320
    %v5229 = vpack.c.b16 %v3339, %v3321
    %v5230 = vpack.c.b16 %v3340, %v3322
    %v5231 = vpack.c.b16 %v3341, %v3323
    %v5232 = vpack.c.b16 %v3342, %v3324
    %v5233 = vpack.c.b16 %v3343, %v3325
    %v5234 = vpack.c.b16 %v3344, %v3326
    %v5235 = vpack.c.b16 %v3345, %v3327
    %v5236 = vpack.c.b16 %v3346, %v3328
    %v5237 = vpack.c.b16 %v3365, %v3347
    %v5238 = vpack.c.b16 %v3366, %v3348
    %v5239 = vpack.c.b16 %v3367, %v3349
    %v5240 = vpack.c.b16 %v3368, %v3350
    %v5241 = vpack.c.b16 %v3369, %v3351
    %v5242 = vpack.c.b16 %v3370, %v3352
    %v5243 = vpack.c.b16 %v3371, %v3353
    %v5244 = vpack.c.b16 %v3372, %v3354
    %v5245 = vpack.c.b16 %v3373, %v3355
    %v5246 = vpack.c.b16 %v3374, %v3356
    %v5247 = vpack.c.b16 %v3375, %v3357
    %v5248 = vpack.c.b16 %v3376, %v3358
    %v5249 = vpack.c.b16 %v3377, %v3359
    %v5250 = vpack.c.b16 %v3378, %v3360
    %v5251 = vpack.c.b16 %v3379, %v3361
    %v5252 = vpack.c.b16 %v3380, %v3362
    %v5253 = vpack.c.b16 %v3381, %v3363
    %v5254 = vpack.c.b16 %v3382, %v3364
    %v5255 = vpack.c.b16 %v3401, %v3383
    %v5256 = vpack.c.b16 %v3402, %v3384
    %v5257 = vpack.c.b16 %v3403, %v3385
    %v5258 = vpack.c.b16 %v3404, %v3386
    %v5259 = vpack.c.b16 %v3405, %v3387
    %v5260 = vpack.c.b16 %v3406, %v3388
    %v5261 = vpack.c.b16 %v3407, %v3389
    %v5262 = vpack.c.b16 %v3408, %v3390
    %v5263 = vpack.c.b16 %v3409, %v3391
    %v5264 = vpack.c.b16 %v3410, %v3392
    %v5265 = vpack.c.b16 %v3411, %v3393
    %v5266 = vpack.c.b16 %v3412, %v3394
    %v5267 = vpack.c.b16 %v3413, %v3395
    %v5268 = vpack.c.b16 %v3414, %v3396
    %v5269 = vpack.c.b16 %v3415, %v3397
    %v5270 = vpack.c.b16 %v3416, %v3398
    %v5271 = vpack.c.b16 %v3417, %v3399
    %v5272 = vpack.c.b16 %v3418, %v3400
    %v5273 = vpack.c.b16 %v3437, %v3419
    %v5274 = vpack.c.b16 %v3438, %v3420
    %v5275 = vpack.c.b16 %v3439, %v3421
    %v5276 = vpack.c.b16 %v3440, %v3422
    %v5277 = vpack.c.b16 %v3441, %v3423
    %v5278 = vpack.c.b16 %v3442, %v3424
    %v5279 = vpack.c.b16 %v3443, %v3425
    %v5280 = vpack.c.b16 %v3444, %v3426
    %v5281 = vpack.c.b16 %v3445, %v3427
    %v5282 = vpack.c.b16 %v3446, %v3428
    %v5283 = vpack.c.b16 %v3447, %v3429
    %v5284 = vpack.c.b16 %v3448, %v3430
    %v5285 = vpack.c.b16 %v3449, %v3431
    %v5286 = vpack.c.b16 %v3450, %v3432
    %v5287 = vpack.c.b16 %v3451, %v3433
    %v5288 = vpack.c.b16 %v3452, %v3434
    %v5289 = vpack.c.b16 %v3453, %v3435
    %v5290 = vpack.c.b16 %v3454, %v3436
    %v5291 = vpack.c.b16 %v3473, %v3455
    %v5292 = vpack.c.b16 %v3474, %v3456
    %v5293 = vpack.c.b16 %v3475, %v3457
    %v5294 = vpack.c.b16 %v3476, %v3458
    %v5295 = vpack.c.b16 %v3477, %v3459
    %v5296 = vpack.c.b16 %v3478, %v3460
    %v5297 = vpack.c.b16 %v3479, %v3461
    %v5298 = vpack.c.b16 %v3480, %v3462
    %v5299 = vpack.c.b16 %v3481, %v3463
    %v5300 = vpack.c.b16 %v3482, %v3464
    %v5301 = vpack.c.b16 %v3483, %v3465
    %v5302 = vpack.c.b16 %v3484, %v3466
    %v5303 = vpack.c.b16 %v3485, %v3467
    %v5304 = vpack.c.b16 %v3486, %v3468
    %v5305 = vpack.c.b16 %v3487, %v3469
    %v5306 = vpack.c.b16 %v3488, %v3470
    %v5307 = vpack.c.b16 %v3489, %v3471
    %v5308 = vpack.c.b16 %v3490, %v3472
    %v5309 = vpack.c.b16 %v3509, %v3491
    %v5310 = vpack.c.b16 %v3510, %v3492
    %v5311 = vpack.c.b16 %v3511, %v3493
    %v5312 = vpack.c.b16 %v3512, %v3494
    %v5313 = vpack.c.b16 %v3513, %v3495
    %v5314 = vpack.c.b16 %v3514, %v3496
    %v5315 = vpack.c.b16 %v3515, %v3497
    %v5316 = vpack.c.b16 %v3516, %v3498
    %v5317 = vpack.c.b16 %v3517, %v3499
    %v5318 = vpack.c.b16 %v3518, %v3500
    %v5319 = vpack.c.b16 %v3519, %v3501
    %v5320 = vpack.c.b16 %v3520, %v3502
    %v5321 = vpack.c.b16 %v3521, %v3503
    %v5322 = vpack.c.b16 %v3522, %v3504
    %v5323 = vpack.c.b16 %v3523, %v3505
    %v5324 = vpack.c.b16 %v3524, %v3506
    %v5325 = vpack.c.b16 %v3525, %v3507
    %v5326 = vpack.c.b16 %v3526, %v3508
    %v5327 = vpack.c.b16 %v3545, %v3527
    %v5328 = vpack.c.b16 %v3546, %v3528
    %v5329 = vpack.c.b16 %v3547, %v3529
    %v5330 = vpack.c.b16 %v3548, %v3530
    %v5331 = vpack.c.b16 %v3549, %v3531
    %v5332 = vpack.c.b16 %v3550, %v3532
    %v5333 = vpack.c.b16 %v3551, %v3533
    %v5334 = vpack.c.b16 %v3552, %v3534
    %v5335 = vpack.c.b16 %v3553, %v3535
    %v5336 = vpack.c.b16 %v3554, %v3536
    %v5337 = vpack.c.b16 %v3555, %v3537
    %v5338 = vpack.c.b16 %v3556, %v3538
    %v5339 = vpack.c.b16 %v3557, %v3539
    %v5340 = vpack.c.b16 %v3558, %v3540
    %v5341 = vpack.c.b16 %v3559, %v3541
    %v5342 = vpack.c.b16 %v3560, %v3542
    %v5343 = vpack.c.b16 %v3561, %v3543
    %v5344 = vpack.c.b16 %v3562, %v3544
    %v5345 = vpack.c.b16 %v3581, %v3563
    %v5346 = vpack.c.b16 %v3582, %v3564
    %v5347 = vpack.c.b16 %v3583, %v3565
    %v5348 = vpack.c.b16 %v3584, %v3566
    %v5349 = vpack.c.b16 %v3585, %v3567
    %v5350 = vpack.c.b16 %v3586, %v3568
    %v5351 = vpack.c.b16 %v3587, %v3569
    %v5352 = vpack.c.b16 %v3588, %v3570
    %v5353 = vpack.c.b16 %v3589, %v3571
    %v5354 = vpack.c.b16 %v3590, %v3572
    %v5355 = vpack.c.b16 %v3591, %v3573
    %v5356 = vpack.c.b16 %v3592, %v3574
    %v5357 = vpack.c.b16 %v3593, %v3575
    %v5358 = vpack.c.b16 %v3594, %v3576
    %v5359 = vpack.c.b16 %v3595, %v3577
    %v5360 = vpack.c.b16 %v3596, %v3578
    %v5361 = vpack.c.b16 %v3597, %v3579
    %v5362 = vpack.c.b16 %v3598, %v3580
    %v5363 = vpack.c.b16 %v3617, %v3599
    %v5364 = vpack.c.b16 %v3618, %v3600
    %v5365 = vpack.c.b16 %v3619, %v3601
    %v5366 = vpack.c.b16 %v3620, %v3602
    %v5367 = vpack.c.b16 %v3621, %v3603
    %v5368 = vpack.c.b16 %v3622, %v3604
    %v5369 = vpack.c.b16 %v3623, %v3605
    %v5370 = vpack.c.b16 %v3624, %v3606
    %v5371 = vpack.c.b16 %v3625, %v3607
    %v5372 = vpack.c.b16 %v3626, %v3608
    %v5373 = vpack.c.b16 %v3627, %v3609
    %v5374 = vpack.c.b16 %v3628, %v3610
    %v5375 = vpack.c.b16 %v3629, %v3611
    %v5376 = vpack.c.b16 %v3630, %v3612
    %v5377 = vpack.c.b16 %v3631, %v3613
    %v5378 = vpack.c.b16 %v3632, %v3614
    %v5379 = vpack.c.b16 %v3633, %v3615
    %v5380 = vpack.c.b16 %v3634, %v3616
    %v5381 = vpack.c.b16 %v3653, %v3635
    %v5382 = vpack.c.b16 %v3654, %v3636
    %v5383 = vpack.c.b16 %v3655, %v3637
    %v5384 = vpack.c.b16 %v3656, %v3638
    %v5385 = vpack.c.b16 %v3657, %v3639
    %v5386 = vpack.c.b16 %v3658, %v3640
    %v5387 = vpack.c.b16 %v3659, %v3641
    %v5388 = vpack.c.b16 %v3660, %v3642
    %v5389 = vpack.c.b16 %v3661, %v3643
    %v5390 = vpack.c.b16 %v3662, %v3644
    %v5391 = vpack.c.b16 %v3663, %v3645
    %v5392 = vpack.c.b16 %v3664, %v3646
    %v5393 = vpack.c.b16 %v3665, %v3647
    %v5394 = vpack.c.b16 %v3666, %v3648
    %v5395 = vpack.c.b16 %v3667, %v3649
    %v5396 = vpack.c.b16 %v3668, %v3650
    %v5397 = vpack.c.b16 %v3669, %v3651
    %v5398 = vpack.c.b16 %v3670, %v3652
    %v5399 = vpack.c.b16 %v3689, %v3671
    %v5400 = vpack.c.b16 %v3690, %v3672
    %v5401 = vpack.c.b16 %v3691, %v3673
    %v5402 = vpack.c.b16 %v3692, %v3674
    %v5403 = vpack.c.b16 %v3693, %v3675
    %v5404 = vpack.c.b16 %v3694, %v3676
    %v5405 = vpack.c.b16 %v3695, %v3677
    %v5406 = vpack.c.b16 %v3696, %v3678
    %v5407 = vpack.c.b16 %v3697, %v3679
    %v5408 = vpack.c.b16 %v3698, %v3680
    %v5409 = vpack.c.b16 %v3699, %v3681
    %v5410 = vpack.c.b16 %v3700, %v3682
    %v5411 = vpack.c.b16 %v3701, %v3683
    %v5412 = vpack.c.b16 %v3702, %v3684
    %v5413 = vpack.c.b16 %v3703, %v3685
    %v5414 = vpack.c.b16 %v3704, %v3686
    %v5415 = vpack.c.b16 %v3705, %v3687
    %v5416 = vpack.c.b16 %v3706, %v3688
    %v5417 = vpack.c.b16 %v3725, %v3707
    %v5418 = vpack.c.b16 %v3726, %v3708
    %v5419 = vpack.c.b16 %v3727, %v3709
    %v5420 = vpack.c.b16 %v3728, %v3710
    %v5421 = vpack.c.b16 %v3729, %v3711
    %v5422 = vpack.c.b16 %v3730, %v3712
    %v5423 = vpack.c.b16 %v3731, %v3713
    %v5424 = vpack.c.b16 %v3732, %v3714
    %v5425 = vpack.c.b16 %v3733, %v3715
    %v5426 = vpack.c.b16 %v3734, %v3716
    %v5427 = vpack.c.b16 %v3735, %v3717
    %v5428 = vpack.c.b16 %v3736, %v3718
    %v5429 = vpack.c.b16 %v3737, %v3719
    %v5430 = vpack.c.b16 %v3738, %v3720
    %v5431 = vpack.c.b16 %v3739, %v3721
    %v5432 = vpack.c.b16 %v3740, %v3722
    %v5433 = vpack.c.b16 %v3741, %v3723
    %v5434 = vpack.c.b16 %v3742, %v3724
    %v5435 = vpack.c.b16 %v3761, %v3743
    %v5436 = vpack.c.b16 %v3762, %v3744
    %v5437 = vpack.c.b16 %v3763, %v3745
    %v5438 = vpack.c.b16 %v3764, %v3746
    %v5439 = vpack.c.b16 %v3765, %v3747
    %v5440 = vpack.c.b16 %v3766, %v3748
    %v5441 = vpack.c.b16 %v3767, %v3749
    %v5442 = vpack.c.b16 %v3768, %v3750
    %v5443 = vpack.c.b16 %v3769, %v3751
    %v5444 = vpack.c.b16 %v3770, %v3752
    %v5445 = vpack.c.b16 %v3771, %v3753
    %v5446 = vpack.c.b16 %v3772, %v3754
    %v5447 = vpack.c.b16 %v3773, %v3755
    %v5448 = vpack.c.b16 %v3774, %v3756
    %v5449 = vpack.c.b16 %v3775, %v3757
    %v5450 = vpack.c.b16 %v3776, %v3758
    %v5451 = vpack.c.b16 %v3777, %v3759
    %v5452 = vpack.c.b16 %v3778, %v3760
    %v5453 = vpack.c.b16 %v3797, %v3779
    %v5454 = vpack.c.b16 %v3798, %v3780
    %v5455 = vpack.c.b16 %v3799, %v3781
    %v5456 = vpack.c.b16 %v3800, %v3782
    %v5457 = vpack.c.b16 %v3801, %v3783
    %v5458 = vpack.c.b16 %v3802, %v3784
    %v5459 = vpack.c.b16 %v3803, %v3785
    %v5460 = vpack.c.b16 %v3804, %v3786
    %v5461 = vpack.c.b16 %v3805, %v3787
    %v5462 = vpack.c.b16 %v3806, %v3788
    %v5463 = vpack.c.b16 %v3807, %v3789
    %v5464 = vpack.c.b16 %v3808, %v3790
    %v5465 = vpack.c.b16 %v3809, %v3791
    %v5466 = vpack.c.b16 %v3810, %v3792
    %v5467 = vpack.c.b16 %v3811, %v3793
    %v5468 = vpack.c.b16 %v3812, %v3794
    %v5469 = vpack.c.b16 %v3813, %v3795
    %v5470 = vpack.c.b16 %v3814, %v3796
    %v5471 = vpack.c.b16 %v3833, %v3815
    %v5472 = vpack.c.b16 %v3834, %v3816
    %v5473 = vpack.c.b16 %v3835, %v3817
    %v5474 = vpack.c.b16 %v3836, %v3818
    %v5475 = vpack.c.b16 %v3837, %v3819
    %v5476 = vpack.c.b16 %v3838, %v3820
    %v5477 = vpack.c.b16 %v3839, %v3821
    %v5478 = vpack.c.b16 %v3840, %v3822
    %v5479 = vpack.c.b16 %v3841, %v3823
    %v5480 = vpack.c.b16 %v3842, %v3824
    %v5481 = vpack.c.b16 %v3843, %v3825
    %v5482 = vpack.c.b16 %v3844, %v3826
    %v5483 = vpack.c.b16 %v3845, %v3827
    %v5484 = vpack.c.b16 %v3846, %v3828
    %v5485 = vpack.c.b16 %v3847, %v3829
    %v5486 = vpack.c.b16 %v3848, %v3830
    %v5487 = vpack.c.b16 %v3849, %v3831
    %v5488 = vpack.c.b16 %v3850, %v3832
    %v5489 = vpack.c.b16 %v3869, %v3851
    %v5490 = vpack.c.b16 %v3870, %v3852
    %v5491 = vpack.c.b16 %v3871, %v3853
    %v5492 = vpack.c.b16 %v3872, %v3854
    %v5493 = vpack.c.b16 %v3873, %v3855
    %v5494 = vpack.c.b16 %v3874, %v3856
    %v5495 = vpack.c.b16 %v3875, %v3857
    %v5496 = vpack.c.b16 %v3876, %v3858
    %v5497 = vpack.c.b16 %v3877, %v3859
    %v5498 = vpack.c.b16 %v3878, %v3860
    %v5499 = vpack.c.b16 %v3879, %v3861
    %v5500 = vpack.c.b16 %v3880, %v3862
    %v5501 = vpack.c.b16 %v3881, %v3863
    %v5502 = vpack.c.b16 %v3882, %v3864
    %v5503 = vpack.c.b16 %v3883, %v3865
    %v5504 = vpack.c.b16 %v3884, %v3866
    %v5505 = vpack.c.b16 %v3885, %v3867
    %v5506 = vpack.c.b16 %v3886, %v3868
    %v5507 = vpack.c.b16 %v3905, %v3887
    %v5508 = vpack.c.b16 %v3906, %v3888
    %v5509 = vpack.c.b16 %v3907, %v3889
    %v5510 = vpack.c.b16 %v3908, %v3890
    %v5511 = vpack.c.b16 %v3909, %v3891
    %v5512 = vpack.c.b16 %v3910, %v3892
    %v5513 = vpack.c.b16 %v3911, %v3893
    %v5514 = vpack.c.b16 %v3912, %v3894
    %v5515 = vpack.c.b16 %v3913, %v3895
    %v5516 = vpack.c.b16 %v3914, %v3896
    %v5517 = vpack.c.b16 %v3915, %v3897
    %v5518 = vpack.c.b16 %v3916, %v3898
    %v5519 = vpack.c.b16 %v3917, %v3899
    %v5520 = vpack.c.b16 %v3918, %v3900
    %v5521 = vpack.c.b16 %v3919, %v3901
    %v5522 = vpack.c.b16 %v3920, %v3902
    %v5523 = vpack.c.b16 %v3921, %v3903
    %v5524 = vpack.c.b16 %v3922, %v3904
    %v5525 = vpack.c.b16 %v3941, %v3923
    %v5526 = vpack.c.b16 %v3942, %v3924
    %v5527 = vpack.c.b16 %v3943, %v3925
    %v5528 = vpack.c.b16 %v3944, %v3926
    %v5529 = vpack.c.b16 %v3945, %v3927
    %v5530 = vpack.c.b16 %v3946, %v3928
    %v5531 = vpack.c.b16 %v3947, %v3929
    %v5532 = vpack.c.b16 %v3948, %v3930
    %v5533 = vpack.c.b16 %v3949, %v3931
    %v5534 = vpack.c.b16 %v3950, %v3932
    %v5535 = vpack.c.b16 %v3951, %v3933
    %v5536 = vpack.c.b16 %v3952, %v3934
    %v5537 = vpack.c.b16 %v3953, %v3935
    %v5538 = vpack.c.b16 %v3954, %v3936
    %v5539 = vpack.c.b16 %v3955, %v3937
    %v5540 = vpack.c.b16 %v3956, %v3938
    %v5541 = vpack.c.b16 %v3957, %v3939
    %v5542 = vpack.c.b16 %v3958, %v3940
    %v5543 = vpack.c.b16 %v3977, %v3959
    %v5544 = vpack.c.b16 %v3978, %v3960
    %v5545 = vpack.c.b16 %v3979, %v3961
    %v5546 = vpack.c.b16 %v3980, %v3962
    %v5547 = vpack.c.b16 %v3981, %v3963
    %v5548 = vpack.c.b16 %v3982, %v3964
    %v5549 = vpack.c.b16 %v3983, %v3965
    %v5550 = vpack.c.b16 %v3984, %v3966
    %v5551 = vpack.c.b16 %v3985, %v3967
    %v5552 = vpack.c.b16 %v3986, %v3968
    %v5553 = vpack.c.b16 %v3987, %v3969
    %v5554 = vpack.c.b16 %v3988, %v3970
    %v5555 = vpack.c.b16 %v3989, %v3971
    %v5556 = vpack.c.b16 %v3990, %v3972
    %v5557 = vpack.c.b16 %v3991, %v3973
    %v5558 = vpack.c.b16 %v3992, %v3974
    %v5559 = vpack.c.b16 %v3993, %v3975
    %v5560 = vpack.c.b16 %v3994, %v3976
    %v5561 = vpack.c.b16 %v4013, %v3995
    %v5562 = vpack.c.b16 %v4014, %v3996
    %v5563 = vpack.c.b16 %v4015, %v3997
    %v5564 = vpack.c.b16 %v4016, %v3998
    %v5565 = vpack.c.b16 %v4017, %v3999
    %v5566 = vpack.c.b16 %v4018, %v4000
    %v5567 = vpack.c.b16 %v4019, %v4001
    %v5568 = vpack.c.b16 %v4020, %v4002
    %v5569 = vpack.c.b16 %v4021, %v4003
    %v5570 = vpack.c.b16 %v4022, %v4004
    %v5571 = vpack.c.b16 %v4023, %v4005
    %v5572 = vpack.c.b16 %v4024, %v4006
    %v5573 = vpack.c.b16 %v4025, %v4007
    %v5574 = vpack.c.b16 %v4026, %v4008
    %v5575 = vpack.c.b16 %v4027, %v4009
    %v5576 = vpack.c.b16 %v4028, %v4010
    %v5577 = vpack.c.b16 %v4029, %v4011
    %v5578 = vpack.c.b16 %v4030, %v4012
    %v5579 = vpack.c.b16 %v4049, %v4031
    %v5580 = vpack.c.b16 %v4050, %v4032
    %v5581 = vpack.c.b16 %v4051, %v4033
    %v5582 = vpack.c.b16 %v4052, %v4034
    %v5583 = vpack.c.b16 %v4053, %v4035
    %v5584 = vpack.c.b16 %v4054, %v4036
    %v5585 = vpack.c.b16 %v4055, %v4037
    %v5586 = vpack.c.b16 %v4056, %v4038
    %v5587 = vpack.c.b16 %v4057, %v4039
    %v5588 = vpack.c.b16 %v4058, %v4040
    %v5589 = vpack.c.b16 %v4059, %v4041
    %v5590 = vpack.c.b16 %v4060, %v4042
    %v5591 = vpack.c.b16 %v4061, %v4043
    %v5592 = vpack.c.b16 %v4062, %v4044
    %v5593 = vpack.c.b16 %v4063, %v4045
    %v5594 = vpack.c.b16 %v4064, %v4046
    %v5595 = vpack.c.b16 %v4065, %v4047
    %v5596 = vpack.c.b16 %v4066, %v4048
    %v5597 = vpack.c.b16 %v4085, %v4067
    %v5598 = vpack.c.b16 %v4086, %v4068
    %v5599 = vpack.c.b16 %v4087, %v4069
    %v5600 = vpack.c.b16 %v4088, %v4070
    %v5601 = vpack.c.b16 %v4089, %v4071
    %v5602 = vpack.c.b16 %v4090, %v4072
    %v5603 = vpack.c.b16 %v4091, %v4073
    %v5604 = vpack.c.b16 %v4092, %v4074
    %v5605 = vpack.c.b16 %v4093, %v4075
    %v5606 = vpack.c.b16 %v4094, %v4076
    %v5607 = vpack.c.b16 %v4095, %v4077
    %v5608 = vpack.c.b16 %v4096, %v4078
    %v5609 = vpack.c.b16 %v4097, %v4079
    %v5610 = vpack.c.b16 %v4098, %v4080
    %v5611 = vpack.c.b16 %v4099, %v4081
    %v5612 = vpack.c.b16 %v4100, %v4082
    %v5613 = vpack.c.b16 %v4101, %v4083
    %v5614 = vpack.c.b16 %v4102, %v4084
    %v5615 = vpack.c.b16 %v4121, %v4103
    %v5616 = vpack.c.b16 %v4122, %v4104
    %v5617 = vpack.c.b16 %v4123, %v4105
    %v5618 = vpack.c.b16 %v4124, %v4106
    %v5619 = vpack.c.b16 %v4125, %v4107
    %v5620 = vpack.c.b16 %v4126, %v4108
    %v5621 = vpack.c.b16 %v4127, %v4109
    %v5622 = vpack.c.b16 %v4128, %v4110
    %v5623 = vpack.c.b16 %v4129, %v4111
    %v5624 = vpack.c.b16 %v4130, %v4112
    %v5625 = vpack.c.b16 %v4131, %v4113
    %v5626 = vpack.c.b16 %v4132, %v4114
    %v5627 = vpack.c.b16 %v4133, %v4115
    %v5628 = vpack.c.b16 %v4134, %v4116
    %v5629 = vpack.c.b16 %v4135, %v4117
    %v5630 = vpack.c.b16 %v4136, %v4118
    %v5631 = vpack.c.b16 %v4137, %v4119
    %v5632 = vpack.c.b16 %v4138, %v4120
    %v5633 = vpack.c.b16 %v4157, %v4139
    %v5634 = vpack.c.b16 %v4158, %v4140
    %v5635 = vpack.c.b16 %v4159, %v4141
    %v5636 = vpack.c.b16 %v4160, %v4142
    %v5637 = vpack.c.b16 %v4161, %v4143
    %v5638 = vpack.c.b16 %v4162, %v4144
    %v5639 = vpack.c.b16 %v4163, %v4145
    %v5640 = vpack.c.b16 %v4164, %v4146
    %v5641 = vpack.c.b16 %v4165, %v4147
    %v5642 = vpack.c.b16 %v4166, %v4148
    %v5643 = vpack.c.b16 %v4167, %v4149
    %v5644 = vpack.c.b16 %v4168, %v4150
    %v5645 = vpack.c.b16 %v4169, %v4151
    %v5646 = vpack.c.b16 %v4170, %v4152
    %v5647 = vpack.c.b16 %v4171, %v4153
    %v5648 = vpack.c.b16 %v4172, %v4154
    %v5649 = vpack.c.b16 %v4173, %v4155
    %v5650 = vpack.c.b16 %v4174, %v4156
    %v5651 = vpack.c.b16 %v4193, %v4175
    %v5652 = vpack.c.b16 %v4194, %v4176
    %v5653 = vpack.c.b16 %v4195, %v4177
    %v5654 = vpack.c.b16 %v4196, %v4178
    %v5655 = vpack.c.b16 %v4197, %v4179
    %v5656 = vpack.c.b16 %v4198, %v4180
    %v5657 = vpack.c.b16 %v4199, %v4181
    %v5658 = vpack.c.b16 %v4200, %v4182
    %v5659 = vpack.c.b16 %v4201, %v4183
    %v5660 = vpack.c.b16 %v4202, %v4184
    %v5661 = vpack.c.b16 %v4203, %v4185
    %v5662 = vpack.c.b16 %v4204, %v4186
    %v5663 = vpack.c.b16 %v4205, %v4187
    %v5664 = vpack.c.b16 %v4206, %v4188
    %v5665 = vpack.c.b16 %v4207, %v4189
    %v5666 = vpack.c.b16 %v4208, %v4190
    %v5667 = vpack.c.b16 %v4209, %v4191
    %v5668 = vpack.c.b16 %v4210, %v4192
    %v5669 = vpack.c.b16 %v4229, %v4211
    %v5670 = vpack.c.b16 %v4230, %v4212
    %v5671 = vpack.c.b16 %v4231, %v4213
    %v5672 = vpack.c.b16 %v4232, %v4214
    %v5673 = vpack.c.b16 %v4233, %v4215
    %v5674 = vpack.c.b16 %v4234, %v4216
    %v5675 = vpack.c.b16 %v4235, %v4217
    %v5676 = vpack.c.b16 %v4236, %v4218
    %v5677 = vpack.c.b16 %v4237, %v4219
    %v5678 = vpack.c.b16 %v4238, %v4220
    %v5679 = vpack.c.b16 %v4239, %v4221
    %v5680 = vpack.c.b16 %v4240, %v4222
    %v5681 = vpack.c.b16 %v4241, %v4223
    %v5682 = vpack.c.b16 %v4242, %v4224
    %v5683 = vpack.c.b16 %v4243, %v4225
    %v5684 = vpack.c.b16 %v4244, %v4226
    %v5685 = vpack.c.b16 %v4245, %v4227
    %v5686 = vpack.c.b16 %v4246, %v4228
    %v5687 = vpack.c.b16 %v4265, %v4247
    %v5688 = vpack.c.b16 %v4266, %v4248
    %v5689 = vpack.c.b16 %v4267, %v4249
    %v5690 = vpack.c.b16 %v4268, %v4250
    %v5691 = vpack.c.b16 %v4269, %v4251
    %v5692 = vpack.c.b16 %v4270, %v4252
    %v5693 = vpack.c.b16 %v4271, %v4253
    %v5694 = vpack.c.b16 %v4272, %v4254
    %v5695 = vpack.c.b16 %v4273, %v4255
    %v5696 = vpack.c.b16 %v4274, %v4256
    %v5697 = vpack.c.b16 %v4275, %v4257
    %v5698 = vpack.c.b16 %v4276, %v4258
    %v5699 = vpack.c.b16 %v4277, %v4259
    %v5700 = vpack.c.b16 %v4278, %v4260
    %v5701 = vpack.c.b16 %v4279, %v4261
    %v5702 = vpack.c.b16 %v4280, %v4262
    %v5703 = vpack.c.b16 %v4281, %v4263
    %v5704 = vpack.c.b16 %v4282, %v4264
    %v5705 = vpack.c.b16 %v4301, %v4283
    %v5706 = vpack.c.b16 %v4302, %v4284
    %v5707 = vpack.c.b16 %v4303, %v4285
    %v5708 = vpack.c.b16 %v4304, %v4286
    %v5709 = vpack.c.b16 %v4305, %v4287
    %v5710 = vpack.c.b16 %v4306, %v4288
    %v5711 = vpack.c.b16 %v4307, %v4289
    %v5712 = vpack.c.b16 %v4308, %v4290
    %v5713 = vpack.c.b16 %v4309, %v4291
    %v5714 = vpack.c.b16 %v4310, %v4292
    %v5715 = vpack.c.b16 %v4311, %v4293
    %v5716 = vpack.c.b16 %v4312, %v4294
    %v5717 = vpack.c.b16 %v4313, %v4295
    %v5718 = vpack.c.b16 %v4314, %v4296
    %v5719 = vpack.c.b16 %v4315, %v4297
    %v5720 = vpack.c.b16 %v4316, %v4298
    %v5721 = vpack.c.b16 %v4317, %v4299
    %v5722 = vpack.c.b16 %v4318, %v4300
    %v5723 = vpack.c.b16 %v4337, %v4319
    %v5724 = vpack.c.b16 %v4338, %v4320
    %v5725 = vpack.c.b16 %v4339, %v4321
    %v5726 = vpack.c.b16 %v4340, %v4322
    %v5727 = vpack.c.b16 %v4341, %v4323
    %v5728 = vpack.c.b16 %v4342, %v4324
    %v5729 = vpack.c.b16 %v4343, %v4325
    %v5730 = vpack.c.b16 %v4344, %v4326
    %v5731 = vpack.c.b16 %v4345, %v4327
    %v5732 = vpack.c.b16 %v4346, %v4328
    %v5733 = vpack.c.b16 %v4347, %v4329
    %v5734 = vpack.c.b16 %v4348, %v4330
    %v5735 = vpack.c.b16 %v4349, %v4331
    %v5736 = vpack.c.b16 %v4350, %v4332
    %v5737 = vpack.c.b16 %v4351, %v4333
    %v5738 = vpack.c.b16 %v4352, %v4334
    %v5739 = vpack.c.b16 %v4353, %v4335
    %v5740 = vpack.c.b16 %v4354, %v4336
    %v5741 = vpack.c.b16 %v4373, %v4355
    %v5742 = vpack.c.b16 %v4374, %v4356
    %v5743 = vpack.c.b16 %v4375, %v4357
    %v5744 = vpack.c.b16 %v4376, %v4358
    %v5745 = vpack.c.b16 %v4377, %v4359
    %v5746 = vpack.c.b16 %v4378, %v4360
    %v5747 = vpack.c.b16 %v4379, %v4361
    %v5748 = vpack.c.b16 %v4380, %v4362
    %v5749 = vpack.c.b16 %v4381, %v4363
    %v5750 = vpack.c.b16 %v4382, %v4364
    %v5751 = vpack.c.b16 %v4383, %v4365
    %v5752 = vpack.c.b16 %v4384, %v4366
    %v5753 = vpack.c.b16 %v4385, %v4367
    %v5754 = vpack.c.b16 %v4386, %v4368
    %v5755 = vpack.c.b16 %v4387, %v4369
    %v5756 = vpack.c.b16 %v4388, %v4370
    %v5757 = vpack.c.b16 %v4389, %v4371
    %v5758 = vpack.c.b16 %v4390, %v4372
    %v5759 = vpack.c.b16 %v4409, %v4391
    %v5760 = vpack.c.b16 %v4410, %v4392
    %v5761 = vpack.c.b16 %v4411, %v4393
    %v5762 = vpack.c.b16 %v4412, %v4394
    %v5763 = vpack.c.b16 %v4413, %v4395
    %v5764 = vpack.c.b16 %v4414, %v4396
    %v5765 = vpack.c.b16 %v4415, %v4397
    %v5766 = vpack.c.b16 %v4416, %v4398
    %v5767 = vpack.c.b16 %v4417, %v4399
    %v5768 = vpack.c.b16 %v4418, %v4400
    %v5769 = vpack.c.b16 %v4419, %v4401
    %v5770 = vpack.c.b16 %v4420, %v4402
    %v5771 = vpack.c.b16 %v4421, %v4403
    %v5772 = vpack.c.b16 %v4422, %v4404
    %v5773 = vpack.c.b16 %v4423, %v4405
    %v5774 = vpack.c.b16 %v4424, %v4406
    %v5775 = vpack.c.b16 %v4425, %v4407
    %v5776 = vpack.c.b16 %v4426, %v4408
    %v5777 = vpack.c.b16 %v4445, %v4427
    %v5778 = vpack.c.b16 %v4446, %v4428
    %v5779 = vpack.c.b16 %v4447, %v4429
    %v5780 = vpack.c.b16 %v4448, %v4430
    %v5781 = vpack.c.b16 %v4449, %v4431
    %v5782 = vpack.c.b16 %v4450, %v4432
    %v5783 = vpack.c.b16 %v4451, %v4433
    %v5784 = vpack.c.b16 %v4452, %v4434
    %v5785 = vpack.c.b16 %v4453, %v4435
    %v5786 = vpack.c.b16 %v4454, %v4436
    %v5787 = vpack.c.b16 %v4455, %v4437
    %v5788 = vpack.c.b16 %v4456, %v4438
    %v5789 = vpack.c.b16 %v4457, %v4439
    %v5790 = vpack.c.b16 %v4458, %v4440
    %v5791 = vpack.c.b16 %v4459, %v4441
    %v5792 = vpack.c.b16 %v4460, %v4442
    %v5793 = vpack.c.b16 %v4461, %v4443
    %v5794 = vpack.c.b16 %v4462, %v4444
    %v5795 = vpack.c.b16 %v4481, %v4463
    %v5796 = vpack.c.b16 %v4482, %v4464
    %v5797 = vpack.c.b16 %v4483, %v4465
    %v5798 = vpack.c.b16 %v4484, %v4466
    %v5799 = vpack.c.b16 %v4485, %v4467
    %v5800 = vpack.c.b16 %v4486, %v4468
    %v5801 = vpack.c.b16 %v4487, %v4469
    %v5802 = vpack.c.b16 %v4488, %v4470
    %v5803 = vpack.c.b16 %v4489, %v4471
    %v5804 = vpack.c.b16 %v4490, %v4472
    %v5805 = vpack.c.b16 %v4491, %v4473
    %v5806 = vpack.c.b16 %v4492, %v4474
    %v5807 = vpack.c.b16 %v4493, %v4475
    %v5808 = vpack.c.b16 %v4494, %v4476
    %v5809 = vpack.c.b16 %v4495, %v4477
    %v5810 = vpack.c.b16 %v4496, %v4478
    %v5811 = vpack.c.b16 %v4497, %v4479
    %v5812 = vpack.c.b16 %v4498, %v4480
    %v5813 = vpack.c.b16 %v4517, %v4499
    %v5814 = vpack.c.b16 %v4518, %v4500
    %v5815 = vpack.c.b16 %v4519, %v4501
    %v5816 = vpack.c.b16 %v4520, %v4502
    %v5817 = vpack.c.b16 %v4521, %v4503
    %v5818 = vpack.c.b16 %v4522, %v4504
    %v5819 = vpack.c.b16 %v4523, %v4505
    %v5820 = vpack.c.b16 %v4524, %v4506
    %v5821 = vpack.c.b16 %v4525, %v4507
    %v5822 = vpack.c.b16 %v4526, %v4508
    %v5823 = vpack.c.b16 %v4527, %v4509
    %v5824 = vpack.c.b16 %v4528, %v4510
    %v5825 = vpack.c.b16 %v4529, %v4511
    %v5826 = vpack.c.b16 %v4530, %v4512
    %v5827 = vpack.c.b16 %v4531, %v4513
    %v5828 = vpack.c.b16 %v4532, %v4514
    %v5829 = vpack.c.b16 %v4533, %v4515
    %v5830 = vpack.c.b16 %v4534, %v4516
    %v5831 = vpack.c.b16 %v4553, %v4535
    %v5832 = vpack.c.b16 %v4554, %v4536
    %v5833 = vpack.c.b16 %v4555, %v4537
    %v5834 = vpack.c.b16 %v4556, %v4538
    %v5835 = vpack.c.b16 %v4557, %v4539
    %v5836 = vpack.c.b16 %v4558, %v4540
    %v5837 = vpack.c.b16 %v4559, %v4541
    %v5838 = vpack.c.b16 %v4560, %v4542
    %v5839 = vpack.c.b16 %v4561, %v4543
    %v5840 = vpack.c.b16 %v4562, %v4544
    %v5841 = vpack.c.b16 %v4563, %v4545
    %v5842 = vpack.c.b16 %v4564, %v4546
    %v5843 = vpack.c.b16 %v4565, %v4547
    %v5844 = vpack.c.b16 %v4566, %v4548
    %v5845 = vpack.c.b16 %v4567, %v4549
    %v5846 = vpack.c.b16 %v4568, %v4550
    %v5847 = vpack.c.b16 %v4569, %v4551
    %v5848 = vpack.c.b16 %v4570, %v4552
    %v5849 = vpack.c.b16 %v4589, %v4571
    %v5850 = vpack.c.b16 %v4590, %v4572
    %v5851 = vpack.c.b16 %v4591, %v4573
    %v5852 = vpack.c.b16 %v4592, %v4574
    %v5853 = vpack.c.b16 %v4593, %v4575
    %v5854 = vpack.c.b16 %v4594, %v4576
    %v5855 = vpack.c.b16 %v4595, %v4577
    %v5856 = vpack.c.b16 %v4596, %v4578
    %v5857 = vpack.c.b16 %v4597, %v4579
    %v5858 = vpack.c.b16 %v4598, %v4580
    %v5859 = vpack.c.b16 %v4599, %v4581
    %v5860 = vpack.c.b16 %v4600, %v4582
    %v5861 = vpack.c.b16 %v4601, %v4583
    %v5862 = vpack.c.b16 %v4602, %v4584
    %v5863 = vpack.c.b16 %v4603, %v4585
    %v5864 = vpack.c.b16 %v4604, %v4586
    %v5865 = vpack.c.b16 %v4605, %v4587
    %v5866 = vpack.c.b16 %v4606, %v4588
    %v5867 = vpack.c.b16 %v4625, %v4607
    %v5868 = vpack.c.b16 %v4626, %v4608
    %v5869 = vpack.c.b16 %v4627, %v4609
    %v5870 = vpack.c.b16 %v4628, %v4610
    %v5871 = vpack.c.b16 %v4629, %v4611
    %v5872 = vpack.c.b16 %v4630, %v4612
    %v5873 = vpack.c.b16 %v4631, %v4613
    %v5874 = vpack.c.b16 %v4632, %v4614
    %v5875 = vpack.c.b16 %v4633, %v4615
    %v5876 = vpack.c.b16 %v4634, %v4616
    %v5877 = vpack.c.b16 %v4635, %v4617
    %v5878 = vpack.c.b16 %v4636, %v4618
    %v5879 = vpack.c.b16 %v4637, %v4619
    %v5880 = vpack.c.b16 %v4638, %v4620
    %v5881 = vpack.c.b16 %v4639, %v4621
    %v5882 = vpack.c.b16 %v4640, %v4622
    %v5883 = vpack.c.b16 %v4641, %v4623
    %v5884 = vpack.c.b16 %v4642, %v4624
    %v5885 = vpack.c.b16 %v4661, %v4643
    %v5886 = vpack.c.b16 %v4662, %v4644
    %v5887 = vpack.c.b16 %v4663, %v4645
    %v5888 = vpack.c.b16 %v4664, %v4646
    %v5889 = vpack.c.b16 %v4665, %v4647
    %v5890 = vpack.c.b16 %v4666, %v4648
    %v5891 = vpack.c.b16 %v4667, %v4649
    %v5892 = vpack.c.b16 %v4668, %v4650
    %v5893 = vpack.c.b16 %v4669, %v4651
    %v5894 = vpack.c.b16 %v4670, %v4652
    %v5895 = vpack.c.b16 %v4671, %v4653
    %v5896 = vpack.c.b16 %v4672, %v4654
    %v5897 = vpack.c.b16 %v4673, %v4655
    %v5898 = vpack.c.b16 %v4674, %v4656
    %v5899 = vpack.c.b16 %v4675, %v4657
    %v5900 = vpack.c.b16 %v4676, %v4658
    %v5901 = vpack.c.b16 %v4677, %v4659
    %v5902 = vpack.c.b16 %v4678, %v4660
    %v5903 = vpack.c.b16 %v4697, %v4679
    %v5904 = vpack.c.b16 %v4698, %v4680
    %v5905 = vpack.c.b16 %v4699, %v4681
    %v5906 = vpack.c.b16 %v4700, %v4682
    %v5907 = vpack.c.b16 %v4701, %v4683
    %v5908 = vpack.c.b16 %v4702, %v4684
    %v5909 = vpack.c.b16 %v4703, %v4685
    %v5910 = vpack.c.b16 %v4704, %v4686
    %v5911 = vpack.c.b16 %v4705, %v4687
    %v5912 = vpack.c.b16 %v4706, %v4688
    %v5913 = vpack.c.b16 %v4707, %v4689
    %v5914 = vpack.c.b16 %v4708, %v4690
    %v5915 = vpack.c.b16 %v4709, %v4691
    %v5916 = vpack.c.b16 %v4710, %v4692
    %v5917 = vpack.c.b16 %v4711, %v4693
    %v5918 = vpack.c.b16 %v4712, %v4694
    %v5919 = vpack.c.b16 %v4713, %v4695
    %v5920 = vpack.c.b16 %v4714, %v4696
    %v5921 = vpack.c.b16 %v4733, %v4715
    %v5922 = vpack.c.b16 %v4734, %v4716
    %v5923 = vpack.c.b16 %v4735, %v4717
    %v5924 = vpack.c.b16 %v4736, %v4718
    %v5925 = vpack.c.b16 %v4737, %v4719
    %v5926 = vpack.c.b16 %v4738, %v4720
    %v5927 = vpack.c.b16 %v4739, %v4721
    %v5928 = vpack.c.b16 %v4740, %v4722
    %v5929 = vpack.c.b16 %v4741, %v4723
    %v5930 = vpack.c.b16 %v4742, %v4724
    %v5931 = vpack.c.b16 %v4743, %v4725
    %v5932 = vpack.c.b16 %v4744, %v4726
    %v5933 = vpack.c.b16 %v4745, %v4727
    %v5934 = vpack.c.b16 %v4746, %v4728
    %v5935 = vpack.c.b16 %v4747, %v4729
    %v5936 = vpack.c.b16 %v4748, %v4730
    %v5937 = vpack.c.b16 %v4749, %v4731
    %v5938 = vpack.c.b16 %v4750, %v4732
    %v5939 = vpack.c.b16 %v4769, %v4751
    %v5940 = vpack.c.b16 %v4770, %v4752
    %v5941 = vpack.c.b16 %v4771, %v4753
    %v5942 = vpack.c.b16 %v4772, %v4754
    %v5943 = vpack.c.b16 %v4773, %v4755
    %v5944 = vpack.c.b16 %v4774, %v4756
    %v5945 = vpack.c.b16 %v4775, %v4757
    %v5946 = vpack.c.b16 %v4776, %v4758
    %v5947 = vpack.c.b16 %v4777, %v4759
    %v5948 = vpack.c.b16 %v4778, %v4760
    %v5949 = vpack.c.b16 %v4779, %v4761
    %v5950 = vpack.c.b16 %v4780, %v4762
    %v5951 = vpack.c.b16 %v4781, %v4763
    %v5952 = vpack.c.b16 %v4782, %v4764
    %v5953 = vpack.c.b16 %v4783, %v4765
    %v5954 = vpack.c.b16 %v4784, %v4766
    %v5955 = vpack.c.b16 %v4785, %v4767
    %v5956 = vpack.c.b16 %v4786, %v4768
    %v5957 = vpack.c.b16 %v4805, %v4787
    %v5958 = vpack.c.b16 %v4806, %v4788
    %v5959 = vpack.c.b16 %v4807, %v4789
    %v5960 = vpack.c.b16 %v4808, %v4790
    %v5961 = vpack.c.b16 %v4809, %v4791
    %v5962 = vpack.c.b16 %v4810, %v4792
    %v5963 = vpack.c.b16 %v4811, %v4793
    %v5964 = vpack.c.b16 %v4812, %v4794
    %v5965 = vpack.c.b16 %v4813, %v4795
    %v5966 = vpack.c.b16 %v4814, %v4796
    %v5967 = vpack.c.b16 %v4815, %v4797
    %v5968 = vpack.c.b16 %v4816, %v4798
    %v5969 = vpack.c.b16 %v4817, %v4799
    %v5970 = vpack.c.b16 %v4818, %v4800
    %v5971 = vpack.c.b16 %v4819, %v4801
    %v5972 = vpack.c.b16 %v4820, %v4802
    %v5973 = vpack.c.b16 %v4821, %v4803
    %v5974 = vpack.c.b16 %v4822, %v4804
    %7127 = vmatprep.subr.bf16.mxu0 %v4824
    %7128 = vmatpush1.bf16.msra.mxu0 %v4823
    %7129 = vmatprep.subr.bf16.mxu0 %v4842
    %7130 = vmatpush1.bf16.msra.mxu0 %v4841
    %7131 = vmatprep.subr.bf16.mxu0 %v4860
    %7132 = vmatpush1.bf16.msra.mxu0 %v4859
    %7133 = vmatprep.subr.bf16.mxu0 %v4878
    %7134 = vmatpush1.bf16.msra.mxu0 %v4877
    %7135 = vmatprep.subr.bf16.mxu0 %v4896
    %7136 = vmatpush1.bf16.msra.mxu0 %v4895
    %7137 = vmatprep.subr.bf16.mxu0 %v4914
    %7138 = vmatpush1.bf16.msra.mxu0 %v4913
    %7139 = vmatprep.subr.bf16.mxu0 %v4932
    %7140 = vmatpush1.bf16.msra.mxu0 %v4931
    %7141 = vmatprep.subr.bf16.mxu0 %v4950
    %7142 = vmatpush1.bf16.msra.mxu0 %v4949
    %7143 = vmatprep.subr.bf16.mxu0 %v4968
    %7144 = vmatpush1.bf16.msra.mxu0 %v4967
    %7145 = vmatprep.subr.bf16.mxu0 %v4986
    %7146 = vmatpush1.bf16.msra.mxu0 %v4985
    %7147 = vmatprep.subr.bf16.mxu0 %v5004
    %7148 = vmatpush1.bf16.msra.mxu0 %v5003
    %7149 = vmatprep.subr.bf16.mxu0 %v5022
    %7150 = vmatpush1.bf16.msra.mxu0 %v5021
    %7151 = vmatprep.subr.bf16.mxu0 %v5040
    %7152 = vmatpush1.bf16.msra.mxu0 %v5039
    %7153 = vmatprep.subr.bf16.mxu0 %v5058
    %7154 = vmatpush1.bf16.msra.mxu0 %v5057
    %7155 = vmatprep.subr.bf16.mxu0 %v5076
    %7156 = vmatpush1.bf16.msra.mxu0 %v5075
    %7157 = vmatprep.subr.bf16.mxu0 %v5094
    %7158 = vmatpush1.bf16.msra.mxu0 %v5093
    %7159 = vmatprep.mubr.bf16.mxu0 %v1352
    %7160 = vmatmul.mubr.bf16.gmra.mrb[0].mxu0 %v1351
    %v7161 = vpop.f32.mrb[0].mxu0
    %v7162 = vadd.f32 0.0, %v7161
    %v7163 = vpop.f32.mrb[0].mxu0
    %v7164 = vadd.f32 0.0, %v7163
    %v7165 = vpop.f32.mrb[0].mxu0
    %v7166 = vpop.f32.mrb[0].mxu0
    %7167 = vdwg.mxu0
    %7168 = vmatprep.subr.bf16.mxu0 %v5112
    %7169 = vmatpush1.bf16.msra.mxu0 %v5111
    %7170 = vmatprep.subr.bf16.mxu0 %v5130
    %7171 = vmatpush1.bf16.msra.mxu0 %v5129
    %7172 = vmatprep.subr.bf16.mxu0 %v5148
    %7173 = vmatpush1.bf16.msra.mxu0 %v5147
    %7174 = vmatprep.subr.bf16.mxu0 %v5166
    %7175 = vmatpush1.bf16.msra.mxu0 %v5165
    %7176 = vmatprep.subr.bf16.mxu0 %v5184
    %7177 = vmatpush1.bf16.msra.mxu0 %v5183
    %7178 = vmatprep.subr.bf16.mxu0 %v5202
    %7179 = vmatpush1.bf16.msra.mxu0 %v5201
    %7180 = vmatprep.subr.bf16.mxu0 %v5220
    %7181 = vmatpush1.bf16.msra.mxu0 %v5219
    %7182 = vmatprep.subr.bf16.mxu0 %v5238
    %7183 = vmatpush1.bf16.msra.mxu0 %v5237
    %7184 = vmatprep.subr.bf16.mxu0 %v5256
    %7185 = vmatpush1.bf16.msra.mxu0 %v5255
    %7186 = vmatprep.subr.bf16.mxu0 %v5274
    %7187 = vmatpush1.bf16.msra.mxu0 %v5273
    %7188 = vmatprep.subr.bf16.mxu0 %v5292
    %7189 = vmatpush1.bf16.msra.mxu0 %v5291
    %7190 = vmatprep.subr.bf16.mxu0 %v5310
    %7191 = vmatpush1.bf16.msra.mxu0 %v5309
    %7192 = vmatprep.subr.bf16.mxu0 %v5328
    %7193 = vmatpush1.bf16.msra.mxu0 %v5327
    %7194 = vmatprep.subr.bf16.mxu0 %v5346
    %7195 = vmatpush1.bf16.msra.mxu0 %v5345
    %7196 = vmatprep.subr.bf16.mxu0 %v5364
    %7197 = vmatpush1.bf16.msra.mxu0 %v5363
    %7198 = vmatprep.subr.bf16.mxu0 %v5382
    %7199 = vmatpush1.bf16.msra.mxu0 %v5381
    %7200 = vmatprep.mubr.bf16.mxu0 %v1354
    %7201 = vmatmul.mubr.bf16.gmra.mrb[0].mxu0 %v1353
    %v7202 = vpop.f32.mrb[0].mxu0
    %v7203 = vadd.f32 %v7162, %v7202
    %v7204 = vpop.f32.mrb[0].mxu0
    %v7205 = vadd.f32 %v7164, %v7204
    %v7206 = vpop.f32.mrb[0].mxu0
    %v7207 = vpop.f32.mrb[0].mxu0
    %7208 = vdwg.mxu0
    %7209 = vmatprep.subr.bf16.mxu0 %v5400
    %7210 = vmatpush1.bf16.msra.mxu0 %v5399
    %7211 = vmatprep.subr.bf16.mxu0 %v5418
    %7212 = vmatpush1.bf16.msra.mxu0 %v5417
    %7213 = vmatprep.subr.bf16.mxu0 %v5436
    %7214 = vmatpush1.bf16.msra.mxu0 %v5435
    %7215 = vmatprep.subr.bf16.mxu0 %v5454
    %7216 = vmatpush1.bf16.msra.mxu0 %v5453
    %7217 = vmatprep.subr.bf16.mxu0 %v5472
    %7218 = vmatpush1.bf16.msra.mxu0 %v5471
    %7219 = vmatprep.subr.bf16.mxu0 %v5490
    %7220 = vmatpush1.bf16.msra.mxu0 %v5489
    %7221 = vmatprep.subr.bf16.mxu0 %v5508
    %7222 = vmatpush1.bf16.msra.mxu0 %v5507
    %7223 = vmatprep.subr.bf16.mxu0 %v5526
    %7224 = vmatpush1.bf16.msra.mxu0 %v5525
    %7225 = vmatprep.subr.bf16.mxu0 %v5544
    %7226 = vmatpush1.bf16.msra.mxu0 %v5543
    %7227 = vmatprep.subr.bf16.mxu0 %v5562
    %7228 = vmatpush1.bf16.msra.mxu0 %v5561
    %7229 = vmatprep.subr.bf16.mxu0 %v5580
    %7230 = vmatpush1.bf16.msra.mxu0 %v5579
    %7231 = vmatprep.subr.bf16.mxu0 %v5598
    %7232 = vmatpush1.bf16.msra.mxu0 %v5597
    %7233 = vmatprep.subr.bf16.mxu0 %v5616
    %7234 = vmatpush1.bf16.msra.mxu0 %v5615
    %7235 = vmatprep.subr.bf16.mxu0 %v5634
    %7236 = vmatpush1.bf16.msra.mxu0 %v5633
    %7237 = vmatprep.subr.bf16.mxu0 %v5652
    %7238 = vmatpush1.bf16.msra.mxu0 %v5651
    %7239 = vmatprep.subr.bf16.mxu0 %v5670
    %7240 = vmatpush1.bf16.msra.mxu0 %v5669
    %7241 = vmatprep.mubr.bf16.mxu0 %v1356
    %7242 = vmatmul.mubr.bf16.gmra.mrb[0].mxu0 %v1355
    %v7243 = vpop.f32.mrb[0].mxu0
    %v7244 = vadd.f32 %v7203, %v7243
    %v7245 = vpop.f32.mrb[0].mxu0
    %v7246 = vadd.f32 %v7205, %v7245
    %v7247 = vpop.f32.mrb[0].mxu0
    %v7248 = vpop.f32.mrb[0].mxu0
    %7249 = vdwg.mxu0
    %7250 = vmatprep.subr.bf16.mxu0 %v5688
    %7251 = vmatpush1.bf16.msra.mxu0 %v5687
    %7252 = vmatprep.subr.bf16.mxu0 %v5706
    %7253 = vmatpush1.bf16.msra.mxu0 %v5705
    %7254 = vmatprep.subr.bf16.mxu0 %v5724
    %7255 = vmatpush1.bf16.msra.mxu0 %v5723
    %7256 = vmatprep.subr.bf16.mxu0 %v5742
    %7257 = vmatpush1.bf16.msra.mxu0 %v5741
    %7258 = vmatprep.subr.bf16.mxu0 %v5760
    %7259 = vmatpush1.bf16.msra.mxu0 %v5759
    %7260 = vmatprep.subr.bf16.mxu0 %v5778
    %7261 = vmatpush1.bf16.msra.mxu0 %v5777
    %7262 = vmatprep.subr.bf16.mxu0 %v5796
    %7263 = vmatpush1.bf16.msra.mxu0 %v5795
    %7264 = vmatprep.subr.bf16.mxu0 %v5814
    %7265 = vmatpush1.bf16.msra.mxu0 %v5813
    %7266 = vmatprep.subr.bf16.mxu0 %v5832
    %7267 = vmatpush1.bf16.msra.mxu0 %v5831
    %7268 = vmatprep.subr.bf16.mxu0 %v5850
    %7269 = vmatpush1.bf16.msra.mxu0 %v5849
    %7270 = vmatprep.subr.bf16.mxu0 %v5868
    %7271 = vmatpush1.bf16.msra.mxu0 %v5867
    %7272 = vmatprep.subr.bf16.mxu0 %v5886
    %7273 = vmatpush1.bf16.msra.mxu0 %v5885
    %7274 = vmatprep.subr.bf16.mxu0 %v5904
    %7275 = vmatpush1.bf16.msra.mxu0 %v5903
    %7276 = vmatprep.subr.bf16.mxu0 %v5922
    %7277 = vmatpush1.bf16.msra.mxu0 %v5921
    %7278 = vmatprep.subr.bf16.mxu0 %v5940
    %7279 = vmatpush1.bf16.msra.mxu0 %v5939
    %7280 = vmatprep.subr.bf16.mxu0 %v5958
    %7281 = vmatpush1.bf16.msra.mxu0 %v5957
    %7282 = vmatprep.mubr.bf16.mxu0 %v1358
    %7283 = vmatmul.mubr.bf16.gmra.mrb[0].mxu0 %v1357
    %v7284 = vpop.f32.mrb[0].mxu0
    %v7285 = vadd.f32 %v7244, %v7284
    %v7286 = vpop.f32.mrb[0].mxu0
    %v7287 = vadd.f32 %v7246, %v7286
    %v7288 = vpop.f32.mrb[0].mxu0
    %v7289 = vpop.f32.mrb[0].mxu0
    %7290 = vdwg.mxu0
    %7291 = vmatprep.subr.bf16.mxu0 %v4826
    %7292 = vmatpush1.bf16.msra.mxu0 %v4825
    %7293 = vmatprep.subr.bf16.mxu0 %v4844
    %7294 = vmatpush1.bf16.msra.mxu0 %v4843
    %7295 = vmatprep.subr.bf16.mxu0 %v4862
    %7296 = vmatpush1.bf16.msra.mxu0 %v4861
    %7297 = vmatprep.subr.bf16.mxu0 %v4880
    %7298 = vmatpush1.bf16.msra.mxu0 %v4879
    %7299 = vmatprep.subr.bf16.mxu0 %v4898
    %7300 = vmatpush1.bf16.msra.mxu0 %v4897
    %7301 = vmatprep.subr.bf16.mxu0 %v4916
    %7302 = vmatpush1.bf16.msra.mxu0 %v4915
    %7303 = vmatprep.subr.bf16.mxu0 %v4934
    %7304 = vmatpush1.bf16.msra.mxu0 %v4933
    %7305 = vmatprep.subr.bf16.mxu0 %v4952
    %7306 = vmatpush1.bf16.msra.mxu0 %v4951
    %7307 = vmatprep.subr.bf16.mxu0 %v4970
    %7308 = vmatpush1.bf16.msra.mxu0 %v4969
    %7309 = vmatprep.subr.bf16.mxu0 %v4988
    %7310 = vmatpush1.bf16.msra.mxu0 %v4987
    %7311 = vmatprep.subr.bf16.mxu0 %v5006
    %7312 = vmatpush1.bf16.msra.mxu0 %v5005
    %7313 = vmatprep.subr.bf16.mxu0 %v5024
    %7314 = vmatpush1.bf16.msra.mxu0 %v5023
    %7315 = vmatprep.subr.bf16.mxu0 %v5042
    %7316 = vmatpush1.bf16.msra.mxu0 %v5041
    %7317 = vmatprep.subr.bf16.mxu0 %v5060
    %7318 = vmatpush1.bf16.msra.mxu0 %v5059
    %7319 = vmatprep.subr.bf16.mxu0 %v5078
    %7320 = vmatpush1.bf16.msra.mxu0 %v5077
    %7321 = vmatprep.subr.bf16.mxu0 %v5096
    %7322 = vmatpush1.bf16.msra.mxu0 %v5095
    %7323 = vmatprep.mubr.bf16.mxu0 %v1352
    %7324 = vmatmul.mubr.bf16.gmra.mrb[0].mxu0 %v1351
    %v7325 = vpop.f32.mrb[0].mxu0
    %v7326 = vadd.f32 0.0, %v7325
    %v7327 = vpop.f32.mrb[0].mxu0
    %v7328 = vadd.f32 0.0, %v7327
    %v7329 = vpop.f32.mrb[0].mxu0
    %v7330 = vpop.f32.mrb[0].mxu0
    %7331 = vdwg.mxu0
    %7332 = vmatprep.subr.bf16.mxu0 %v5114
    %7333 = vmatpush1.bf16.msra.mxu0 %v5113
    %7334 = vmatprep.subr.bf16.mxu0 %v5132
    %7335 = vmatpush1.bf16.msra.mxu0 %v5131
    %7336 = vmatprep.subr.bf16.mxu0 %v5150
    %7337 = vmatpush1.bf16.msra.mxu0 %v5149
    %7338 = vmatprep.subr.bf16.mxu0 %v5168
    %7339 = vmatpush1.bf16.msra.mxu0 %v5167
    %7340 = vmatprep.subr.bf16.mxu0 %v5186
    %7341 = vmatpush1.bf16.msra.mxu0 %v5185
    %7342 = vmatprep.subr.bf16.mxu0 %v5204
    %7343 = vmatpush1.bf16.msra.mxu0 %v5203
    %7344 = vmatprep.subr.bf16.mxu0 %v5222
    %7345 = vmatpush1.bf16.msra.mxu0 %v5221
    %7346 = vmatprep.subr.bf16.mxu0 %v5240
    %7347 = vmatpush1.bf16.msra.mxu0 %v5239
    %7348 = vmatprep.subr.bf16.mxu0 %v5258
    %7349 = vmatpush1.bf16.msra.mxu0 %v5257
    %7350 = vmatprep.subr.bf16.mxu0 %v5276
    %7351 = vmatpush1.bf16.msra.mxu0 %v5275
    %7352 = vmatprep.subr.bf16.mxu0 %v5294
    %7353 = vmatpush1.bf16.msra.mxu0 %v5293
    %7354 = vmatprep.subr.bf16.mxu0 %v5312
    %7355 = vmatpush1.bf16.msra.mxu0 %v5311
    %7356 = vmatprep.subr.bf16.mxu0 %v5330
    %7357 = vmatpush1.bf16.msra.mxu0 %v5329
    %7358 = vmatprep.subr.bf16.mxu0 %v5348
    %7359 = vmatpush1.bf16.msra.mxu0 %v5347
    %7360 = vmatprep.subr.bf16.mxu0 %v5366
    %7361 = vmatpush1.bf16.msra.mxu0 %v5365
    %7362 = vmatprep.subr.bf16.mxu0 %v5384
    %7363 = vmatpush1.bf16.msra.mxu0 %v5383
    %7364 = vmatprep.mubr.bf16.mxu0 %v1354
    %7365 = vmatmul.mubr.bf16.gmra.mrb[0].mxu0 %v1353
    %v7366 = vpop.f32.mrb[0].mxu0
    %v7367 = vadd.f32 %v7326, %v7366
    %v7368 = vpop.f32.mrb[0].mxu0
    %v7369 = vadd.f32 %v7328, %v7368
    %v7370 = vpop.f32.mrb[0].mxu0
    %v7371 = vpop.f32.mrb[0].mxu0
    %7372 = vdwg.mxu0
    %7373 = vmatprep.subr.bf16.mxu0 %v5402
    %7374 = vmatpush1.bf16.msra.mxu0 %v5401
    %7375 = vmatprep.subr.bf16.mxu0 %v5420
    %7376 = vmatpush1.bf16.msra.mxu0 %v5419
    %7377 = vmatprep.subr.bf16.mxu0 %v5438
    %7378 = vmatpush1.bf16.msra.mxu0 %v5437
    %7379 = vmatprep.subr.bf16.mxu0 %v5456
    %7380 = vmatpush1.bf16.msra.mxu0 %v5455
    %7381 = vmatprep.subr.bf16.mxu0 %v5474
    %7382 = vmatpush1.bf16.msra.mxu0 %v5473
    %7383 = vmatprep.subr.bf16.mxu0 %v5492
    %7384 = vmatpush1.bf16.msra.mxu0 %v5491
    %7385 = vmatprep.subr.bf16.mxu0 %v5510
    %7386 = vmatpush1.bf16.msra.mxu0 %v5509
    %7387 = vmatprep.subr.bf16.mxu0 %v5528
    %7388 = vmatpush1.bf16.msra.mxu0 %v5527
    %7389 = vmatprep.subr.bf16.mxu0 %v5546
    %7390 = vmatpush1.bf16.msra.mxu0 %v5545
    %7391 = vmatprep.subr.bf16.mxu0 %v5564
    %7392 = vmatpush1.bf16.msra.mxu0 %v5563
    %7393 = vmatprep.subr.bf16.mxu0 %v5582
    %7394 = vmatpush1.bf16.msra.mxu0 %v5581
    %7395 = vmatprep.subr.bf16.mxu0 %v5600
    %7396 = vmatpush1.bf16.msra.mxu0 %v5599
    %7397 = vmatprep.subr.bf16.mxu0 %v5618
    %7398 = vmatpush1.bf16.msra.mxu0 %v5617
    %7399 = vmatprep.subr.bf16.mxu0 %v5636
    %7400 = vmatpush1.bf16.msra.mxu0 %v5635
    %7401 = vmatprep.subr.bf16.mxu0 %v5654
    %7402 = vmatpush1.bf16.msra.mxu0 %v5653
    %7403 = vmatprep.subr.bf16.mxu0 %v5672
    %7404 = vmatpush1.bf16.msra.mxu0 %v5671
    %7405 = vmatprep.mubr.bf16.mxu0 %v1356
    %7406 = vmatmul.mubr.bf16.gmra.mrb[0].mxu0 %v1355
    %v7407 = vpop.f32.mrb[0].mxu0
    %v7408 = vadd.f32 %v7367, %v7407
    %v7409 = vpop.f32.mrb[0].mxu0
    %v7410 = vadd.f32 %v7369, %v7409
    %v7411 = vpop.f32.mrb[0].mxu0
    %v7412 = vpop.f32.mrb[0].mxu0
    %7413 = vdwg.mxu0
    %7414 = vmatprep.subr.bf16.mxu0 %v5690
    %7415 = vmatpush1.bf16.msra.mxu0 %v5689
    %7416 = vmatprep.subr.bf16.mxu0 %v5708
    %7417 = vmatpush1.bf16.msra.mxu0 %v5707
    %7418 = vmatprep.subr.bf16.mxu0 %v5726
    %7419 = vmatpush1.bf16.msra.mxu0 %v5725
    %7420 = vmatprep.subr.bf16.mxu0 %v5744
    %7421 = vmatpush1.bf16.msra.mxu0 %v5743
    %7422 = vmatprep.subr.bf16.mxu0 %v5762
    %7423 = vmatpush1.bf16.msra.mxu0 %v5761
    %7424 = vmatprep.subr.bf16.mxu0 %v5780
    %7425 = vmatpush1.bf16.msra.mxu0 %v5779
    %7426 = vmatprep.subr.bf16.mxu0 %v5798
    %7427 = vmatpush1.bf16.msra.mxu0 %v5797
    %7428 = vmatprep.subr.bf16.mxu0 %v5816
    %7429 = vmatpush1.bf16.msra.mxu0 %v5815
    %7430 = vmatprep.subr.bf16.mxu0 %v5834
    %7431 = vmatpush1.bf16.msra.mxu0 %v5833
    %7432 = vmatprep.subr.bf16.mxu0 %v5852
    %7433 = vmatpush1.bf16.msra.mxu0 %v5851
    %7434 = vmatprep.subr.bf16.mxu0 %v5870
    %7435 = vmatpush1.bf16.msra.mxu0 %v5869
    %7436 = vmatprep.subr.bf16.mxu0 %v5888
    %7437 = vmatpush1.bf16.msra.mxu0 %v5887
    %7438 = vmatprep.subr.bf16.mxu0 %v5906
    %7439 = vmatpush1.bf16.msra.mxu0 %v5905
    %7440 = vmatprep.subr.bf16.mxu0 %v5924
    %7441 = vmatpush1.bf16.msra.mxu0 %v5923
    %7442 = vmatprep.subr.bf16.mxu0 %v5942
    %7443 = vmatpush1.bf16.msra.mxu0 %v5941
    %7444 = vmatprep.subr.bf16.mxu0 %v5960
    %7445 = vmatpush1.bf16.msra.mxu0 %v5959
    %7446 = vmatprep.mubr.bf16.mxu0 %v1358
    %7447 = vmatmul.mubr.bf16.gmra.mrb[0].mxu0 %v1357
    %v7448 = vpop.f32.mrb[0].mxu0
    %v7449 = vadd.f32 %v7408, %v7448
    %v7450 = vpop.f32.mrb[0].mxu0
    %v7451 = vadd.f32 %v7410, %v7450
    %v7452 = vpop.f32.mrb[0].mxu0
    %v7453 = vpop.f32.mrb[0].mxu0
    %7454 = vdwg.mxu0
    %7455 = vmatprep.subr.bf16.mxu0 %v4828
    %7456 = vmatpush1.bf16.msra.mxu0 %v4827
    %7457 = vmatprep.subr.bf16.mxu0 %v4846
    %7458 = vmatpush1.bf16.msra.mxu0 %v4845
    %7459 = vmatprep.subr.bf16.mxu0 %v4864
    %7460 = vmatpush1.bf16.msra.mxu0 %v4863
    %7461 = vmatprep.subr.bf16.mxu0 %v4882
    %7462 = vmatpush1.bf16.msra.mxu0 %v4881
    %7463 = vmatprep.subr.bf16.mxu0 %v4900
    %7464 = vmatpush1.bf16.msra.mxu0 %v4899
    %7465 = vmatprep.subr.bf16.mxu0 %v4918
    %7466 = vmatpush1.bf16.msra.mxu0 %v4917
    %7467 = vmatprep.subr.bf16.mxu0 %v4936
    %7468 = vmatpush1.bf16.msra.mxu0 %v4935
    %7469 = vmatprep.subr.bf16.mxu0 %v4954
    %7470 = vmatpush1.bf16.msra.mxu0 %v4953
    %7471 = vmatprep.subr.bf16.mxu0 %v4972
    %7472 = vmatpush1.bf16.msra.mxu0 %v4971
    %7473 = vmatprep.subr.bf16.mxu0 %v4990
    %7474 = vmatpush1.bf16.msra.mxu0 %v4989
    %7475 = vmatprep.subr.bf16.mxu0 %v5008
    %7476 = vmatpush1.bf16.msra.mxu0 %v5007
    %7477 = vmatprep.subr.bf16.mxu0 %v5026
    %7478 = vmatpush1.bf16.msra.mxu0 %v5025
    %7479 = vmatprep.subr.bf16.mxu0 %v5044
    %7480 = vmatpush1.bf16.msra.mxu0 %v5043
    %7481 = vmatprep.subr.bf16.mxu0 %v5062
    %7482 = vmatpush1.bf16.msra.mxu0 %v5061
    %7483 = vmatprep.subr.bf16.mxu0 %v5080
    %7484 = vmatpush1.bf16.msra.mxu0 %v5079
    %7485 = vmatprep.subr.bf16.mxu0 %v5098
    %7486 = vmatpush1.bf16.msra.mxu0 %v5097
    %7487 = vmatprep.mubr.bf16.mxu0 %v1352
    %7488 = vmatmul.mubr.bf16.gmra.mrb[0].mxu0 %v1351
    %v7489 = vpop.f32.mrb[0].mxu0
    %v7490 = vadd.f32 0.0, %v7489
    %v7491 = vpop.f32.mrb[0].mxu0
    %v7492 = vadd.f32 0.0, %v7491
    %v7493 = vpop.f32.mrb[0].mxu0
    %v7494 = vpop.f32.mrb[0].mxu0
    %7495 = vdwg.mxu0
    %7496 = vmatprep.subr.bf16.mxu0 %v5116
    %7497 = vmatpush1.bf16.msra.mxu0 %v5115
    %7498 = vmatprep.subr.bf16.mxu0 %v5134
    %7499 = vmatpush1.bf16.msra.mxu0 %v5133
    %7500 = vmatprep.subr.bf16.mxu0 %v5152
    %7501 = vmatpush1.bf16.msra.mxu0 %v5151
    %7502 = vmatprep.subr.bf16.mxu0 %v5170
    %7503 = vmatpush1.bf16.msra.mxu0 %v5169
    %7504 = vmatprep.subr.bf16.mxu0 %v5188
    %7505 = vmatpush1.bf16.msra.mxu0 %v5187
    %7506 = vmatprep.subr.bf16.mxu0 %v5206
    %7507 = vmatpush1.bf16.msra.mxu0 %v5205
    %7508 = vmatprep.subr.bf16.mxu0 %v5224
    %7509 = vmatpush1.bf16.msra.mxu0 %v5223
    %7510 = vmatprep.subr.bf16.mxu0 %v5242
    %7511 = vmatpush1.bf16.msra.mxu0 %v5241
    %7512 = vmatprep.subr.bf16.mxu0 %v5260
    %7513 = vmatpush1.bf16.msra.mxu0 %v5259
    %7514 = vmatprep.subr.bf16.mxu0 %v5278
    %7515 = vmatpush1.bf16.msra.mxu0 %v5277
    %7516 = vmatprep.subr.bf16.mxu0 %v5296
    %7517 = vmatpush1.bf16.msra.mxu0 %v5295
    %7518 = vmatprep.subr.bf16.mxu0 %v5314
    %7519 = vmatpush1.bf16.msra.mxu0 %v5313
    %7520 = vmatprep.subr.bf16.mxu0 %v5332
    %7521 = vmatpush1.bf16.msra.mxu0 %v5331
    %7522 = vmatprep.subr.bf16.mxu0 %v5350
    %7523 = vmatpush1.bf16.msra.mxu0 %v5349
    %7524 = vmatprep.subr.bf16.mxu0 %v5368
    %7525 = vmatpush1.bf16.msra.mxu0 %v5367
    %7526 = vmatprep.subr.bf16.mxu0 %v5386
    %7527 = vmatpush1.bf16.msra.mxu0 %v5385
    %7528 = vmatprep.mubr.bf16.mxu0 %v1354
    %7529 = vmatmul.mubr.bf16.gmra.mrb[0].mxu0 %v1353
    %v7530 = vpop.f32.mrb[0].mxu0
    %v7531 = vadd.f32 %v7490, %v7530
    %v7532 = vpop.f32.mrb[0].mxu0
    %v7533 = vadd.f32 %v7492, %v7532
    %v7534 = vpop.f32.mrb[0].mxu0
    %v7535 = vpop.f32.mrb[0].mxu0
    %7536 = vdwg.mxu0
    %7537 = vmatprep.subr.bf16.mxu0 %v5404
    %7538 = vmatpush1.bf16.msra.mxu0 %v5403
    %7539 = vmatprep.subr.bf16.mxu0 %v5422
    %7540 = vmatpush1.bf16.msra.mxu0 %v5421
    %7541 = vmatprep.subr.bf16.mxu0 %v5440
    %7542 = vmatpush1.bf16.msra.mxu0 %v5439
    %7543 = vmatprep.subr.bf16.mxu0 %v5458
    %7544 = vmatpush1.bf16.msra.mxu0 %v5457
    %7545 = vmatprep.subr.bf16.mxu0 %v5476
    %7546 = vmatpush1.bf16.msra.mxu0 %v5475
    %7547 = vmatprep.subr.bf16.mxu0 %v5494
    %7548 = vmatpush1.bf16.msra.mxu0 %v5493
    %7549 = vmatprep.subr.bf16.mxu0 %v5512
    %7550 = vmatpush1.bf16.msra.mxu0 %v5511
    %7551 = vmatprep.subr.bf16.mxu0 %v5530
    %7552 = vmatpush1.bf16.msra.mxu0 %v5529
    %7553 = vmatprep.subr.bf16.mxu0 %v5548
    %7554 = vmatpush1.bf16.msra.mxu0 %v5547
    %7555 = vmatprep.subr.bf16.mxu0 %v5566
    %7556 = vmatpush1.bf16.msra.mxu0 %v5565
    %7557 = vmatprep.subr.bf16.mxu0 %v5584
    %7558 = vmatpush1.bf16.msra.mxu0 %v5583
    %7559 = vmatprep.subr.bf16.mxu0 %v5602
    %7560 = vmatpush1.bf16.msra.mxu0 %v5601
    %7561 = vmatprep.subr.bf16.mxu0 %v5620
    %7562 = vmatpush1.bf16.msra.mxu0 %v5619
    %7563 = vmatprep.subr.bf16.mxu0 %v5638
    %7564 = vmatpush1.bf16.msra.mxu0 %v5637
    %7565 = vmatprep.subr.bf16.mxu0 %v5656
    %7566 = vmatpush1.bf16.msra.mxu0 %v5655
    %7567 = vmatprep.subr.bf16.mxu0 %v5674
    %7568 = vmatpush1.bf16.msra.mxu0 %v5673
    %7569 = vmatprep.mubr.bf16.mxu0 %v1356
    %7570 = vmatmul.mubr.bf16.gmra.mrb[0].mxu0 %v1355
    %v7571 = vpop.f32.mrb[0].mxu0
    %v7572 = vadd.f32 %v7531, %v7571
    %v7573 = vpop.f32.mrb[0].mxu0
    %v7574 = vadd.f32 %v7533, %v7573
    %v7575 = vpop.f32.mrb[0].mxu0
    %v7576 = vpop.f32.mrb[0].mxu0
    %7577 = vdwg.mxu0
    %7578 = vmatprep.subr.bf16.mxu0 %v5692
    %7579 = vmatpush1.bf16.msra.mxu0 %v5691
    %7580 = vmatprep.subr.bf16.mxu0 %v5710
    %7581 = vmatpush1.bf16.msra.mxu0 %v5709
    %7582 = vmatprep.subr.bf16.mxu0 %v5728
    %7583 = vmatpush1.bf16.msra.mxu0 %v5727
    %7584 = vmatprep.subr.bf16.mxu0 %v5746
    %7585 = vmatpush1.bf16.msra.mxu0 %v5745
    %7586 = vmatprep.subr.bf16.mxu0 %v5764
    %7587 = vmatpush1.bf16.msra.mxu0 %v5763
    %7588 = vmatprep.subr.bf16.mxu0 %v5782
    %7589 = vmatpush1.bf16.msra.mxu0 %v5781
    %7590 = vmatprep.subr.bf16.mxu0 %v5800
    %7591 = vmatpush1.bf16.msra.mxu0 %v5799
    %7592 = vmatprep.subr.bf16.mxu0 %v5818
    %7593 = vmatpush1.bf16.msra.mxu0 %v5817
    %7594 = vmatprep.subr.bf16.mxu0 %v5836
    %7595 = vmatpush1.bf16.msra.mxu0 %v5835
    %7596 = vmatprep.subr.bf16.mxu0 %v5854
    %7597 = vmatpush1.bf16.msra.mxu0 %v5853
    %7598 = vmatprep.subr.bf16.mxu0 %v5872
    %7599 = vmatpush1.bf16.msra.mxu0 %v5871
    %7600 = vmatprep.subr.bf16.mxu0 %v5890
    %7601 = vmatpush1.bf16.msra.mxu0 %v5889
    %7602 = vmatprep.subr.bf16.mxu0 %v5908
    %7603 = vmatpush1.bf16.msra.mxu0 %v5907
    %7604 = vmatprep.subr.bf16.mxu0 %v5926
    %7605 = vmatpush1.bf16.msra.mxu0 %v5925
    %7606 = vmatprep.subr.bf16.mxu0 %v5944
    %7607 = vmatpush1.bf16.msra.mxu0 %v5943
    %7608 = vmatprep.subr.bf16.mxu0 %v5962
    %7609 = vmatpush1.bf16.msra.mxu0 %v5961
    %7610 = vmatprep.mubr.bf16.mxu0 %v1358
    %7611 = vmatmul.mubr.bf16.gmra.mrb[0].mxu0 %v1357
    %v7612 = vpop.f32.mrb[0].mxu0
    %v7613 = vadd.f32 %v7572, %v7612
    %v7614 = vpop.f32.mrb[0].mxu0
    %v7615 = vadd.f32 %v7574, %v7614
    %v7616 = vpop.f32.mrb[0].mxu0
    %v7617 = vpop.f32.mrb[0].mxu0
    %7618 = vdwg.mxu0
    %7619 = vmatprep.subr.bf16.mxu0 %v4830
    %7620 = vmatpush1.bf16.msra.mxu0 %v4829
    %7621 = vmatprep.subr.bf16.mxu0 %v4848
    %7622 = vmatpush1.bf16.msra.mxu0 %v4847
    %7623 = vmatprep.subr.bf16.mxu0 %v4866
    %7624 = vmatpush1.bf16.msra.mxu0 %v4865
    %7625 = vmatprep.subr.bf16.mxu0 %v4884
    %7626 = vmatpush1.bf16.msra.mxu0 %v4883
    %7627 = vmatprep.subr.bf16.mxu0 %v4902
    %7628 = vmatpush1.bf16.msra.mxu0 %v4901
    %7629 = vmatprep.subr.bf16.mxu0 %v4920
    %7630 = vmatpush1.bf16.msra.mxu0 %v4919
    %7631 = vmatprep.subr.bf16.mxu0 %v4938
    %7632 = vmatpush1.bf16.msra.mxu0 %v4937
    %7633 = vmatprep.subr.bf16.mxu0 %v4956
    %7634 = vmatpush1.bf16.msra.mxu0 %v4955
    %7635 = vmatprep.subr.bf16.mxu0 %v4974
    %7636 = vmatpush1.bf16.msra.mxu0 %v4973
    %7637 = vmatprep.subr.bf16.mxu0 %v4992
    %7638 = vmatpush1.bf16.msra.mxu0 %v4991
    %7639 = vmatprep.subr.bf16.mxu0 %v5010
    %7640 = vmatpush1.bf16.msra.mxu0 %v5009
    %7641 = vmatprep.subr.bf16.mxu0 %v5028
    %7642 = vmatpush1.bf16.msra.mxu0 %v5027
    %7643 = vmatprep.subr.bf16.mxu0 %v5046
    %7644 = vmatpush1.bf16.msra.mxu0 %v5045
    %7645 = vmatprep.subr.bf16.mxu0 %v5064
    %7646 = vmatpush1.bf16.msra.mxu0 %v5063
    %7647 = vmatprep.subr.bf16.mxu0 %v5082
    %7648 = vmatpush1.bf16.msra.mxu0 %v5081
    %7649 = vmatprep.subr.bf16.mxu0 %v5100
    %7650 = vmatpush1.bf16.msra.mxu0 %v5099
    %7651 = vmatprep.mubr.bf16.mxu0 %v1352
    %7652 = vmatmul.mubr.bf16.gmra.mrb[0].mxu0 %v1351
    %v7653 = vpop.f32.mrb[0].mxu0
    %v7654 = vadd.f32 0.0, %v7653
    %v7655 = vpop.f32.mrb[0].mxu0
    %v7656 = vadd.f32 0.0, %v7655
    %v7657 = vpop.f32.mrb[0].mxu0
    %v7658 = vpop.f32.mrb[0].mxu0
    %7659 = vdwg.mxu0
    %7660 = vmatprep.subr.bf16.mxu0 %v5118
    %7661 = vmatpush1.bf16.msra.mxu0 %v5117
    %7662 = vmatprep.subr.bf16.mxu0 %v5136
    %7663 = vmatpush1.bf16.msra.mxu0 %v5135
    %7664 = vmatprep.subr.bf16.mxu0 %v5154
    %7665 = vmatpush1.bf16.msra.mxu0 %v5153
    %7666 = vmatprep.subr.bf16.mxu0 %v5172
    %7667 = vmatpush1.bf16.msra.mxu0 %v5171
    %7668 = vmatprep.subr.bf16.mxu0 %v5190
    %7669 = vmatpush1.bf16.msra.mxu0 %v5189
    %7670 = vmatprep.subr.bf16.mxu0 %v5208
    %7671 = vmatpush1.bf16.msra.mxu0 %v5207
    %7672 = vmatprep.subr.bf16.mxu0 %v5226
    %7673 = vmatpush1.bf16.msra.mxu0 %v5225
    %7674 = vmatprep.subr.bf16.mxu0 %v5244
    %7675 = vmatpush1.bf16.msra.mxu0 %v5243
    %7676 = vmatprep.subr.bf16.mxu0 %v5262
    %7677 = vmatpush1.bf16.msra.mxu0 %v5261
    %7678 = vmatprep.subr.bf16.mxu0 %v5280
    %7679 = vmatpush1.bf16.msra.mxu0 %v5279
    %7680 = vmatprep.subr.bf16.mxu0 %v5298
    %7681 = vmatpush1.bf16.msra.mxu0 %v5297
    %7682 = vmatprep.subr.bf16.mxu0 %v5316
    %7683 = vmatpush1.bf16.msra.mxu0 %v5315
    %7684 = vmatprep.subr.bf16.mxu0 %v5334
    %7685 = vmatpush1.bf16.msra.mxu0 %v5333
    %7686 = vmatprep.subr.bf16.mxu0 %v5352
    %7687 = vmatpush1.bf16.msra.mxu0 %v5351
    %7688 = vmatprep.subr.bf16.mxu0 %v5370
    %7689 = vmatpush1.bf16.msra.mxu0 %v5369
    %7690 = vmatprep.subr.bf16.mxu0 %v5388
    %7691 = vmatpush1.bf16.msra.mxu0 %v5387
    %7692 = vmatprep.mubr.bf16.mxu0 %v1354
    %7693 = vmatmul.mubr.bf16.gmra.mrb[0].mxu0 %v1353
    %v7694 = vpop.f32.mrb[0].mxu0
    %v7695 = vadd.f32 %v7654, %v7694
    %v7696 = vpop.f32.mrb[0].mxu0
    %v7697 = vadd.f32 %v7656, %v7696
    %v7698 = vpop.f32.mrb[0].mxu0
    %v7699 = vpop.f32.mrb[0].mxu0
    %7700 = vdwg.mxu0
    %7701 = vmatprep.subr.bf16.mxu0 %v5406
    %7702 = vmatpush1.bf16.msra.mxu0 %v5405
    %7703 = vmatprep.subr.bf16.mxu0 %v5424
    %7704 = vmatpush1.bf16.msra.mxu0 %v5423
    %7705 = vmatprep.subr.bf16.mxu0 %v5442
    %7706 = vmatpush1.bf16.msra.mxu0 %v5441
    %7707 = vmatprep.subr.bf16.mxu0 %v5460
    %7708 = vmatpush1.bf16.msra.mxu0 %v5459
    %7709 = vmatprep.subr.bf16.mxu0 %v5478
    %7710 = vmatpush1.bf16.msra.mxu0 %v5477
    %7711 = vmatprep.subr.bf16.mxu0 %v5496
    %7712 = vmatpush1.bf16.msra.mxu0 %v5495
    %7713 = vmatprep.subr.bf16.mxu0 %v5514
    %7714 = vmatpush1.bf16.msra.mxu0 %v5513
    %7715 = vmatprep.subr.bf16.mxu0 %v5532
    %7716 = vmatpush1.bf16.msra.mxu0 %v5531
    %7717 = vmatprep.subr.bf16.mxu0 %v5550
    %7718 = vmatpush1.bf16.msra.mxu0 %v5549
    %7719 = vmatprep.subr.bf16.mxu0 %v5568
    %7720 = vmatpush1.bf16.msra.mxu0 %v5567
    %7721 = vmatprep.subr.bf16.mxu0 %v5586
    %7722 = vmatpush1.bf16.msra.mxu0 %v5585
    %7723 = vmatprep.subr.bf16.mxu0 %v5604
    %7724 = vmatpush1.bf16.msra.mxu0 %v5603
    %7725 = vmatprep.subr.bf16.mxu0 %v5622
    %7726 = vmatpush1.bf16.msra.mxu0 %v5621
    %7727 = vmatprep.subr.bf16.mxu0 %v5640
    %7728 = vmatpush1.bf16.msra.mxu0 %v5639
    %7729 = vmatprep.subr.bf16.mxu0 %v5658
    %7730 = vmatpush1.bf16.msra.mxu0 %v5657
    %7731 = vmatprep.subr.bf16.mxu0 %v5676
    %7732 = vmatpush1.bf16.msra.mxu0 %v5675
    %7733 = vmatprep.mubr.bf16.mxu0 %v1356
    %7734 = vmatmul.mubr.bf16.gmra.mrb[0].mxu0 %v1355
    %v7735 = vpop.f32.mrb[0].mxu0
    %v7736 = vadd.f32 %v7695, %v7735
    %v7737 = vpop.f32.mrb[0].mxu0
    %v7738 = vadd.f32 %v7697, %v7737
    %v7739 = vpop.f32.mrb[0].mxu0
    %v7740 = vpop.f32.mrb[0].mxu0
    %7741 = vdwg.mxu0
    %7742 = vmatprep.subr.bf16.mxu0 %v5694
    %7743 = vmatpush1.bf16.msra.mxu0 %v5693
    %7744 = vmatprep.subr.bf16.mxu0 %v5712
    %7745 = vmatpush1.bf16.msra.mxu0 %v5711
    %7746 = vmatprep.subr.bf16.mxu0 %v5730
    %7747 = vmatpush1.bf16.msra.mxu0 %v5729
    %7748 = vmatprep.subr.bf16.mxu0 %v5748
    %7749 = vmatpush1.bf16.msra.mxu0 %v5747
    %7750 = vmatprep.subr.bf16.mxu0 %v5766
    %7751 = vmatpush1.bf16.msra.mxu0 %v5765
    %7752 = vmatprep.subr.bf16.mxu0 %v5784
    %7753 = vmatpush1.bf16.msra.mxu0 %v5783
    %7754 = vmatprep.subr.bf16.mxu0 %v5802
    %7755 = vmatpush1.bf16.msra.mxu0 %v5801
    %7756 = vmatprep.subr.bf16.mxu0 %v5820
    %7757 = vmatpush1.bf16.msra.mxu0 %v5819
    %7758 = vmatprep.subr.bf16.mxu0 %v5838
    %7759 = vmatpush1.bf16.msra.mxu0 %v5837
    %7760 = vmatprep.subr.bf16.mxu0 %v5856
    %7761 = vmatpush1.bf16.msra.mxu0 %v5855
    %7762 = vmatprep.subr.bf16.mxu0 %v5874
    %7763 = vmatpush1.bf16.msra.mxu0 %v5873
    %7764 = vmatprep.subr.bf16.mxu0 %v5892
    %7765 = vmatpush1.bf16.msra.mxu0 %v5891
    %7766 = vmatprep.subr.bf16.mxu0 %v5910
    %7767 = vmatpush1.bf16.msra.mxu0 %v5909
    %7768 = vmatprep.subr.bf16.mxu0 %v5928
    %7769 = vmatpush1.bf16.msra.mxu0 %v5927
    %7770 = vmatprep.subr.bf16.mxu0 %v5946
    %7771 = vmatpush1.bf16.msra.mxu0 %v5945
    %7772 = vmatprep.subr.bf16.mxu0 %v5964
    %7773 = vmatpush1.bf16.msra.mxu0 %v5963
    %7774 = vmatprep.mubr.bf16.mxu0 %v1358
    %7775 = vmatmul.mubr.bf16.gmra.mrb[0].mxu0 %v1357
    %v7776 = vpop.f32.mrb[0].mxu0
    %v7777 = vadd.f32 %v7736, %v7776
    %v7778 = vpop.f32.mrb[0].mxu0
    %v7779 = vadd.f32 %v7738, %v7778
    %v7780 = vpop.f32.mrb[0].mxu0
    %v7781 = vpop.f32.mrb[0].mxu0
    %7782 = vdwg.mxu0
    %7783 = vmatprep.subr.bf16.mxu0 %v4832
    %7784 = vmatpush1.bf16.msra.mxu0 %v4831
    %7785 = vmatprep.subr.bf16.mxu0 %v4850
    %7786 = vmatpush1.bf16.msra.mxu0 %v4849
    %7787 = vmatprep.subr.bf16.mxu0 %v4868
    %7788 = vmatpush1.bf16.msra.mxu0 %v4867
    %7789 = vmatprep.subr.bf16.mxu0 %v4886
    %7790 = vmatpush1.bf16.msra.mxu0 %v4885
    %7791 = vmatprep.subr.bf16.mxu0 %v4904
    %7792 = vmatpush1.bf16.msra.mxu0 %v4903
    %7793 = vmatprep.subr.bf16.mxu0 %v4922
    %7794 = vmatpush1.bf16.msra.mxu0 %v4921
    %7795 = vmatprep.subr.bf16.mxu0 %v4940
    %7796 = vmatpush1.bf16.msra.mxu0 %v4939
    %7797 = vmatprep.subr.bf16.mxu0 %v4958
    %7798 = vmatpush1.bf16.msra.mxu0 %v4957
    %7799 = vmatprep.subr.bf16.mxu0 %v4976
    %7800 = vmatpush1.bf16.msra.mxu0 %v4975
    %7801 = vmatprep.subr.bf16.mxu0 %v4994
    %7802 = vmatpush1.bf16.msra.mxu0 %v4993
    %7803 = vmatprep.subr.bf16.mxu0 %v5012
    %7804 = vmatpush1.bf16.msra.mxu0 %v5011
    %7805 = vmatprep.subr.bf16.mxu0 %v5030
    %7806 = vmatpush1.bf16.msra.mxu0 %v5029
    %7807 = vmatprep.subr.bf16.mxu0 %v5048
    %7808 = vmatpush1.bf16.msra.mxu0 %v5047
    %7809 = vmatprep.subr.bf16.mxu0 %v5066
    %7810 = vmatpush1.bf16.msra.mxu0 %v5065
    %7811 = vmatprep.subr.bf16.mxu0 %v5084
    %7812 = vmatpush1.bf16.msra.mxu0 %v5083
    %7813 = vmatprep.subr.bf16.mxu0 %v5102
    %7814 = vmatpush1.bf16.msra.mxu0 %v5101
    %7815 = vmatprep.mubr.bf16.mxu0 %v1352
    %7816 = vmatmul.mubr.bf16.gmra.mrb[0].mxu0 %v1351
    %v7817 = vpop.f32.mrb[0].mxu0
    %v7818 = vadd.f32 0.0, %v7817
    %v7819 = vpop.f32.mrb[0].mxu0
    %v7820 = vadd.f32 0.0, %v7819
    %v7821 = vpop.f32.mrb[0].mxu0
    %v7822 = vpop.f32.mrb[0].mxu0
    %7823 = vdwg.mxu0
    %7824 = vmatprep.subr.bf16.mxu0 %v5120
    %7825 = vmatpush1.bf16.msra.mxu0 %v5119
    %7826 = vmatprep.subr.bf16.mxu0 %v5138
    %7827 = vmatpush1.bf16.msra.mxu0 %v5137
    %7828 = vmatprep.subr.bf16.mxu0 %v5156
    %7829 = vmatpush1.bf16.msra.mxu0 %v5155
    %7830 = vmatprep.subr.bf16.mxu0 %v5174
    %7831 = vmatpush1.bf16.msra.mxu0 %v5173
    %7832 = vmatprep.subr.bf16.mxu0 %v5192
    %7833 = vmatpush1.bf16.msra.mxu0 %v5191
    %7834 = vmatprep.subr.bf16.mxu0 %v5210
    %7835 = vmatpush1.bf16.msra.mxu0 %v5209
    %7836 = vmatprep.subr.bf16.mxu0 %v5228
    %7837 = vmatpush1.bf16.msra.mxu0 %v5227
    %7838 = vmatprep.subr.bf16.mxu0 %v5246
    %7839 = vmatpush1.bf16.msra.mxu0 %v5245
    %7840 = vmatprep.subr.bf16.mxu0 %v5264
    %7841 = vmatpush1.bf16.msra.mxu0 %v5263
    %7842 = vmatprep.subr.bf16.mxu0 %v5282
    %7843 = vmatpush1.bf16.msra.mxu0 %v5281
    %7844 = vmatprep.subr.bf16.mxu0 %v5300
    %7845 = vmatpush1.bf16.msra.mxu0 %v5299
    %7846 = vmatprep.subr.bf16.mxu0 %v5318
    %7847 = vmatpush1.bf16.msra.mxu0 %v5317
    %7848 = vmatprep.subr.bf16.mxu0 %v5336
    %7849 = vmatpush1.bf16.msra.mxu0 %v5335
    %7850 = vmatprep.subr.bf16.mxu0 %v5354
    %7851 = vmatpush1.bf16.msra.mxu0 %v5353
    %7852 = vmatprep.subr.bf16.mxu0 %v5372
    %7853 = vmatpush1.bf16.msra.mxu0 %v5371
    %7854 = vmatprep.subr.bf16.mxu0 %v5390
    %7855 = vmatpush1.bf16.msra.mxu0 %v5389
    %7856 = vmatprep.mubr.bf16.mxu0 %v1354
    %7857 = vmatmul.mubr.bf16.gmra.mrb[0].mxu0 %v1353
    %v7858 = vpop.f32.mrb[0].mxu0
    %v7859 = vadd.f32 %v7818, %v7858
    %v7860 = vpop.f32.mrb[0].mxu0
    %v7861 = vadd.f32 %v7820, %v7860
    %v7862 = vpop.f32.mrb[0].mxu0
    %v7863 = vpop.f32.mrb[0].mxu0
    %7864 = vdwg.mxu0
    %7865 = vmatprep.subr.bf16.mxu0 %v5408
    %7866 = vmatpush1.bf16.msra.mxu0 %v5407
    %7867 = vmatprep.subr.bf16.mxu0 %v5426
    %7868 = vmatpush1.bf16.msra.mxu0 %v5425
    %7869 = vmatprep.subr.bf16.mxu0 %v5444
    %7870 = vmatpush1.bf16.msra.mxu0 %v5443
    %7871 = vmatprep.subr.bf16.mxu0 %v5462
    %7872 = vmatpush1.bf16.msra.mxu0 %v5461
    %7873 = vmatprep.subr.bf16.mxu0 %v5480
    %7874 = vmatpush1.bf16.msra.mxu0 %v5479
    %7875 = vmatprep.subr.bf16.mxu0 %v5498
    %7876 = vmatpush1.bf16.msra.mxu0 %v5497
    %7877 = vmatprep.subr.bf16.mxu0 %v5516
    %7878 = vmatpush1.bf16.msra.mxu0 %v5515
    %7879 = vmatprep.subr.bf16.mxu0 %v5534
    %7880 = vmatpush1.bf16.msra.mxu0 %v5533
    %7881 = vmatprep.subr.bf16.mxu0 %v5552
    %7882 = vmatpush1.bf16.msra.mxu0 %v5551
    %7883 = vmatprep.subr.bf16.mxu0 %v5570
    %7884 = vmatpush1.bf16.msra.mxu0 %v5569
    %7885 = vmatprep.subr.bf16.mxu0 %v5588
    %7886 = vmatpush1.bf16.msra.mxu0 %v5587
    %7887 = vmatprep.subr.bf16.mxu0 %v5606
    %7888 = vmatpush1.bf16.msra.mxu0 %v5605
    %7889 = vmatprep.subr.bf16.mxu0 %v5624
    %7890 = vmatpush1.bf16.msra.mxu0 %v5623
    %7891 = vmatprep.subr.bf16.mxu0 %v5642
    %7892 = vmatpush1.bf16.msra.mxu0 %v5641
    %7893 = vmatprep.subr.bf16.mxu0 %v5660
    %7894 = vmatpush1.bf16.msra.mxu0 %v5659
    %7895 = vmatprep.subr.bf16.mxu0 %v5678
    %7896 = vmatpush1.bf16.msra.mxu0 %v5677
    %7897 = vmatprep.mubr.bf16.mxu0 %v1356
    %7898 = vmatmul.mubr.bf16.gmra.mrb[0].mxu0 %v1355
    %v7899 = vpop.f32.mrb[0].mxu0
    %v7900 = vadd.f32 %v7859, %v7899
    %v7901 = vpop.f32.mrb[0].mxu0
    %v7902 = vadd.f32 %v7861, %v7901
    %v7903 = vpop.f32.mrb[0].mxu0
    %v7904 = vpop.f32.mrb[0].mxu0
    %7905 = vdwg.mxu0
    %7906 = vmatprep.subr.bf16.mxu0 %v5696
    %7907 = vmatpush1.bf16.msra.mxu0 %v5695
    %7908 = vmatprep.subr.bf16.mxu0 %v5714
    %7909 = vmatpush1.bf16.msra.mxu0 %v5713
    %7910 = vmatprep.subr.bf16.mxu0 %v5732
    %7911 = vmatpush1.bf16.msra.mxu0 %v5731
    %7912 = vmatprep.subr.bf16.mxu0 %v5750
    %7913 = vmatpush1.bf16.msra.mxu0 %v5749
    %7914 = vmatprep.subr.bf16.mxu0 %v5768
    %7915 = vmatpush1.bf16.msra.mxu0 %v5767
    %7916 = vmatprep.subr.bf16.mxu0 %v5786
    %7917 = vmatpush1.bf16.msra.mxu0 %v5785
    %7918 = vmatprep.subr.bf16.mxu0 %v5804
    %7919 = vmatpush1.bf16.msra.mxu0 %v5803
    %7920 = vmatprep.subr.bf16.mxu0 %v5822
    %7921 = vmatpush1.bf16.msra.mxu0 %v5821
    %7922 = vmatprep.subr.bf16.mxu0 %v5840
    %7923 = vmatpush1.bf16.msra.mxu0 %v5839
    %7924 = vmatprep.subr.bf16.mxu0 %v5858
    %7925 = vmatpush1.bf16.msra.mxu0 %v5857
    %7926 = vmatprep.subr.bf16.mxu0 %v5876
    %7927 = vmatpush1.bf16.msra.mxu0 %v5875
    %7928 = vmatprep.subr.bf16.mxu0 %v5894
    %7929 = vmatpush1.bf16.msra.mxu0 %v5893
    %7930 = vmatprep.subr.bf16.mxu0 %v5912
    %7931 = vmatpush1.bf16.msra.mxu0 %v5911
    %7932 = vmatprep.subr.bf16.mxu0 %v5930
    %7933 = vmatpush1.bf16.msra.mxu0 %v5929
    %7934 = vmatprep.subr.bf16.mxu0 %v5948
    %7935 = vmatpush1.bf16.msra.mxu0 %v5947
    %7936 = vmatprep.subr.bf16.mxu0 %v5966
    %7937 = vmatpush1.bf16.msra.mxu0 %v5965
    %7938 = vmatprep.mubr.bf16.mxu0 %v1358
    %7939 = vmatmul.mubr.bf16.gmra.mrb[0].mxu0 %v1357
    %v7940 = vpop.f32.mrb[0].mxu0
    %v7941 = vadd.f32 %v7900, %v7940
    %v7942 = vpop.f32.mrb[0].mxu0
    %v7943 = vadd.f32 %v7902, %v7942
    %v7944 = vpop.f32.mrb[0].mxu0
    %v7945 = vpop.f32.mrb[0].mxu0
    %7946 = vdwg.mxu0
    %7947 = vmatprep.subr.bf16.mxu0 %v4834
    %7948 = vmatpush1.bf16.msra.mxu0 %v4833
    %7949 = vmatprep.subr.bf16.mxu0 %v4852
    %7950 = vmatpush1.bf16.msra.mxu0 %v4851
    %7951 = vmatprep.subr.bf16.mxu0 %v4870
    %7952 = vmatpush1.bf16.msra.mxu0 %v4869
    %7953 = vmatprep.subr.bf16.mxu0 %v4888
    %7954 = vmatpush1.bf16.msra.mxu0 %v4887
    %7955 = vmatprep.subr.bf16.mxu0 %v4906
    %7956 = vmatpush1.bf16.msra.mxu0 %v4905
    %7957 = vmatprep.subr.bf16.mxu0 %v4924
    %7958 = vmatpush1.bf16.msra.mxu0 %v4923
    %7959 = vmatprep.subr.bf16.mxu0 %v4942
    %7960 = vmatpush1.bf16.msra.mxu0 %v4941
    %7961 = vmatprep.subr.bf16.mxu0 %v4960
    %7962 = vmatpush1.bf16.msra.mxu0 %v4959
    %7963 = vmatprep.subr.bf16.mxu0 %v4978
    %7964 = vmatpush1.bf16.msra.mxu0 %v4977
    %7965 = vmatprep.subr.bf16.mxu0 %v4996
    %7966 = vmatpush1.bf16.msra.mxu0 %v4995
    %7967 = vmatprep.subr.bf16.mxu0 %v5014
    %7968 = vmatpush1.bf16.msra.mxu0 %v5013
    %7969 = vmatprep.subr.bf16.mxu0 %v5032
    %7970 = vmatpush1.bf16.msra.mxu0 %v5031
    %7971 = vmatprep.subr.bf16.mxu0 %v5050
    %7972 = vmatpush1.bf16.msra.mxu0 %v5049
    %7973 = vmatprep.subr.bf16.mxu0 %v5068
    %7974 = vmatpush1.bf16.msra.mxu0 %v5067
    %7975 = vmatprep.subr.bf16.mxu0 %v5086
    %7976 = vmatpush1.bf16.msra.mxu0 %v5085
    %7977 = vmatprep.subr.bf16.mxu0 %v5104
    %7978 = vmatpush1.bf16.msra.mxu0 %v5103
    %7979 = vmatprep.mubr.bf16.mxu0 %v1352
    %7980 = vmatmul.mubr.bf16.gmra.mrb[0].mxu0 %v1351
    %v7981 = vpop.f32.mrb[0].mxu0
    %v7982 = vadd.f32 0.0, %v7981
    %v7983 = vpop.f32.mrb[0].mxu0
    %v7984 = vadd.f32 0.0, %v7983
    %v7985 = vpop.f32.mrb[0].mxu0
    %v7986 = vpop.f32.mrb[0].mxu0
    %7987 = vdwg.mxu0
    %7988 = vmatprep.subr.bf16.mxu0 %v5122
    %7989 = vmatpush1.bf16.msra.mxu0 %v5121
    %7990 = vmatprep.subr.bf16.mxu0 %v5140
    %7991 = vmatpush1.bf16.msra.mxu0 %v5139
    %7992 = vmatprep.subr.bf16.mxu0 %v5158
    %7993 = vmatpush1.bf16.msra.mxu0 %v5157
    %7994 = vmatprep.subr.bf16.mxu0 %v5176
    %7995 = vmatpush1.bf16.msra.mxu0 %v5175
    %7996 = vmatprep.subr.bf16.mxu0 %v5194
    %7997 = vmatpush1.bf16.msra.mxu0 %v5193
    %7998 = vmatprep.subr.bf16.mxu0 %v5212
    %7999 = vmatpush1.bf16.msra.mxu0 %v5211
    %8000 = vmatprep.subr.bf16.mxu0 %v5230
    %8001 = vmatpush1.bf16.msra.mxu0 %v5229
    %8002 = vmatprep.subr.bf16.mxu0 %v5248
    %8003 = vmatpush1.bf16.msra.mxu0 %v5247
    %8004 = vmatprep.subr.bf16.mxu0 %v5266
    %8005 = vmatpush1.bf16.msra.mxu0 %v5265
    %8006 = vmatprep.subr.bf16.mxu0 %v5284
    %8007 = vmatpush1.bf16.msra.mxu0 %v5283
    %8008 = vmatprep.subr.bf16.mxu0 %v5302
    %8009 = vmatpush1.bf16.msra.mxu0 %v5301
    %8010 = vmatprep.subr.bf16.mxu0 %v5320
    %8011 = vmatpush1.bf16.msra.mxu0 %v5319
    %8012 = vmatprep.subr.bf16.mxu0 %v5338
    %8013 = vmatpush1.bf16.msra.mxu0 %v5337
    %8014 = vmatprep.subr.bf16.mxu0 %v5356
    %8015 = vmatpush1.bf16.msra.mxu0 %v5355
    %8016 = vmatprep.subr.bf16.mxu0 %v5374
    %8017 = vmatpush1.bf16.msra.mxu0 %v5373
    %8018 = vmatprep.subr.bf16.mxu0 %v5392
    %8019 = vmatpush1.bf16.msra.mxu0 %v5391
    %8020 = vmatprep.mubr.bf16.mxu0 %v1354
    %8021 = vmatmul.mubr.bf16.gmra.mrb[0].mxu0 %v1353
    %v8022 = vpop.f32.mrb[0].mxu0
    %v8023 = vadd.f32 %v7982, %v8022
    %v8024 = vpop.f32.mrb[0].mxu0
    %v8025 = vadd.f32 %v7984, %v8024
    %v8026 = vpop.f32.mrb[0].mxu0
    %v8027 = vpop.f32.mrb[0].mxu0
    %8028 = vdwg.mxu0
    %8029 = vmatprep.subr.bf16.mxu0 %v5410
    %8030 = vmatpush1.bf16.msra.mxu0 %v5409
    %8031 = vmatprep.subr.bf16.mxu0 %v5428
    %8032 = vmatpush1.bf16.msra.mxu0 %v5427
    %8033 = vmatprep.subr.bf16.mxu0 %v5446
    %8034 = vmatpush1.bf16.msra.mxu0 %v5445
    %8035 = vmatprep.subr.bf16.mxu0 %v5464
    %8036 = vmatpush1.bf16.msra.mxu0 %v5463
    %8037 = vmatprep.subr.bf16.mxu0 %v5482
    %8038 = vmatpush1.bf16.msra.mxu0 %v5481
    %8039 = vmatprep.subr.bf16.mxu0 %v5500
    %8040 = vmatpush1.bf16.msra.mxu0 %v5499
    %8041 = vmatprep.subr.bf16.mxu0 %v5518
    %8042 = vmatpush1.bf16.msra.mxu0 %v5517
    %8043 = vmatprep.subr.bf16.mxu0 %v5536
    %8044 = vmatpush1.bf16.msra.mxu0 %v5535
    %8045 = vmatprep.subr.bf16.mxu0 %v5554
    %8046 = vmatpush1.bf16.msra.mxu0 %v5553
    %8047 = vmatprep.subr.bf16.mxu0 %v5572
    %8048 = vmatpush1.bf16.msra.mxu0 %v5571
    %8049 = vmatprep.subr.bf16.mxu0 %v5590
    %8050 = vmatpush1.bf16.msra.mxu0 %v5589
    %8051 = vmatprep.subr.bf16.mxu0 %v5608
    %8052 = vmatpush1.bf16.msra.mxu0 %v5607
    %8053 = vmatprep.subr.bf16.mxu0 %v5626
    %8054 = vmatpush1.bf16.msra.mxu0 %v5625
    %8055 = vmatprep.subr.bf16.mxu0 %v5644
    %8056 = vmatpush1.bf16.msra.mxu0 %v5643
    %8057 = vmatprep.subr.bf16.mxu0 %v5662
    %8058 = vmatpush1.bf16.msra.mxu0 %v5661
    %8059 = vmatprep.subr.bf16.mxu0 %v5680
    %8060 = vmatpush1.bf16.msra.mxu0 %v5679
    %8061 = vmatprep.mubr.bf16.mxu0 %v1356
    %8062 = vmatmul.mubr.bf16.gmra.mrb[0].mxu0 %v1355
    %v8063 = vpop.f32.mrb[0].mxu0
    %v8064 = vadd.f32 %v8023, %v8063
    %v8065 = vpop.f32.mrb[0].mxu0
    %v8066 = vadd.f32 %v8025, %v8065
    %v8067 = vpop.f32.mrb[0].mxu0
    %v8068 = vpop.f32.mrb[0].mxu0
    %8069 = vdwg.mxu0
    %8070 = vmatprep.subr.bf16.mxu0 %v5698
    %8071 = vmatpush1.bf16.msra.mxu0 %v5697
    %8072 = vmatprep.subr.bf16.mxu0 %v5716
    %8073 = vmatpush1.bf16.msra.mxu0 %v5715
    %8074 = vmatprep.subr.bf16.mxu0 %v5734
    %8075 = vmatpush1.bf16.msra.mxu0 %v5733
    %8076 = vmatprep.subr.bf16.mxu0 %v5752
    %8077 = vmatpush1.bf16.msra.mxu0 %v5751
    %8078 = vmatprep.subr.bf16.mxu0 %v5770
    %8079 = vmatpush1.bf16.msra.mxu0 %v5769
    %8080 = vmatprep.subr.bf16.mxu0 %v5788
    %8081 = vmatpush1.bf16.msra.mxu0 %v5787
    %8082 = vmatprep.subr.bf16.mxu0 %v5806
    %8083 = vmatpush1.bf16.msra.mxu0 %v5805
    %8084 = vmatprep.subr.bf16.mxu0 %v5824
    %8085 = vmatpush1.bf16.msra.mxu0 %v5823
    %8086 = vmatprep.subr.bf16.mxu0 %v5842
    %8087 = vmatpush1.bf16.msra.mxu0 %v5841
    %8088 = vmatprep.subr.bf16.mxu0 %v5860
    %8089 = vmatpush1.bf16.msra.mxu0 %v5859
    %8090 = vmatprep.subr.bf16.mxu0 %v5878
    %8091 = vmatpush1.bf16.msra.mxu0 %v5877
    %8092 = vmatprep.subr.bf16.mxu0 %v5896
    %8093 = vmatpush1.bf16.msra.mxu0 %v5895
    %8094 = vmatprep.subr.bf16.mxu0 %v5914
    %8095 = vmatpush1.bf16.msra.mxu0 %v5913
    %8096 = vmatprep.subr.bf16.mxu0 %v5932
    %8097 = vmatpush1.bf16.msra.mxu0 %v5931
    %8098 = vmatprep.subr.bf16.mxu0 %v5950
    %8099 = vmatpush1.bf16.msra.mxu0 %v5949
    %8100 = vmatprep.subr.bf16.mxu0 %v5968
    %8101 = vmatpush1.bf16.msra.mxu0 %v5967
    %8102 = vmatprep.mubr.bf16.mxu0 %v1358
    %8103 = vmatmul.mubr.bf16.gmra.mrb[0].mxu0 %v1357
    %v8104 = vpop.f32.mrb[0].mxu0
    %v8105 = vadd.f32 %v8064, %v8104
    %v8106 = vpop.f32.mrb[0].mxu0
    %v8107 = vadd.f32 %v8066, %v8106
    %v8108 = vpop.f32.mrb[0].mxu0
    %v8109 = vpop.f32.mrb[0].mxu0
    %8110 = vdwg.mxu0
    %8111 = vmatprep.subr.bf16.mxu0 %v4836
    %8112 = vmatpush1.bf16.msra.mxu0 %v4835
    %8113 = vmatprep.subr.bf16.mxu0 %v4854
    %8114 = vmatpush1.bf16.msra.mxu0 %v4853
    %8115 = vmatprep.subr.bf16.mxu0 %v4872
    %8116 = vmatpush1.bf16.msra.mxu0 %v4871
    %8117 = vmatprep.subr.bf16.mxu0 %v4890
    %8118 = vmatpush1.bf16.msra.mxu0 %v4889
    %8119 = vmatprep.subr.bf16.mxu0 %v4908
    %8120 = vmatpush1.bf16.msra.mxu0 %v4907
    %8121 = vmatprep.subr.bf16.mxu0 %v4926
    %8122 = vmatpush1.bf16.msra.mxu0 %v4925
    %8123 = vmatprep.subr.bf16.mxu0 %v4944
    %8124 = vmatpush1.bf16.msra.mxu0 %v4943
    %8125 = vmatprep.subr.bf16.mxu0 %v4962
    %8126 = vmatpush1.bf16.msra.mxu0 %v4961
    %8127 = vmatprep.subr.bf16.mxu0 %v4980
    %8128 = vmatpush1.bf16.msra.mxu0 %v4979
    %8129 = vmatprep.subr.bf16.mxu0 %v4998
    %8130 = vmatpush1.bf16.msra.mxu0 %v4997
    %8131 = vmatprep.subr.bf16.mxu0 %v5016
    %8132 = vmatpush1.bf16.msra.mxu0 %v5015
    %8133 = vmatprep.subr.bf16.mxu0 %v5034
    %8134 = vmatpush1.bf16.msra.mxu0 %v5033
    %8135 = vmatprep.subr.bf16.mxu0 %v5052
    %8136 = vmatpush1.bf16.msra.mxu0 %v5051
    %8137 = vmatprep.subr.bf16.mxu0 %v5070
    %8138 = vmatpush1.bf16.msra.mxu0 %v5069
    %8139 = vmatprep.subr.bf16.mxu0 %v5088
    %8140 = vmatpush1.bf16.msra.mxu0 %v5087
    %8141 = vmatprep.subr.bf16.mxu0 %v5106
    %8142 = vmatpush1.bf16.msra.mxu0 %v5105
    %8143 = vmatprep.mubr.bf16.mxu0 %v1352
    %8144 = vmatmul.mubr.bf16.gmra.mrb[0].mxu0 %v1351
    %v8145 = vpop.f32.mrb[0].mxu0
    %v8146 = vadd.f32 0.0, %v8145
    %v8147 = vpop.f32.mrb[0].mxu0
    %v8148 = vadd.f32 0.0, %v8147
    %v8149 = vpop.f32.mrb[0].mxu0
    %v8150 = vpop.f32.mrb[0].mxu0
    %8151 = vdwg.mxu0
    %8152 = vmatprep.subr.bf16.mxu0 %v5124
    %8153 = vmatpush1.bf16.msra.mxu0 %v5123
    %8154 = vmatprep.subr.bf16.mxu0 %v5142
    %8155 = vmatpush1.bf16.msra.mxu0 %v5141
    %8156 = vmatprep.subr.bf16.mxu0 %v5160
    %8157 = vmatpush1.bf16.msra.mxu0 %v5159
    %8158 = vmatprep.subr.bf16.mxu0 %v5178
    %8159 = vmatpush1.bf16.msra.mxu0 %v5177
    %8160 = vmatprep.subr.bf16.mxu0 %v5196
    %8161 = vmatpush1.bf16.msra.mxu0 %v5195
    %8162 = vmatprep.subr.bf16.mxu0 %v5214
    %8163 = vmatpush1.bf16.msra.mxu0 %v5213
    %8164 = vmatprep.subr.bf16.mxu0 %v5232
    %8165 = vmatpush1.bf16.msra.mxu0 %v5231
    %8166 = vmatprep.subr.bf16.mxu0 %v5250
    %8167 = vmatpush1.bf16.msra.mxu0 %v5249
    %8168 = vmatprep.subr.bf16.mxu0 %v5268
    %8169 = vmatpush1.bf16.msra.mxu0 %v5267
    %8170 = vmatprep.subr.bf16.mxu0 %v5286
    %8171 = vmatpush1.bf16.msra.mxu0 %v5285
    %8172 = vmatprep.subr.bf16.mxu0 %v5304
    %8173 = vmatpush1.bf16.msra.mxu0 %v5303
    %8174 = vmatprep.subr.bf16.mxu0 %v5322
    %8175 = vmatpush1.bf16.msra.mxu0 %v5321
    %8176 = vmatprep.subr.bf16.mxu0 %v5340
    %8177 = vmatpush1.bf16.msra.mxu0 %v5339
    %8178 = vmatprep.subr.bf16.mxu0 %v5358
    %8179 = vmatpush1.bf16.msra.mxu0 %v5357
    %8180 = vmatprep.subr.bf16.mxu0 %v5376
    %8181 = vmatpush1.bf16.msra.mxu0 %v5375
    %8182 = vmatprep.subr.bf16.mxu0 %v5394
    %8183 = vmatpush1.bf16.msra.mxu0 %v5393
    %8184 = vmatprep.mubr.bf16.mxu0 %v1354
    %8185 = vmatmul.mubr.bf16.gmra.mrb[0].mxu0 %v1353
    %v8186 = vpop.f32.mrb[0].mxu0
    %v8187 = vadd.f32 %v8146, %v8186
    %v8188 = vpop.f32.mrb[0].mxu0
    %v8189 = vadd.f32 %v8148, %v8188
    %v8190 = vpop.f32.mrb[0].mxu0
    %v8191 = vpop.f32.mrb[0].mxu0
    %8192 = vdwg.mxu0
    %8193 = vmatprep.subr.bf16.mxu0 %v5412
    %8194 = vmatpush1.bf16.msra.mxu0 %v5411
    %8195 = vmatprep.subr.bf16.mxu0 %v5430
    %8196 = vmatpush1.bf16.msra.mxu0 %v5429
    %8197 = vmatprep.subr.bf16.mxu0 %v5448
    %8198 = vmatpush1.bf16.msra.mxu0 %v5447
    %8199 = vmatprep.subr.bf16.mxu0 %v5466
    %8200 = vmatpush1.bf16.msra.mxu0 %v5465
    %8201 = vmatprep.subr.bf16.mxu0 %v5484
    %8202 = vmatpush1.bf16.msra.mxu0 %v5483
    %8203 = vmatprep.subr.bf16.mxu0 %v5502
    %8204 = vmatpush1.bf16.msra.mxu0 %v5501
    %8205 = vmatprep.subr.bf16.mxu0 %v5520
    %8206 = vmatpush1.bf16.msra.mxu0 %v5519
    %8207 = vmatprep.subr.bf16.mxu0 %v5538
    %8208 = vmatpush1.bf16.msra.mxu0 %v5537
    %8209 = vmatprep.subr.bf16.mxu0 %v5556
    %8210 = vmatpush1.bf16.msra.mxu0 %v5555
    %8211 = vmatprep.subr.bf16.mxu0 %v5574
    %8212 = vmatpush1.bf16.msra.mxu0 %v5573
    %8213 = vmatprep.subr.bf16.mxu0 %v5592
    %8214 = vmatpush1.bf16.msra.mxu0 %v5591
    %8215 = vmatprep.subr.bf16.mxu0 %v5610
    %8216 = vmatpush1.bf16.msra.mxu0 %v5609
    %8217 = vmatprep.subr.bf16.mxu0 %v5628
    %8218 = vmatpush1.bf16.msra.mxu0 %v5627
    %8219 = vmatprep.subr.bf16.mxu0 %v5646
    %8220 = vmatpush1.bf16.msra.mxu0 %v5645
    %8221 = vmatprep.subr.bf16.mxu0 %v5664
    %8222 = vmatpush1.bf16.msra.mxu0 %v5663
    %8223 = vmatprep.subr.bf16.mxu0 %v5682
    %8224 = vmatpush1.bf16.msra.mxu0 %v5681
    %8225 = vmatprep.mubr.bf16.mxu0 %v1356
    %8226 = vmatmul.mubr.bf16.gmra.mrb[0].mxu0 %v1355
    %v8227 = vpop.f32.mrb[0].mxu0
    %v8228 = vadd.f32 %v8187, %v8227
    %v8229 = vpop.f32.mrb[0].mxu0
    %v8230 = vadd.f32 %v8189, %v8229
    %v8231 = vpop.f32.mrb[0].mxu0
    %v8232 = vpop.f32.mrb[0].mxu0
    %8233 = vdwg.mxu0
    %8234 = vmatprep.subr.bf16.mxu0 %v5700
    %8235 = vmatpush1.bf16.msra.mxu0 %v5699
    %8236 = vmatprep.subr.bf16.mxu0 %v5718
    %8237 = vmatpush1.bf16.msra.mxu0 %v5717
    %8238 = vmatprep.subr.bf16.mxu0 %v5736
    %8239 = vmatpush1.bf16.msra.mxu0 %v5735
    %8240 = vmatprep.subr.bf16.mxu0 %v5754
    %8241 = vmatpush1.bf16.msra.mxu0 %v5753
    %8242 = vmatprep.subr.bf16.mxu0 %v5772
    %8243 = vmatpush1.bf16.msra.mxu0 %v5771
    %8244 = vmatprep.subr.bf16.mxu0 %v5790
    %8245 = vmatpush1.bf16.msra.mxu0 %v5789
    %8246 = vmatprep.subr.bf16.mxu0 %v5808
    %8247 = vmatpush1.bf16.msra.mxu0 %v5807
    %8248 = vmatprep.subr.bf16.mxu0 %v5826
    %8249 = vmatpush1.bf16.msra.mxu0 %v5825
    %8250 = vmatprep.subr.bf16.mxu0 %v5844
    %8251 = vmatpush1.bf16.msra.mxu0 %v5843
    %8252 = vmatprep.subr.bf16.mxu0 %v5862
    %8253 = vmatpush1.bf16.msra.mxu0 %v5861
    %8254 = vmatprep.subr.bf16.mxu0 %v5880
    %8255 = vmatpush1.bf16.msra.mxu0 %v5879
    %8256 = vmatprep.subr.bf16.mxu0 %v5898
    %8257 = vmatpush1.bf16.msra.mxu0 %v5897
    %8258 = vmatprep.subr.bf16.mxu0 %v5916
    %8259 = vmatpush1.bf16.msra.mxu0 %v5915
    %8260 = vmatprep.subr.bf16.mxu0 %v5934
    %8261 = vmatpush1.bf16.msra.mxu0 %v5933
    %8262 = vmatprep.subr.bf16.mxu0 %v5952
    %8263 = vmatpush1.bf16.msra.mxu0 %v5951
    %8264 = vmatprep.subr.bf16.mxu0 %v5970
    %8265 = vmatpush1.bf16.msra.mxu0 %v5969
    %8266 = vmatprep.mubr.bf16.mxu0 %v1358
    %8267 = vmatmul.mubr.bf16.gmra.mrb[0].mxu0 %v1357
    %v8268 = vpop.f32.mrb[0].mxu0
    %v8269 = vadd.f32 %v8228, %v8268
    %v8270 = vpop.f32.mrb[0].mxu0
    %v8271 = vadd.f32 %v8230, %v8270
    %v8272 = vpop.f32.mrb[0].mxu0
    %v8273 = vpop.f32.mrb[0].mxu0
    %8274 = vdwg.mxu0
    %8275 = vmatprep.subr.bf16.mxu0 %v4838
    %8276 = vmatpush1.bf16.msra.mxu0 %v4837
    %8277 = vmatprep.subr.bf16.mxu0 %v4856
    %8278 = vmatpush1.bf16.msra.mxu0 %v4855
    %8279 = vmatprep.subr.bf16.mxu0 %v4874
    %8280 = vmatpush1.bf16.msra.mxu0 %v4873
    %8281 = vmatprep.subr.bf16.mxu0 %v4892
    %8282 = vmatpush1.bf16.msra.mxu0 %v4891
    %8283 = vmatprep.subr.bf16.mxu0 %v4910
    %8284 = vmatpush1.bf16.msra.mxu0 %v4909
    %8285 = vmatprep.subr.bf16.mxu0 %v4928
    %8286 = vmatpush1.bf16.msra.mxu0 %v4927
    %8287 = vmatprep.subr.bf16.mxu0 %v4946
    %8288 = vmatpush1.bf16.msra.mxu0 %v4945
    %8289 = vmatprep.subr.bf16.mxu0 %v4964
    %8290 = vmatpush1.bf16.msra.mxu0 %v4963
    %8291 = vmatprep.subr.bf16.mxu0 %v4982
    %8292 = vmatpush1.bf16.msra.mxu0 %v4981
    %8293 = vmatprep.subr.bf16.mxu0 %v5000
    %8294 = vmatpush1.bf16.msra.mxu0 %v4999
    %8295 = vmatprep.subr.bf16.mxu0 %v5018
    %8296 = vmatpush1.bf16.msra.mxu0 %v5017
    %8297 = vmatprep.subr.bf16.mxu0 %v5036
    %8298 = vmatpush1.bf16.msra.mxu0 %v5035
    %8299 = vmatprep.subr.bf16.mxu0 %v5054
    %8300 = vmatpush1.bf16.msra.mxu0 %v5053
    %8301 = vmatprep.subr.bf16.mxu0 %v5072
    %8302 = vmatpush1.bf16.msra.mxu0 %v5071
    %8303 = vmatprep.subr.bf16.mxu0 %v5090
    %8304 = vmatpush1.bf16.msra.mxu0 %v5089
    %8305 = vmatprep.subr.bf16.mxu0 %v5108
    %8306 = vmatpush1.bf16.msra.mxu0 %v5107
    %8307 = vmatprep.mubr.bf16.mxu0 %v1352
    %8308 = vmatmul.mubr.bf16.gmra.mrb[0].mxu0 %v1351
    %v8309 = vpop.f32.mrb[0].mxu0
    %v8310 = vadd.f32 0.0, %v8309
    %v8311 = vpop.f32.mrb[0].mxu0
    %v8312 = vadd.f32 0.0, %v8311
    %v8313 = vpop.f32.mrb[0].mxu0
    %v8314 = vpop.f32.mrb[0].mxu0
    %8315 = vdwg.mxu0
    %8316 = vmatprep.subr.bf16.mxu0 %v5126
    %8317 = vmatpush1.bf16.msra.mxu0 %v5125
    %8318 = vmatprep.subr.bf16.mxu0 %v5144
    %8319 = vmatpush1.bf16.msra.mxu0 %v5143
    %8320 = vmatprep.subr.bf16.mxu0 %v5162
    %8321 = vmatpush1.bf16.msra.mxu0 %v5161
    %8322 = vmatprep.subr.bf16.mxu0 %v5180
    %8323 = vmatpush1.bf16.msra.mxu0 %v5179
    %8324 = vmatprep.subr.bf16.mxu0 %v5198
    %8325 = vmatpush1.bf16.msra.mxu0 %v5197
    %8326 = vmatprep.subr.bf16.mxu0 %v5216
    %8327 = vmatpush1.bf16.msra.mxu0 %v5215
    %8328 = vmatprep.subr.bf16.mxu0 %v5234
    %8329 = vmatpush1.bf16.msra.mxu0 %v5233
    %8330 = vmatprep.subr.bf16.mxu0 %v5252
    %8331 = vmatpush1.bf16.msra.mxu0 %v5251
    %8332 = vmatprep.subr.bf16.mxu0 %v5270
    %8333 = vmatpush1.bf16.msra.mxu0 %v5269
    %8334 = vmatprep.subr.bf16.mxu0 %v5288
    %8335 = vmatpush1.bf16.msra.mxu0 %v5287
    %8336 = vmatprep.subr.bf16.mxu0 %v5306
    %8337 = vmatpush1.bf16.msra.mxu0 %v5305
    %8338 = vmatprep.subr.bf16.mxu0 %v5324
    %8339 = vmatpush1.bf16.msra.mxu0 %v5323
    %8340 = vmatprep.subr.bf16.mxu0 %v5342
    %8341 = vmatpush1.bf16.msra.mxu0 %v5341
    %8342 = vmatprep.subr.bf16.mxu0 %v5360
    %8343 = vmatpush1.bf16.msra.mxu0 %v5359
    %8344 = vmatprep.subr.bf16.mxu0 %v5378
    %8345 = vmatpush1.bf16.msra.mxu0 %v5377
    %8346 = vmatprep.subr.bf16.mxu0 %v5396
    %8347 = vmatpush1.bf16.msra.mxu0 %v5395
    %8348 = vmatprep.mubr.bf16.mxu0 %v1354
    %8349 = vmatmul.mubr.bf16.gmra.mrb[0].mxu0 %v1353
    %v8350 = vpop.f32.mrb[0].mxu0
    %v8351 = vadd.f32 %v8310, %v8350
    %v8352 = vpop.f32.mrb[0].mxu0
    %v8353 = vadd.f32 %v8312, %v8352
    %v8354 = vpop.f32.mrb[0].mxu0
    %v8355 = vpop.f32.mrb[0].mxu0
    %8356 = vdwg.mxu0
    %8357 = vmatprep.subr.bf16.mxu0 %v5414
    %8358 = vmatpush1.bf16.msra.mxu0 %v5413
    %8359 = vmatprep.subr.bf16.mxu0 %v5432
    %8360 = vmatpush1.bf16.msra.mxu0 %v5431
    %8361 = vmatprep.subr.bf16.mxu0 %v5450
    %8362 = vmatpush1.bf16.msra.mxu0 %v5449
    %8363 = vmatprep.subr.bf16.mxu0 %v5468
    %8364 = vmatpush1.bf16.msra.mxu0 %v5467
    %8365 = vmatprep.subr.bf16.mxu0 %v5486
    %8366 = vmatpush1.bf16.msra.mxu0 %v5485
    %8367 = vmatprep.subr.bf16.mxu0 %v5504
    %8368 = vmatpush1.bf16.msra.mxu0 %v5503
    %8369 = vmatprep.subr.bf16.mxu0 %v5522
    %8370 = vmatpush1.bf16.msra.mxu0 %v5521
    %8371 = vmatprep.subr.bf16.mxu0 %v5540
    %8372 = vmatpush1.bf16.msra.mxu0 %v5539
    %8373 = vmatprep.subr.bf16.mxu0 %v5558
    %8374 = vmatpush1.bf16.msra.mxu0 %v5557
    %8375 = vmatprep.subr.bf16.mxu0 %v5576
    %8376 = vmatpush1.bf16.msra.mxu0 %v5575
    %8377 = vmatprep.subr.bf16.mxu0 %v5594
    %8378 = vmatpush1.bf16.msra.mxu0 %v5593
    %8379 = vmatprep.subr.bf16.mxu0 %v5612
    %8380 = vmatpush1.bf16.msra.mxu0 %v5611
    %8381 = vmatprep.subr.bf16.mxu0 %v5630
    %8382 = vmatpush1.bf16.msra.mxu0 %v5629
    %8383 = vmatprep.subr.bf16.mxu0 %v5648
    %8384 = vmatpush1.bf16.msra.mxu0 %v5647
    %8385 = vmatprep.subr.bf16.mxu0 %v5666
    %8386 = vmatpush1.bf16.msra.mxu0 %v5665
    %8387 = vmatprep.subr.bf16.mxu0 %v5684
    %8388 = vmatpush1.bf16.msra.mxu0 %v5683
    %8389 = vmatprep.mubr.bf16.mxu0 %v1356
    %8390 = vmatmul.mubr.bf16.gmra.mrb[0].mxu0 %v1355
    %v8391 = vpop.f32.mrb[0].mxu0
    %v8392 = vadd.f32 %v8351, %v8391
    %v8393 = vpop.f32.mrb[0].mxu0
    %v8394 = vadd.f32 %v8353, %v8393
    %v8395 = vpop.f32.mrb[0].mxu0
    %v8396 = vpop.f32.mrb[0].mxu0
    %8397 = vdwg.mxu0
    %8398 = vmatprep.subr.bf16.mxu0 %v5702
    %8399 = vmatpush1.bf16.msra.mxu0 %v5701
    %8400 = vmatprep.subr.bf16.mxu0 %v5720
    %8401 = vmatpush1.bf16.msra.mxu0 %v5719
    %8402 = vmatprep.subr.bf16.mxu0 %v5738
    %8403 = vmatpush1.bf16.msra.mxu0 %v5737
    %8404 = vmatprep.subr.bf16.mxu0 %v5756
    %8405 = vmatpush1.bf16.msra.mxu0 %v5755
    %8406 = vmatprep.subr.bf16.mxu0 %v5774
    %8407 = vmatpush1.bf16.msra.mxu0 %v5773
    %8408 = vmatprep.subr.bf16.mxu0 %v5792
    %8409 = vmatpush1.bf16.msra.mxu0 %v5791
    %8410 = vmatprep.subr.bf16.mxu0 %v5810
    %8411 = vmatpush1.bf16.msra.mxu0 %v5809
    %8412 = vmatprep.subr.bf16.mxu0 %v5828
    %8413 = vmatpush1.bf16.msra.mxu0 %v5827
    %8414 = vmatprep.subr.bf16.mxu0 %v5846
    %8415 = vmatpush1.bf16.msra.mxu0 %v5845
    %8416 = vmatprep.subr.bf16.mxu0 %v5864
    %8417 = vmatpush1.bf16.msra.mxu0 %v5863
    %8418 = vmatprep.subr.bf16.mxu0 %v5882
    %8419 = vmatpush1.bf16.msra.mxu0 %v5881
    %8420 = vmatprep.subr.bf16.mxu0 %v5900
    %8421 = vmatpush1.bf16.msra.mxu0 %v5899
    %8422 = vmatprep.subr.bf16.mxu0 %v5918
    %8423 = vmatpush1.bf16.msra.mxu0 %v5917
    %8424 = vmatprep.subr.bf16.mxu0 %v5936
    %8425 = vmatpush1.bf16.msra.mxu0 %v5935
    %8426 = vmatprep.subr.bf16.mxu0 %v5954
    %8427 = vmatpush1.bf16.msra.mxu0 %v5953
    %8428 = vmatprep.subr.bf16.mxu0 %v5972
    %8429 = vmatpush1.bf16.msra.mxu0 %v5971
    %8430 = vmatprep.mubr.bf16.mxu0 %v1358
    %8431 = vmatmul.mubr.bf16.gmra.mrb[0].mxu0 %v1357
    %v8432 = vpop.f32.mrb[0].mxu0
    %v8433 = vadd.f32 %v8392, %v8432
    %v8434 = vpop.f32.mrb[0].mxu0
    %v8435 = vadd.f32 %v8394, %v8434
    %v8436 = vpop.f32.mrb[0].mxu0
    %v8437 = vpop.f32.mrb[0].mxu0
    %8438 = vdwg.mxu0
    %8439 = vmatprep.subr.bf16.mxu0 %v4840
    %8440 = vmatpush1.bf16.msra.mxu0 %v4839
    %8441 = vmatprep.subr.bf16.mxu0 %v4858
    %8442 = vmatpush1.bf16.msra.mxu0 %v4857
    %8443 = vmatprep.subr.bf16.mxu0 %v4876
    %8444 = vmatpush1.bf16.msra.mxu0 %v4875
    %8445 = vmatprep.subr.bf16.mxu0 %v4894
    %8446 = vmatpush1.bf16.msra.mxu0 %v4893
    %8447 = vmatprep.subr.bf16.mxu0 %v4912
    %8448 = vmatpush1.bf16.msra.mxu0 %v4911
    %8449 = vmatprep.subr.bf16.mxu0 %v4930
    %8450 = vmatpush1.bf16.msra.mxu0 %v4929
    %8451 = vmatprep.subr.bf16.mxu0 %v4948
    %8452 = vmatpush1.bf16.msra.mxu0 %v4947
    %8453 = vmatprep.subr.bf16.mxu0 %v4966
    %8454 = vmatpush1.bf16.msra.mxu0 %v4965
    %8455 = vmatprep.subr.bf16.mxu0 %v4984
    %8456 = vmatpush1.bf16.msra.mxu0 %v4983
    %8457 = vmatprep.subr.bf16.mxu0 %v5002
    %8458 = vmatpush1.bf16.msra.mxu0 %v5001
    %8459 = vmatprep.subr.bf16.mxu0 %v5020
    %8460 = vmatpush1.bf16.msra.mxu0 %v5019
    %8461 = vmatprep.subr.bf16.mxu0 %v5038
    %8462 = vmatpush1.bf16.msra.mxu0 %v5037
    %8463 = vmatprep.subr.bf16.mxu0 %v5056
    %8464 = vmatpush1.bf16.msra.mxu0 %v5055
    %8465 = vmatprep.subr.bf16.mxu0 %v5074
    %8466 = vmatpush1.bf16.msra.mxu0 %v5073
    %8467 = vmatprep.subr.bf16.mxu0 %v5092
    %8468 = vmatpush1.bf16.msra.mxu0 %v5091
    %8469 = vmatprep.subr.bf16.mxu0 %v5110
    %8470 = vmatpush1.bf16.msra.mxu0 %v5109
    %8471 = vmatprep.mubr.bf16.mxu0 %v1352
    %8472 = vmatmul.mubr.bf16.gmra.mrb[0].mxu0 %v1351
    %v8473 = vpop.f32.mrb[0].mxu0
    %v8474 = vadd.f32 0.0, %v8473
    %v8475 = vpop.f32.mrb[0].mxu0
    %v8476 = vadd.f32 0.0, %v8475
    %v8477 = vpop.f32.mrb[0].mxu0
    %v8478 = vpop.f32.mrb[0].mxu0
    %8479 = vdwg.mxu0
    %8480 = vmatprep.subr.bf16.mxu0 %v5128
    %8481 = vmatpush1.bf16.msra.mxu0 %v5127
    %8482 = vmatprep.subr.bf16.mxu0 %v5146
    %8483 = vmatpush1.bf16.msra.mxu0 %v5145
    %8484 = vmatprep.subr.bf16.mxu0 %v5164
    %8485 = vmatpush1.bf16.msra.mxu0 %v5163
    %8486 = vmatprep.subr.bf16.mxu0 %v5182
    %8487 = vmatpush1.bf16.msra.mxu0 %v5181
    %8488 = vmatprep.subr.bf16.mxu0 %v5200
    %8489 = vmatpush1.bf16.msra.mxu0 %v5199
    %8490 = vmatprep.subr.bf16.mxu0 %v5218
    %8491 = vmatpush1.bf16.msra.mxu0 %v5217
    %8492 = vmatprep.subr.bf16.mxu0 %v5236
    %8493 = vmatpush1.bf16.msra.mxu0 %v5235
    %8494 = vmatprep.subr.bf16.mxu0 %v5254
    %8495 = vmatpush1.bf16.msra.mxu0 %v5253
    %8496 = vmatprep.subr.bf16.mxu0 %v5272
    %8497 = vmatpush1.bf16.msra.mxu0 %v5271
    %8498 = vmatprep.subr.bf16.mxu0 %v5290
    %8499 = vmatpush1.bf16.msra.mxu0 %v5289
    %8500 = vmatprep.subr.bf16.mxu0 %v5308
    %8501 = vmatpush1.bf16.msra.mxu0 %v5307
    %8502 = vmatprep.subr.bf16.mxu0 %v5326
    %8503 = vmatpush1.bf16.msra.mxu0 %v5325
    %8504 = vmatprep.subr.bf16.mxu0 %v5344
    %8505 = vmatpush1.bf16.msra.mxu0 %v5343
    %8506 = vmatprep.subr.bf16.mxu0 %v5362
    %8507 = vmatpush1.bf16.msra.mxu0 %v5361
    %8508 = vmatprep.subr.bf16.mxu0 %v5380
    %8509 = vmatpush1.bf16.msra.mxu0 %v5379
    %8510 = vmatprep.subr.bf16.mxu0 %v5398
    %8511 = vmatpush1.bf16.msra.mxu0 %v5397
    %8512 = vmatprep.mubr.bf16.mxu0 %v1354
    %8513 = vmatmul.mubr.bf16.gmra.mrb[0].mxu0 %v1353
    %v8514 = vpop.f32.mrb[0].mxu0
    %v8515 = vadd.f32 %v8474, %v8514
    %v8516 = vpop.f32.mrb[0].mxu0
    %v8517 = vadd.f32 %v8476, %v8516
    %v8518 = vpop.f32.mrb[0].mxu0
    %v8519 = vpop.f32.mrb[0].mxu0
    %8520 = vdwg.mxu0
    %8521 = vmatprep.subr.bf16.mxu0 %v5416
    %8522 = vmatpush1.bf16.msra.mxu0 %v5415
    %8523 = vmatprep.subr.bf16.mxu0 %v5434
    %8524 = vmatpush1.bf16.msra.mxu0 %v5433
    %8525 = vmatprep.subr.bf16.mxu0 %v5452
    %8526 = vmatpush1.bf16.msra.mxu0 %v5451
    %8527 = vmatprep.subr.bf16.mxu0 %v5470
    %8528 = vmatpush1.bf16.msra.mxu0 %v5469
    %8529 = vmatprep.subr.bf16.mxu0 %v5488
    %8530 = vmatpush1.bf16.msra.mxu0 %v5487
    %8531 = vmatprep.subr.bf16.mxu0 %v5506
    %8532 = vmatpush1.bf16.msra.mxu0 %v5505
    %8533 = vmatprep.subr.bf16.mxu0 %v5524
    %8534 = vmatpush1.bf16.msra.mxu0 %v5523
    %8535 = vmatprep.subr.bf16.mxu0 %v5542
    %8536 = vmatpush1.bf16.msra.mxu0 %v5541
    %8537 = vmatprep.subr.bf16.mxu0 %v5560
    %8538 = vmatpush1.bf16.msra.mxu0 %v5559
    %8539 = vmatprep.subr.bf16.mxu0 %v5578
    %8540 = vmatpush1.bf16.msra.mxu0 %v5577
    %8541 = vmatprep.subr.bf16.mxu0 %v5596
    %8542 = vmatpush1.bf16.msra.mxu0 %v5595
    %8543 = vmatprep.subr.bf16.mxu0 %v5614
    %8544 = vmatpush1.bf16.msra.mxu0 %v5613
    %8545 = vmatprep.subr.bf16.mxu0 %v5632
    %8546 = vmatpush1.bf16.msra.mxu0 %v5631
    %8547 = vmatprep.subr.bf16.mxu0 %v5650
    %8548 = vmatpush1.bf16.msra.mxu0 %v5649
    %8549 = vmatprep.subr.bf16.mxu0 %v5668
    %8550 = vmatpush1.bf16.msra.mxu0 %v5667
    %8551 = vmatprep.subr.bf16.mxu0 %v5686
    %8552 = vmatpush1.bf16.msra.mxu0 %v5685
    %8553 = vmatprep.mubr.bf16.mxu0 %v1356
    %8554 = vmatmul.mubr.bf16.gmra.mrb[0].mxu0 %v1355
    %v8555 = vpop.f32.mrb[0].mxu0
    %v8556 = vadd.f32 %v8515, %v8555
    %v8557 = vpop.f32.mrb[0].mxu0
    %v8558 = vadd.f32 %v8517, %v8557
    %v8559 = vpop.f32.mrb[0].mxu0
    %v8560 = vpop.f32.mrb[0].mxu0
    %8561 = vdwg.mxu0
    %8562 = vmatprep.subr.bf16.mxu0 %v5704
    %8563 = vmatpush1.bf16.msra.mxu0 %v5703
    %8564 = vmatprep.subr.bf16.mxu0 %v5722
    %8565 = vmatpush1.bf16.msra.mxu0 %v5721
    %8566 = vmatprep.subr.bf16.mxu0 %v5740
    %8567 = vmatpush1.bf16.msra.mxu0 %v5739
    %8568 = vmatprep.subr.bf16.mxu0 %v5758
    %8569 = vmatpush1.bf16.msra.mxu0 %v5757
    %8570 = vmatprep.subr.bf16.mxu0 %v5776
    %8571 = vmatpush1.bf16.msra.mxu0 %v5775
    %8572 = vmatprep.subr.bf16.mxu0 %v5794
    %8573 = vmatpush1.bf16.msra.mxu0 %v5793
    %8574 = vmatprep.subr.bf16.mxu0 %v5812
    %8575 = vmatpush1.bf16.msra.mxu0 %v5811
    %8576 = vmatprep.subr.bf16.mxu0 %v5830
    %8577 = vmatpush1.bf16.msra.mxu0 %v5829
    %8578 = vmatprep.subr.bf16.mxu0 %v5848
    %8579 = vmatpush1.bf16.msra.mxu0 %v5847
    %8580 = vmatprep.subr.bf16.mxu0 %v5866
    %8581 = vmatpush1.bf16.msra.mxu0 %v5865
    %8582 = vmatprep.subr.bf16.mxu0 %v5884
    %8583 = vmatpush1.bf16.msra.mxu0 %v5883
    %8584 = vmatprep.subr.bf16.mxu0 %v5902
    %8585 = vmatpush1.bf16.msra.mxu0 %v5901
    %8586 = vmatprep.subr.bf16.mxu0 %v5920
    %8587 = vmatpush1.bf16.msra.mxu0 %v5919
    %8588 = vmatprep.subr.bf16.mxu0 %v5938
    %8589 = vmatpush1.bf16.msra.mxu0 %v5937
    %8590 = vmatprep.subr.bf16.mxu0 %v5956
    %8591 = vmatpush1.bf16.msra.mxu0 %v5955
    %8592 = vmatprep.subr.bf16.mxu0 %v5974
    %8593 = vmatpush1.bf16.msra.mxu0 %v5973
    %8594 = vmatprep.mubr.bf16.mxu0 %v1358
    %8595 = vmatmul.mubr.bf16.gmra.mrb[0].mxu0 %v1357
    %v8596 = vpop.f32.mrb[0].mxu0
    %v8597 = vadd.f32 %v8556, %v8596
    %v8598 = vpop.f32.mrb[0].mxu0
    %v8599 = vadd.f32 %v8558, %v8598
    %v8600 = vpop.f32.mrb[0].mxu0
    %v8601 = vpop.f32.mrb[0].mxu0
    %8602 = vdwg.mxu0
    %v8603 = vld [vmem:[#allocation13] ss:$2 sm:$0xff]
    %s8604 = scalar_lea.vmem [#allocation13], 16
    %v8605 = vld [vmem:[%s8604] ss:$2 sm:$0xff]
    %s8606 = scalar_lea.vmem [#allocation13], 32
    %v8607 = vld [vmem:[%s8606] ss:$2 sm:$0x3]
    %v8611 = vlaneseq
    %v8612 = vshrl.u32 %v8611, 7
    %v8613 = vsub.s32 0, %v8612
    %v8614 = vrot.slane %v8603, %v8613
    %v8615 = vlaneseq
    %v8616 = vshrl.u32 %v8615, 7
    %v8617 = vsub.s32 1, %v8616
    %v8618 = vrot.slane %v8603, %v8617
    %v8619 = vlaneseq
    %v8620 = vshrl.u32 %v8619, 7
    %v8621 = vsub.s32 2, %v8620
    %v8622 = vrot.slane %v8603, %v8621
    %v8623 = vlaneseq
    %v8624 = vshrl.u32 %v8623, 7
    %v8625 = vsub.s32 3, %v8624
    %v8626 = vrot.slane %v8603, %v8625
    %v8627 = vlaneseq
    %v8628 = vshrl.u32 %v8627, 7
    %v8629 = vsub.s32 4, %v8628
    %v8630 = vrot.slane %v8603, %v8629
    %v8631 = vlaneseq
    %v8632 = vshrl.u32 %v8631, 7
    %v8633 = vsub.s32 5, %v8632
    %v8634 = vrot.slane %v8603, %v8633
    %v8635 = vlaneseq
    %v8636 = vshrl.u32 %v8635, 7
    %v8637 = vsub.s32 6, %v8636
    %v8638 = vrot.slane %v8603, %v8637
    %v8639 = vlaneseq
    %v8640 = vshrl.u32 %v8639, 7
    %v8641 = vsub.s32 7, %v8640
    %v8642 = vrot.slane %v8603, %v8641
    %v8643 = vlaneseq
    %v8644 = vshrl.u32 %v8643, 7
    %v8645 = vsub.s32 0, %v8644
    %v8646 = vrot.slane %v8605, %v8645
    %v8647 = vlaneseq
    %v8648 = vshrl.u32 %v8647, 7
    %v8649 = vsub.s32 1, %v8648
    %v8650 = vrot.slane %v8605, %v8649
    %v8651 = vlaneseq
    %v8652 = vshrl.u32 %v8651, 7
    %v8653 = vsub.s32 2, %v8652
    %v8654 = vrot.slane %v8605, %v8653
    %v8655 = vlaneseq
    %v8656 = vshrl.u32 %v8655, 7
    %v8657 = vsub.s32 3, %v8656
    %v8658 = vrot.slane %v8605, %v8657
    %v8659 = vlaneseq
    %v8660 = vshrl.u32 %v8659, 7
    %v8661 = vsub.s32 4, %v8660
    %v8662 = vrot.slane %v8605, %v8661
    %v8663 = vlaneseq
    %v8664 = vshrl.u32 %v8663, 7
    %v8665 = vsub.s32 5, %v8664
    %v8666 = vrot.slane %v8605, %v8665
    %v8667 = vlaneseq
    %v8668 = vshrl.u32 %v8667, 7
    %v8669 = vsub.s32 6, %v8668
    %v8670 = vrot.slane %v8605, %v8669
    %v8671 = vlaneseq
    %v8672 = vshrl.u32 %v8671, 7
    %v8673 = vsub.s32 7, %v8672
    %v8674 = vrot.slane %v8605, %v8673
    %v8675 = vlaneseq
    %v8676 = vshrl.u32 %v8675, 7
    %v8677 = vsub.s32 0, %v8676
    %v8678 = vrot.slane %v8607, %v8677
    %v8679 = vlaneseq
    %v8680 = vshrl.u32 %v8679, 7
    %v8681 = vsub.s32 1, %v8680
    %v8682 = vrot.slane %v8607, %v8681
    %v8701 = vmul.f32 %v7285, %v8614
    %v8702 = vmul.f32 %v7287, %v8618
    %v8703 = vmul.f32 %v7449, %v8622
    %v8704 = vmul.f32 %v7451, %v8626
    %v8705 = vmul.f32 %v7613, %v8630
    %v8706 = vmul.f32 %v7615, %v8634
    %v8707 = vmul.f32 %v7777, %v8638
    %v8708 = vmul.f32 %v7779, %v8642
    %v8709 = vmul.f32 %v7941, %v8646
    %v8710 = vmul.f32 %v7943, %v8650
    %v8711 = vmul.f32 %v8105, %v8654
    %v8712 = vmul.f32 %v8107, %v8658
    %v8713 = vmul.f32 %v8269, %v8662
    %v8714 = vmul.f32 %v8271, %v8666
    %v8715 = vmul.f32 %v8433, %v8670
    %v8716 = vmul.f32 %v8435, %v8674
    %v8717 = vmul.f32 %v8597, %v8678
    %v8718 = vmul.f32 %v8599, %v8682
    %s8719 = scalar_lea.vmem [#allocation13], 1
    %v8720 = vld [vmem:[%s8719] ss:$2 sm:$0xff]
    %s8721 = scalar_lea.vmem [#allocation13], 17
    %v8722 = vld [vmem:[%s8721] ss:$2 sm:$0xff]
    %s8723 = scalar_lea.vmem [#allocation13], 33
    %v8724 = vld [vmem:[%s8723] ss:$2 sm:$0x3]
    %v8728 = vlaneseq
    %v8729 = vshrl.u32 %v8728, 7
    %v8730 = vsub.s32 0, %v8729
    %v8731 = vrot.slane %v8720, %v8730
    %v8732 = vlaneseq
    %v8733 = vshrl.u32 %v8732, 7
    %v8734 = vsub.s32 1, %v8733
    %v8735 = vrot.slane %v8720, %v8734
    %v8736 = vlaneseq
    %v8737 = vshrl.u32 %v8736, 7
    %v8738 = vsub.s32 2, %v8737
    %v8739 = vrot.slane %v8720, %v8738
    %v8740 = vlaneseq
    %v8741 = vshrl.u32 %v8740, 7
    %v8742 = vsub.s32 3, %v8741
    %v8743 = vrot.slane %v8720, %v8742
    %v8744 = vlaneseq
    %v8745 = vshrl.u32 %v8744, 7
    %v8746 = vsub.s32 4, %v8745
    %v8747 = vrot.slane %v8720, %v8746
    %v8748 = vlaneseq
    %v8749 = vshrl.u32 %v8748, 7
    %v8750 = vsub.s32 5, %v8749
    %v8751 = vrot.slane %v8720, %v8750
    %v8752 = vlaneseq
    %v8753 = vshrl.u32 %v8752, 7
    %v8754 = vsub.s32 6, %v8753
    %v8755 = vrot.slane %v8720, %v8754
    %v8756 = vlaneseq
    %v8757 = vshrl.u32 %v8756, 7
    %v8758 = vsub.s32 7, %v8757
    %v8759 = vrot.slane %v8720, %v8758
    %v8760 = vlaneseq
    %v8761 = vshrl.u32 %v8760, 7
    %v8762 = vsub.s32 0, %v8761
    %v8763 = vrot.slane %v8722, %v8762
    %v8764 = vlaneseq
    %v8765 = vshrl.u32 %v8764, 7
    %v8766 = vsub.s32 1, %v8765
    %v8767 = vrot.slane %v8722, %v8766
    %v8768 = vlaneseq
    %v8769 = vshrl.u32 %v8768, 7
    %v8770 = vsub.s32 2, %v8769
    %v8771 = vrot.slane %v8722, %v8770
    %v8772 = vlaneseq
    %v8773 = vshrl.u32 %v8772, 7
    %v8774 = vsub.s32 3, %v8773
    %v8775 = vrot.slane %v8722, %v8774
    %v8776 = vlaneseq
    %v8777 = vshrl.u32 %v8776, 7
    %v8778 = vsub.s32 4, %v8777
    %v8779 = vrot.slane %v8722, %v8778
    %v8780 = vlaneseq
    %v8781 = vshrl.u32 %v8780, 7
    %v8782 = vsub.s32 5, %v8781
    %v8783 = vrot.slane %v8722, %v8782
    %v8784 = vlaneseq
    %v8785 = vshrl.u32 %v8784, 7
    %v8786 = vsub.s32 6, %v8785
    %v8787 = vrot.slane %v8722, %v8786
    %v8788 = vlaneseq
    %v8789 = vshrl.u32 %v8788, 7
    %v8790 = vsub.s32 7, %v8789
    %v8791 = vrot.slane %v8722, %v8790
    %v8792 = vlaneseq
    %v8793 = vshrl.u32 %v8792, 7
    %v8794 = vsub.s32 0, %v8793
    %v8795 = vrot.slane %v8724, %v8794
    %v8796 = vlaneseq
    %v8797 = vshrl.u32 %v8796, 7
    %v8798 = vsub.s32 1, %v8797
    %v8799 = vrot.slane %v8724, %v8798
    %v8818 = vadd.f32 %v8701, %v8731
    %v8819 = vadd.f32 %v8702, %v8735
    %v8820 = vadd.f32 %v8703, %v8739
    %v8821 = vadd.f32 %v8704, %v8743
    %v8822 = vadd.f32 %v8705, %v8747
    %v8823 = vadd.f32 %v8706, %v8751
    %v8824 = vadd.f32 %v8707, %v8755
    %v8825 = vadd.f32 %v8708, %v8759
    %v8826 = vadd.f32 %v8709, %v8763
    %v8827 = vadd.f32 %v8710, %v8767
    %v8828 = vadd.f32 %v8711, %v8771
    %v8829 = vadd.f32 %v8712, %v8775
    %v8830 = vadd.f32 %v8713, %v8779
    %v8831 = vadd.f32 %v8714, %v8783
    %v8832 = vadd.f32 %v8715, %v8787
    %v8833 = vadd.f32 %v8716, %v8791
    %v8834 = vadd.f32 %v8717, %v8795
    %v8835 = vadd.f32 %v8718, %v8799
    %v8836 = vmax.f32 %v8818, 0.0
    %v8837 = vmax.f32 %v8819, 0.0
    %v8838 = vmax.f32 %v8820, 0.0
    %v8839 = vmax.f32 %v8821, 0.0
    %v8840 = vmax.f32 %v8822, 0.0
    %v8841 = vmax.f32 %v8823, 0.0
    %v8842 = vmax.f32 %v8824, 0.0
    %v8843 = vmax.f32 %v8825, 0.0
    %v8844 = vmax.f32 %v8826, 0.0
    %v8845 = vmax.f32 %v8827, 0.0
    %v8846 = vmax.f32 %v8828, 0.0
    %v8847 = vmax.f32 %v8829, 0.0
    %v8848 = vmax.f32 %v8830, 0.0
    %v8849 = vmax.f32 %v8831, 0.0
    %v8850 = vmax.f32 %v8832, 0.0
    %v8851 = vmax.f32 %v8833, 0.0
    %v8852 = vmax.f32 %v8834, 0.0
    %v8853 = vmax.f32 %v8835, 0.0
    %v8854 = vmax.f32 %v8836, %v8838
    %v8855 = vmax.f32 %v8837, %v8839
    %v8856 = vmax.f32 %v8840, %v8842
    %v8857 = vmax.f32 %v8841, %v8843
    %v8858 = vmax.f32 %v8844, %v8846
    %v8859 = vmax.f32 %v8845, %v8847
    %v8860 = vmax.f32 %v8848, %v8850
    %v8861 = vmax.f32 %v8849, %v8851
    %v8862 = vmax.f32 %v8854, %v8856
    %v8863 = vmax.f32 %v8855, %v8857
    %v8864 = vmax.f32 %v8858, %v8860
    %v8865 = vmax.f32 %v8859, %v8861
    %v8866 = vmax.f32 %v8862, %v8864
    %v8867 = vmax.f32 %v8863, %v8865
    %v8868 = vmax.f32 %v8866, %v8852
    %v8869 = vmax.f32 %v8867, %v8853
    %v8870 = vpack.c.bf16 %v8868, %v8868
    %v8871 = vpack.c.bf16 %v8869, %v8869
    %v8872 = vld [vmem:[#allocation4] sm:$0xff]
    %v8873 = vld [vmem:[#allocation4 + $0x8] sm:$0xff]
    %v8874 = vld [vmem:[#allocation4 + $0x10] sm:$0xff]
    %v8875 = vld [vmem:[#allocation4 + $0x18] sm:$0xff]
    %v8876 = vld [vmem:[#allocation4 + $0x20] sm:$0xff]
    %v8877 = vld [vmem:[#allocation4 + $0x28] sm:$0xff]
    %v8878 = vld [vmem:[#allocation4 + $0x30] sm:$0xff]
    %v8879 = vld [vmem:[#allocation4 + $0x38] sm:$0xff]
    %v8880 = vld [vmem:[#allocation4 + $0x40] sm:$0xff]
    %v8881 = vld [vmem:[#allocation4 + $0x48] sm:$0xff]
    %v8882 = vld [vmem:[#allocation4 + $0x50] sm:$0xff]
    %v8883 = vld [vmem:[#allocation4 + $0x58] sm:$0xff]
    %v8884 = vld [vmem:[#allocation4 + $0x60] sm:$0xff]
    %v8885 = vld [vmem:[#allocation4 + $0x68] sm:$0xff]
    %v8886 = vld [vmem:[#allocation4 + $0x70] sm:$0xff]
    %v8887 = vld [vmem:[#allocation4 + $0x78] sm:$0xff]
    %v8888 = vld [vmem:[#allocation4 + $0x80] sm:$0xff]
    %v8889 = vld [vmem:[#allocation4 + $0x88] sm:$0xff]
    %v8890 = vld [vmem:[#allocation4 + $0x90] sm:$0xff]
    %v8891 = vld [vmem:[#allocation4 + $0x98] sm:$0xff]
    %v8892 = vld [vmem:[#allocation4 + $0xa0] sm:$0xff]
    %v8893 = vld [vmem:[#allocation4 + $0xa8] sm:$0xff]
    %v8894 = vld [vmem:[#allocation4 + $0xb0] sm:$0xff]
    %v8895 = vld [vmem:[#allocation4 + $0xb8] sm:$0xff]
    %v8896 = vld [vmem:[#allocation4 + $0xc0] sm:$0xff]
    %v8897 = vld [vmem:[#allocation4 + $0xc8] sm:$0xff]
    %v8898 = vld [vmem:[#allocation4 + $0xd0] sm:$0xff]
    %v8899 = vld [vmem:[#allocation4 + $0xd8] sm:$0xff]
    %v8900 = vld [vmem:[#allocation4 + $0xe0] sm:$0xff]
    %v8901 = vld [vmem:[#allocation4 + $0xe8] sm:$0xff]
    %v8902 = vld [vmem:[#allocation4 + $0xf0] sm:$0xff]
    %v8903 = vld [vmem:[#allocation4 + $0xf8] sm:$0xff]
    %v8904 = vld [vmem:[#allocation4 + $0x100] sm:$0xff]
    %v8905 = vld [vmem:[#allocation4 + $0x108] sm:$0xff]
    %v8906 = vld [vmem:[#allocation4 + $0x110] sm:$0xff]
    %v8907 = vld [vmem:[#allocation4 + $0x118] sm:$0xff]
    %v8908 = vld [vmem:[#allocation4 + $0x120] sm:$0xff]
    %v8909 = vld [vmem:[#allocation4 + $0x128] sm:$0xff]
    %v8910 = vld [vmem:[#allocation4 + $0x130] sm:$0xff]
    %v8911 = vld [vmem:[#allocation4 + $0x138] sm:$0xff]
    %v8912 = vld [vmem:[#allocation4 + $0x140] sm:$0xff]
    %v8913 = vld [vmem:[#allocation4 + $0x148] sm:$0xff]
    %v8914 = vld [vmem:[#allocation4 + $0x150] sm:$0xff]
    %v8915 = vld [vmem:[#allocation4 + $0x158] sm:$0xff]
    %v8916 = vld [vmem:[#allocation4 + $0x160] sm:$0xff]
    %v8917 = vld [vmem:[#allocation4 + $0x168] sm:$0xff]
    %v8918 = vld [vmem:[#allocation4 + $0x170] sm:$0xff]
    %v8919 = vld [vmem:[#allocation4 + $0x178] sm:$0xff]
    %v8920 = vld [vmem:[#allocation4 + $0x180] sm:$0xff]
    %v8921 = vld [vmem:[#allocation4 + $0x188] sm:$0xff]
    %v8922 = vld [vmem:[#allocation4 + $0x190] sm:$0xff]
    %v8923 = vld [vmem:[#allocation4 + $0x198] sm:$0xff]
    %v8924 = vld [vmem:[#allocation4 + $0x1a0] sm:$0xff]
    %v8925 = vld [vmem:[#allocation4 + $0x1a8] sm:$0xff]
    %v8926 = vld [vmem:[#allocation4 + $0x1b0] sm:$0xff]
    %v8927 = vld [vmem:[#allocation4 + $0x1b8] sm:$0xff]
    %v8928 = vld [vmem:[#allocation4 + $0x1c0] sm:$0xff]
    %v8929 = vld [vmem:[#allocation4 + $0x1c8] sm:$0xff]
    %v8930 = vld [vmem:[#allocation4 + $0x1d0] sm:$0xff]
    %v8931 = vld [vmem:[#allocation4 + $0x1d8] sm:$0xff]
    %v8932 = vld [vmem:[#allocation4 + $0x1e0] sm:$0xff]
    %v8933 = vld [vmem:[#allocation4 + $0x1e8] sm:$0xff]
    %v8934 = vld [vmem:[#allocation4 + $0x1f0] sm:$0xff]
    %v8935 = vld [vmem:[#allocation4 + $0x1f8] sm:$0xff]
    %v9000 = vunpack.c.l.b16 %v8872
    %v9001 = vunpack.c.h.b16 %v8872
    %v9002 = vunpack.c.l.b16 %v8873
    %v9003 = vunpack.c.h.b16 %v8873
    %v9004 = vunpack.c.l.b16 %v8874
    %v9005 = vunpack.c.h.b16 %v8874
    %v9006 = vunpack.c.l.b16 %v8875
    %v9007 = vunpack.c.h.b16 %v8875
    %v9008 = vunpack.c.l.b16 %v8876
    %v9009 = vunpack.c.h.b16 %v8876
    %v9010 = vunpack.c.l.b16 %v8877
    %v9011 = vunpack.c.h.b16 %v8877
    %v9012 = vunpack.c.l.b16 %v8878
    %v9013 = vunpack.c.h.b16 %v8878
    %v9014 = vunpack.c.l.b16 %v8879
    %v9015 = vunpack.c.h.b16 %v8879
    %v9016 = vunpack.c.l.b16 %v8880
    %v9017 = vunpack.c.h.b16 %v8880
    %v9018 = vunpack.c.l.b16 %v8881
    %v9019 = vunpack.c.h.b16 %v8881
    %v9020 = vunpack.c.l.b16 %v8882
    %v9021 = vunpack.c.h.b16 %v8882
    %v9022 = vunpack.c.l.b16 %v8883
    %v9023 = vunpack.c.h.b16 %v8883
    %v9024 = vunpack.c.l.b16 %v8884
    %v9025 = vunpack.c.h.b16 %v8884
    %v9026 = vunpack.c.l.b16 %v8885
    %v9027 = vunpack.c.h.b16 %v8885
    %v9028 = vunpack.c.l.b16 %v8886
    %v9029 = vunpack.c.h.b16 %v8886
    %v9030 = vunpack.c.l.b16 %v8887
    %v9031 = vunpack.c.h.b16 %v8887
    %v9032 = vunpack.c.l.b16 %v8888
    %v9033 = vunpack.c.h.b16 %v8888
    %v9034 = vunpack.c.l.b16 %v8889
    %v9035 = vunpack.c.h.b16 %v8889
    %v9036 = vunpack.c.l.b16 %v8890
    %v9037 = vunpack.c.h.b16 %v8890
    %v9038 = vunpack.c.l.b16 %v8891
    %v9039 = vunpack.c.h.b16 %v8891
    %v9040 = vunpack.c.l.b16 %v8892
    %v9041 = vunpack.c.h.b16 %v8892
    %v9042 = vunpack.c.l.b16 %v8893
    %v9043 = vunpack.c.h.b16 %v8893
    %v9044 = vunpack.c.l.b16 %v8894
    %v9045 = vunpack.c.h.b16 %v8894
    %v9046 = vunpack.c.l.b16 %v8895
    %v9047 = vunpack.c.h.b16 %v8895
    %v9048 = vunpack.c.l.b16 %v8896
    %v9049 = vunpack.c.h.b16 %v8896
    %v9050 = vunpack.c.l.b16 %v8897
    %v9051 = vunpack.c.h.b16 %v8897
    %v9052 = vunpack.c.l.b16 %v8898
    %v9053 = vunpack.c.h.b16 %v8898
    %v9054 = vunpack.c.l.b16 %v8899
    %v9055 = vunpack.c.h.b16 %v8899
    %v9056 = vunpack.c.l.b16 %v8900
    %v9057 = vunpack.c.h.b16 %v8900
    %v9058 = vunpack.c.l.b16 %v8901
    %v9059 = vunpack.c.h.b16 %v8901
    %v9060 = vunpack.c.l.b16 %v8902
    %v9061 = vunpack.c.h.b16 %v8902
    %v9062 = vunpack.c.l.b16 %v8903
    %v9063 = vunpack.c.h.b16 %v8903
    %v9064 = vunpack.c.l.b16 %v8904
    %v9065 = vunpack.c.h.b16 %v8904
    %v9066 = vunpack.c.l.b16 %v8905
    %v9067 = vunpack.c.h.b16 %v8905
    %v9068 = vunpack.c.l.b16 %v8906
    %v9069 = vunpack.c.h.b16 %v8906
    %v9070 = vunpack.c.l.b16 %v8907
    %v9071 = vunpack.c.h.b16 %v8907
    %v9072 = vunpack.c.l.b16 %v8908
    %v9073 = vunpack.c.h.b16 %v8908
    %v9074 = vunpack.c.l.b16 %v8909
    %v9075 = vunpack.c.h.b16 %v8909
    %v9076 = vunpack.c.l.b16 %v8910
    %v9077 = vunpack.c.h.b16 %v8910
    %v9078 = vunpack.c.l.b16 %v8911
    %v9079 = vunpack.c.h.b16 %v8911
    %v9080 = vunpack.c.l.b16 %v8912
    %v9081 = vunpack.c.h.b16 %v8912
    %v9082 = vunpack.c.l.b16 %v8913
    %v9083 = vunpack.c.h.b16 %v8913
    %v9084 = vunpack.c.l.b16 %v8914
    %v9085 = vunpack.c.h.b16 %v8914
    %v9086 = vunpack.c.l.b16 %v8915
    %v9087 = vunpack.c.h.b16 %v8915
    %v9088 = vunpack.c.l.b16 %v8916
    %v9089 = vunpack.c.h.b16 %v8916
    %v9090 = vunpack.c.l.b16 %v8917
    %v9091 = vunpack.c.h.b16 %v8917
    %v9092 = vunpack.c.l.b16 %v8918
    %v9093 = vunpack.c.h.b16 %v8918
    %v9094 = vunpack.c.l.b16 %v8919
    %v9095 = vunpack.c.h.b16 %v8919
    %v9096 = vunpack.c.l.b16 %v8920
    %v9097 = vunpack.c.h.b16 %v8920
    %v9098 = vunpack.c.l.b16 %v8921
    %v9099 = vunpack.c.h.b16 %v8921
    %v9100 = vunpack.c.l.b16 %v8922
    %v9101 = vunpack.c.h.b16 %v8922
    %v9102 = vunpack.c.l.b16 %v8923
    %v9103 = vunpack.c.h.b16 %v8923
    %v9104 = vunpack.c.l.b16 %v8924
    %v9105 = vunpack.c.h.b16 %v8924
    %v9106 = vunpack.c.l.b16 %v8925
    %v9107 = vunpack.c.h.b16 %v8925
    %v9108 = vunpack.c.l.b16 %v8926
    %v9109 = vunpack.c.h.b16 %v8926
    %v9110 = vunpack.c.l.b16 %v8927
    %v9111 = vunpack.c.h.b16 %v8927
    %v9112 = vunpack.c.l.b16 %v8928
    %v9113 = vunpack.c.h.b16 %v8928
    %v9114 = vunpack.c.l.b16 %v8929
    %v9115 = vunpack.c.h.b16 %v8929
    %v9116 = vunpack.c.l.b16 %v8930
    %v9117 = vunpack.c.h.b16 %v8930
    %v9118 = vunpack.c.l.b16 %v8931
    %v9119 = vunpack.c.h.b16 %v8931
    %v9120 = vunpack.c.l.b16 %v8932
    %v9121 = vunpack.c.h.b16 %v8932
    %v9122 = vunpack.c.l.b16 %v8933
    %v9123 = vunpack.c.h.b16 %v8933
    %v9124 = vunpack.c.l.b16 %v8934
    %v9125 = vunpack.c.h.b16 %v8934
    %v9126 = vunpack.c.l.b16 %v8935
    %v9127 = vunpack.c.h.b16 %v8935
    %v9128 = vpack.c.b16 %v9004, %v9000
    %v9129 = vpack.c.b16 %v9005, %v9001
    %v9130 = vpack.c.b16 %v9006, %v9002
    %v9131 = vpack.c.b16 %v9007, %v9003
    %v9132 = vpack.c.b16 %v9012, %v9008
    %v9133 = vpack.c.b16 %v9013, %v9009
    %v9134 = vpack.c.b16 %v9014, %v9010
    %v9135 = vpack.c.b16 %v9015, %v9011
    %v9136 = vpack.c.b16 %v9020, %v9016
    %v9137 = vpack.c.b16 %v9021, %v9017
    %v9138 = vpack.c.b16 %v9022, %v9018
    %v9139 = vpack.c.b16 %v9023, %v9019
    %v9140 = vpack.c.b16 %v9028, %v9024
    %v9141 = vpack.c.b16 %v9029, %v9025
    %v9142 = vpack.c.b16 %v9030, %v9026
    %v9143 = vpack.c.b16 %v9031, %v9027
    %v9144 = vpack.c.b16 %v9036, %v9032
    %v9145 = vpack.c.b16 %v9037, %v9033
    %v9146 = vpack.c.b16 %v9038, %v9034
    %v9147 = vpack.c.b16 %v9039, %v9035
    %v9148 = vpack.c.b16 %v9044, %v9040
    %v9149 = vpack.c.b16 %v9045, %v9041
    %v9150 = vpack.c.b16 %v9046, %v9042
    %v9151 = vpack.c.b16 %v9047, %v9043
    %v9152 = vpack.c.b16 %v9052, %v9048
    %v9153 = vpack.c.b16 %v9053, %v9049
    %v9154 = vpack.c.b16 %v9054, %v9050
    %v9155 = vpack.c.b16 %v9055, %v9051
    %v9156 = vpack.c.b16 %v9060, %v9056
    %v9157 = vpack.c.b16 %v9061, %v9057
    %v9158 = vpack.c.b16 %v9062, %v9058
    %v9159 = vpack.c.b16 %v9063, %v9059
    %v9160 = vpack.c.b16 %v9068, %v9064
    %v9161 = vpack.c.b16 %v9069, %v9065
    %v9162 = vpack.c.b16 %v9070, %v9066
    %v9163 = vpack.c.b16 %v9071, %v9067
    %v9164 = vpack.c.b16 %v9076, %v9072
    %v9165 = vpack.c.b16 %v9077, %v9073
    %v9166 = vpack.c.b16 %v9078, %v9074
    %v9167 = vpack.c.b16 %v9079, %v9075
    %v9168 = vpack.c.b16 %v9084, %v9080
    %v9169 = vpack.c.b16 %v9085, %v9081
    %v9170 = vpack.c.b16 %v9086, %v9082
    %v9171 = vpack.c.b16 %v9087, %v9083
    %v9172 = vpack.c.b16 %v9092, %v9088
    %v9173 = vpack.c.b16 %v9093, %v9089
    %v9174 = vpack.c.b16 %v9094, %v9090
    %v9175 = vpack.c.b16 %v9095, %v9091
    %v9176 = vpack.c.b16 %v9100, %v9096
    %v9177 = vpack.c.b16 %v9101, %v9097
    %v9178 = vpack.c.b16 %v9102, %v9098
    %v9179 = vpack.c.b16 %v9103, %v9099
    %v9180 = vpack.c.b16 %v9108, %v9104
    %v9181 = vpack.c.b16 %v9109, %v9105
    %v9182 = vpack.c.b16 %v9110, %v9106
    %v9183 = vpack.c.b16 %v9111, %v9107
    %v9184 = vpack.c.b16 %v9116, %v9112
    %v9185 = vpack.c.b16 %v9117, %v9113
    %v9186 = vpack.c.b16 %v9118, %v9114
    %v9187 = vpack.c.b16 %v9119, %v9115
    %v9188 = vpack.c.b16 %v9124, %v9120
    %v9189 = vpack.c.b16 %v9125, %v9121
    %v9190 = vpack.c.b16 %v9126, %v9122
    %v9191 = vpack.c.b16 %v9127, %v9123
    %9256 = vmatprep.subr.bf16.mxu0 %v9129
    %9257 = vmatpush1.bf16.msra.mxu0 %v9128
    %9258 = vmatprep.subr.bf16.mxu0 %v9133
    %9259 = vmatpush1.bf16.msra.mxu0 %v9132
    %9260 = vmatprep.subr.bf16.mxu0 %v9137
    %9261 = vmatpush1.bf16.msra.mxu0 %v9136
    %9262 = vmatprep.subr.bf16.mxu0 %v9141
    %9263 = vmatpush1.bf16.msra.mxu0 %v9140
    %9264 = vmatprep.subr.bf16.mxu0 %v9145
    %9265 = vmatpush1.bf16.msra.mxu0 %v9144
    %9266 = vmatprep.subr.bf16.mxu0 %v9149
    %9267 = vmatpush1.bf16.msra.mxu0 %v9148
    %9268 = vmatprep.subr.bf16.mxu0 %v9153
    %9269 = vmatpush1.bf16.msra.mxu0 %v9152
    %9270 = vmatprep.subr.bf16.mxu0 %v9157
    %9271 = vmatpush1.bf16.msra.mxu0 %v9156
    %9272 = vmatprep.subr.bf16.mxu0 %v9161
    %9273 = vmatpush1.bf16.msra.mxu0 %v9160
    %9274 = vmatprep.subr.bf16.mxu0 %v9165
    %9275 = vmatpush1.bf16.msra.mxu0 %v9164
    %9276 = vmatprep.subr.bf16.mxu0 %v9169
    %9277 = vmatpush1.bf16.msra.mxu0 %v9168
    %9278 = vmatprep.subr.bf16.mxu0 %v9173
    %9279 = vmatpush1.bf16.msra.mxu0 %v9172
    %9280 = vmatprep.subr.bf16.mxu0 %v9177
    %9281 = vmatpush1.bf16.msra.mxu0 %v9176
    %9282 = vmatprep.subr.bf16.mxu0 %v9181
    %9283 = vmatpush1.bf16.msra.mxu0 %v9180
    %9284 = vmatprep.subr.bf16.mxu0 %v9185
    %9285 = vmatpush1.bf16.msra.mxu0 %v9184
    %9286 = vmatprep.subr.bf16.mxu0 %v9189
    %9287 = vmatpush1.bf16.msra.mxu0 %v9188
    %9288 = vmatprep.mubr.bf16.mxu0 %v8871
    %9289 = vmatmul.mubr.bf16.gmra.mrb[0].mxu0 %v8870
    %v9290 = vpop.f32.mrb[0].mxu0
    %v9291 = vadd.f32 0.0, %v9290
    %v9292 = vpop.f32.mrb[0].mxu0
    %v9293 = vadd.f32 0.0, %v9292
    %v9294 = vpop.f32.mrb[0].mxu0
    %v9295 = vpop.f32.mrb[0].mxu0
    %9296 = vdwg.mxu0
    %9297 = vmatprep.subr.bf16.mxu0 %v9131
    %9298 = vmatpush1.bf16.msra.mxu0 %v9130
    %9299 = vmatprep.subr.bf16.mxu0 %v9135
    %9300 = vmatpush1.bf16.msra.mxu0 %v9134
    %9301 = vmatprep.subr.bf16.mxu0 %v9139
    %9302 = vmatpush1.bf16.msra.mxu0 %v9138
    %9303 = vmatprep.subr.bf16.mxu0 %v9143
    %9304 = vmatpush1.bf16.msra.mxu0 %v9142
    %9305 = vmatprep.subr.bf16.mxu0 %v9147
    %9306 = vmatpush1.bf16.msra.mxu0 %v9146
    %9307 = vmatprep.subr.bf16.mxu0 %v9151
    %9308 = vmatpush1.bf16.msra.mxu0 %v9150
    %9309 = vmatprep.subr.bf16.mxu0 %v9155
    %9310 = vmatpush1.bf16.msra.mxu0 %v9154
    %9311 = vmatprep.subr.bf16.mxu0 %v9159
    %9312 = vmatpush1.bf16.msra.mxu0 %v9158
    %9313 = vmatprep.subr.bf16.mxu0 %v9163
    %9314 = vmatpush1.bf16.msra.mxu0 %v9162
    %9315 = vmatprep.subr.bf16.mxu0 %v9167
    %9316 = vmatpush1.bf16.msra.mxu0 %v9166
    %9317 = vmatprep.subr.bf16.mxu0 %v9171
    %9318 = vmatpush1.bf16.msra.mxu0 %v9170
    %9319 = vmatprep.subr.bf16.mxu0 %v9175
    %9320 = vmatpush1.bf16.msra.mxu0 %v9174
    %9321 = vmatprep.subr.bf16.mxu0 %v9179
    %9322 = vmatpush1.bf16.msra.mxu0 %v9178
    %9323 = vmatprep.subr.bf16.mxu0 %v9183
    %9324 = vmatpush1.bf16.msra.mxu0 %v9182
    %9325 = vmatprep.subr.bf16.mxu0 %v9187
    %9326 = vmatpush1.bf16.msra.mxu0 %v9186
    %9327 = vmatprep.subr.bf16.mxu0 %v9191
    %9328 = vmatpush1.bf16.msra.mxu0 %v9190
    %9329 = vmatprep.mubr.bf16.mxu0 %v8871
    %9330 = vmatmul.mubr.bf16.gmra.mrb[0].mxu0 %v8870
    %v9331 = vpop.f32.mrb[0].mxu0
    %v9332 = vadd.f32 0.0, %v9331
    %v9333 = vpop.f32.mrb[0].mxu0
    %v9334 = vadd.f32 0.0, %v9333
    %v9335 = vpop.f32.mrb[0].mxu0
    %v9336 = vpop.f32.mrb[0].mxu0
    %9337 = vdwg.mxu0
    %v9338 = vld [vmem:[#allocation15] ss:$2 sm:$0xf]
    %v9340 = vlaneseq
    %v9341 = vshrl.u32 %v9340, 7
    %v9342 = vsub.s32 0, %v9341
    %v9343 = vrot.slane %v9338, %v9342
    %v9344 = vlaneseq
    %v9345 = vshrl.u32 %v9344, 7
    %v9346 = vsub.s32 1, %v9345
    %v9347 = vrot.slane %v9338, %v9346
    %v9348 = vlaneseq
    %v9349 = vshrl.u32 %v9348, 7
    %v9350 = vsub.s32 2, %v9349
    %v9351 = vrot.slane %v9338, %v9350
    %v9352 = vlaneseq
    %v9353 = vshrl.u32 %v9352, 7
    %v9354 = vsub.s32 3, %v9353
    %v9355 = vrot.slane %v9338, %v9354
    %v9360 = vmul.f32 %v9291, %v9343
    %v9361 = vmul.f32 %v9293, %v9347
    %v9362 = vmul.f32 %v9332, %v9351
    %v9363 = vmul.f32 %v9334, %v9355
    %s9364 = scalar_lea.vmem [#allocation15], 1
    %v9365 = vld [vmem:[%s9364] ss:$2 sm:$0xf]
    %v9367 = vlaneseq
    %v9368 = vshrl.u32 %v9367, 7
    %v9369 = vsub.s32 0, %v9368
    %v9370 = vrot.slane %v9365, %v9369
    %v9371 = vlaneseq
    %v9372 = vshrl.u32 %v9371, 7
    %v9373 = vsub.s32 1, %v9372
    %v9374 = vrot.slane %v9365, %v9373
    %v9375 = vlaneseq
    %v9376 = vshrl.u32 %v9375, 7
    %v9377 = vsub.s32 2, %v9376
    %v9378 = vrot.slane %v9365, %v9377
    %v9379 = vlaneseq
    %v9380 = vshrl.u32 %v9379, 7
    %v9381 = vsub.s32 3, %v9380
    %v9382 = vrot.slane %v9365, %v9381
    %v9387 = vadd.f32 %v9360, %v9370
    %v9388 = vadd.f32 %v9361, %v9374
    %v9389 = vadd.f32 %v9362, %v9378
    %v9390 = vadd.f32 %v9363, %v9382
    %v9391 = vmax.f32 %v9387, 0.0
    %v9392 = vmax.f32 %v9388, 0.0
    %v9393 = vmax.f32 %v9389, 0.0
    %v9394 = vmax.f32 %v9390, 0.0
    %v9395 = vpack.c.bf16 %v9393, %v9393
    %v9396 = vld [vmem:[#allocation6] sm:$0xff]
    %v9397 = vld [vmem:[#allocation6 + $0x8] sm:$0xff]
    %v9398 = vld [vmem:[#allocation6 + $0x10] sm:$0xff]
    %v9399 = vld [vmem:[#allocation6 + $0x18] sm:$0xff]
    %v9400 = vld [vmem:[#allocation6 + $0x20] sm:$0xff]
    %v9401 = vld [vmem:[#allocation6 + $0x28] sm:$0xff]
    %v9402 = vld [vmem:[#allocation6 + $0x30] sm:$0xff]
    %v9403 = vld [vmem:[#allocation6 + $0x38] sm:$0xff]
    %v9404 = vld [vmem:[#allocation6 + $0x40] sm:$0xff]
    %v9405 = vld [vmem:[#allocation6 + $0x48] sm:$0xff]
    %v9406 = vld [vmem:[#allocation6 + $0x50] sm:$0xff]
    %v9407 = vld [vmem:[#allocation6 + $0x58] sm:$0xff]
    %v9408 = vld [vmem:[#allocation6 + $0x60] sm:$0xff]
    %v9409 = vld [vmem:[#allocation6 + $0x68] sm:$0xff]
    %v9410 = vld [vmem:[#allocation6 + $0x70] sm:$0xff]
    %v9411 = vld [vmem:[#allocation6 + $0x78] sm:$0xff]
    %v9428 = vunpack.c.l.b16 %v9396
    %v9429 = vunpack.c.h.b16 %v9396
    %v9430 = vunpack.c.l.b16 %v9397
    %v9431 = vunpack.c.h.b16 %v9397
    %v9432 = vunpack.c.l.b16 %v9398
    %v9433 = vunpack.c.h.b16 %v9398
    %v9434 = vunpack.c.l.b16 %v9399
    %v9435 = vunpack.c.h.b16 %v9399
    %v9436 = vunpack.c.l.b16 %v9400
    %v9437 = vunpack.c.h.b16 %v9400
    %v9438 = vunpack.c.l.b16 %v9401
    %v9439 = vunpack.c.h.b16 %v9401
    %v9440 = vunpack.c.l.b16 %v9402
    %v9441 = vunpack.c.h.b16 %v9402
    %v9442 = vunpack.c.l.b16 %v9403
    %v9443 = vunpack.c.h.b16 %v9403
    %v9444 = vunpack.c.l.b16 %v9404
    %v9445 = vunpack.c.h.b16 %v9404
    %v9446 = vunpack.c.l.b16 %v9405
    %v9447 = vunpack.c.h.b16 %v9405
    %v9448 = vunpack.c.l.b16 %v9406
    %v9449 = vunpack.c.h.b16 %v9406
    %v9450 = vunpack.c.l.b16 %v9407
    %v9451 = vunpack.c.h.b16 %v9407
    %v9452 = vunpack.c.l.b16 %v9408
    %v9453 = vunpack.c.h.b16 %v9408
    %v9454 = vunpack.c.l.b16 %v9409
    %v9455 = vunpack.c.h.b16 %v9409
    %v9456 = vunpack.c.l.b16 %v9410
    %v9457 = vunpack.c.h.b16 %v9410
    %v9458 = vunpack.c.l.b16 %v9411
    %v9459 = vunpack.c.h.b16 %v9411
    %v9460 = vpack.c.b16 %v9430, %v9428
    %v9461 = vpack.c.b16 %v9431, %v9429
    %v9462 = vpack.c.b16 %v9434, %v9432
    %v9463 = vpack.c.b16 %v9435, %v9433
    %v9464 = vpack.c.b16 %v9438, %v9436
    %v9465 = vpack.c.b16 %v9439, %v9437
    %v9466 = vpack.c.b16 %v9442, %v9440
    %v9467 = vpack.c.b16 %v9443, %v9441
    %v9468 = vpack.c.b16 %v9446, %v9444
    %v9469 = vpack.c.b16 %v9447, %v9445
    %v9470 = vpack.c.b16 %v9450, %v9448
    %v9471 = vpack.c.b16 %v9451, %v9449
    %v9472 = vpack.c.b16 %v9454, %v9452
    %v9473 = vpack.c.b16 %v9455, %v9453
    %v9474 = vpack.c.b16 %v9458, %v9456
    %v9475 = vpack.c.b16 %v9459, %v9457
    %9492 = vmatprep.subr.bf16.mxu0 %v9461
    %9493 = vmatpush1.bf16.msra.mxu0 %v9460
    %9494 = vmatprep.subr.bf16.mxu0 %v9463
    %9495 = vmatpush1.bf16.msra.mxu0 %v9462
    %9496 = vmatprep.subr.bf16.mxu0 %v9465
    %9497 = vmatpush1.bf16.msra.mxu0 %v9464
    %9498 = vmatprep.subr.bf16.mxu0 %v9467
    %9499 = vmatpush1.bf16.msra.mxu0 %v9466
    %9500 = vmatprep.subr.bf16.mxu0 %v9469
    %9501 = vmatpush1.bf16.msra.mxu0 %v9468
    %9502 = vmatprep.subr.bf16.mxu0 %v9471
    %9503 = vmatpush1.bf16.msra.mxu0 %v9470
    %9504 = vmatprep.subr.bf16.mxu0 %v9473
    %9505 = vmatpush1.bf16.msra.mxu0 %v9472
    %9506 = vmatprep.subr.bf16.mxu0 %v9475
    %9507 = vmatpush1.bf16.msra.mxu0 %v9474
    %9508 = vmatprep.subr.bf16.mxu0 0
    %9509 = vmatpush1.bf16.msra.mxu0 0
    %9510 = vmatprep.subr.bf16.mxu0 0
    %9511 = vmatpush1.bf16.msra.mxu0 0
    %9512 = vmatprep.subr.bf16.mxu0 0
    %9513 = vmatpush1.bf16.msra.mxu0 0
    %9514 = vmatprep.subr.bf16.mxu0 0
    %9515 = vmatpush1.bf16.msra.mxu0 0
    %9516 = vmatprep.subr.bf16.mxu0 0
    %9517 = vmatpush1.bf16.msra.mxu0 0
    %9518 = vmatprep.subr.bf16.mxu0 0
    %9519 = vmatpush1.bf16.msra.mxu0 0
    %9520 = vmatprep.subr.bf16.mxu0 0
    %9521 = vmatpush1.bf16.msra.mxu0 0
    %9522 = vmatprep.subr.bf16.mxu0 0
    %9523 = vmatpush1.bf16.msra.mxu0 0
    %9524 = vmatprep.mubr.bf16.mxu0 0
    %9525 = vmatmul.mubr.bf16.gmra.mrb[0].mxu0 %v9395
    %v9526 = vpop.f32.mrb[0].mxu0
    %v9527 = vadd.f32 0.0, %v9526
    %v9528 = vpop.f32.mrb[0].mxu0
    %v9529 = vadd.f32 0.0, %v9528
    %v9530 = vpop.f32.mrb[0].mxu0
    %v9531 = vpop.f32.mrb[0].mxu0
    %9532 = vdwg.mxu0
    %v9533 = vld [vmem:[#allocation16] ss:$8 sm:$0x3]
    %v9535 = vlaneseq
    %v9536 = vshrl.u32 %v9535, 7
    %v9537 = vsub.s32 0, %v9536
    %v9538 = vrot.slane %v9533, %v9537
    %v9539 = vlaneseq
    %v9540 = vshrl.u32 %v9539, 7
    %v9541 = vsub.s32 1, %v9540
    %v9542 = vrot.slane %v9533, %v9541
    %v9545 = vmul.f32 %v9527, %v9538
    %v9546 = vmul.f32 %v9529, %v9542
    %s9547 = scalar_lea.vmem [#allocation16], 1
    %v9548 = vld [vmem:[%s9547] ss:$8 sm:$0x3]
    %v9550 = vlaneseq
    %v9551 = vshrl.u32 %v9550, 7
    %v9552 = vsub.s32 0, %v9551
    %v9553 = vrot.slane %v9548, %v9552
    %v9554 = vlaneseq
    %v9555 = vshrl.u32 %v9554, 7
    %v9556 = vsub.s32 1, %v9555
    %v9557 = vrot.slane %v9548, %v9556
    %v9560 = vadd.f32 %v9545, %v9553
    %v9561 = vadd.f32 %v9546, %v9557
    %v9562 = vmax.f32 %v9560, 0.0
    %v9563 = vmax.f32 %v9561, 0.0
    %v9564 = vpack.c.bf16 %v9394, %v9394
    %v9565 = vld [vmem:[#allocation7] sm:$0xff]
    %v9566 = vld [vmem:[#allocation7 + $0x8] sm:$0xff]
    %v9567 = vld [vmem:[#allocation7 + $0x10] sm:$0xff]
    %v9568 = vld [vmem:[#allocation7 + $0x18] sm:$0xff]
    %v9569 = vld [vmem:[#allocation7 + $0x20] sm:$0xff]
    %v9570 = vld [vmem:[#allocation7 + $0x28] sm:$0xff]
    %v9571 = vld [vmem:[#allocation7 + $0x30] sm:$0xff]
    %v9572 = vld [vmem:[#allocation7 + $0x38] sm:$0xff]
    %v9573 = vld [vmem:[#allocation7 + $0x40] sm:$0xff]
    %v9574 = vld [vmem:[#allocation7 + $0x48] sm:$0xff]
    %v9575 = vld [vmem:[#allocation7 + $0x50] sm:$0xff]
    %v9576 = vld [vmem:[#allocation7 + $0x58] sm:$0xff]
    %v9577 = vld [vmem:[#allocation7 + $0x60] sm:$0xff]
    %v9578 = vld [vmem:[#allocation7 + $0x68] sm:$0xff]
    %v9579 = vld [vmem:[#allocation7 + $0x70] sm:$0xff]
    %v9580 = vld [vmem:[#allocation7 + $0x78] sm:$0xff]
    %v9597 = vunpack.c.l.b16 %v9565
    %v9598 = vunpack.c.h.b16 %v9565
    %v9599 = vunpack.c.l.b16 %v9566
    %v9600 = vunpack.c.h.b16 %v9566
    %v9601 = vunpack.c.l.b16 %v9567
    %v9602 = vunpack.c.h.b16 %v9567
    %v9603 = vunpack.c.l.b16 %v9568
    %v9604 = vunpack.c.h.b16 %v9568
    %v9605 = vunpack.c.l.b16 %v9569
    %v9606 = vunpack.c.h.b16 %v9569
    %v9607 = vunpack.c.l.b16 %v9570
    %v9608 = vunpack.c.h.b16 %v9570
    %v9609 = vunpack.c.l.b16 %v9571
    %v9610 = vunpack.c.h.b16 %v9571
    %v9611 = vunpack.c.l.b16 %v9572
    %v9612 = vunpack.c.h.b16 %v9572
    %v9613 = vunpack.c.l.b16 %v9573
    %v9614 = vunpack.c.h.b16 %v9573
    %v9615 = vunpack.c.l.b16 %v9574
    %v9616 = vunpack.c.h.b16 %v9574
    %v9617 = vunpack.c.l.b16 %v9575
    %v9618 = vunpack.c.h.b16 %v9575
    %v9619 = vunpack.c.l.b16 %v9576
    %v9620 = vunpack.c.h.b16 %v9576
    %v9621 = vunpack.c.l.b16 %v9577
    %v9622 = vunpack.c.h.b16 %v9577
    %v9623 = vunpack.c.l.b16 %v9578
    %v9624 = vunpack.c.h.b16 %v9578
    %v9625 = vunpack.c.l.b16 %v9579
    %v9626 = vunpack.c.h.b16 %v9579
    %v9627 = vunpack.c.l.b16 %v9580
    %v9628 = vunpack.c.h.b16 %v9580
    %v9629 = vpack.c.b16 %v9599, %v9597
    %v9630 = vpack.c.b16 %v9600, %v9598
    %v9631 = vpack.c.b16 %v9603, %v9601
    %v9632 = vpack.c.b16 %v9604, %v9602
    %v9633 = vpack.c.b16 %v9607, %v9605
    %v9634 = vpack.c.b16 %v9608, %v9606
    %v9635 = vpack.c.b16 %v9611, %v9609
    %v9636 = vpack.c.b16 %v9612, %v9610
    %v9637 = vpack.c.b16 %v9615, %v9613
    %v9638 = vpack.c.b16 %v9616, %v9614
    %v9639 = vpack.c.b16 %v9619, %v9617
    %v9640 = vpack.c.b16 %v9620, %v9618
    %v9641 = vpack.c.b16 %v9623, %v9621
    %v9642 = vpack.c.b16 %v9624, %v9622
    %v9643 = vpack.c.b16 %v9627, %v9625
    %v9644 = vpack.c.b16 %v9628, %v9626
    %9661 = vmatprep.subr.bf16.mxu0 %v9630
    %9662 = vmatpush1.bf16.msra.mxu0 %v9629
    %9663 = vmatprep.subr.bf16.mxu0 %v9632
    %9664 = vmatpush1.bf16.msra.mxu0 %v9631
    %9665 = vmatprep.subr.bf16.mxu0 %v9634
    %9666 = vmatpush1.bf16.msra.mxu0 %v9633
    %9667 = vmatprep.subr.bf16.mxu0 %v9636
    %9668 = vmatpush1.bf16.msra.mxu0 %v9635
    %9669 = vmatprep.subr.bf16.mxu0 %v9638
    %9670 = vmatpush1.bf16.msra.mxu0 %v9637
    %9671 = vmatprep.subr.bf16.mxu0 %v9640
    %9672 = vmatpush1.bf16.msra.mxu0 %v9639
    %9673 = vmatprep.subr.bf16.mxu0 %v9642
    %9674 = vmatpush1.bf16.msra.mxu0 %v9641
    %9675 = vmatprep.subr.bf16.mxu0 %v9644
    %9676 = vmatpush1.bf16.msra.mxu0 %v9643
    %9677 = vmatprep.subr.bf16.mxu0 0
    %9678 = vmatpush1.bf16.msra.mxu0 0
    %9679 = vmatprep.subr.bf16.mxu0 0
    %9680 = vmatpush1.bf16.msra.mxu0 0
    %9681 = vmatprep.subr.bf16.mxu0 0
    %9682 = vmatpush1.bf16.msra.mxu0 0
    %9683 = vmatprep.subr.bf16.mxu0 0
    %9684 = vmatpush1.bf16.msra.mxu0 0
    %9685 = vmatprep.subr.bf16.mxu0 0
    %9686 = vmatpush1.bf16.msra.mxu0 0
    %9687 = vmatprep.subr.bf16.mxu0 0
    %9688 = vmatpush1.bf16.msra.mxu0 0
    %9689 = vmatprep.subr.bf16.mxu0 0
    %9690 = vmatpush1.bf16.msra.mxu0 0
    %9691 = vmatprep.subr.bf16.mxu0 0
    %9692 = vmatpush1.bf16.msra.mxu0 0
    %9693 = vmatprep.mubr.bf16.mxu0 0
    %9694 = vmatmul.mubr.bf16.gmra.mrb[0].mxu0 %v9564
    %v9695 = vpop.f32.mrb[0].mxu0
    %v9696 = vadd.f32 0.0, %v9695
    %v9697 = vpop.f32.mrb[0].mxu0
    %v9698 = vadd.f32 0.0, %v9697
    %v9699 = vpop.f32.mrb[0].mxu0
    %v9700 = vpop.f32.mrb[0].mxu0
    %9701 = vdwg.mxu0
    %s9702 = scalar_lea.vmem [#allocation16], 2
    %v9703 = vld [vmem:[%s9702] ss:$8 sm:$0x3]
    %v9705 = vlaneseq
    %v9706 = vshrl.u32 %v9705, 7
    %v9707 = vsub.s32 0, %v9706
    %v9708 = vrot.slane %v9703, %v9707
    %v9709 = vlaneseq
    %v9710 = vshrl.u32 %v9709, 7
    %v9711 = vsub.s32 1, %v9710
    %v9712 = vrot.slane %v9703, %v9711
    %v9715 = vmul.f32 %v9696, %v9708
    %v9716 = vmul.f32 %v9698, %v9712
    %s9717 = scalar_lea.vmem [#allocation16], 3
    %v9718 = vld [vmem:[%s9717] ss:$8 sm:$0x3]
    %v9720 = vlaneseq
    %v9721 = vshrl.u32 %v9720, 7
    %v9722 = vsub.s32 0, %v9721
    %v9723 = vrot.slane %v9718, %v9722
    %v9724 = vlaneseq
    %v9725 = vshrl.u32 %v9724, 7
    %v9726 = vsub.s32 1, %v9725
    %v9727 = vrot.slane %v9718, %v9726
    %v9730 = vadd.f32 %v9715, %v9723
    %v9731 = vadd.f32 %v9716, %v9727
    %v9732 = vmax.f32 %v9730, 0.0
    %v9733 = vmax.f32 %v9731, 0.0
    %v9734 = vpack.c.bf16 %v9732, %v9732
    %v9735 = vpack.c.bf16 %v9733, %v9733
    %v9736 = vld [vmem:[#allocation9] sm:$0xff]
    %v9737 = vld [vmem:[#allocation9 + $0x8] sm:$0xff]
    %v9738 = vld [vmem:[#allocation9 + $0x10] sm:$0xff]
    %v9739 = vld [vmem:[#allocation9 + $0x18] sm:$0xff]
    %v9740 = vld [vmem:[#allocation9 + $0x20] sm:$0xff]
    %v9741 = vld [vmem:[#allocation9 + $0x28] sm:$0xff]
    %v9742 = vld [vmem:[#allocation9 + $0x30] sm:$0xff]
    %v9743 = vld [vmem:[#allocation9 + $0x38] sm:$0xff]
    %v9744 = vld [vmem:[#allocation9 + $0x40] sm:$0xff]
    %v9745 = vld [vmem:[#allocation9 + $0x48] sm:$0xff]
    %v9746 = vld [vmem:[#allocation9 + $0x50] sm:$0xff]
    %v9747 = vld [vmem:[#allocation9 + $0x58] sm:$0xff]
    %v9748 = vld [vmem:[#allocation9 + $0x60] sm:$0xff]
    %v9749 = vld [vmem:[#allocation9 + $0x68] sm:$0xff]
    %v9750 = vld [vmem:[#allocation9 + $0x70] sm:$0xff]
    %v9751 = vld [vmem:[#allocation9 + $0x78] sm:$0xff]
    %v9752 = vld [vmem:[#allocation9 + $0x80] sm:$0xff]
    %v9753 = vld [vmem:[#allocation9 + $0x88] sm:$0xff]
    %v9754 = vld [vmem:[#allocation9 + $0x90] sm:$0xff]
    %v9755 = vld [vmem:[#allocation9 + $0x98] sm:$0xff]
    %v9756 = vld [vmem:[#allocation9 + $0xa0] sm:$0xff]
    %v9757 = vld [vmem:[#allocation9 + $0xa8] sm:$0xff]
    %v9758 = vld [vmem:[#allocation9 + $0xb0] sm:$0xff]
    %v9759 = vld [vmem:[#allocation9 + $0xb8] sm:$0xff]
    %v9760 = vld [vmem:[#allocation9 + $0xc0] sm:$0xff]
    %v9761 = vld [vmem:[#allocation9 + $0xc8] sm:$0xff]
    %v9762 = vld [vmem:[#allocation9 + $0xd0] sm:$0xff]
    %v9763 = vld [vmem:[#allocation9 + $0xd8] sm:$0xff]
    %v9764 = vld [vmem:[#allocation9 + $0xe0] sm:$0xff]
    %v9765 = vld [vmem:[#allocation9 + $0xe8] sm:$0xff]
    %v9766 = vld [vmem:[#allocation9 + $0xf0] sm:$0xff]
    %v9767 = vld [vmem:[#allocation9 + $0xf8] sm:$0xff]
    %v9800 = vunpack.c.l.b16 %v9736
    %v9801 = vunpack.c.h.b16 %v9736
    %v9802 = vunpack.c.l.b16 %v9737
    %v9803 = vunpack.c.h.b16 %v9737
    %v9804 = vunpack.c.l.b16 %v9738
    %v9805 = vunpack.c.h.b16 %v9738
    %v9806 = vunpack.c.l.b16 %v9739
    %v9807 = vunpack.c.h.b16 %v9739
    %v9808 = vunpack.c.l.b16 %v9740
    %v9809 = vunpack.c.h.b16 %v9740
    %v9810 = vunpack.c.l.b16 %v9741
    %v9811 = vunpack.c.h.b16 %v9741
    %v9812 = vunpack.c.l.b16 %v9742
    %v9813 = vunpack.c.h.b16 %v9742
    %v9814 = vunpack.c.l.b16 %v9743
    %v9815 = vunpack.c.h.b16 %v9743
    %v9816 = vunpack.c.l.b16 %v9744
    %v9817 = vunpack.c.h.b16 %v9744
    %v9818 = vunpack.c.l.b16 %v9745
    %v9819 = vunpack.c.h.b16 %v9745
    %v9820 = vunpack.c.l.b16 %v9746
    %v9821 = vunpack.c.h.b16 %v9746
    %v9822 = vunpack.c.l.b16 %v9747
    %v9823 = vunpack.c.h.b16 %v9747
    %v9824 = vunpack.c.l.b16 %v9748
    %v9825 = vunpack.c.h.b16 %v9748
    %v9826 = vunpack.c.l.b16 %v9749
    %v9827 = vunpack.c.h.b16 %v9749
    %v9828 = vunpack.c.l.b16 %v9750
    %v9829 = vunpack.c.h.b16 %v9750
    %v9830 = vunpack.c.l.b16 %v9751
    %v9831 = vunpack.c.h.b16 %v9751
    %v9832 = vunpack.c.l.b16 %v9752
    %v9833 = vunpack.c.h.b16 %v9752
    %v9834 = vunpack.c.l.b16 %v9753
    %v9835 = vunpack.c.h.b16 %v9753
    %v9836 = vunpack.c.l.b16 %v9754
    %v9837 = vunpack.c.h.b16 %v9754
    %v9838 = vunpack.c.l.b16 %v9755
    %v9839 = vunpack.c.h.b16 %v9755
    %v9840 = vunpack.c.l.b16 %v9756
    %v9841 = vunpack.c.h.b16 %v9756
    %v9842 = vunpack.c.l.b16 %v9757
    %v9843 = vunpack.c.h.b16 %v9757
    %v9844 = vunpack.c.l.b16 %v9758
    %v9845 = vunpack.c.h.b16 %v9758
    %v9846 = vunpack.c.l.b16 %v9759
    %v9847 = vunpack.c.h.b16 %v9759
    %v9848 = vunpack.c.l.b16 %v9760
    %v9849 = vunpack.c.h.b16 %v9760
    %v9850 = vunpack.c.l.b16 %v9761
    %v9851 = vunpack.c.h.b16 %v9761
    %v9852 = vunpack.c.l.b16 %v9762
    %v9853 = vunpack.c.h.b16 %v9762
    %v9854 = vunpack.c.l.b16 %v9763
    %v9855 = vunpack.c.h.b16 %v9763
    %v9856 = vunpack.c.l.b16 %v9764
    %v9857 = vunpack.c.h.b16 %v9764
    %v9858 = vunpack.c.l.b16 %v9765
    %v9859 = vunpack.c.h.b16 %v9765
    %v9860 = vunpack.c.l.b16 %v9766
    %v9861 = vunpack.c.h.b16 %v9766
    %v9862 = vunpack.c.l.b16 %v9767
    %v9863 = vunpack.c.h.b16 %v9767
    %v9864 = vpack.c.b16 %v9802, %v9800
    %v9865 = vpack.c.b16 %v9803, %v9801
    %v9866 = vpack.c.b16 %v9806, %v9804
    %v9867 = vpack.c.b16 %v9807, %v9805
    %v9868 = vpack.c.b16 %v9810, %v9808
    %v9869 = vpack.c.b16 %v9811, %v9809
    %v9870 = vpack.c.b16 %v9814, %v9812
    %v9871 = vpack.c.b16 %v9815, %v9813
    %v9872 = vpack.c.b16 %v9818, %v9816
    %v9873 = vpack.c.b16 %v9819, %v9817
    %v9874 = vpack.c.b16 %v9822, %v9820
    %v9875 = vpack.c.b16 %v9823, %v9821
    %v9876 = vpack.c.b16 %v9826, %v9824
    %v9877 = vpack.c.b16 %v9827, %v9825
    %v9878 = vpack.c.b16 %v9830, %v9828
    %v9879 = vpack.c.b16 %v9831, %v9829
    %v9880 = vpack.c.b16 %v9834, %v9832
    %v9881 = vpack.c.b16 %v9835, %v9833
    %v9882 = vpack.c.b16 %v9838, %v9836
    %v9883 = vpack.c.b16 %v9839, %v9837
    %v9884 = vpack.c.b16 %v9842, %v9840
    %v9885 = vpack.c.b16 %v9843, %v9841
    %v9886 = vpack.c.b16 %v9846, %v9844
    %v9887 = vpack.c.b16 %v9847, %v9845
    %v9888 = vpack.c.b16 %v9850, %v9848
    %v9889 = vpack.c.b16 %v9851, %v9849
    %v9890 = vpack.c.b16 %v9854, %v9852
    %v9891 = vpack.c.b16 %v9855, %v9853
    %v9892 = vpack.c.b16 %v9858, %v9856
    %v9893 = vpack.c.b16 %v9859, %v9857
    %v9894 = vpack.c.b16 %v9862, %v9860
    %v9895 = vpack.c.b16 %v9863, %v9861
    %9928 = vmatprep.subr.bf16.mxu0 %v9865
    %9929 = vmatpush1.bf16.msra.mxu0 %v9864
    %9930 = vmatprep.subr.bf16.mxu0 %v9867
    %9931 = vmatpush1.bf16.msra.mxu0 %v9866
    %9932 = vmatprep.subr.bf16.mxu0 %v9869
    %9933 = vmatpush1.bf16.msra.mxu0 %v9868
    %9934 = vmatprep.subr.bf16.mxu0 %v9871
    %9935 = vmatpush1.bf16.msra.mxu0 %v9870
    %9936 = vmatprep.subr.bf16.mxu0 %v9873
    %9937 = vmatpush1.bf16.msra.mxu0 %v9872
    %9938 = vmatprep.subr.bf16.mxu0 %v9875
    %9939 = vmatpush1.bf16.msra.mxu0 %v9874
    %9940 = vmatprep.subr.bf16.mxu0 %v9877
    %9941 = vmatpush1.bf16.msra.mxu0 %v9876
    %9942 = vmatprep.subr.bf16.mxu0 %v9879
    %9943 = vmatpush1.bf16.msra.mxu0 %v9878
    %9944 = vmatprep.subr.bf16.mxu0 %v9881
    %9945 = vmatpush1.bf16.msra.mxu0 %v9880
    %9946 = vmatprep.subr.bf16.mxu0 %v9883
    %9947 = vmatpush1.bf16.msra.mxu0 %v9882
    %9948 = vmatprep.subr.bf16.mxu0 %v9885
    %9949 = vmatpush1.bf16.msra.mxu0 %v9884
    %9950 = vmatprep.subr.bf16.mxu0 %v9887
    %9951 = vmatpush1.bf16.msra.mxu0 %v9886
    %9952 = vmatprep.subr.bf16.mxu0 %v9889
    %9953 = vmatpush1.bf16.msra.mxu0 %v9888
    %9954 = vmatprep.subr.bf16.mxu0 %v9891
    %9955 = vmatpush1.bf16.msra.mxu0 %v9890
    %9956 = vmatprep.subr.bf16.mxu0 %v9893
    %9957 = vmatpush1.bf16.msra.mxu0 %v9892
    %9958 = vmatprep.subr.bf16.mxu0 %v9895
    %9959 = vmatpush1.bf16.msra.mxu0 %v9894
    %9960 = vmatprep.mubr.bf16.mxu0 %v9735
    %9961 = vmatmul.mubr.bf16.gmra.mrb[0].mxu0 %v9734
    %v9962 = vpop.f32.mrb[0].mxu0
    %v9963 = vadd.f32 0.0, %v9962
    %v9964 = vpop.f32.mrb[0].mxu0
    %v9965 = vadd.f32 0.0, %v9964
    %v9966 = vpop.f32.mrb[0].mxu0
    %v9967 = vpop.f32.mrb[0].mxu0
    %9968 = vdwg.mxu0
    %s9969 = scalar_lea.vmem [#allocation16], 4
    %v9970 = vld [vmem:[%s9969] ss:$8 sm:$0x3]
    %v9972 = vlaneseq
    %v9973 = vshrl.u32 %v9972, 7
    %v9974 = vsub.s32 0, %v9973
    %v9975 = vrot.slane %v9970, %v9974
    %v9976 = vlaneseq
    %v9977 = vshrl.u32 %v9976, 7
    %v9978 = vsub.s32 1, %v9977
    %v9979 = vrot.slane %v9970, %v9978
    %v9982 = vmul.f32 %v9963, %v9975
    %v9983 = vmul.f32 %v9965, %v9979
    %s9984 = scalar_lea.vmem [#allocation16], 5
    %v9985 = vld [vmem:[%s9984] ss:$8 sm:$0x3]
    %v9987 = vlaneseq
    %v9988 = vshrl.u32 %v9987, 7
    %v9989 = vsub.s32 0, %v9988
    %v9990 = vrot.slane %v9985, %v9989
    %v9991 = vlaneseq
    %v9992 = vshrl.u32 %v9991, 7
    %v9993 = vsub.s32 1, %v9992
    %v9994 = vrot.slane %v9985, %v9993
    %v9997 = vadd.f32 %v9982, %v9990
    %v9998 = vadd.f32 %v9983, %v9994
    %v9999 = vmax.f32 %v9997, 0.0
    %v10000 = vmax.f32 %v9998, 0.0
    %v10001 = vld [vmem:[#allocation10] sm:$0xff]
    %v10002 = vld [vmem:[#allocation10 + $0x8] sm:$0xff]
    %v10003 = vld [vmem:[#allocation10 + $0x10] sm:$0xff]
    %v10004 = vld [vmem:[#allocation10 + $0x18] sm:$0xff]
    %v10005 = vld [vmem:[#allocation10 + $0x20] sm:$0xff]
    %v10006 = vld [vmem:[#allocation10 + $0x28] sm:$0xff]
    %v10007 = vld [vmem:[#allocation10 + $0x30] sm:$0xff]
    %v10008 = vld [vmem:[#allocation10 + $0x38] sm:$0xff]
    %v10009 = vld [vmem:[#allocation10 + $0x40] sm:$0xff]
    %v10010 = vld [vmem:[#allocation10 + $0x48] sm:$0xff]
    %v10011 = vld [vmem:[#allocation10 + $0x50] sm:$0xff]
    %v10012 = vld [vmem:[#allocation10 + $0x58] sm:$0xff]
    %v10013 = vld [vmem:[#allocation10 + $0x60] sm:$0xff]
    %v10014 = vld [vmem:[#allocation10 + $0x68] sm:$0xff]
    %v10015 = vld [vmem:[#allocation10 + $0x70] sm:$0xff]
    %v10016 = vld [vmem:[#allocation10 + $0x78] sm:$0xff]
    %v10017 = vld [vmem:[#allocation10 + $0x80] sm:$0xff]
    %v10018 = vld [vmem:[#allocation10 + $0x88] sm:$0xff]
    %v10019 = vld [vmem:[#allocation10 + $0x90] sm:$0xff]
    %v10020 = vld [vmem:[#allocation10 + $0x98] sm:$0xff]
    %v10021 = vld [vmem:[#allocation10 + $0xa0] sm:$0xff]
    %v10022 = vld [vmem:[#allocation10 + $0xa8] sm:$0xff]
    %v10023 = vld [vmem:[#allocation10 + $0xb0] sm:$0xff]
    %v10024 = vld [vmem:[#allocation10 + $0xb8] sm:$0xff]
    %v10025 = vld [vmem:[#allocation10 + $0xc0] sm:$0xff]
    %v10026 = vld [vmem:[#allocation10 + $0xc8] sm:$0xff]
    %v10027 = vld [vmem:[#allocation10 + $0xd0] sm:$0xff]
    %v10028 = vld [vmem:[#allocation10 + $0xd8] sm:$0xff]
    %v10029 = vld [vmem:[#allocation10 + $0xe0] sm:$0xff]
    %v10030 = vld [vmem:[#allocation10 + $0xe8] sm:$0xff]
    %v10031 = vld [vmem:[#allocation10 + $0xf0] sm:$0xff]
    %v10032 = vld [vmem:[#allocation10 + $0xf8] sm:$0xff]
    %v10065 = vunpack.c.l.b16 %v10001
    %v10066 = vunpack.c.h.b16 %v10001
    %v10067 = vunpack.c.l.b16 %v10002
    %v10068 = vunpack.c.h.b16 %v10002
    %v10069 = vunpack.c.l.b16 %v10003
    %v10070 = vunpack.c.h.b16 %v10003
    %v10071 = vunpack.c.l.b16 %v10004
    %v10072 = vunpack.c.h.b16 %v10004
    %v10073 = vunpack.c.l.b16 %v10005
    %v10074 = vunpack.c.h.b16 %v10005
    %v10075 = vunpack.c.l.b16 %v10006
    %v10076 = vunpack.c.h.b16 %v10006
    %v10077 = vunpack.c.l.b16 %v10007
    %v10078 = vunpack.c.h.b16 %v10007
    %v10079 = vunpack.c.l.b16 %v10008
    %v10080 = vunpack.c.h.b16 %v10008
    %v10081 = vunpack.c.l.b16 %v10009
    %v10082 = vunpack.c.h.b16 %v10009
    %v10083 = vunpack.c.l.b16 %v10010
    %v10084 = vunpack.c.h.b16 %v10010
    %v10085 = vunpack.c.l.b16 %v10011
    %v10086 = vunpack.c.h.b16 %v10011
    %v10087 = vunpack.c.l.b16 %v10012
    %v10088 = vunpack.c.h.b16 %v10012
    %v10089 = vunpack.c.l.b16 %v10013
    %v10090 = vunpack.c.h.b16 %v10013
    %v10091 = vunpack.c.l.b16 %v10014
    %v10092 = vunpack.c.h.b16 %v10014
    %v10093 = vunpack.c.l.b16 %v10015
    %v10094 = vunpack.c.h.b16 %v10015
    %v10095 = vunpack.c.l.b16 %v10016
    %v10096 = vunpack.c.h.b16 %v10016
    %v10097 = vunpack.c.l.b16 %v10017
    %v10098 = vunpack.c.h.b16 %v10017
    %v10099 = vunpack.c.l.b16 %v10018
    %v10100 = vunpack.c.h.b16 %v10018
    %v10101 = vunpack.c.l.b16 %v10019
    %v10102 = vunpack.c.h.b16 %v10019
    %v10103 = vunpack.c.l.b16 %v10020
    %v10104 = vunpack.c.h.b16 %v10020
    %v10105 = vunpack.c.l.b16 %v10021
    %v10106 = vunpack.c.h.b16 %v10021
    %v10107 = vunpack.c.l.b16 %v10022
    %v10108 = vunpack.c.h.b16 %v10022
    %v10109 = vunpack.c.l.b16 %v10023
    %v10110 = vunpack.c.h.b16 %v10023
    %v10111 = vunpack.c.l.b16 %v10024
    %v10112 = vunpack.c.h.b16 %v10024
    %v10113 = vunpack.c.l.b16 %v10025
    %v10114 = vunpack.c.h.b16 %v10025
    %v10115 = vunpack.c.l.b16 %v10026
    %v10116 = vunpack.c.h.b16 %v10026
    %v10117 = vunpack.c.l.b16 %v10027
    %v10118 = vunpack.c.h.b16 %v10027
    %v10119 = vunpack.c.l.b16 %v10028
    %v10120 = vunpack.c.h.b16 %v10028
    %v10121 = vunpack.c.l.b16 %v10029
    %v10122 = vunpack.c.h.b16 %v10029
    %v10123 = vunpack.c.l.b16 %v10030
    %v10124 = vunpack.c.h.b16 %v10030
    %v10125 = vunpack.c.l.b16 %v10031
    %v10126 = vunpack.c.h.b16 %v10031
    %v10127 = vunpack.c.l.b16 %v10032
    %v10128 = vunpack.c.h.b16 %v10032
    %v10129 = vpack.c.b16 %v10067, %v10065
    %v10130 = vpack.c.b16 %v10068, %v10066
    %v10131 = vpack.c.b16 %v10071, %v10069
    %v10132 = vpack.c.b16 %v10072, %v10070
    %v10133 = vpack.c.b16 %v10075, %v10073
    %v10134 = vpack.c.b16 %v10076, %v10074
    %v10135 = vpack.c.b16 %v10079, %v10077
    %v10136 = vpack.c.b16 %v10080, %v10078
    %v10137 = vpack.c.b16 %v10083, %v10081
    %v10138 = vpack.c.b16 %v10084, %v10082
    %v10139 = vpack.c.b16 %v10087, %v10085
    %v10140 = vpack.c.b16 %v10088, %v10086
    %v10141 = vpack.c.b16 %v10091, %v10089
    %v10142 = vpack.c.b16 %v10092, %v10090
    %v10143 = vpack.c.b16 %v10095, %v10093
    %v10144 = vpack.c.b16 %v10096, %v10094
    %v10145 = vpack.c.b16 %v10099, %v10097
    %v10146 = vpack.c.b16 %v10100, %v10098
    %v10147 = vpack.c.b16 %v10103, %v10101
    %v10148 = vpack.c.b16 %v10104, %v10102
    %v10149 = vpack.c.b16 %v10107, %v10105
    %v10150 = vpack.c.b16 %v10108, %v10106
    %v10151 = vpack.c.b16 %v10111, %v10109
    %v10152 = vpack.c.b16 %v10112, %v10110
    %v10153 = vpack.c.b16 %v10115, %v10113
    %v10154 = vpack.c.b16 %v10116, %v10114
    %v10155 = vpack.c.b16 %v10119, %v10117
    %v10156 = vpack.c.b16 %v10120, %v10118
    %v10157 = vpack.c.b16 %v10123, %v10121
    %v10158 = vpack.c.b16 %v10124, %v10122
    %v10159 = vpack.c.b16 %v10127, %v10125
    %v10160 = vpack.c.b16 %v10128, %v10126
    %10193 = vmatprep.subr.bf16.mxu0 %v10130
    %10194 = vmatpush1.bf16.msra.mxu0 %v10129
    %10195 = vmatprep.subr.bf16.mxu0 %v10132
    %10196 = vmatpush1.bf16.msra.mxu0 %v10131
    %10197 = vmatprep.subr.bf16.mxu0 %v10134
    %10198 = vmatpush1.bf16.msra.mxu0 %v10133
    %10199 = vmatprep.subr.bf16.mxu0 %v10136
    %10200 = vmatpush1.bf16.msra.mxu0 %v10135
    %10201 = vmatprep.subr.bf16.mxu0 %v10138
    %10202 = vmatpush1.bf16.msra.mxu0 %v10137
    %10203 = vmatprep.subr.bf16.mxu0 %v10140
    %10204 = vmatpush1.bf16.msra.mxu0 %v10139
    %10205 = vmatprep.subr.bf16.mxu0 %v10142
    %10206 = vmatpush1.bf16.msra.mxu0 %v10141
    %10207 = vmatprep.subr.bf16.mxu0 %v10144
    %10208 = vmatpush1.bf16.msra.mxu0 %v10143
    %10209 = vmatprep.subr.bf16.mxu0 %v10146
    %10210 = vmatpush1.bf16.msra.mxu0 %v10145
    %10211 = vmatprep.subr.bf16.mxu0 %v10148
    %10212 = vmatpush1.bf16.msra.mxu0 %v10147
    %10213 = vmatprep.subr.bf16.mxu0 %v10150
    %10214 = vmatpush1.bf16.msra.mxu0 %v10149
    %10215 = vmatprep.subr.bf16.mxu0 %v10152
    %10216 = vmatpush1.bf16.msra.mxu0 %v10151
    %10217 = vmatprep.subr.bf16.mxu0 %v10154
    %10218 = vmatpush1.bf16.msra.mxu0 %v10153
    %10219 = vmatprep.subr.bf16.mxu0 %v10156
    %10220 = vmatpush1.bf16.msra.mxu0 %v10155
    %10221 = vmatprep.subr.bf16.mxu0 %v10158
    %10222 = vmatpush1.bf16.msra.mxu0 %v10157
    %10223 = vmatprep.subr.bf16.mxu0 %v10160
    %10224 = vmatpush1.bf16.msra.mxu0 %v10159
    %10225 = vmatprep.mubr.bf16.mxu0 %v8871
    %10226 = vmatmul.mubr.bf16.gmra.mrb[0].mxu0 %v8870
    %v10227 = vpop.f32.mrb[0].mxu0
    %v10228 = vadd.f32 0.0, %v10227
    %v10229 = vpop.f32.mrb[0].mxu0
    %v10230 = vadd.f32 0.0, %v10229
    %v10231 = vpop.f32.mrb[0].mxu0
    %v10232 = vpop.f32.mrb[0].mxu0
    %10233 = vdwg.mxu0
    %s10234 = scalar_lea.vmem [#allocation16], 6
    %v10235 = vld [vmem:[%s10234] ss:$8 sm:$0x3]
    %v10237 = vlaneseq
    %v10238 = vshrl.u32 %v10237, 7
    %v10239 = vsub.s32 0, %v10238
    %v10240 = vrot.slane %v10235, %v10239
    %v10241 = vlaneseq
    %v10242 = vshrl.u32 %v10241, 7
    %v10243 = vsub.s32 1, %v10242
    %v10244 = vrot.slane %v10235, %v10243
    %v10247 = vmul.f32 %v10228, %v10240
    %v10248 = vmul.f32 %v10230, %v10244
    %s10249 = scalar_lea.vmem [#allocation16], 7
    %v10250 = vld [vmem:[%s10249] ss:$8 sm:$0x3]
    %v10252 = vlaneseq
    %v10253 = vshrl.u32 %v10252, 7
    %v10254 = vsub.s32 0, %v10253
    %v10255 = vrot.slane %v10250, %v10254
    %v10256 = vlaneseq
    %v10257 = vshrl.u32 %v10256, 7
    %v10258 = vsub.s32 1, %v10257
    %v10259 = vrot.slane %v10250, %v10258
    %v10262 = vadd.f32 %v10247, %v10255
    %v10263 = vadd.f32 %v10248, %v10259
    %v10264 = vmax.f32 %v10262, 0.0
    %v10265 = vmax.f32 %v10263, 0.0
    %v10266 = vpack.c.bf16 %v9391, %v9391
    %v10267 = vpack.c.bf16 %v9392, %v9392
    %v10268 = vld [vmem:[#allocation12] sm:$0xf]
    %v10269 = vld [vmem:[#allocation12 + $0x4] sm:$0xf]
    %v10270 = vld [vmem:[#allocation12 + $0x8] sm:$0xf]
    %v10271 = vld [vmem:[#allocation12 + $0xc] sm:$0xf]
    %v10272 = vld [vmem:[#allocation12 + $0x10] sm:$0xf]
    %v10273 = vld [vmem:[#allocation12 + $0x14] sm:$0xf]
    %v10274 = vld [vmem:[#allocation12 + $0x18] sm:$0xf]
    %v10275 = vld [vmem:[#allocation12 + $0x1c] sm:$0xf]
    %v10276 = vld [vmem:[#allocation12 + $0x20] sm:$0xf]
    %v10277 = vld [vmem:[#allocation12 + $0x24] sm:$0xf]
    %v10278 = vld [vmem:[#allocation12 + $0x28] sm:$0xf]
    %v10279 = vld [vmem:[#allocation12 + $0x2c] sm:$0xf]
    %v10280 = vld [vmem:[#allocation12 + $0x30] sm:$0xf]
    %v10281 = vld [vmem:[#allocation12 + $0x34] sm:$0xf]
    %v10282 = vld [vmem:[#allocation12 + $0x38] sm:$0xf]
    %v10283 = vld [vmem:[#allocation12 + $0x3c] sm:$0xf]
    %v10284 = vld [vmem:[#allocation12 + $0x40] sm:$0xf]
    %v10285 = vld [vmem:[#allocation12 + $0x44] sm:$0xf]
    %v10286 = vld [vmem:[#allocation12 + $0x48] sm:$0xf]
    %v10287 = vld [vmem:[#allocation12 + $0x4c] sm:$0xf]
    %v10288 = vld [vmem:[#allocation12 + $0x50] sm:$0xf]
    %v10289 = vld [vmem:[#allocation12 + $0x54] sm:$0xf]
    %v10290 = vld [vmem:[#allocation12 + $0x58] sm:$0xf]
    %v10291 = vld [vmem:[#allocation12 + $0x5c] sm:$0xf]
    %v10292 = vld [vmem:[#allocation12 + $0x60] sm:$0xf]
    %v10293 = vld [vmem:[#allocation12 + $0x64] sm:$0xf]
    %v10294 = vld [vmem:[#allocation12 + $0x68] sm:$0xf]
    %v10295 = vld [vmem:[#allocation12 + $0x6c] sm:$0xf]
    %v10296 = vld [vmem:[#allocation12 + $0x70] sm:$0xf]
    %v10297 = vld [vmem:[#allocation12 + $0x74] sm:$0xf]
    %v10298 = vld [vmem:[#allocation12 + $0x78] sm:$0xf]
    %v10299 = vld [vmem:[#allocation12 + $0x7c] sm:$0xf]
    %v10300 = vpack.c.bf16 %v9562, %v9562
    %v10301 = vpack.c.bf16 %v9563, %v9563
    %s10302 = scalar_lea.vmem [#allocation12], 128
    %v10303 = vld [vmem:[%s10302] sm:$0xf]
    %v10304 = vld [vmem:[%s10302 + $0x4] sm:$0xf]
    %v10305 = vld [vmem:[%s10302 + $0x8] sm:$0xf]
    %v10306 = vld [vmem:[%s10302 + $0xc] sm:$0xf]
    %v10307 = vld [vmem:[%s10302 + $0x10] sm:$0xf]
    %v10308 = vld [vmem:[%s10302 + $0x14] sm:$0xf]
    %v10309 = vld [vmem:[%s10302 + $0x18] sm:$0xf]
    %v10310 = vld [vmem:[%s10302 + $0x1c] sm:$0xf]
    %v10311 = vld [vmem:[%s10302 + $0x20] sm:$0xf]
    %v10312 = vld [vmem:[%s10302 + $0x24] sm:$0xf]
    %v10313 = vld [vmem:[%s10302 + $0x28] sm:$0xf]
    %v10314 = vld [vmem:[%s10302 + $0x2c] sm:$0xf]
    %v10315 = vld [vmem:[%s10302 + $0x30] sm:$0xf]
    %v10316 = vld [vmem:[%s10302 + $0x34] sm:$0xf]
    %v10317 = vld [vmem:[%s10302 + $0x38] sm:$0xf]
    %v10318 = vld [vmem:[%s10302 + $0x3c] sm:$0xf]
    %v10319 = vld [vmem:[%s10302 + $0x40] sm:$0xf]
    %v10320 = vld [vmem:[%s10302 + $0x44] sm:$0xf]
    %v10321 = vld [vmem:[%s10302 + $0x48] sm:$0xf]
    %v10322 = vld [vmem:[%s10302 + $0x4c] sm:$0xf]
    %v10323 = vld [vmem:[%s10302 + $0x50] sm:$0xf]
    %v10324 = vld [vmem:[%s10302 + $0x54] sm:$0xf]
    %v10325 = vld [vmem:[%s10302 + $0x58] sm:$0xf]
    %v10326 = vld [vmem:[%s10302 + $0x5c] sm:$0xf]
    %v10327 = vld [vmem:[%s10302 + $0x60] sm:$0xf]
    %v10328 = vld [vmem:[%s10302 + $0x64] sm:$0xf]
    %v10329 = vld [vmem:[%s10302 + $0x68] sm:$0xf]
    %v10330 = vld [vmem:[%s10302 + $0x6c] sm:$0xf]
    %v10331 = vld [vmem:[%s10302 + $0x70] sm:$0xf]
    %v10332 = vld [vmem:[%s10302 + $0x74] sm:$0xf]
    %v10333 = vld [vmem:[%s10302 + $0x78] sm:$0xf]
    %v10334 = vld [vmem:[%s10302 + $0x7c] sm:$0xf]
    %v10367 = vunpack.c.l.b16 %v10303
    %v10368 = vunpack.c.l.b16 %v10304
    %v10369 = vunpack.c.l.b16 %v10305
    %v10370 = vunpack.c.l.b16 %v10306
    %v10371 = vunpack.c.l.b16 %v10307
    %v10372 = vunpack.c.l.b16 %v10308
    %v10373 = vunpack.c.l.b16 %v10309
    %v10374 = vunpack.c.l.b16 %v10310
    %v10375 = vunpack.c.l.b16 %v10311
    %v10376 = vunpack.c.l.b16 %v10312
    %v10377 = vunpack.c.l.b16 %v10313
    %v10378 = vunpack.c.l.b16 %v10314
    %v10379 = vunpack.c.l.b16 %v10315
    %v10380 = vunpack.c.l.b16 %v10316
    %v10381 = vunpack.c.l.b16 %v10317
    %v10382 = vunpack.c.l.b16 %v10318
    %v10383 = vunpack.c.l.b16 %v10319
    %v10384 = vunpack.c.l.b16 %v10320
    %v10385 = vunpack.c.l.b16 %v10321
    %v10386 = vunpack.c.l.b16 %v10322
    %v10387 = vunpack.c.l.b16 %v10323
    %v10388 = vunpack.c.l.b16 %v10324
    %v10389 = vunpack.c.l.b16 %v10325
    %v10390 = vunpack.c.l.b16 %v10326
    %v10391 = vunpack.c.l.b16 %v10327
    %v10392 = vunpack.c.l.b16 %v10328
    %v10393 = vunpack.c.l.b16 %v10329
    %v10394 = vunpack.c.l.b16 %v10330
    %v10395 = vunpack.c.l.b16 %v10331
    %v10396 = vunpack.c.l.b16 %v10332
    %v10397 = vunpack.c.l.b16 %v10333
    %v10398 = vunpack.c.l.b16 %v10334
    %v10399 = vpack.c.b16 %v10368, %v10367
    %v10400 = vpack.c.b16 %v10370, %v10369
    %v10401 = vpack.c.b16 %v10372, %v10371
    %v10402 = vpack.c.b16 %v10374, %v10373
    %v10403 = vpack.c.b16 %v10376, %v10375
    %v10404 = vpack.c.b16 %v10378, %v10377
    %v10405 = vpack.c.b16 %v10380, %v10379
    %v10406 = vpack.c.b16 %v10382, %v10381
    %v10407 = vpack.c.b16 %v10384, %v10383
    %v10408 = vpack.c.b16 %v10386, %v10385
    %v10409 = vpack.c.b16 %v10388, %v10387
    %v10410 = vpack.c.b16 %v10390, %v10389
    %v10411 = vpack.c.b16 %v10392, %v10391
    %v10412 = vpack.c.b16 %v10394, %v10393
    %v10413 = vpack.c.b16 %v10396, %v10395
    %v10414 = vpack.c.b16 %v10398, %v10397
    %10431 = vmatprep.subr.bf16.mxu0 0
    %10432 = vmatpush1.bf16.msra.mxu0 %v10399
    %10433 = vmatprep.subr.bf16.mxu0 0
    %10434 = vmatpush1.bf16.msra.mxu0 %v10400
    %10435 = vmatprep.subr.bf16.mxu0 0
    %10436 = vmatpush1.bf16.msra.mxu0 %v10401
    %10437 = vmatprep.subr.bf16.mxu0 0
    %10438 = vmatpush1.bf16.msra.mxu0 %v10402
    %10439 = vmatprep.subr.bf16.mxu0 0
    %10440 = vmatpush1.bf16.msra.mxu0 %v10403
    %10441 = vmatprep.subr.bf16.mxu0 0
    %10442 = vmatpush1.bf16.msra.mxu0 %v10404
    %10443 = vmatprep.subr.bf16.mxu0 0
    %10444 = vmatpush1.bf16.msra.mxu0 %v10405
    %10445 = vmatprep.subr.bf16.mxu0 0
    %10446 = vmatpush1.bf16.msra.mxu0 %v10406
    %10447 = vmatprep.subr.bf16.mxu0 0
    %10448 = vmatpush1.bf16.msra.mxu0 %v10407
    %10449 = vmatprep.subr.bf16.mxu0 0
    %10450 = vmatpush1.bf16.msra.mxu0 %v10408
    %10451 = vmatprep.subr.bf16.mxu0 0
    %10452 = vmatpush1.bf16.msra.mxu0 %v10409
    %10453 = vmatprep.subr.bf16.mxu0 0
    %10454 = vmatpush1.bf16.msra.mxu0 %v10410
    %10455 = vmatprep.subr.bf16.mxu0 0
    %10456 = vmatpush1.bf16.msra.mxu0 %v10411
    %10457 = vmatprep.subr.bf16.mxu0 0
    %10458 = vmatpush1.bf16.msra.mxu0 %v10412
    %10459 = vmatprep.subr.bf16.mxu0 0
    %10460 = vmatpush1.bf16.msra.mxu0 %v10413
    %10461 = vmatprep.subr.bf16.mxu0 0
    %10462 = vmatpush1.bf16.msra.mxu0 %v10414
    %10463 = vmatprep.mubr.bf16.mxu0 %v10301
    %10464 = vmatmul.mubr.bf16.gmra.mrb[0].mxu0 %v10300
    %v10465 = vpop.f32.mrb[0].mxu0
    %v10466 = vadd.f32 0.0, %v10465
    %v10467 = vpop.f32.mrb[0].mxu0
    %v10468 = vpop.f32.mrb[0].mxu0
    %v10469 = vpop.f32.mrb[0].mxu0
    %10470 = vdwg.mxu0
    %v10503 = vunpack.c.l.b16 %v10268
    %v10504 = vunpack.c.l.b16 %v10269
    %v10505 = vunpack.c.l.b16 %v10270
    %v10506 = vunpack.c.l.b16 %v10271
    %v10507 = vunpack.c.l.b16 %v10272
    %v10508 = vunpack.c.l.b16 %v10273
    %v10509 = vunpack.c.l.b16 %v10274
    %v10510 = vunpack.c.l.b16 %v10275
    %v10511 = vunpack.c.l.b16 %v10276
    %v10512 = vunpack.c.l.b16 %v10277
    %v10513 = vunpack.c.l.b16 %v10278
    %v10514 = vunpack.c.l.b16 %v10279
    %v10515 = vunpack.c.l.b16 %v10280
    %v10516 = vunpack.c.l.b16 %v10281
    %v10517 = vunpack.c.l.b16 %v10282
    %v10518 = vunpack.c.l.b16 %v10283
    %v10519 = vunpack.c.l.b16 %v10284
    %v10520 = vunpack.c.l.b16 %v10285
    %v10521 = vunpack.c.l.b16 %v10286
    %v10522 = vunpack.c.l.b16 %v10287
    %v10523 = vunpack.c.l.b16 %v10288
    %v10524 = vunpack.c.l.b16 %v10289
    %v10525 = vunpack.c.l.b16 %v10290
    %v10526 = vunpack.c.l.b16 %v10291
    %v10527 = vunpack.c.l.b16 %v10292
    %v10528 = vunpack.c.l.b16 %v10293
    %v10529 = vunpack.c.l.b16 %v10294
    %v10530 = vunpack.c.l.b16 %v10295
    %v10531 = vunpack.c.l.b16 %v10296
    %v10532 = vunpack.c.l.b16 %v10297
    %v10533 = vunpack.c.l.b16 %v10298
    %v10534 = vunpack.c.l.b16 %v10299
    %v10535 = vpack.c.b16 %v10504, %v10503
    %v10536 = vpack.c.b16 %v10506, %v10505
    %v10537 = vpack.c.b16 %v10508, %v10507
    %v10538 = vpack.c.b16 %v10510, %v10509
    %v10539 = vpack.c.b16 %v10512, %v10511
    %v10540 = vpack.c.b16 %v10514, %v10513
    %v10541 = vpack.c.b16 %v10516, %v10515
    %v10542 = vpack.c.b16 %v10518, %v10517
    %v10543 = vpack.c.b16 %v10520, %v10519
    %v10544 = vpack.c.b16 %v10522, %v10521
    %v10545 = vpack.c.b16 %v10524, %v10523
    %v10546 = vpack.c.b16 %v10526, %v10525
    %v10547 = vpack.c.b16 %v10528, %v10527
    %v10548 = vpack.c.b16 %v10530, %v10529
    %v10549 = vpack.c.b16 %v10532, %v10531
    %v10550 = vpack.c.b16 %v10534, %v10533
    %10567 = vmatprep.subr.bf16.mxu0 0
    %10568 = vmatpush1.bf16.msra.mxu0 %v10535
    %10569 = vmatprep.subr.bf16.mxu0 0
    %10570 = vmatpush1.bf16.msra.mxu0 %v10536
    %10571 = vmatprep.subr.bf16.mxu0 0
    %10572 = vmatpush1.bf16.msra.mxu0 %v10537
    %10573 = vmatprep.subr.bf16.mxu0 0
    %10574 = vmatpush1.bf16.msra.mxu0 %v10538
    %10575 = vmatprep.subr.bf16.mxu0 0
    %10576 = vmatpush1.bf16.msra.mxu0 %v10539
    %10577 = vmatprep.subr.bf16.mxu0 0
    %10578 = vmatpush1.bf16.msra.mxu0 %v10540
    %10579 = vmatprep.subr.bf16.mxu0 0
    %10580 = vmatpush1.bf16.msra.mxu0 %v10541
    %10581 = vmatprep.subr.bf16.mxu0 0
    %10582 = vmatpush1.bf16.msra.mxu0 %v10542
    %10583 = vmatprep.subr.bf16.mxu0 0
    %10584 = vmatpush1.bf16.msra.mxu0 %v10543
    %10585 = vmatprep.subr.bf16.mxu0 0
    %10586 = vmatpush1.bf16.msra.mxu0 %v10544
    %10587 = vmatprep.subr.bf16.mxu0 0
    %10588 = vmatpush1.bf16.msra.mxu0 %v10545
    %10589 = vmatprep.subr.bf16.mxu0 0
    %10590 = vmatpush1.bf16.msra.mxu0 %v10546
    %10591 = vmatprep.subr.bf16.mxu0 0
    %10592 = vmatpush1.bf16.msra.mxu0 %v10547
    %10593 = vmatprep.subr.bf16.mxu0 0
    %10594 = vmatpush1.bf16.msra.mxu0 %v10548
    %10595 = vmatprep.subr.bf16.mxu0 0
    %10596 = vmatpush1.bf16.msra.mxu0 %v10549
    %10597 = vmatprep.subr.bf16.mxu0 0
    %10598 = vmatpush1.bf16.msra.mxu0 %v10550
    %10599 = vmatprep.mubr.bf16.mxu0 %v10267
    %10600 = vmatmul.mubr.bf16.gmra.mrb[0].mxu0 %v10266
    %v10601 = vpop.f32.mrb[0].mxu0
    %v10602 = vadd.f32 %v10466, %v10601
    %v10603 = vpop.f32.mrb[0].mxu0
    %v10604 = vpop.f32.mrb[0].mxu0
    %v10605 = vpop.f32.mrb[0].mxu0
    %10606 = vdwg.mxu0
    %v10607 = vpack.c.bf16 %v9999, %v9999
    %v10608 = vpack.c.bf16 %v10000, %v10000
    %s10609 = scalar_lea.vmem [#allocation12], 256
    %v10610 = vld [vmem:[%s10609] sm:$0xf]
    %v10611 = vld [vmem:[%s10609 + $0x4] sm:$0xf]
    %v10612 = vld [vmem:[%s10609 + $0x8] sm:$0xf]
    %v10613 = vld [vmem:[%s10609 + $0xc] sm:$0xf]
    %v10614 = vld [vmem:[%s10609 + $0x10] sm:$0xf]
    %v10615 = vld [vmem:[%s10609 + $0x14] sm:$0xf]
    %v10616 = vld [vmem:[%s10609 + $0x18] sm:$0xf]
    %v10617 = vld [vmem:[%s10609 + $0x1c] sm:$0xf]
    %v10618 = vld [vmem:[%s10609 + $0x20] sm:$0xf]
    %v10619 = vld [vmem:[%s10609 + $0x24] sm:$0xf]
    %v10620 = vld [vmem:[%s10609 + $0x28] sm:$0xf]
    %v10621 = vld [vmem:[%s10609 + $0x2c] sm:$0xf]
    %v10622 = vld [vmem:[%s10609 + $0x30] sm:$0xf]
    %v10623 = vld [vmem:[%s10609 + $0x34] sm:$0xf]
    %v10624 = vld [vmem:[%s10609 + $0x38] sm:$0xf]
    %v10625 = vld [vmem:[%s10609 + $0x3c] sm:$0xf]
    %v10626 = vld [vmem:[%s10609 + $0x40] sm:$0xf]
    %v10627 = vld [vmem:[%s10609 + $0x44] sm:$0xf]
    %v10628 = vld [vmem:[%s10609 + $0x48] sm:$0xf]
    %v10629 = vld [vmem:[%s10609 + $0x4c] sm:$0xf]
    %v10630 = vld [vmem:[%s10609 + $0x50] sm:$0xf]
    %v10631 = vld [vmem:[%s10609 + $0x54] sm:$0xf]
    %v10632 = vld [vmem:[%s10609 + $0x58] sm:$0xf]
    %v10633 = vld [vmem:[%s10609 + $0x5c] sm:$0xf]
    %v10634 = vld [vmem:[%s10609 + $0x60] sm:$0xf]
    %v10635 = vld [vmem:[%s10609 + $0x64] sm:$0xf]
    %v10636 = vld [vmem:[%s10609 + $0x68] sm:$0xf]
    %v10637 = vld [vmem:[%s10609 + $0x6c] sm:$0xf]
    %v10638 = vld [vmem:[%s10609 + $0x70] sm:$0xf]
    %v10639 = vld [vmem:[%s10609 + $0x74] sm:$0xf]
    %v10640 = vld [vmem:[%s10609 + $0x78] sm:$0xf]
    %v10641 = vld [vmem:[%s10609 + $0x7c] sm:$0xf]
    %v10674 = vunpack.c.l.b16 %v10610
    %v10675 = vunpack.c.l.b16 %v10611
    %v10676 = vunpack.c.l.b16 %v10612
    %v10677 = vunpack.c.l.b16 %v10613
    %v10678 = vunpack.c.l.b16 %v10614
    %v10679 = vunpack.c.l.b16 %v10615
    %v10680 = vunpack.c.l.b16 %v10616
    %v10681 = vunpack.c.l.b16 %v10617
    %v10682 = vunpack.c.l.b16 %v10618
    %v10683 = vunpack.c.l.b16 %v10619
    %v10684 = vunpack.c.l.b16 %v10620
    %v10685 = vunpack.c.l.b16 %v10621
    %v10686 = vunpack.c.l.b16 %v10622
    %v10687 = vunpack.c.l.b16 %v10623
    %v10688 = vunpack.c.l.b16 %v10624
    %v10689 = vunpack.c.l.b16 %v10625
    %v10690 = vunpack.c.l.b16 %v10626
    %v10691 = vunpack.c.l.b16 %v10627
    %v10692 = vunpack.c.l.b16 %v10628
    %v10693 = vunpack.c.l.b16 %v10629
    %v10694 = vunpack.c.l.b16 %v10630
    %v10695 = vunpack.c.l.b16 %v10631
    %v10696 = vunpack.c.l.b16 %v10632
    %v10697 = vunpack.c.l.b16 %v10633
    %v10698 = vunpack.c.l.b16 %v10634
    %v10699 = vunpack.c.l.b16 %v10635
    %v10700 = vunpack.c.l.b16 %v10636
    %v10701 = vunpack.c.l.b16 %v10637
    %v10702 = vunpack.c.l.b16 %v10638
    %v10703 = vunpack.c.l.b16 %v10639
    %v10704 = vunpack.c.l.b16 %v10640
    %v10705 = vunpack.c.l.b16 %v10641
    %v10706 = vpack.c.b16 %v10675, %v10674
    %v10707 = vpack.c.b16 %v10677, %v10676
    %v10708 = vpack.c.b16 %v10679, %v10678
    %v10709 = vpack.c.b16 %v10681, %v10680
    %v10710 = vpack.c.b16 %v10683, %v10682
    %v10711 = vpack.c.b16 %v10685, %v10684
    %v10712 = vpack.c.b16 %v10687, %v10686
    %v10713 = vpack.c.b16 %v10689, %v10688
    %v10714 = vpack.c.b16 %v10691, %v10690
    %v10715 = vpack.c.b16 %v10693, %v10692
    %v10716 = vpack.c.b16 %v10695, %v10694
    %v10717 = vpack.c.b16 %v10697, %v10696
    %v10718 = vpack.c.b16 %v10699, %v10698
    %v10719 = vpack.c.b16 %v10701, %v10700
    %v10720 = vpack.c.b16 %v10703, %v10702
    %v10721 = vpack.c.b16 %v10705, %v10704
    %10738 = vmatprep.subr.bf16.mxu0 0
    %10739 = vmatpush1.bf16.msra.mxu0 %v10706
    %10740 = vmatprep.subr.bf16.mxu0 0
    %10741 = vmatpush1.bf16.msra.mxu0 %v10707
    %10742 = vmatprep.subr.bf16.mxu0 0
    %10743 = vmatpush1.bf16.msra.mxu0 %v10708
    %10744 = vmatprep.subr.bf16.mxu0 0
    %10745 = vmatpush1.bf16.msra.mxu0 %v10709
    %10746 = vmatprep.subr.bf16.mxu0 0
    %10747 = vmatpush1.bf16.msra.mxu0 %v10710
    %10748 = vmatprep.subr.bf16.mxu0 0
    %10749 = vmatpush1.bf16.msra.mxu0 %v10711
    %10750 = vmatprep.subr.bf16.mxu0 0
    %10751 = vmatpush1.bf16.msra.mxu0 %v10712
    %10752 = vmatprep.subr.bf16.mxu0 0
    %10753 = vmatpush1.bf16.msra.mxu0 %v10713
    %10754 = vmatprep.subr.bf16.mxu0 0
    %10755 = vmatpush1.bf16.msra.mxu0 %v10714
    %10756 = vmatprep.subr.bf16.mxu0 0
    %10757 = vmatpush1.bf16.msra.mxu0 %v10715
    %10758 = vmatprep.subr.bf16.mxu0 0
    %10759 = vmatpush1.bf16.msra.mxu0 %v10716
    %10760 = vmatprep.subr.bf16.mxu0 0
    %10761 = vmatpush1.bf16.msra.mxu0 %v10717
    %10762 = vmatprep.subr.bf16.mxu0 0
    %10763 = vmatpush1.bf16.msra.mxu0 %v10718
    %10764 = vmatprep.subr.bf16.mxu0 0
    %10765 = vmatpush1.bf16.msra.mxu0 %v10719
    %10766 = vmatprep.subr.bf16.mxu0 0
    %10767 = vmatpush1.bf16.msra.mxu0 %v10720
    %10768 = vmatprep.subr.bf16.mxu0 0
    %10769 = vmatpush1.bf16.msra.mxu0 %v10721
    %10770 = vmatprep.mubr.bf16.mxu0 %v10608
    %10771 = vmatmul.mubr.bf16.gmra.mrb[0].mxu0 %v10607
    %v10772 = vpop.f32.mrb[0].mxu0
    %v10773 = vadd.f32 0.0, %v10772
    %v10774 = vpop.f32.mrb[0].mxu0
    %v10775 = vpop.f32.mrb[0].mxu0
    %v10776 = vpop.f32.mrb[0].mxu0
    %10777 = vdwg.mxu0
    %v10778 = vadd.f32 %v10602, %v10773
    %v10779 = vpack.c.bf16 %v10264, %v10264
    %v10780 = vpack.c.bf16 %v10265, %v10265
    %s10781 = scalar_lea.vmem [#allocation12], 384
    %v10782 = vld [vmem:[%s10781] sm:$0xf]
    %v10783 = vld [vmem:[%s10781 + $0x4] sm:$0xf]
    %v10784 = vld [vmem:[%s10781 + $0x8] sm:$0xf]
    %v10785 = vld [vmem:[%s10781 + $0xc] sm:$0xf]
    %v10786 = vld [vmem:[%s10781 + $0x10] sm:$0xf]
    %v10787 = vld [vmem:[%s10781 + $0x14] sm:$0xf]
    %v10788 = vld [vmem:[%s10781 + $0x18] sm:$0xf]
    %v10789 = vld [vmem:[%s10781 + $0x1c] sm:$0xf]
    %v10790 = vld [vmem:[%s10781 + $0x20] sm:$0xf]
    %v10791 = vld [vmem:[%s10781 + $0x24] sm:$0xf]
    %v10792 = vld [vmem:[%s10781 + $0x28] sm:$0xf]
    %v10793 = vld [vmem:[%s10781 + $0x2c] sm:$0xf]
    %v10794 = vld [vmem:[%s10781 + $0x30] sm:$0xf]
    %v10795 = vld [vmem:[%s10781 + $0x34] sm:$0xf]
    %v10796 = vld [vmem:[%s10781 + $0x38] sm:$0xf]
    %v10797 = vld [vmem:[%s10781 + $0x3c] sm:$0xf]
    %v10798 = vld [vmem:[%s10781 + $0x40] sm:$0xf]
    %v10799 = vld [vmem:[%s10781 + $0x44] sm:$0xf]
    %v10800 = vld [vmem:[%s10781 + $0x48] sm:$0xf]
    %v10801 = vld [vmem:[%s10781 + $0x4c] sm:$0xf]
    %v10802 = vld [vmem:[%s10781 + $0x50] sm:$0xf]
    %v10803 = vld [vmem:[%s10781 + $0x54] sm:$0xf]
    %v10804 = vld [vmem:[%s10781 + $0x58] sm:$0xf]
    %v10805 = vld [vmem:[%s10781 + $0x5c] sm:$0xf]
    %v10806 = vld [vmem:[%s10781 + $0x60] sm:$0xf]
    %v10807 = vld [vmem:[%s10781 + $0x64] sm:$0xf]
    %v10808 = vld [vmem:[%s10781 + $0x68] sm:$0xf]
    %v10809 = vld [vmem:[%s10781 + $0x6c] sm:$0xf]
    %v10810 = vld [vmem:[%s10781 + $0x70] sm:$0xf]
    %v10811 = vld [vmem:[%s10781 + $0x74] sm:$0xf]
    %v10812 = vld [vmem:[%s10781 + $0x78] sm:$0xf]
    %v10813 = vld [vmem:[%s10781 + $0x7c] sm:$0xf]
    %v10846 = vunpack.c.l.b16 %v10782
    %v10847 = vunpack.c.l.b16 %v10783
    %v10848 = vunpack.c.l.b16 %v10784
    %v10849 = vunpack.c.l.b16 %v10785
    %v10850 = vunpack.c.l.b16 %v10786
    %v10851 = vunpack.c.l.b16 %v10787
    %v10852 = vunpack.c.l.b16 %v10788
    %v10853 = vunpack.c.l.b16 %v10789
    %v10854 = vunpack.c.l.b16 %v10790
    %v10855 = vunpack.c.l.b16 %v10791
    %v10856 = vunpack.c.l.b16 %v10792
    %v10857 = vunpack.c.l.b16 %v10793
    %v10858 = vunpack.c.l.b16 %v10794
    %v10859 = vunpack.c.l.b16 %v10795
    %v10860 = vunpack.c.l.b16 %v10796
    %v10861 = vunpack.c.l.b16 %v10797
    %v10862 = vunpack.c.l.b16 %v10798
    %v10863 = vunpack.c.l.b16 %v10799
    %v10864 = vunpack.c.l.b16 %v10800
    %v10865 = vunpack.c.l.b16 %v10801
    %v10866 = vunpack.c.l.b16 %v10802
    %v10867 = vunpack.c.l.b16 %v10803
    %v10868 = vunpack.c.l.b16 %v10804
    %v10869 = vunpack.c.l.b16 %v10805
    %v10870 = vunpack.c.l.b16 %v10806
    %v10871 = vunpack.c.l.b16 %v10807
    %v10872 = vunpack.c.l.b16 %v10808
    %v10873 = vunpack.c.l.b16 %v10809
    %v10874 = vunpack.c.l.b16 %v10810
    %v10875 = vunpack.c.l.b16 %v10811
    %v10876 = vunpack.c.l.b16 %v10812
    %v10877 = vunpack.c.l.b16 %v10813
    %v10878 = vpack.c.b16 %v10847, %v10846
    %v10879 = vpack.c.b16 %v10849, %v10848
    %v10880 = vpack.c.b16 %v10851, %v10850
    %v10881 = vpack.c.b16 %v10853, %v10852
    %v10882 = vpack.c.b16 %v10855, %v10854
    %v10883 = vpack.c.b16 %v10857, %v10856
    %v10884 = vpack.c.b16 %v10859, %v10858
    %v10885 = vpack.c.b16 %v10861, %v10860
    %v10886 = vpack.c.b16 %v10863, %v10862
    %v10887 = vpack.c.b16 %v10865, %v10864
    %v10888 = vpack.c.b16 %v10867, %v10866
    %v10889 = vpack.c.b16 %v10869, %v10868
    %v10890 = vpack.c.b16 %v10871, %v10870
    %v10891 = vpack.c.b16 %v10873, %v10872
    %v10892 = vpack.c.b16 %v10875, %v10874
    %v10893 = vpack.c.b16 %v10877, %v10876
    %10910 = vmatprep.subr.bf16.mxu0 0
    %10911 = vmatpush1.bf16.msra.mxu0 %v10878
    %10912 = vmatprep.subr.bf16.mxu0 0
    %10913 = vmatpush1.bf16.msra.mxu0 %v10879
    %10914 = vmatprep.subr.bf16.mxu0 0
    %10915 = vmatpush1.bf16.msra.mxu0 %v10880
    %10916 = vmatprep.subr.bf16.mxu0 0
    %10917 = vmatpush1.bf16.msra.mxu0 %v10881
    %10918 = vmatprep.subr.bf16.mxu0 0
    %10919 = vmatpush1.bf16.msra.mxu0 %v10882
    %10920 = vmatprep.subr.bf16.mxu0 0
    %10921 = vmatpush1.bf16.msra.mxu0 %v10883
    %10922 = vmatprep.subr.bf16.mxu0 0
    %10923 = vmatpush1.bf16.msra.mxu0 %v10884
    %10924 = vmatprep.subr.bf16.mxu0 0
    %10925 = vmatpush1.bf16.msra.mxu0 %v10885
    %10926 = vmatprep.subr.bf16.mxu0 0
    %10927 = vmatpush1.bf16.msra.mxu0 %v10886
    %10928 = vmatprep.subr.bf16.mxu0 0
    %10929 = vmatpush1.bf16.msra.mxu0 %v10887
    %10930 = vmatprep.subr.bf16.mxu0 0
    %10931 = vmatpush1.bf16.msra.mxu0 %v10888
    %10932 = vmatprep.subr.bf16.mxu0 0
    %10933 = vmatpush1.bf16.msra.mxu0 %v10889
    %10934 = vmatprep.subr.bf16.mxu0 0
    %10935 = vmatpush1.bf16.msra.mxu0 %v10890
    %10936 = vmatprep.subr.bf16.mxu0 0
    %10937 = vmatpush1.bf16.msra.mxu0 %v10891
    %10938 = vmatprep.subr.bf16.mxu0 0
    %10939 = vmatpush1.bf16.msra.mxu0 %v10892
    %10940 = vmatprep.subr.bf16.mxu0 0
    %10941 = vmatpush1.bf16.msra.mxu0 %v10893
    %10942 = vmatprep.mubr.bf16.mxu0 %v10780
    %10943 = vmatmul.mubr.bf16.gmra.mrb[0].mxu0 %v10779
    %v10944 = vpop.f32.mrb[0].mxu0
    %v10945 = vadd.f32 0.0, %v10944
    %v10946 = vpop.f32.mrb[0].mxu0
    %v10947 = vpop.f32.mrb[0].mxu0
    %v10948 = vpop.f32.mrb[0].mxu0
    %10949 = vdwg.mxu0
    %v10950 = vadd.f32 %v10778, %v10945
    %v10951 = vld [vmem:[#allocation18] sm:$0x1]
    %v10953 = vlaneseq
    %v10954 = vshrl.u32 %v10953, 7
    %v10955 = vsub.s32 0, %v10954
    %v10956 = vrot.slane %v10951, %v10955
    %v10958 = vadd.f32 %v10950, %v10956
    %10959 = vst [vmem:[%s12] sm:$0xff] %v10958
    // Predicated region
    $region94: #{forward.1} parent=1 // pred_check
      _
    $region95: #{forward.1} parent=1 // pred_check_branch
      %10961 = sbr.rel (0) target = $region97
    $region96: #{forward.1} parent=1 // pred_region
      _
    $region97: #{forward.1} parent=1 // pred_fallthru
      _
    // Predicated region
    $region98: #{forward.1} parent=1 // pred_check
      _
    $region99: #{forward.1} parent=1 // pred_check_branch
      %10963 = sbr.rel (0) target = $region101
    $region100: #{forward.1} parent=1 // pred_region
      _
    $region101: #{forward.1} parent=1 // pred_fallthru
      _
    %10964 = vsyncpa [#allocation3], 1
    %10965 = vsyncpa [#allocation5], 1
    %10966 = vsyncpa [#allocation8], 1
    %10967 = vsyncpa [#allocation11], 1
    %10968 = vsyncpa [#allocation14], 1
    %10969 = vsyncpa [#allocation17], 1

</llo_original>
